<compile_context>
chip_gen: v7x
topology: tpu7x:2x2x1
jax: 0.10.0
libtpu: 0.0.40
codegen_flags: <defaults>
</compile_context>

<pallas_src>
import math
from functools import partial

import jax
import jax.numpy as jnp
from jax import lax
from jax.experimental import pallas as pl
from jax.experimental.pallas import tpu as pltpu


# ------------------------- fused forward kernel --------------------------
def _fused_forward_kernel(*refs, B, S, C, E, NH):
    (cols1_ref, cols2_ref, xf_ref,
     c1w_ref, c1b_ref, c2w_ref, c2b_ref,
     fc1w_ref, fc1b_ref, fc2w_ref, fc2b_ref,
     rw_ref, rb_ref, *rest) = refs[:-1]
    out_ref = refs[-1]

    tr_refs = rest[:24]                               # 2 encoder blocks x 12
    (w1_ref, b1_ref, w2_ref, b2_ref, w3_ref, b3_ref) = rest[24:30]

    f32, bf16 = jnp.float32, jnp.bfloat16
    HD = E // NH
    scale = 1.0 / math.sqrt(HD)

    xf = xf_ref[...]                                  # (B*S, C) f32

    # ------------------------------ TBlock ------------------------------
    # 3x3 convs (BN folded), im2col columns precomputed in the wrapper:
    # one (B*S, 9C) x (9C, C) matmul per dilation.
    x1 = jnp.maximum(jnp.dot(cols1_ref[...], c1w_ref[...],
                             preferred_element_type=f32) + c1b_ref[...], 0.0)
    x2 = jnp.maximum(jnp.dot(cols2_ref[...], c2w_ref[...],
                             preferred_element_type=f32) + c2b_ref[...], 0.0)

    # channel attention: per-image GAP -> fc1 -> ReLU -> fc2 -> sigmoid -> scale
    gaps = jnp.concatenate(
        [jnp.mean(xf[b * S:(b + 1) * S], axis=0, keepdims=True)
         for b in range(B)], axis=0)                                   # (B, C)
    hdn = jnp.maximum(jnp.dot(gaps.astype(bf16), fc1w_ref[...],
                              preferred_element_type=f32) + fc1b_ref[...], 0.0)
    att = jax.nn.sigmoid(jnp.dot(hdn.astype(bf16), fc2w_ref[...],
                                 preferred_element_type=f32) + fc2b_ref[...])
    x3 = jnp.concatenate(
        [xf[b * S:(b + 1) * S] * att[b:b + 1, :] for b in range(B)], axis=0)

    feat = jnp.maximum(x1 + x2 + x3, 0.0)                              # (B*S, C)

    # ------------------- reduce_conv (1x1) -> tokens ---------------------
    x = jnp.dot(feat.astype(bf16), rw_ref[...],
                preferred_element_type=f32) + rb_ref[...]              # (B*S, E)

    # ------------- 2x pre-norm transformer encoder blocks ----------------
    def layer_norm(z, g_ref, b_ref):
        mu = jnp.mean(z, axis=-1, keepdims=True)
        var = jnp.mean((z - mu) ** 2, axis=-1, keepdims=True)
        return (z - mu) * lax.rsqrt(var + 1e-5) * g_ref[...] + b_ref[...]

    for blk in range(2):
        (ln1g, ln1b, wqkv, bqkv, wo, bo,
         ln2g, ln2b, wf1, bf1, wf2, bf2) = tr_refs[blk * 12:(blk + 1) * 12]

        # self-attention on norm1(x); fused QKV projection on stacked batch
        xn = layer_norm(x, ln1g, ln1b)
        qkv = (jnp.dot(xn.astype(bf16), wqkv[...],
                       preferred_element_type=f32) + bqkv[...]).astype(bf16)

        ao_rows = []
        for b in range(B):                            # attention is per image
            qkv_b = qkv[b * S:(b + 1) * S]            # (S, 3E) bf16, row slice
            ao_b = None
            for h in range(NH):
                qh = qkv_b[:, h * HD:(h + 1) * HD]
                kh = qkv_b[:, E + h * HD:E + (h + 1) * HD]
                vh = qkv_b[:, 2 * E + h * HD:2 * E + (h + 1) * HD]
                # contract on K's last dim -> no materialized transpose
                s = lax.dot_general(qh, kh, (((1,), (1,)), ((), ())),
                                    preferred_element_type=f32) * scale
                s = s - jnp.max(s, axis=-1, keepdims=True)
                p = jnp.exp(s)
                p = p * pl.reciprocal(jnp.sum(p, axis=-1, keepdims=True),
                                      approx=True)
                pv = jnp.dot(p.astype(bf16), vh,
                             preferred_element_type=f32)               # (S, HD)
                # fold output projection per head -> no lane concat
                hp = jnp.dot(pv.astype(bf16), wo[h * HD:(h + 1) * HD, :],
                             preferred_element_type=f32)               # (S, E)
                ao_b = hp if ao_b is None else ao_b + hp
            ao_rows.append(ao_b)
        x = x + jnp.concatenate(ao_rows, axis=0) + bo[...]  # dropout: id (eval)

        # feed-forward on norm2(x)
        xn2 = layer_norm(x, ln2g, ln2b)
        h1 = jnp.maximum(jnp.dot(xn2.astype(bf16), wf1[...],
                                 preferred_element_type=f32) + bf1[...], 0.0)
        x = x + jnp.dot(h1.astype(bf16), wf2[...],
                        preferred_element_type=f32) + bf2[...]  # dropout: id

    # ------------------- mean pool + classifier head ---------------------
    pooled = jnp.concatenate(
        [jnp.mean(x[b * S:(b + 1) * S], axis=0, keepdims=True)
         for b in range(B)], axis=0)                                   # (B, E)
    hcls = jnp.maximum(jnp.dot(pooled.astype(bf16), w1_ref[...],
                               preferred_element_type=f32) + b1_ref[...], 0.0)
    hcls = jnp.maximum(jnp.dot(hcls.astype(bf16), w2_ref[...],
                               preferred_element_type=f32) + b2_ref[...], 0.0)
    out_ref[...] = jnp.dot(hcls.astype(bf16), w3_ref[...],
                           preferred_element_type=f32) + b3_ref[...]   # (B, 128)


# ------------------------------ wrapper -----------------------------------
def novel_hybrid_transformer(feats_nchw, params, num_classes=5, num_heads=4):
    # TODO(synk): densenet169 pretrained backbone omitted (frozen pretrained
    # torchvision weights) — this consumes its feature map directly.
    x = jnp.transpose(feats_nchw, (0, 2, 3, 1)).astype(jnp.float32)  # -> NHWC
    B, H, W, C = x.shape
    S = H * W
    BS = B * S
    E = params["reduce_w"].shape[1]
    FF = params["tr1"]["ff1_w"].shape[1]
    NCPAD = params["cls_w3"].shape[1]
    HD = E // num_heads

    # ---- im2col in plain XLA (outside the kernel) ----
    xpad = jnp.pad(x, ((0, 0), (2, 2), (2, 2), (0, 0)))

    def im2col(dil):
        off = 2 - dil                                  # buffer pad=2, conv pad=dil
        taps = [xpad[:, off + kh * dil: off + kh * dil + H,
                        off + kw * dil: off + kw * dil + W, :]
                for kh in range(3) for kw in range(3)]
        return jnp.concatenate(taps, axis=-1).reshape(BS, 9 * C).astype(jnp.bfloat16)

    cols1 = im2col(2)
    cols2 = im2col(1)
    xf = x.reshape(BS, C)                              # center, f32

    flat = [
        params["conv1_w"], params["conv1_b"],
        params["conv2_w"], params["conv2_b"],
        params["fc1_w"], params["fc1_b"], params["fc2_w"], params["fc2_b"],
        params["reduce_w"], params["reduce_b"],
    ]
    for tp in (params["tr1"], params["tr2"]):
        flat += [tp[k] for k in ("ln1_g", "ln1_b", "wqkv", "bqkv", "wo", "bo",
                                 "ln2_g", "ln2_b", "ff1_w", "ff1_b",
                                 "ff2_w", "ff2_b")]
    flat += [params["cls_w1"], params["cls_b1"],
             params["cls_w2"], params["cls_b2"],
             params["cls_w3"], params["cls_b3"]]

    args = [cols1, cols2, xf] + flat

    def full_spec(a):
        nd = a.ndim
        return pl.BlockSpec(a.shape, lambda i, _nd=nd: (0,) * _nd)

    # ---- advisory cost estimate for the XLA scheduler ----
    flops = (2 * 2 * BS * 9 * C * C                       # two im2col convs
             + 2 * BS * C * E                             # reduce_conv
             + 2 * (2 * BS * E * 3 * E                    # fused QKV
                    + B * num_heads * (4 * S * S * HD + 2 * S * HD * E)
                    + 2 * 2 * BS * E * FF)                # FFN
             + 2 * B * (E * 128 + 128 * 64 + 64 * NCPAD))  # classifier
    transcendentals = 2 * B * num_heads * S * S + B * C + BS * E
    bytes_accessed = (sum(int(a.size) * a.dtype.itemsize for a in args)
                      + B * NCPAD * 4)

    out = pl.pallas_call(
        partial(_fused_forward_kernel, B=B, S=S, C=C, E=E, NH=num_heads),
        grid=(1,),
        in_specs=[full_spec(a) for a in args],
        out_specs=pl.BlockSpec((B, NCPAD), lambda i: (0, 0)),
        out_shape=jax.ShapeDtypeStruct((B, NCPAD), jnp.float32),
        compiler_params=pltpu.CompilerParams(
            dimension_semantics=("arbitrary",)),
        cost_estimate=pl.CostEstimate(flops=int(flops),
                                      transcendentals=int(transcendentals),
                                      bytes_accessed=int(bytes_accessed)),
    )(*args)
    return out[:, :num_classes]


# ----------------------------- parameters ---------------------------------
def init_raw_params(key, c_in=32, embed=64, ff=128, num_classes=5):
    """PyTorch-style raw parameters (eval-mode BN running stats)."""
    keys = iter(jax.random.split(key, 64))

    def rnd(shape, fan_in):
        return (jax.random.normal(next(keys), shape, jnp.float32)
                / math.sqrt(float(fan_in)))

    cr = c_in // 8
    one = jnp.ones((1, c_in), jnp.float32)
    zero = jnp.zeros((1, c_in), jnp.float32)

    def transformer_p():
        return dict(
            ln1_g=jnp.ones((1, embed), jnp.float32),
            ln1_b=jnp.zeros((1, embed), jnp.float32),
            wq=rnd((embed, embed), embed), bq=rnd((1, embed), embed),
            wk=rnd((embed, embed), embed), bk=rnd((1, embed), embed),
            wv=rnd((embed, embed), embed), bv=rnd((1, embed), embed),
            wo=rnd((embed, embed), embed), bo=rnd((1, embed), embed),
            ln2_g=jnp.ones((1, embed), jnp.float32),
            ln2_b=jnp.zeros((1, embed), jnp.float32),
            ff1_w=rnd((embed, ff), embed), ff1_b=rnd((1, ff), embed),
            ff2_w=rnd((ff, embed), ff), ff2_b=rnd((1, embed), ff),
        )

    return dict(
        conv1_w=rnd((3, 3, c_in, c_in), 9 * c_in), conv1_b=rnd((1, c_in), c_in),
        bn1_gamma=one, bn1_beta=zero, bn1_mean=zero, bn1_var=one,
        conv2_w=rnd((3, 3, c_in, c_in), 9 * c_in), conv2_b=rnd((1, c_in), c_in),
        bn2_gamma=one, bn2_beta=zero, bn2_mean=zero, bn2_var=one,
        fc1_w=rnd((c_in, cr), c_in), fc1_b=rnd((1, cr), c_in),
        fc2_w=rnd((cr, c_in), cr), fc2_b=rnd((1, c_in), cr),
        reduce_w=rnd((c_in, embed), c_in), reduce_b=rnd((1, embed), c_in),
        tr1=transformer_p(), tr2=transformer_p(),
        cls_w1=rnd((embed, 128), embed), cls_b1=rnd((1, 128), embed),
        cls_w2=rnd((128, 64), 128), cls_b2=rnd((1, 64), 128),
        cls_w3=rnd((64, num_classes), 64), cls_b3=rnd((1, num_classes), 64),
    )


def prepare_params(raw, lane_pad=128, eps=1e-5):
    """Fold BN into convs, fuse QKV, reshape im2col weights, cast matmul
    weights to bf16, lane-pad the classifier output."""
    bf16 = jnp.bfloat16

    def fold_conv(w, b, gamma, beta, mean, var):
        s = gamma / jnp.sqrt(var + eps)                        # (1, Cout)
        w_f = w * s.reshape(1, 1, 1, -1)                       # scale out-channels
        b_f = b * s + (beta - mean * s)
        cin, cout = w.shape[2], w.shape[3]
        return w_f.reshape(9 * cin, cout).astype(bf16), b_f    # im2col layout

    c1w, c1b = fold_conv(raw["conv1_w"], raw["conv1_b"], raw["bn1_gamma"],
                         raw["bn1_beta"], raw["bn1_mean"], raw["bn1_var"])
    c2w, c2b = fold_conv(raw["conv2_w"], raw["conv2_b"], raw["bn2_gamma"],
                         raw["bn2_beta"], raw["bn2_mean"], raw["bn2_var"])

    def prep_tr(tp):
        return dict(
            ln1_g=tp["ln1_g"], ln1_b=tp["ln1_b"],
            wqkv=jnp.concatenate([tp["wq"], tp["wk"], tp["wv"]],
                                 axis=1).astype(bf16),
            bqkv=jnp.concatenate([tp["bq"], tp["bk"], tp["bv"]], axis=1),
            wo=tp["wo"].astype(bf16), bo=tp["bo"],
            ln2_g=tp["ln2_g"], ln2_b=tp["ln2_b"],
            ff1_w=tp["ff1_w"].astype(bf16), ff1_b=tp["ff1_b"],
            ff2_w=tp["ff2_w"].astype(bf16), ff2_b=tp["ff2_b"],
        )

    nc = raw["cls_w3"].shape[1]
    w3p = jnp.zeros((raw["cls_w3"].shape[0], lane_pad), jnp.float32)
    w3p = w3p.at[:, :nc].set(raw["cls_w3"])
    b3p = jnp.zeros((1, lane_pad), jnp.float32).at[:, :nc].set(raw["cls_b3"])

    return dict(
        conv1_w=c1w, conv1_b=c1b, conv2_w=c2w, conv2_b=c2b,
        fc1_w=raw["fc1_w"].astype(bf16), fc1_b=raw["fc1_b"],
        fc2_w=raw["fc2_w"].astype(bf16), fc2_b=raw["fc2_b"],
        reduce_w=raw["reduce_w"].astype(bf16), reduce_b=raw["reduce_b"],
        tr1=prep_tr(raw["tr1"]), tr2=prep_tr(raw["tr2"]),
        cls_w1=raw["cls_w1"].astype(bf16), cls_b1=raw["cls_b1"],
        cls_w2=raw["cls_w2"].astype(bf16), cls_b2=raw["cls_b2"],
        cls_w3=w3p.astype(bf16), cls_b3=b3p,
    )


# -------------------------------- main -------------------------------------
if __name__ == "__main__":
    key = jax.random.PRNGKey(0)
    k_in, k_par = jax.random.split(key)

    # small synthetic "backbone output": B=2, C=32 (stand-in for 1664), 8x8 spatial
    B, C_IN, H, W = 2, 32, 8, 8
    feats = jax.random.normal(k_in, (B, C_IN, H, W), jnp.float32)

    raw = init_raw_params(k_par, c_in=C_IN, embed=64, ff=128, num_classes=5)
    params = prepare_params(raw, lane_pad=128)

    fwd = jax.jit(novel_hybrid_transformer)
    out = jax.block_until_ready(fwd(feats, params))

    assert out.shape == (B, 5), out.shape
    assert bool(jnp.all(jnp.isfinite(out)))
    print("KERNEL_OK")
</pallas_src>

<mosaic_0001>
module attributes {stable_mosaic.version = 11 : i64} {
  func.func @_fused_forward_kernel(%arg0: i32, %arg1: memref<128x288xbf16, #tpu.memory_space<vmem>>, %arg2: memref<128x288xbf16, #tpu.memory_space<vmem>>, %arg3: memref<128x32xf32, #tpu.memory_space<vmem>>, %arg4: memref<288x32xbf16, #tpu.memory_space<vmem>>, %arg5: memref<1x32xf32, #tpu.memory_space<vmem>>, %arg6: memref<288x32xbf16, #tpu.memory_space<vmem>>, %arg7: memref<1x32xf32, #tpu.memory_space<vmem>>, %arg8: memref<32x4xbf16, #tpu.memory_space<vmem>>, %arg9: memref<1x4xf32, #tpu.memory_space<vmem>>, %arg10: memref<4x32xbf16, #tpu.memory_space<vmem>>, %arg11: memref<1x32xf32, #tpu.memory_space<vmem>>, %arg12: memref<32x64xbf16, #tpu.memory_space<vmem>>, %arg13: memref<1x64xf32, #tpu.memory_space<vmem>>, %arg14: memref<1x64xf32, #tpu.memory_space<vmem>>, %arg15: memref<1x64xf32, #tpu.memory_space<vmem>>, %arg16: memref<64x192xbf16, #tpu.memory_space<vmem>>, %arg17: memref<1x192xf32, #tpu.memory_space<vmem>>, %arg18: memref<64x64xbf16, #tpu.memory_space<vmem>>, %arg19: memref<1x64xf32, #tpu.memory_space<vmem>>, %arg20: memref<1x64xf32, #tpu.memory_space<vmem>>, %arg21: memref<1x64xf32, #tpu.memory_space<vmem>>, %arg22: memref<64x128xbf16, #tpu.memory_space<vmem>>, %arg23: memref<1x128xf32, #tpu.memory_space<vmem>>, %arg24: memref<128x64xbf16, #tpu.memory_space<vmem>>, %arg25: memref<1x64xf32, #tpu.memory_space<vmem>>, %arg26: memref<1x64xf32, #tpu.memory_space<vmem>>, %arg27: memref<1x64xf32, #tpu.memory_space<vmem>>, %arg28: memref<64x192xbf16, #tpu.memory_space<vmem>>, %arg29: memref<1x192xf32, #tpu.memory_space<vmem>>, %arg30: memref<64x64xbf16, #tpu.memory_space<vmem>>, %arg31: memref<1x64xf32, #tpu.memory_space<vmem>>, %arg32: memref<1x64xf32, #tpu.memory_space<vmem>>, %arg33: memref<1x64xf32, #tpu.memory_space<vmem>>, %arg34: memref<64x128xbf16, #tpu.memory_space<vmem>>, %arg35: memref<1x128xf32, #tpu.memory_space<vmem>>, %arg36: memref<128x64xbf16, #tpu.memory_space<vmem>>, %arg37: memref<1x64xf32, #tpu.memory_space<vmem>>, %arg38: memref<64x128xbf16, #tpu.memory_space<vmem>>, %arg39: memref<1x128xf32, #tpu.memory_space<vmem>>, %arg40: memref<128x64xbf16, #tpu.memory_space<vmem>>, %arg41: memref<1x64xf32, #tpu.memory_space<vmem>>, %arg42: memref<64x128xbf16, #tpu.memory_space<vmem>>, %arg43: memref<1x128xf32, #tpu.memory_space<vmem>>, %arg44: memref<2x128xf32, #tpu.memory_space<vmem>>) attributes {dimension_semantics = [#tpu.dimension_semantics<arbitrary>], iteration_bounds = array<i64: 1>, scalar_prefetch = 0 : i64, scratch_operands = 0 : i64, tpu.core_type = #tpu.core_type<tc>, window_params = [{pipeline_mode = #tpu.pipeline_mode<synchronous>, transform_indices = @transform_0, window_bounds = array<i64: 128, 288>}, {pipeline_mode = #tpu.pipeline_mode<synchronous>, transform_indices = @transform_1, window_bounds = array<i64: 128, 288>}, {pipeline_mode = #tpu.pipeline_mode<synchronous>, transform_indices = @transform_2, window_bounds = array<i64: 128, 32>}, {pipeline_mode = #tpu.pipeline_mode<synchronous>, transform_indices = @transform_3, window_bounds = array<i64: 288, 32>}, {pipeline_mode = #tpu.pipeline_mode<synchronous>, transform_indices = @transform_4, window_bounds = array<i64: 1, 32>}, {pipeline_mode = #tpu.pipeline_mode<synchronous>, transform_indices = @transform_5, window_bounds = array<i64: 288, 32>}, {pipeline_mode = #tpu.pipeline_mode<synchronous>, transform_indices = @transform_6, window_bounds = array<i64: 1, 32>}, {pipeline_mode = #tpu.pipeline_mode<synchronous>, transform_indices = @transform_7, window_bounds = array<i64: 32, 4>}, {pipeline_mode = #tpu.pipeline_mode<synchronous>, transform_indices = @transform_8, window_bounds = array<i64: 1, 4>}, {pipeline_mode = #tpu.pipeline_mode<synchronous>, transform_indices = @transform_9, window_bounds = array<i64: 4, 32>}, {pipeline_mode = #tpu.pipeline_mode<synchronous>, transform_indices = @transform_10, window_bounds = array<i64: 1, 32>}, {pipeline_mode = #tpu.pipeline_mode<synchronous>, transform_indices = @transform_11, window_bounds = array<i64: 32, 64>}, {pipeline_mode = #tpu.pipeline_mode<synchronous>, transform_indices = @transform_12, window_bounds = array<i64: 1, 64>}, {pipeline_mode = #tpu.pipeline_mode<synchronous>, transform_indices = @transform_13, window_bounds = array<i64: 1, 64>}, {pipeline_mode = #tpu.pipeline_mode<synchronous>, transform_indices = @transform_14, window_bounds = array<i64: 1, 64>}, {pipeline_mode = #tpu.pipeline_mode<synchronous>, transform_indices = @transform_15, window_bounds = array<i64: 64, 192>}, {pipeline_mode = #tpu.pipeline_mode<synchronous>, transform_indices = @transform_16, window_bounds = array<i64: 1, 192>}, {pipeline_mode = #tpu.pipeline_mode<synchronous>, transform_indices = @transform_17, window_bounds = array<i64: 64, 64>}, {pipeline_mode = #tpu.pipeline_mode<synchronous>, transform_indices = @transform_18, window_bounds = array<i64: 1, 64>}, {pipeline_mode = #tpu.pipeline_mode<synchronous>, transform_indices = @transform_19, window_bounds = array<i64: 1, 64>}, {pipeline_mode = #tpu.pipeline_mode<synchronous>, transform_indices = @transform_20, window_bounds = array<i64: 1, 64>}, {pipeline_mode = #tpu.pipeline_mode<synchronous>, transform_indices = @transform_21, window_bounds = array<i64: 64, 128>}, {pipeline_mode = #tpu.pipeline_mode<synchronous>, transform_indices = @transform_22, window_bounds = array<i64: 1, 128>}, {pipeline_mode = #tpu.pipeline_mode<synchronous>, transform_indices = @transform_23, window_bounds = array<i64: 128, 64>}, {pipeline_mode = #tpu.pipeline_mode<synchronous>, transform_indices = @transform_24, window_bounds = array<i64: 1, 64>}, {pipeline_mode = #tpu.pipeline_mode<synchronous>, transform_indices = @transform_25, window_bounds = array<i64: 1, 64>}, {pipeline_mode = #tpu.pipeline_mode<synchronous>, transform_indices = @transform_26, window_bounds = array<i64: 1, 64>}, {pipeline_mode = #tpu.pipeline_mode<synchronous>, transform_indices = @transform_27, window_bounds = array<i64: 64, 192>}, {pipeline_mode = #tpu.pipeline_mode<synchronous>, transform_indices = @transform_28, window_bounds = array<i64: 1, 192>}, {pipeline_mode = #tpu.pipeline_mode<synchronous>, transform_indices = @transform_29, window_bounds = array<i64: 64, 64>}, {pipeline_mode = #tpu.pipeline_mode<synchronous>, transform_indices = @transform_30, window_bounds = array<i64: 1, 64>}, {pipeline_mode = #tpu.pipeline_mode<synchronous>, transform_indices = @transform_31, window_bounds = array<i64: 1, 64>}, {pipeline_mode = #tpu.pipeline_mode<synchronous>, transform_indices = @transform_32, window_bounds = array<i64: 1, 64>}, {pipeline_mode = #tpu.pipeline_mode<synchronous>, transform_indices = @transform_33, window_bounds = array<i64: 64, 128>}, {pipeline_mode = #tpu.pipeline_mode<synchronous>, transform_indices = @transform_34, window_bounds = array<i64: 1, 128>}, {pipeline_mode = #tpu.pipeline_mode<synchronous>, transform_indices = @transform_35, window_bounds = array<i64: 128, 64>}, {pipeline_mode = #tpu.pipeline_mode<synchronous>, transform_indices = @transform_36, window_bounds = array<i64: 1, 64>}, {pipeline_mode = #tpu.pipeline_mode<synchronous>, transform_indices = @transform_37, window_bounds = array<i64: 64, 128>}, {pipeline_mode = #tpu.pipeline_mode<synchronous>, transform_indices = @transform_38, window_bounds = array<i64: 1, 128>}, {pipeline_mode = #tpu.pipeline_mode<synchronous>, transform_indices = @transform_39, window_bounds = array<i64: 128, 64>}, {pipeline_mode = #tpu.pipeline_mode<synchronous>, transform_indices = @transform_40, window_bounds = array<i64: 1, 64>}, {pipeline_mode = #tpu.pipeline_mode<synchronous>, transform_indices = @transform_41, window_bounds = array<i64: 64, 128>}, {pipeline_mode = #tpu.pipeline_mode<synchronous>, transform_indices = @transform_42, window_bounds = array<i64: 1, 128>}, {pipeline_mode = #tpu.pipeline_mode<synchronous>, transform_indices = @transform_43, window_bounds = array<i64: 2, 128>}]} {
    %c0 = arith.constant 0 : index
    %c0_0 = arith.constant 0 : index
    %0 = vector.load %arg3[%c0, %c0_0] : memref<128x32xf32, #tpu.memory_space<vmem>>, vector<128x32xf32>
    %c0_1 = arith.constant 0 : index
    %c0_2 = arith.constant 0 : index
    %1 = vector.load %arg1[%c0_1, %c0_2] : memref<128x288xbf16, #tpu.memory_space<vmem>>, vector<128x288xbf16>
    %c0_3 = arith.constant 0 : index
    %c0_4 = arith.constant 0 : index
    %2 = vector.load %arg4[%c0_3, %c0_4] : memref<288x32xbf16, #tpu.memory_space<vmem>>, vector<288x32xbf16>
    %cst = arith.constant dense<0.000000e+00> : vector<128x32xf32>
    %3 = tpu.matmul %1, %2, %cst {dimension_numbers = #tpu.dot_dimension_numbers<[1], [0], [0], [1], [0, 0, 1, 1], [], []>} : vector<128x288xbf16>, vector<288x32xbf16>, vector<128x32xf32> -> vector<128x32xf32>
    %c0_5 = arith.constant 0 : index
    %c0_6 = arith.constant 0 : index
    %4 = vector.load %arg5[%c0_5, %c0_6] : memref<1x32xf32, #tpu.memory_space<vmem>>, vector<1x32xf32>
    %5 = vector.broadcast %4 : vector<1x32xf32> to vector<128x32xf32>
    %6 = arith.addf %3, %5 : vector<128x32xf32>
    %cst_7 = arith.constant 0.000000e+00 : f32
    %7 = vector.broadcast %cst_7 : f32 to vector<128x32xf32>
    %8 = arith.maximumf %6, %7 : vector<128x32xf32>
    %c0_8 = arith.constant 0 : index
    %c0_9 = arith.constant 0 : index
    %9 = vector.load %arg2[%c0_8, %c0_9] : memref<128x288xbf16, #tpu.memory_space<vmem>>, vector<128x288xbf16>
    %c0_10 = arith.constant 0 : index
    %c0_11 = arith.constant 0 : index
    %10 = vector.load %arg6[%c0_10, %c0_11] : memref<288x32xbf16, #tpu.memory_space<vmem>>, vector<288x32xbf16>
    %cst_12 = arith.constant dense<0.000000e+00> : vector<128x32xf32>
    %11 = tpu.matmul %9, %10, %cst_12 {dimension_numbers = #tpu.dot_dimension_numbers<[1], [0], [0], [1], [0, 0, 1, 1], [], []>} : vector<128x288xbf16>, vector<288x32xbf16>, vector<128x32xf32> -> vector<128x32xf32>
    %c0_13 = arith.constant 0 : index
    %c0_14 = arith.constant 0 : index
    %12 = vector.load %arg7[%c0_13, %c0_14] : memref<1x32xf32, #tpu.memory_space<vmem>>, vector<1x32xf32>
    %13 = vector.broadcast %12 : vector<1x32xf32> to vector<128x32xf32>
    %14 = arith.addf %11, %13 : vector<128x32xf32>
    %cst_15 = arith.constant 0.000000e+00 : f32
    %15 = vector.broadcast %cst_15 : f32 to vector<128x32xf32>
    %16 = arith.maximumf %14, %15 : vector<128x32xf32>
    %17 = vector.extract_strided_slice %0 {offsets = [0, 0], sizes = [64, 32], strides = [1, 1]} : vector<128x32xf32> to vector<64x32xf32>
    %cst_16 = arith.constant dense<0.000000e+00> : vector<32xf32>
    %18 = vector.multi_reduction <add>, %17, %cst_16 [0] : vector<64x32xf32> to vector<32xf32>
    %19 = vector.shape_cast %18 : vector<32xf32> to vector<1x32xf32>
    %cst_17 = arith.constant 6.400000e+01 : f32
    %20 = vector.broadcast %cst_17 : f32 to vector<1x32xf32>
    %21 = arith.divf %19, %20 : vector<1x32xf32>
    %22 = vector.extract_strided_slice %0 {offsets = [64, 0], sizes = [64, 32], strides = [1, 1]} : vector<128x32xf32> to vector<64x32xf32>
    %cst_18 = arith.constant dense<0.000000e+00> : vector<32xf32>
    %23 = vector.multi_reduction <add>, %22, %cst_18 [0] : vector<64x32xf32> to vector<32xf32>
    %24 = vector.shape_cast %23 : vector<32xf32> to vector<1x32xf32>
    %cst_19 = arith.constant 6.400000e+01 : f32
    %25 = vector.broadcast %cst_19 : f32 to vector<1x32xf32>
    %26 = arith.divf %24, %25 : vector<1x32xf32>
    %27 = tpu.concatenate %21, %26 in 0 : vector<1x32xf32>, vector<1x32xf32> -> vector<2x32xf32>
    %28 = arith.truncf %27 : vector<2x32xf32> to vector<2x32xbf16>
    %c0_20 = arith.constant 0 : index
    %c0_21 = arith.constant 0 : index
    %29 = vector.load %arg8[%c0_20, %c0_21] : memref<32x4xbf16, #tpu.memory_space<vmem>>, vector<32x4xbf16>
    %cst_22 = arith.constant dense<0.000000e+00> : vector<2x4xf32>
    %30 = tpu.matmul %28, %29, %cst_22 {dimension_numbers = #tpu.dot_dimension_numbers<[1], [0], [0], [1], [0, 0, 1, 1], [], []>} : vector<2x32xbf16>, vector<32x4xbf16>, vector<2x4xf32> -> vector<2x4xf32>
    %c0_23 = arith.constant 0 : index
    %c0_24 = arith.constant 0 : index
    %31 = vector.load %arg9[%c0_23, %c0_24] : memref<1x4xf32, #tpu.memory_space<vmem>>, vector<1x4xf32>
    %32 = vector.broadcast %31 : vector<1x4xf32> to vector<2x4xf32>
    %33 = arith.addf %30, %32 : vector<2x4xf32>
    %cst_25 = arith.constant 0.000000e+00 : f32
    %34 = vector.broadcast %cst_25 : f32 to vector<2x4xf32>
    %35 = arith.maximumf %33, %34 : vector<2x4xf32>
    %36 = arith.truncf %35 : vector<2x4xf32> to vector<2x4xbf16>
    %c0_26 = arith.constant 0 : index
    %c0_27 = arith.constant 0 : index
    %37 = vector.load %arg10[%c0_26, %c0_27] : memref<4x32xbf16, #tpu.memory_space<vmem>>, vector<4x32xbf16>
    %cst_28 = arith.constant dense<0.000000e+00> : vector<2x32xf32>
    %38 = tpu.matmul %36, %37, %cst_28 {dimension_numbers = #tpu.dot_dimension_numbers<[1], [0], [0], [1], [0, 0, 1, 1], [], []>} : vector<2x4xbf16>, vector<4x32xbf16>, vector<2x32xf32> -> vector<2x32xf32>
    %c0_29 = arith.constant 0 : index
    %c0_30 = arith.constant 0 : index
    %39 = vector.load %arg11[%c0_29, %c0_30] : memref<1x32xf32, #tpu.memory_space<vmem>>, vector<1x32xf32>
    %40 = vector.broadcast %39 : vector<1x32xf32> to vector<2x32xf32>
    %41 = arith.addf %38, %40 : vector<2x32xf32>
    %42 = arith.negf %41 : vector<2x32xf32>
    %43 = math.exp %42 : vector<2x32xf32>
    %cst_31 = arith.constant 1.000000e+00 : f32
    %44 = vector.broadcast %cst_31 : f32 to vector<2x32xf32>
    %45 = arith.addf %44, %43 : vector<2x32xf32>
    %46 = arith.divf %44, %45 : vector<2x32xf32>
    %47 = vector.extract_strided_slice %0 {offsets = [0, 0], sizes = [64, 32], strides = [1, 1]} : vector<128x32xf32> to vector<64x32xf32>
    %48 = vector.extract_strided_slice %46 {offsets = [0, 0], sizes = [1, 32], strides = [1, 1]} : vector<2x32xf32> to vector<1x32xf32>
    %49 = vector.broadcast %48 : vector<1x32xf32> to vector<64x32xf32>
    %50 = arith.mulf %47, %49 : vector<64x32xf32>
    %51 = vector.extract_strided_slice %0 {offsets = [64, 0], sizes = [64, 32], strides = [1, 1]} : vector<128x32xf32> to vector<64x32xf32>
    %52 = vector.extract_strided_slice %46 {offsets = [1, 0], sizes = [1, 32], strides = [1, 1]} : vector<2x32xf32> to vector<1x32xf32>
    %53 = vector.broadcast %52 : vector<1x32xf32> to vector<64x32xf32>
    %54 = arith.mulf %51, %53 : vector<64x32xf32>
    %55 = tpu.concatenate %50, %54 in 0 : vector<64x32xf32>, vector<64x32xf32> -> vector<128x32xf32>
    %56 = arith.addf %8, %16 : vector<128x32xf32>
    %57 = arith.addf %56, %55 : vector<128x32xf32>
    %cst_32 = arith.constant 0.000000e+00 : f32
    %58 = vector.broadcast %cst_32 : f32 to vector<128x32xf32>
    %59 = arith.maximumf %57, %58 : vector<128x32xf32>
    %60 = arith.truncf %59 : vector<128x32xf32> to vector<128x32xbf16>
    %c0_33 = arith.constant 0 : index
    %c0_34 = arith.constant 0 : index
    %61 = vector.load %arg12[%c0_33, %c0_34] : memref<32x64xbf16, #tpu.memory_space<vmem>>, vector<32x64xbf16>
    %cst_35 = arith.constant dense<0.000000e+00> : vector<128x64xf32>
    %62 = tpu.matmul %60, %61, %cst_35 {dimension_numbers = #tpu.dot_dimension_numbers<[1], [0], [0], [1], [0, 0, 1, 1], [], []>} : vector<128x32xbf16>, vector<32x64xbf16>, vector<128x64xf32> -> vector<128x64xf32>
    %c0_36 = arith.constant 0 : index
    %c0_37 = arith.constant 0 : index
    %63 = vector.load %arg13[%c0_36, %c0_37] : memref<1x64xf32, #tpu.memory_space<vmem>>, vector<1x64xf32>
    %64 = vector.broadcast %63 : vector<1x64xf32> to vector<128x64xf32>
    %65 = arith.addf %62, %64 : vector<128x64xf32>
    %cst_38 = arith.constant dense<0.000000e+00> : vector<128xf32>
    %66 = vector.multi_reduction <add>, %65, %cst_38 [1] : vector<128x64xf32> to vector<128xf32>
    %67 = vector.shape_cast %66 : vector<128xf32> to vector<128x1xf32>
    %cst_39 = arith.constant 6.400000e+01 : f32
    %68 = vector.broadcast %cst_39 : f32 to vector<128x1xf32>
    %69 = arith.divf %67, %68 : vector<128x1xf32>
    %70 = vector.broadcast %69 : vector<128x1xf32> to vector<128x64xf32>
    %71 = arith.subf %65, %70 : vector<128x64xf32>
    %72 = arith.mulf %71, %71 : vector<128x64xf32>
    %cst_40 = arith.constant dense<0.000000e+00> : vector<128xf32>
    %73 = vector.multi_reduction <add>, %72, %cst_40 [1] : vector<128x64xf32> to vector<128xf32>
    %74 = vector.shape_cast %73 : vector<128xf32> to vector<128x1xf32>
    %cst_41 = arith.constant 6.400000e+01 : f32
    %75 = vector.broadcast %cst_41 : f32 to vector<128x1xf32>
    %76 = arith.divf %74, %75 : vector<128x1xf32>
    %77 = vector.broadcast %69 : vector<128x1xf32> to vector<128x64xf32>
    %78 = arith.subf %65, %77 : vector<128x64xf32>
    %cst_42 = arith.constant 9.99999974E-6 : f32
    %79 = vector.broadcast %cst_42 : f32 to vector<128x1xf32>
    %80 = arith.addf %76, %79 : vector<128x1xf32>
    %81 = math.rsqrt %80 : vector<128x1xf32>
    %82 = vector.broadcast %81 : vector<128x1xf32> to vector<128x64xf32>
    %83 = arith.mulf %78, %82 : vector<128x64xf32>
    %c0_43 = arith.constant 0 : index
    %c0_44 = arith.constant 0 : index
    %84 = vector.load %arg14[%c0_43, %c0_44] : memref<1x64xf32, #tpu.memory_space<vmem>>, vector<1x64xf32>
    %85 = vector.broadcast %84 : vector<1x64xf32> to vector<128x64xf32>
    %86 = arith.mulf %83, %85 : vector<128x64xf32>
    %c0_45 = arith.constant 0 : index
    %c0_46 = arith.constant 0 : index
    %87 = vector.load %arg15[%c0_45, %c0_46] : memref<1x64xf32, #tpu.memory_space<vmem>>, vector<1x64xf32>
    %88 = vector.broadcast %87 : vector<1x64xf32> to vector<128x64xf32>
    %89 = arith.addf %86, %88 : vector<128x64xf32>
    %90 = arith.truncf %89 : vector<128x64xf32> to vector<128x64xbf16>
    %c0_47 = arith.constant 0 : index
    %c0_48 = arith.constant 0 : index
    %91 = vector.load %arg16[%c0_47, %c0_48] : memref<64x192xbf16, #tpu.memory_space<vmem>>, vector<64x192xbf16>
    %cst_49 = arith.constant dense<0.000000e+00> : vector<128x192xf32>
    %92 = tpu.matmul %90, %91, %cst_49 {dimension_numbers = #tpu.dot_dimension_numbers<[1], [0], [0], [1], [0, 0, 1, 1], [], []>} : vector<128x64xbf16>, vector<64x192xbf16>, vector<128x192xf32> -> vector<128x192xf32>
    %c0_50 = arith.constant 0 : index
    %c0_51 = arith.constant 0 : index
    %93 = vector.load %arg17[%c0_50, %c0_51] : memref<1x192xf32, #tpu.memory_space<vmem>>, vector<1x192xf32>
    %94 = vector.broadcast %93 : vector<1x192xf32> to vector<128x192xf32>
    %95 = arith.addf %92, %94 : vector<128x192xf32>
    %96 = arith.truncf %95 : vector<128x192xf32> to vector<128x192xbf16>
    %97 = vector.extract_strided_slice %96 {offsets = [0, 0], sizes = [64, 192], strides = [1, 1]} : vector<128x192xbf16> to vector<64x192xbf16>
    %98 = vector.extract_strided_slice %97 {offsets = [0, 0], sizes = [64, 16], strides = [1, 1]} : vector<64x192xbf16> to vector<64x16xbf16>
    %99 = vector.extract_strided_slice %97 {offsets = [0, 64], sizes = [64, 16], strides = [1, 1]} : vector<64x192xbf16> to vector<64x16xbf16>
    %100 = vector.extract_strided_slice %97 {offsets = [0, 128], sizes = [64, 16], strides = [1, 1]} : vector<64x192xbf16> to vector<64x16xbf16>
    %cst_52 = arith.constant dense<0.000000e+00> : vector<64x64xf32>
    %101 = tpu.matmul %98, %99, %cst_52 {dimension_numbers = #tpu.dot_dimension_numbers<[1], [1], [0], [0], [0, 0, 1, 0], [], []>} : vector<64x16xbf16>, vector<64x16xbf16>, vector<64x64xf32> -> vector<64x64xf32>
    %cst_53 = arith.constant 2.500000e-01 : f32
    %102 = vector.broadcast %cst_53 : f32 to vector<64x64xf32>
    %103 = arith.mulf %101, %102 : vector<64x64xf32>
    %cst_54 = arith.constant dense<0xFF800000> : vector<64xf32>
    %104 = vector.multi_reduction <maximumf>, %103, %cst_54 [1] : vector<64x64xf32> to vector<64xf32>
    %105 = vector.shape_cast %104 : vector<64xf32> to vector<64x1xf32>
    %106 = vector.broadcast %105 : vector<64x1xf32> to vector<64x64xf32>
    %107 = arith.subf %103, %106 : vector<64x64xf32>
    %108 = math.exp %107 : vector<64x64xf32>
    %cst_55 = arith.constant dense<0.000000e+00> : vector<64xf32>
    %109 = vector.multi_reduction <add>, %108, %cst_55 [1] : vector<64x64xf32> to vector<64xf32>
    %110 = vector.shape_cast %109 : vector<64xf32> to vector<64x1xf32>
    %111 = tpu.reciprocal %110 {approx = true} : vector<64x1xf32> -> vector<64x1xf32>
    %112 = vector.broadcast %111 : vector<64x1xf32> to vector<64x64xf32>
    %113 = arith.mulf %108, %112 : vector<64x64xf32>
    %114 = arith.truncf %113 : vector<64x64xf32> to vector<64x64xbf16>
    %cst_56 = arith.constant dense<0.000000e+00> : vector<64x16xf32>
    %115 = tpu.matmul %114, %100, %cst_56 {dimension_numbers = #tpu.dot_dimension_numbers<[1], [0], [0], [1], [0, 0, 1, 1], [], []>} : vector<64x64xbf16>, vector<64x16xbf16>, vector<64x16xf32> -> vector<64x16xf32>
    %116 = arith.truncf %115 : vector<64x16xf32> to vector<64x16xbf16>
    %c0_57 = arith.constant 0 : index
    %c0_58 = arith.constant 0 : index
    %117 = vector.load %arg18[%c0_57, %c0_58] : memref<64x64xbf16, #tpu.memory_space<vmem>>, vector<16x64xbf16>
    %cst_59 = arith.constant dense<0.000000e+00> : vector<64x64xf32>
    %118 = tpu.matmul %116, %117, %cst_59 {dimension_numbers = #tpu.dot_dimension_numbers<[1], [0], [0], [1], [0, 0, 1, 1], [], []>} : vector<64x16xbf16>, vector<16x64xbf16>, vector<64x64xf32> -> vector<64x64xf32>
    %119 = vector.extract_strided_slice %97 {offsets = [0, 16], sizes = [64, 16], strides = [1, 1]} : vector<64x192xbf16> to vector<64x16xbf16>
    %120 = vector.extract_strided_slice %97 {offsets = [0, 80], sizes = [64, 16], strides = [1, 1]} : vector<64x192xbf16> to vector<64x16xbf16>
    %121 = vector.extract_strided_slice %97 {offsets = [0, 144], sizes = [64, 16], strides = [1, 1]} : vector<64x192xbf16> to vector<64x16xbf16>
    %cst_60 = arith.constant dense<0.000000e+00> : vector<64x64xf32>
    %122 = tpu.matmul %119, %120, %cst_60 {dimension_numbers = #tpu.dot_dimension_numbers<[1], [1], [0], [0], [0, 0, 1, 0], [], []>} : vector<64x16xbf16>, vector<64x16xbf16>, vector<64x64xf32> -> vector<64x64xf32>
    %cst_61 = arith.constant 2.500000e-01 : f32
    %123 = vector.broadcast %cst_61 : f32 to vector<64x64xf32>
    %124 = arith.mulf %122, %123 : vector<64x64xf32>
    %cst_62 = arith.constant dense<0xFF800000> : vector<64xf32>
    %125 = vector.multi_reduction <maximumf>, %124, %cst_62 [1] : vector<64x64xf32> to vector<64xf32>
    %126 = vector.shape_cast %125 : vector<64xf32> to vector<64x1xf32>
    %127 = vector.broadcast %126 : vector<64x1xf32> to vector<64x64xf32>
    %128 = arith.subf %124, %127 : vector<64x64xf32>
    %129 = math.exp %128 : vector<64x64xf32>
    %cst_63 = arith.constant dense<0.000000e+00> : vector<64xf32>
    %130 = vector.multi_reduction <add>, %129, %cst_63 [1] : vector<64x64xf32> to vector<64xf32>
    %131 = vector.shape_cast %130 : vector<64xf32> to vector<64x1xf32>
    %132 = tpu.reciprocal %131 {approx = true} : vector<64x1xf32> -> vector<64x1xf32>
    %133 = vector.broadcast %132 : vector<64x1xf32> to vector<64x64xf32>
    %134 = arith.mulf %129, %133 : vector<64x64xf32>
    %135 = arith.truncf %134 : vector<64x64xf32> to vector<64x64xbf16>
    %cst_64 = arith.constant dense<0.000000e+00> : vector<64x16xf32>
    %136 = tpu.matmul %135, %121, %cst_64 {dimension_numbers = #tpu.dot_dimension_numbers<[1], [0], [0], [1], [0, 0, 1, 1], [], []>} : vector<64x64xbf16>, vector<64x16xbf16>, vector<64x16xf32> -> vector<64x16xf32>
    %137 = arith.truncf %136 : vector<64x16xf32> to vector<64x16xbf16>
    %c16 = arith.constant 16 : index
    %c0_65 = arith.constant 0 : index
    %138 = vector.load %arg18[%c16, %c0_65] : memref<64x64xbf16, #tpu.memory_space<vmem>>, vector<16x64xbf16>
    %cst_66 = arith.constant dense<0.000000e+00> : vector<64x64xf32>
    %139 = tpu.matmul %137, %138, %cst_66 {dimension_numbers = #tpu.dot_dimension_numbers<[1], [0], [0], [1], [0, 0, 1, 1], [], []>} : vector<64x16xbf16>, vector<16x64xbf16>, vector<64x64xf32> -> vector<64x64xf32>
    %140 = arith.addf %118, %139 : vector<64x64xf32>
    %141 = vector.extract_strided_slice %97 {offsets = [0, 32], sizes = [64, 16], strides = [1, 1]} : vector<64x192xbf16> to vector<64x16xbf16>
    %142 = vector.extract_strided_slice %97 {offsets = [0, 96], sizes = [64, 16], strides = [1, 1]} : vector<64x192xbf16> to vector<64x16xbf16>
    %143 = vector.extract_strided_slice %97 {offsets = [0, 160], sizes = [64, 16], strides = [1, 1]} : vector<64x192xbf16> to vector<64x16xbf16>
    %cst_67 = arith.constant dense<0.000000e+00> : vector<64x64xf32>
    %144 = tpu.matmul %141, %142, %cst_67 {dimension_numbers = #tpu.dot_dimension_numbers<[1], [1], [0], [0], [0, 0, 1, 0], [], []>} : vector<64x16xbf16>, vector<64x16xbf16>, vector<64x64xf32> -> vector<64x64xf32>
    %cst_68 = arith.constant 2.500000e-01 : f32
    %145 = vector.broadcast %cst_68 : f32 to vector<64x64xf32>
    %146 = arith.mulf %144, %145 : vector<64x64xf32>
    %cst_69 = arith.constant dense<0xFF800000> : vector<64xf32>
    %147 = vector.multi_reduction <maximumf>, %146, %cst_69 [1] : vector<64x64xf32> to vector<64xf32>
    %148 = vector.shape_cast %147 : vector<64xf32> to vector<64x1xf32>
    %149 = vector.broadcast %148 : vector<64x1xf32> to vector<64x64xf32>
    %150 = arith.subf %146, %149 : vector<64x64xf32>
    %151 = math.exp %150 : vector<64x64xf32>
    %cst_70 = arith.constant dense<0.000000e+00> : vector<64xf32>
    %152 = vector.multi_reduction <add>, %151, %cst_70 [1] : vector<64x64xf32> to vector<64xf32>
    %153 = vector.shape_cast %152 : vector<64xf32> to vector<64x1xf32>
    %154 = tpu.reciprocal %153 {approx = true} : vector<64x1xf32> -> vector<64x1xf32>
    %155 = vector.broadcast %154 : vector<64x1xf32> to vector<64x64xf32>
    %156 = arith.mulf %151, %155 : vector<64x64xf32>
    %157 = arith.truncf %156 : vector<64x64xf32> to vector<64x64xbf16>
    %cst_71 = arith.constant dense<0.000000e+00> : vector<64x16xf32>
    %158 = tpu.matmul %157, %143, %cst_71 {dimension_numbers = #tpu.dot_dimension_numbers<[1], [0], [0], [1], [0, 0, 1, 1], [], []>} : vector<64x64xbf16>, vector<64x16xbf16>, vector<64x16xf32> -> vector<64x16xf32>
    %159 = arith.truncf %158 : vector<64x16xf32> to vector<64x16xbf16>
    %c32 = arith.constant 32 : index
    %c0_72 = arith.constant 0 : index
    %160 = vector.load %arg18[%c32, %c0_72] : memref<64x64xbf16, #tpu.memory_space<vmem>>, vector<16x64xbf16>
    %cst_73 = arith.constant dense<0.000000e+00> : vector<64x64xf32>
    %161 = tpu.matmul %159, %160, %cst_73 {dimension_numbers = #tpu.dot_dimension_numbers<[1], [0], [0], [1], [0, 0, 1, 1], [], []>} : vector<64x16xbf16>, vector<16x64xbf16>, vector<64x64xf32> -> vector<64x64xf32>
    %162 = arith.addf %140, %161 : vector<64x64xf32>
    %163 = vector.extract_strided_slice %97 {offsets = [0, 48], sizes = [64, 16], strides = [1, 1]} : vector<64x192xbf16> to vector<64x16xbf16>
    %164 = vector.extract_strided_slice %97 {offsets = [0, 112], sizes = [64, 16], strides = [1, 1]} : vector<64x192xbf16> to vector<64x16xbf16>
    %165 = vector.extract_strided_slice %97 {offsets = [0, 176], sizes = [64, 16], strides = [1, 1]} : vector<64x192xbf16> to vector<64x16xbf16>
    %cst_74 = arith.constant dense<0.000000e+00> : vector<64x64xf32>
    %166 = tpu.matmul %163, %164, %cst_74 {dimension_numbers = #tpu.dot_dimension_numbers<[1], [1], [0], [0], [0, 0, 1, 0], [], []>} : vector<64x16xbf16>, vector<64x16xbf16>, vector<64x64xf32> -> vector<64x64xf32>
    %cst_75 = arith.constant 2.500000e-01 : f32
    %167 = vector.broadcast %cst_75 : f32 to vector<64x64xf32>
    %168 = arith.mulf %166, %167 : vector<64x64xf32>
    %cst_76 = arith.constant dense<0xFF800000> : vector<64xf32>
    %169 = vector.multi_reduction <maximumf>, %168, %cst_76 [1] : vector<64x64xf32> to vector<64xf32>
    %170 = vector.shape_cast %169 : vector<64xf32> to vector<64x1xf32>
    %171 = vector.broadcast %170 : vector<64x1xf32> to vector<64x64xf32>
    %172 = arith.subf %168, %171 : vector<64x64xf32>
    %173 = math.exp %172 : vector<64x64xf32>
    %cst_77 = arith.constant dense<0.000000e+00> : vector<64xf32>
    %174 = vector.multi_reduction <add>, %173, %cst_77 [1] : vector<64x64xf32> to vector<64xf32>
    %175 = vector.shape_cast %174 : vector<64xf32> to vector<64x1xf32>
    %176 = tpu.reciprocal %175 {approx = true} : vector<64x1xf32> -> vector<64x1xf32>
    %177 = vector.broadcast %176 : vector<64x1xf32> to vector<64x64xf32>
    %178 = arith.mulf %173, %177 : vector<64x64xf32>
    %179 = arith.truncf %178 : vector<64x64xf32> to vector<64x64xbf16>
    %cst_78 = arith.constant dense<0.000000e+00> : vector<64x16xf32>
    %180 = tpu.matmul %179, %165, %cst_78 {dimension_numbers = #tpu.dot_dimension_numbers<[1], [0], [0], [1], [0, 0, 1, 1], [], []>} : vector<64x64xbf16>, vector<64x16xbf16>, vector<64x16xf32> -> vector<64x16xf32>
    %181 = arith.truncf %180 : vector<64x16xf32> to vector<64x16xbf16>
    %c48 = arith.constant 48 : index
    %c0_79 = arith.constant 0 : index
    %182 = vector.load %arg18[%c48, %c0_79] : memref<64x64xbf16, #tpu.memory_space<vmem>>, vector<16x64xbf16>
    %cst_80 = arith.constant dense<0.000000e+00> : vector<64x64xf32>
    %183 = tpu.matmul %181, %182, %cst_80 {dimension_numbers = #tpu.dot_dimension_numbers<[1], [0], [0], [1], [0, 0, 1, 1], [], []>} : vector<64x16xbf16>, vector<16x64xbf16>, vector<64x64xf32> -> vector<64x64xf32>
    %184 = arith.addf %162, %183 : vector<64x64xf32>
    %185 = vector.extract_strided_slice %96 {offsets = [64, 0], sizes = [64, 192], strides = [1, 1]} : vector<128x192xbf16> to vector<64x192xbf16>
    %186 = vector.extract_strided_slice %185 {offsets = [0, 0], sizes = [64, 16], strides = [1, 1]} : vector<64x192xbf16> to vector<64x16xbf16>
    %187 = vector.extract_strided_slice %185 {offsets = [0, 64], sizes = [64, 16], strides = [1, 1]} : vector<64x192xbf16> to vector<64x16xbf16>
    %188 = vector.extract_strided_slice %185 {offsets = [0, 128], sizes = [64, 16], strides = [1, 1]} : vector<64x192xbf16> to vector<64x16xbf16>
    %cst_81 = arith.constant dense<0.000000e+00> : vector<64x64xf32>
    %189 = tpu.matmul %186, %187, %cst_81 {dimension_numbers = #tpu.dot_dimension_numbers<[1], [1], [0], [0], [0, 0, 1, 0], [], []>} : vector<64x16xbf16>, vector<64x16xbf16>, vector<64x64xf32> -> vector<64x64xf32>
    %cst_82 = arith.constant 2.500000e-01 : f32
    %190 = vector.broadcast %cst_82 : f32 to vector<64x64xf32>
    %191 = arith.mulf %189, %190 : vector<64x64xf32>
    %cst_83 = arith.constant dense<0xFF800000> : vector<64xf32>
    %192 = vector.multi_reduction <maximumf>, %191, %cst_83 [1] : vector<64x64xf32> to vector<64xf32>
    %193 = vector.shape_cast %192 : vector<64xf32> to vector<64x1xf32>
    %194 = vector.broadcast %193 : vector<64x1xf32> to vector<64x64xf32>
    %195 = arith.subf %191, %194 : vector<64x64xf32>
    %196 = math.exp %195 : vector<64x64xf32>
    %cst_84 = arith.constant dense<0.000000e+00> : vector<64xf32>
    %197 = vector.multi_reduction <add>, %196, %cst_84 [1] : vector<64x64xf32> to vector<64xf32>
    %198 = vector.shape_cast %197 : vector<64xf32> to vector<64x1xf32>
    %199 = tpu.reciprocal %198 {approx = true} : vector<64x1xf32> -> vector<64x1xf32>
    %200 = vector.broadcast %199 : vector<64x1xf32> to vector<64x64xf32>
    %201 = arith.mulf %196, %200 : vector<64x64xf32>
    %202 = arith.truncf %201 : vector<64x64xf32> to vector<64x64xbf16>
    %cst_85 = arith.constant dense<0.000000e+00> : vector<64x16xf32>
    %203 = tpu.matmul %202, %188, %cst_85 {dimension_numbers = #tpu.dot_dimension_numbers<[1], [0], [0], [1], [0, 0, 1, 1], [], []>} : vector<64x64xbf16>, vector<64x16xbf16>, vector<64x16xf32> -> vector<64x16xf32>
    %204 = arith.truncf %203 : vector<64x16xf32> to vector<64x16xbf16>
    %c0_86 = arith.constant 0 : index
    %c0_87 = arith.constant 0 : index
    %205 = vector.load %arg18[%c0_86, %c0_87] : memref<64x64xbf16, #tpu.memory_space<vmem>>, vector<16x64xbf16>
    %cst_88 = arith.constant dense<0.000000e+00> : vector<64x64xf32>
    %206 = tpu.matmul %204, %205, %cst_88 {dimension_numbers = #tpu.dot_dimension_numbers<[1], [0], [0], [1], [0, 0, 1, 1], [], []>} : vector<64x16xbf16>, vector<16x64xbf16>, vector<64x64xf32> -> vector<64x64xf32>
    %207 = vector.extract_strided_slice %185 {offsets = [0, 16], sizes = [64, 16], strides = [1, 1]} : vector<64x192xbf16> to vector<64x16xbf16>
    %208 = vector.extract_strided_slice %185 {offsets = [0, 80], sizes = [64, 16], strides = [1, 1]} : vector<64x192xbf16> to vector<64x16xbf16>
    %209 = vector.extract_strided_slice %185 {offsets = [0, 144], sizes = [64, 16], strides = [1, 1]} : vector<64x192xbf16> to vector<64x16xbf16>
    %cst_89 = arith.constant dense<0.000000e+00> : vector<64x64xf32>
    %210 = tpu.matmul %207, %208, %cst_89 {dimension_numbers = #tpu.dot_dimension_numbers<[1], [1], [0], [0], [0, 0, 1, 0], [], []>} : vector<64x16xbf16>, vector<64x16xbf16>, vector<64x64xf32> -> vector<64x64xf32>
    %cst_90 = arith.constant 2.500000e-01 : f32
    %211 = vector.broadcast %cst_90 : f32 to vector<64x64xf32>
    %212 = arith.mulf %210, %211 : vector<64x64xf32>
    %cst_91 = arith.constant dense<0xFF800000> : vector<64xf32>
    %213 = vector.multi_reduction <maximumf>, %212, %cst_91 [1] : vector<64x64xf32> to vector<64xf32>
    %214 = vector.shape_cast %213 : vector<64xf32> to vector<64x1xf32>
    %215 = vector.broadcast %214 : vector<64x1xf32> to vector<64x64xf32>
    %216 = arith.subf %212, %215 : vector<64x64xf32>
    %217 = math.exp %216 : vector<64x64xf32>
    %cst_92 = arith.constant dense<0.000000e+00> : vector<64xf32>
    %218 = vector.multi_reduction <add>, %217, %cst_92 [1] : vector<64x64xf32> to vector<64xf32>
    %219 = vector.shape_cast %218 : vector<64xf32> to vector<64x1xf32>
    %220 = tpu.reciprocal %219 {approx = true} : vector<64x1xf32> -> vector<64x1xf32>
    %221 = vector.broadcast %220 : vector<64x1xf32> to vector<64x64xf32>
    %222 = arith.mulf %217, %221 : vector<64x64xf32>
    %223 = arith.truncf %222 : vector<64x64xf32> to vector<64x64xbf16>
    %cst_93 = arith.constant dense<0.000000e+00> : vector<64x16xf32>
    %224 = tpu.matmul %223, %209, %cst_93 {dimension_numbers = #tpu.dot_dimension_numbers<[1], [0], [0], [1], [0, 0, 1, 1], [], []>} : vector<64x64xbf16>, vector<64x16xbf16>, vector<64x16xf32> -> vector<64x16xf32>
    %225 = arith.truncf %224 : vector<64x16xf32> to vector<64x16xbf16>
    %c16_94 = arith.constant 16 : index
    %c0_95 = arith.constant 0 : index
    %226 = vector.load %arg18[%c16_94, %c0_95] : memref<64x64xbf16, #tpu.memory_space<vmem>>, vector<16x64xbf16>
    %cst_96 = arith.constant dense<0.000000e+00> : vector<64x64xf32>
    %227 = tpu.matmul %225, %226, %cst_96 {dimension_numbers = #tpu.dot_dimension_numbers<[1], [0], [0], [1], [0, 0, 1, 1], [], []>} : vector<64x16xbf16>, vector<16x64xbf16>, vector<64x64xf32> -> vector<64x64xf32>
    %228 = arith.addf %206, %227 : vector<64x64xf32>
    %229 = vector.extract_strided_slice %185 {offsets = [0, 32], sizes = [64, 16], strides = [1, 1]} : vector<64x192xbf16> to vector<64x16xbf16>
    %230 = vector.extract_strided_slice %185 {offsets = [0, 96], sizes = [64, 16], strides = [1, 1]} : vector<64x192xbf16> to vector<64x16xbf16>
    %231 = vector.extract_strided_slice %185 {offsets = [0, 160], sizes = [64, 16], strides = [1, 1]} : vector<64x192xbf16> to vector<64x16xbf16>
    %cst_97 = arith.constant dense<0.000000e+00> : vector<64x64xf32>
    %232 = tpu.matmul %229, %230, %cst_97 {dimension_numbers = #tpu.dot_dimension_numbers<[1], [1], [0], [0], [0, 0, 1, 0], [], []>} : vector<64x16xbf16>, vector<64x16xbf16>, vector<64x64xf32> -> vector<64x64xf32>
    %cst_98 = arith.constant 2.500000e-01 : f32
    %233 = vector.broadcast %cst_98 : f32 to vector<64x64xf32>
    %234 = arith.mulf %232, %233 : vector<64x64xf32>
    %cst_99 = arith.constant dense<0xFF800000> : vector<64xf32>
    %235 = vector.multi_reduction <maximumf>, %234, %cst_99 [1] : vector<64x64xf32> to vector<64xf32>
    %236 = vector.shape_cast %235 : vector<64xf32> to vector<64x1xf32>
    %237 = vector.broadcast %236 : vector<64x1xf32> to vector<64x64xf32>
    %238 = arith.subf %234, %237 : vector<64x64xf32>
    %239 = math.exp %238 : vector<64x64xf32>
    %cst_100 = arith.constant dense<0.000000e+00> : vector<64xf32>
    %240 = vector.multi_reduction <add>, %239, %cst_100 [1] : vector<64x64xf32> to vector<64xf32>
    %241 = vector.shape_cast %240 : vector<64xf32> to vector<64x1xf32>
    %242 = tpu.reciprocal %241 {approx = true} : vector<64x1xf32> -> vector<64x1xf32>
    %243 = vector.broadcast %242 : vector<64x1xf32> to vector<64x64xf32>
    %244 = arith.mulf %239, %243 : vector<64x64xf32>
    %245 = arith.truncf %244 : vector<64x64xf32> to vector<64x64xbf16>
    %cst_101 = arith.constant dense<0.000000e+00> : vector<64x16xf32>
    %246 = tpu.matmul %245, %231, %cst_101 {dimension_numbers = #tpu.dot_dimension_numbers<[1], [0], [0], [1], [0, 0, 1, 1], [], []>} : vector<64x64xbf16>, vector<64x16xbf16>, vector<64x16xf32> -> vector<64x16xf32>
    %247 = arith.truncf %246 : vector<64x16xf32> to vector<64x16xbf16>
    %c32_102 = arith.constant 32 : index
    %c0_103 = arith.constant 0 : index
    %248 = vector.load %arg18[%c32_102, %c0_103] : memref<64x64xbf16, #tpu.memory_space<vmem>>, vector<16x64xbf16>
    %cst_104 = arith.constant dense<0.000000e+00> : vector<64x64xf32>
    %249 = tpu.matmul %247, %248, %cst_104 {dimension_numbers = #tpu.dot_dimension_numbers<[1], [0], [0], [1], [0, 0, 1, 1], [], []>} : vector<64x16xbf16>, vector<16x64xbf16>, vector<64x64xf32> -> vector<64x64xf32>
    %250 = arith.addf %228, %249 : vector<64x64xf32>
    %251 = vector.extract_strided_slice %185 {offsets = [0, 48], sizes = [64, 16], strides = [1, 1]} : vector<64x192xbf16> to vector<64x16xbf16>
    %252 = vector.extract_strided_slice %185 {offsets = [0, 112], sizes = [64, 16], strides = [1, 1]} : vector<64x192xbf16> to vector<64x16xbf16>
    %253 = vector.extract_strided_slice %185 {offsets = [0, 176], sizes = [64, 16], strides = [1, 1]} : vector<64x192xbf16> to vector<64x16xbf16>
    %cst_105 = arith.constant dense<0.000000e+00> : vector<64x64xf32>
    %254 = tpu.matmul %251, %252, %cst_105 {dimension_numbers = #tpu.dot_dimension_numbers<[1], [1], [0], [0], [0, 0, 1, 0], [], []>} : vector<64x16xbf16>, vector<64x16xbf16>, vector<64x64xf32> -> vector<64x64xf32>
    %cst_106 = arith.constant 2.500000e-01 : f32
    %255 = vector.broadcast %cst_106 : f32 to vector<64x64xf32>
    %256 = arith.mulf %254, %255 : vector<64x64xf32>
    %cst_107 = arith.constant dense<0xFF800000> : vector<64xf32>
    %257 = vector.multi_reduction <maximumf>, %256, %cst_107 [1] : vector<64x64xf32> to vector<64xf32>
    %258 = vector.shape_cast %257 : vector<64xf32> to vector<64x1xf32>
    %259 = vector.broadcast %258 : vector<64x1xf32> to vector<64x64xf32>
    %260 = arith.subf %256, %259 : vector<64x64xf32>
    %261 = math.exp %260 : vector<64x64xf32>
    %cst_108 = arith.constant dense<0.000000e+00> : vector<64xf32>
    %262 = vector.multi_reduction <add>, %261, %cst_108 [1] : vector<64x64xf32> to vector<64xf32>
    %263 = vector.shape_cast %262 : vector<64xf32> to vector<64x1xf32>
    %264 = tpu.reciprocal %263 {approx = true} : vector<64x1xf32> -> vector<64x1xf32>
    %265 = vector.broadcast %264 : vector<64x1xf32> to vector<64x64xf32>
    %266 = arith.mulf %261, %265 : vector<64x64xf32>
    %267 = arith.truncf %266 : vector<64x64xf32> to vector<64x64xbf16>
    %cst_109 = arith.constant dense<0.000000e+00> : vector<64x16xf32>
    %268 = tpu.matmul %267, %253, %cst_109 {dimension_numbers = #tpu.dot_dimension_numbers<[1], [0], [0], [1], [0, 0, 1, 1], [], []>} : vector<64x64xbf16>, vector<64x16xbf16>, vector<64x16xf32> -> vector<64x16xf32>
    %269 = arith.truncf %268 : vector<64x16xf32> to vector<64x16xbf16>
    %c48_110 = arith.constant 48 : index
    %c0_111 = arith.constant 0 : index
    %270 = vector.load %arg18[%c48_110, %c0_111] : memref<64x64xbf16, #tpu.memory_space<vmem>>, vector<16x64xbf16>
    %cst_112 = arith.constant dense<0.000000e+00> : vector<64x64xf32>
    %271 = tpu.matmul %269, %270, %cst_112 {dimension_numbers = #tpu.dot_dimension_numbers<[1], [0], [0], [1], [0, 0, 1, 1], [], []>} : vector<64x16xbf16>, vector<16x64xbf16>, vector<64x64xf32> -> vector<64x64xf32>
    %272 = arith.addf %250, %271 : vector<64x64xf32>
    %273 = tpu.concatenate %184, %272 in 0 : vector<64x64xf32>, vector<64x64xf32> -> vector<128x64xf32>
    %274 = arith.addf %65, %273 : vector<128x64xf32>
    %c0_113 = arith.constant 0 : index
    %c0_114 = arith.constant 0 : index
    %275 = vector.load %arg19[%c0_113, %c0_114] : memref<1x64xf32, #tpu.memory_space<vmem>>, vector<1x64xf32>
    %276 = vector.broadcast %275 : vector<1x64xf32> to vector<128x64xf32>
    %277 = arith.addf %274, %276 : vector<128x64xf32>
    %cst_115 = arith.constant dense<0.000000e+00> : vector<128xf32>
    %278 = vector.multi_reduction <add>, %277, %cst_115 [1] : vector<128x64xf32> to vector<128xf32>
    %279 = vector.shape_cast %278 : vector<128xf32> to vector<128x1xf32>
    %cst_116 = arith.constant 6.400000e+01 : f32
    %280 = vector.broadcast %cst_116 : f32 to vector<128x1xf32>
    %281 = arith.divf %279, %280 : vector<128x1xf32>
    %282 = vector.broadcast %281 : vector<128x1xf32> to vector<128x64xf32>
    %283 = arith.subf %277, %282 : vector<128x64xf32>
    %284 = arith.mulf %283, %283 : vector<128x64xf32>
    %cst_117 = arith.constant dense<0.000000e+00> : vector<128xf32>
    %285 = vector.multi_reduction <add>, %284, %cst_117 [1] : vector<128x64xf32> to vector<128xf32>
    %286 = vector.shape_cast %285 : vector<128xf32> to vector<128x1xf32>
    %cst_118 = arith.constant 6.400000e+01 : f32
    %287 = vector.broadcast %cst_118 : f32 to vector<128x1xf32>
    %288 = arith.divf %286, %287 : vector<128x1xf32>
    %289 = vector.broadcast %281 : vector<128x1xf32> to vector<128x64xf32>
    %290 = arith.subf %277, %289 : vector<128x64xf32>
    %cst_119 = arith.constant 9.99999974E-6 : f32
    %291 = vector.broadcast %cst_119 : f32 to vector<128x1xf32>
    %292 = arith.addf %288, %291 : vector<128x1xf32>
    %293 = math.rsqrt %292 : vector<128x1xf32>
    %294 = vector.broadcast %293 : vector<128x1xf32> to vector<128x64xf32>
    %295 = arith.mulf %290, %294 : vector<128x64xf32>
    %c0_120 = arith.constant 0 : index
    %c0_121 = arith.constant 0 : index
    %296 = vector.load %arg20[%c0_120, %c0_121] : memref<1x64xf32, #tpu.memory_space<vmem>>, vector<1x64xf32>
    %297 = vector.broadcast %296 : vector<1x64xf32> to vector<128x64xf32>
    %298 = arith.mulf %295, %297 : vector<128x64xf32>
    %c0_122 = arith.constant 0 : index
    %c0_123 = arith.constant 0 : index
    %299 = vector.load %arg21[%c0_122, %c0_123] : memref<1x64xf32, #tpu.memory_space<vmem>>, vector<1x64xf32>
    %300 = vector.broadcast %299 : vector<1x64xf32> to vector<128x64xf32>
    %301 = arith.addf %298, %300 : vector<128x64xf32>
    %302 = arith.truncf %301 : vector<128x64xf32> to vector<128x64xbf16>
    %c0_124 = arith.constant 0 : index
    %c0_125 = arith.constant 0 : index
    %303 = vector.load %arg22[%c0_124, %c0_125] : memref<64x128xbf16, #tpu.memory_space<vmem>>, vector<64x128xbf16>
    %cst_126 = arith.constant dense<0.000000e+00> : vector<128x128xf32>
    %304 = tpu.matmul %302, %303, %cst_126 {dimension_numbers = #tpu.dot_dimension_numbers<[1], [0], [0], [1], [0, 0, 1, 1], [], []>} : vector<128x64xbf16>, vector<64x128xbf16>, vector<128x128xf32> -> vector<128x128xf32>
    %c0_127 = arith.constant 0 : index
    %c0_128 = arith.constant 0 : index
    %305 = vector.load %arg23[%c0_127, %c0_128] : memref<1x128xf32, #tpu.memory_space<vmem>>, vector<1x128xf32>
    %306 = vector.broadcast %305 : vector<1x128xf32> to vector<128x128xf32>
    %307 = arith.addf %304, %306 : vector<128x128xf32>
    %cst_129 = arith.constant 0.000000e+00 : f32
    %308 = vector.broadcast %cst_129 : f32 to vector<128x128xf32>
    %309 = arith.maximumf %307, %308 : vector<128x128xf32>
    %310 = arith.truncf %309 : vector<128x128xf32> to vector<128x128xbf16>
    %c0_130 = arith.constant 0 : index
    %c0_131 = arith.constant 0 : index
    %311 = vector.load %arg24[%c0_130, %c0_131] : memref<128x64xbf16, #tpu.memory_space<vmem>>, vector<128x64xbf16>
    %cst_132 = arith.constant dense<0.000000e+00> : vector<128x64xf32>
    %312 = tpu.matmul %310, %311, %cst_132 {dimension_numbers = #tpu.dot_dimension_numbers<[1], [0], [0], [1], [0, 0, 1, 1], [], []>} : vector<128x128xbf16>, vector<128x64xbf16>, vector<128x64xf32> -> vector<128x64xf32>
    %313 = arith.addf %277, %312 : vector<128x64xf32>
    %c0_133 = arith.constant 0 : index
    %c0_134 = arith.constant 0 : index
    %314 = vector.load %arg25[%c0_133, %c0_134] : memref<1x64xf32, #tpu.memory_space<vmem>>, vector<1x64xf32>
    %315 = vector.broadcast %314 : vector<1x64xf32> to vector<128x64xf32>
    %316 = arith.addf %313, %315 : vector<128x64xf32>
    %cst_135 = arith.constant dense<0.000000e+00> : vector<128xf32>
    %317 = vector.multi_reduction <add>, %316, %cst_135 [1] : vector<128x64xf32> to vector<128xf32>
    %318 = vector.shape_cast %317 : vector<128xf32> to vector<128x1xf32>
    %cst_136 = arith.constant 6.400000e+01 : f32
    %319 = vector.broadcast %cst_136 : f32 to vector<128x1xf32>
    %320 = arith.divf %318, %319 : vector<128x1xf32>
    %321 = vector.broadcast %320 : vector<128x1xf32> to vector<128x64xf32>
    %322 = arith.subf %316, %321 : vector<128x64xf32>
    %323 = arith.mulf %322, %322 : vector<128x64xf32>
    %cst_137 = arith.constant dense<0.000000e+00> : vector<128xf32>
    %324 = vector.multi_reduction <add>, %323, %cst_137 [1] : vector<128x64xf32> to vector<128xf32>
    %325 = vector.shape_cast %324 : vector<128xf32> to vector<128x1xf32>
    %cst_138 = arith.constant 6.400000e+01 : f32
    %326 = vector.broadcast %cst_138 : f32 to vector<128x1xf32>
    %327 = arith.divf %325, %326 : vector<128x1xf32>
    %328 = vector.broadcast %320 : vector<128x1xf32> to vector<128x64xf32>
    %329 = arith.subf %316, %328 : vector<128x64xf32>
    %cst_139 = arith.constant 9.99999974E-6 : f32
    %330 = vector.broadcast %cst_139 : f32 to vector<128x1xf32>
    %331 = arith.addf %327, %330 : vector<128x1xf32>
    %332 = math.rsqrt %331 : vector<128x1xf32>
    %333 = vector.broadcast %332 : vector<128x1xf32> to vector<128x64xf32>
    %334 = arith.mulf %329, %333 : vector<128x64xf32>
    %c0_140 = arith.constant 0 : index
    %c0_141 = arith.constant 0 : index
    %335 = vector.load %arg26[%c0_140, %c0_141] : memref<1x64xf32, #tpu.memory_space<vmem>>, vector<1x64xf32>
    %336 = vector.broadcast %335 : vector<1x64xf32> to vector<128x64xf32>
    %337 = arith.mulf %334, %336 : vector<128x64xf32>
    %c0_142 = arith.constant 0 : index
    %c0_143 = arith.constant 0 : index
    %338 = vector.load %arg27[%c0_142, %c0_143] : memref<1x64xf32, #tpu.memory_space<vmem>>, vector<1x64xf32>
    %339 = vector.broadcast %338 : vector<1x64xf32> to vector<128x64xf32>
    %340 = arith.addf %337, %339 : vector<128x64xf32>
    %341 = arith.truncf %340 : vector<128x64xf32> to vector<128x64xbf16>
    %c0_144 = arith.constant 0 : index
    %c0_145 = arith.constant 0 : index
    %342 = vector.load %arg28[%c0_144, %c0_145] : memref<64x192xbf16, #tpu.memory_space<vmem>>, vector<64x192xbf16>
    %cst_146 = arith.constant dense<0.000000e+00> : vector<128x192xf32>
    %343 = tpu.matmul %341, %342, %cst_146 {dimension_numbers = #tpu.dot_dimension_numbers<[1], [0], [0], [1], [0, 0, 1, 1], [], []>} : vector<128x64xbf16>, vector<64x192xbf16>, vector<128x192xf32> -> vector<128x192xf32>
    %c0_147 = arith.constant 0 : index
    %c0_148 = arith.constant 0 : index
    %344 = vector.load %arg29[%c0_147, %c0_148] : memref<1x192xf32, #tpu.memory_space<vmem>>, vector<1x192xf32>
    %345 = vector.broadcast %344 : vector<1x192xf32> to vector<128x192xf32>
    %346 = arith.addf %343, %345 : vector<128x192xf32>
    %347 = arith.truncf %346 : vector<128x192xf32> to vector<128x192xbf16>
    %348 = vector.extract_strided_slice %347 {offsets = [0, 0], sizes = [64, 192], strides = [1, 1]} : vector<128x192xbf16> to vector<64x192xbf16>
    %349 = vector.extract_strided_slice %348 {offsets = [0, 0], sizes = [64, 16], strides = [1, 1]} : vector<64x192xbf16> to vector<64x16xbf16>
    %350 = vector.extract_strided_slice %348 {offsets = [0, 64], sizes = [64, 16], strides = [1, 1]} : vector<64x192xbf16> to vector<64x16xbf16>
    %351 = vector.extract_strided_slice %348 {offsets = [0, 128], sizes = [64, 16], strides = [1, 1]} : vector<64x192xbf16> to vector<64x16xbf16>
    %cst_149 = arith.constant dense<0.000000e+00> : vector<64x64xf32>
    %352 = tpu.matmul %349, %350, %cst_149 {dimension_numbers = #tpu.dot_dimension_numbers<[1], [1], [0], [0], [0, 0, 1, 0], [], []>} : vector<64x16xbf16>, vector<64x16xbf16>, vector<64x64xf32> -> vector<64x64xf32>
    %cst_150 = arith.constant 2.500000e-01 : f32
    %353 = vector.broadcast %cst_150 : f32 to vector<64x64xf32>
    %354 = arith.mulf %352, %353 : vector<64x64xf32>
    %cst_151 = arith.constant dense<0xFF800000> : vector<64xf32>
    %355 = vector.multi_reduction <maximumf>, %354, %cst_151 [1] : vector<64x64xf32> to vector<64xf32>
    %356 = vector.shape_cast %355 : vector<64xf32> to vector<64x1xf32>
    %357 = vector.broadcast %356 : vector<64x1xf32> to vector<64x64xf32>
    %358 = arith.subf %354, %357 : vector<64x64xf32>
    %359 = math.exp %358 : vector<64x64xf32>
    %cst_152 = arith.constant dense<0.000000e+00> : vector<64xf32>
    %360 = vector.multi_reduction <add>, %359, %cst_152 [1] : vector<64x64xf32> to vector<64xf32>
    %361 = vector.shape_cast %360 : vector<64xf32> to vector<64x1xf32>
    %362 = tpu.reciprocal %361 {approx = true} : vector<64x1xf32> -> vector<64x1xf32>
    %363 = vector.broadcast %362 : vector<64x1xf32> to vector<64x64xf32>
    %364 = arith.mulf %359, %363 : vector<64x64xf32>
    %365 = arith.truncf %364 : vector<64x64xf32> to vector<64x64xbf16>
    %cst_153 = arith.constant dense<0.000000e+00> : vector<64x16xf32>
    %366 = tpu.matmul %365, %351, %cst_153 {dimension_numbers = #tpu.dot_dimension_numbers<[1], [0], [0], [1], [0, 0, 1, 1], [], []>} : vector<64x64xbf16>, vector<64x16xbf16>, vector<64x16xf32> -> vector<64x16xf32>
    %367 = arith.truncf %366 : vector<64x16xf32> to vector<64x16xbf16>
    %c0_154 = arith.constant 0 : index
    %c0_155 = arith.constant 0 : index
    %368 = vector.load %arg30[%c0_154, %c0_155] : memref<64x64xbf16, #tpu.memory_space<vmem>>, vector<16x64xbf16>
    %cst_156 = arith.constant dense<0.000000e+00> : vector<64x64xf32>
    %369 = tpu.matmul %367, %368, %cst_156 {dimension_numbers = #tpu.dot_dimension_numbers<[1], [0], [0], [1], [0, 0, 1, 1], [], []>} : vector<64x16xbf16>, vector<16x64xbf16>, vector<64x64xf32> -> vector<64x64xf32>
    %370 = vector.extract_strided_slice %348 {offsets = [0, 16], sizes = [64, 16], strides = [1, 1]} : vector<64x192xbf16> to vector<64x16xbf16>
    %371 = vector.extract_strided_slice %348 {offsets = [0, 80], sizes = [64, 16], strides = [1, 1]} : vector<64x192xbf16> to vector<64x16xbf16>
    %372 = vector.extract_strided_slice %348 {offsets = [0, 144], sizes = [64, 16], strides = [1, 1]} : vector<64x192xbf16> to vector<64x16xbf16>
    %cst_157 = arith.constant dense<0.000000e+00> : vector<64x64xf32>
    %373 = tpu.matmul %370, %371, %cst_157 {dimension_numbers = #tpu.dot_dimension_numbers<[1], [1], [0], [0], [0, 0, 1, 0], [], []>} : vector<64x16xbf16>, vector<64x16xbf16>, vector<64x64xf32> -> vector<64x64xf32>
    %cst_158 = arith.constant 2.500000e-01 : f32
    %374 = vector.broadcast %cst_158 : f32 to vector<64x64xf32>
    %375 = arith.mulf %373, %374 : vector<64x64xf32>
    %cst_159 = arith.constant dense<0xFF800000> : vector<64xf32>
    %376 = vector.multi_reduction <maximumf>, %375, %cst_159 [1] : vector<64x64xf32> to vector<64xf32>
    %377 = vector.shape_cast %376 : vector<64xf32> to vector<64x1xf32>
    %378 = vector.broadcast %377 : vector<64x1xf32> to vector<64x64xf32>
    %379 = arith.subf %375, %378 : vector<64x64xf32>
    %380 = math.exp %379 : vector<64x64xf32>
    %cst_160 = arith.constant dense<0.000000e+00> : vector<64xf32>
    %381 = vector.multi_reduction <add>, %380, %cst_160 [1] : vector<64x64xf32> to vector<64xf32>
    %382 = vector.shape_cast %381 : vector<64xf32> to vector<64x1xf32>
    %383 = tpu.reciprocal %382 {approx = true} : vector<64x1xf32> -> vector<64x1xf32>
    %384 = vector.broadcast %383 : vector<64x1xf32> to vector<64x64xf32>
    %385 = arith.mulf %380, %384 : vector<64x64xf32>
    %386 = arith.truncf %385 : vector<64x64xf32> to vector<64x64xbf16>
    %cst_161 = arith.constant dense<0.000000e+00> : vector<64x16xf32>
    %387 = tpu.matmul %386, %372, %cst_161 {dimension_numbers = #tpu.dot_dimension_numbers<[1], [0], [0], [1], [0, 0, 1, 1], [], []>} : vector<64x64xbf16>, vector<64x16xbf16>, vector<64x16xf32> -> vector<64x16xf32>
    %388 = arith.truncf %387 : vector<64x16xf32> to vector<64x16xbf16>
    %c16_162 = arith.constant 16 : index
    %c0_163 = arith.constant 0 : index
    %389 = vector.load %arg30[%c16_162, %c0_163] : memref<64x64xbf16, #tpu.memory_space<vmem>>, vector<16x64xbf16>
    %cst_164 = arith.constant dense<0.000000e+00> : vector<64x64xf32>
    %390 = tpu.matmul %388, %389, %cst_164 {dimension_numbers = #tpu.dot_dimension_numbers<[1], [0], [0], [1], [0, 0, 1, 1], [], []>} : vector<64x16xbf16>, vector<16x64xbf16>, vector<64x64xf32> -> vector<64x64xf32>
    %391 = arith.addf %369, %390 : vector<64x64xf32>
    %392 = vector.extract_strided_slice %348 {offsets = [0, 32], sizes = [64, 16], strides = [1, 1]} : vector<64x192xbf16> to vector<64x16xbf16>
    %393 = vector.extract_strided_slice %348 {offsets = [0, 96], sizes = [64, 16], strides = [1, 1]} : vector<64x192xbf16> to vector<64x16xbf16>
    %394 = vector.extract_strided_slice %348 {offsets = [0, 160], sizes = [64, 16], strides = [1, 1]} : vector<64x192xbf16> to vector<64x16xbf16>
    %cst_165 = arith.constant dense<0.000000e+00> : vector<64x64xf32>
    %395 = tpu.matmul %392, %393, %cst_165 {dimension_numbers = #tpu.dot_dimension_numbers<[1], [1], [0], [0], [0, 0, 1, 0], [], []>} : vector<64x16xbf16>, vector<64x16xbf16>, vector<64x64xf32> -> vector<64x64xf32>
    %cst_166 = arith.constant 2.500000e-01 : f32
    %396 = vector.broadcast %cst_166 : f32 to vector<64x64xf32>
    %397 = arith.mulf %395, %396 : vector<64x64xf32>
    %cst_167 = arith.constant dense<0xFF800000> : vector<64xf32>
    %398 = vector.multi_reduction <maximumf>, %397, %cst_167 [1] : vector<64x64xf32> to vector<64xf32>
    %399 = vector.shape_cast %398 : vector<64xf32> to vector<64x1xf32>
    %400 = vector.broadcast %399 : vector<64x1xf32> to vector<64x64xf32>
    %401 = arith.subf %397, %400 : vector<64x64xf32>
    %402 = math.exp %401 : vector<64x64xf32>
    %cst_168 = arith.constant dense<0.000000e+00> : vector<64xf32>
    %403 = vector.multi_reduction <add>, %402, %cst_168 [1] : vector<64x64xf32> to vector<64xf32>
    %404 = vector.shape_cast %403 : vector<64xf32> to vector<64x1xf32>
    %405 = tpu.reciprocal %404 {approx = true} : vector<64x1xf32> -> vector<64x1xf32>
    %406 = vector.broadcast %405 : vector<64x1xf32> to vector<64x64xf32>
    %407 = arith.mulf %402, %406 : vector<64x64xf32>
    %408 = arith.truncf %407 : vector<64x64xf32> to vector<64x64xbf16>
    %cst_169 = arith.constant dense<0.000000e+00> : vector<64x16xf32>
    %409 = tpu.matmul %408, %394, %cst_169 {dimension_numbers = #tpu.dot_dimension_numbers<[1], [0], [0], [1], [0, 0, 1, 1], [], []>} : vector<64x64xbf16>, vector<64x16xbf16>, vector<64x16xf32> -> vector<64x16xf32>
    %410 = arith.truncf %409 : vector<64x16xf32> to vector<64x16xbf16>
    %c32_170 = arith.constant 32 : index
    %c0_171 = arith.constant 0 : index
    %411 = vector.load %arg30[%c32_170, %c0_171] : memref<64x64xbf16, #tpu.memory_space<vmem>>, vector<16x64xbf16>
    %cst_172 = arith.constant dense<0.000000e+00> : vector<64x64xf32>
    %412 = tpu.matmul %410, %411, %cst_172 {dimension_numbers = #tpu.dot_dimension_numbers<[1], [0], [0], [1], [0, 0, 1, 1], [], []>} : vector<64x16xbf16>, vector<16x64xbf16>, vector<64x64xf32> -> vector<64x64xf32>
    %413 = arith.addf %391, %412 : vector<64x64xf32>
    %414 = vector.extract_strided_slice %348 {offsets = [0, 48], sizes = [64, 16], strides = [1, 1]} : vector<64x192xbf16> to vector<64x16xbf16>
    %415 = vector.extract_strided_slice %348 {offsets = [0, 112], sizes = [64, 16], strides = [1, 1]} : vector<64x192xbf16> to vector<64x16xbf16>
    %416 = vector.extract_strided_slice %348 {offsets = [0, 176], sizes = [64, 16], strides = [1, 1]} : vector<64x192xbf16> to vector<64x16xbf16>
    %cst_173 = arith.constant dense<0.000000e+00> : vector<64x64xf32>
    %417 = tpu.matmul %414, %415, %cst_173 {dimension_numbers = #tpu.dot_dimension_numbers<[1], [1], [0], [0], [0, 0, 1, 0], [], []>} : vector<64x16xbf16>, vector<64x16xbf16>, vector<64x64xf32> -> vector<64x64xf32>
    %cst_174 = arith.constant 2.500000e-01 : f32
    %418 = vector.broadcast %cst_174 : f32 to vector<64x64xf32>
    %419 = arith.mulf %417, %418 : vector<64x64xf32>
    %cst_175 = arith.constant dense<0xFF800000> : vector<64xf32>
    %420 = vector.multi_reduction <maximumf>, %419, %cst_175 [1] : vector<64x64xf32> to vector<64xf32>
    %421 = vector.shape_cast %420 : vector<64xf32> to vector<64x1xf32>
    %422 = vector.broadcast %421 : vector<64x1xf32> to vector<64x64xf32>
    %423 = arith.subf %419, %422 : vector<64x64xf32>
    %424 = math.exp %423 : vector<64x64xf32>
    %cst_176 = arith.constant dense<0.000000e+00> : vector<64xf32>
    %425 = vector.multi_reduction <add>, %424, %cst_176 [1] : vector<64x64xf32> to vector<64xf32>
    %426 = vector.shape_cast %425 : vector<64xf32> to vector<64x1xf32>
    %427 = tpu.reciprocal %426 {approx = true} : vector<64x1xf32> -> vector<64x1xf32>
    %428 = vector.broadcast %427 : vector<64x1xf32> to vector<64x64xf32>
    %429 = arith.mulf %424, %428 : vector<64x64xf32>
    %430 = arith.truncf %429 : vector<64x64xf32> to vector<64x64xbf16>
    %cst_177 = arith.constant dense<0.000000e+00> : vector<64x16xf32>
    %431 = tpu.matmul %430, %416, %cst_177 {dimension_numbers = #tpu.dot_dimension_numbers<[1], [0], [0], [1], [0, 0, 1, 1], [], []>} : vector<64x64xbf16>, vector<64x16xbf16>, vector<64x16xf32> -> vector<64x16xf32>
    %432 = arith.truncf %431 : vector<64x16xf32> to vector<64x16xbf16>
    %c48_178 = arith.constant 48 : index
    %c0_179 = arith.constant 0 : index
    %433 = vector.load %arg30[%c48_178, %c0_179] : memref<64x64xbf16, #tpu.memory_space<vmem>>, vector<16x64xbf16>
    %cst_180 = arith.constant dense<0.000000e+00> : vector<64x64xf32>
    %434 = tpu.matmul %432, %433, %cst_180 {dimension_numbers = #tpu.dot_dimension_numbers<[1], [0], [0], [1], [0, 0, 1, 1], [], []>} : vector<64x16xbf16>, vector<16x64xbf16>, vector<64x64xf32> -> vector<64x64xf32>
    %435 = arith.addf %413, %434 : vector<64x64xf32>
    %436 = vector.extract_strided_slice %347 {offsets = [64, 0], sizes = [64, 192], strides = [1, 1]} : vector<128x192xbf16> to vector<64x192xbf16>
    %437 = vector.extract_strided_slice %436 {offsets = [0, 0], sizes = [64, 16], strides = [1, 1]} : vector<64x192xbf16> to vector<64x16xbf16>
    %438 = vector.extract_strided_slice %436 {offsets = [0, 64], sizes = [64, 16], strides = [1, 1]} : vector<64x192xbf16> to vector<64x16xbf16>
    %439 = vector.extract_strided_slice %436 {offsets = [0, 128], sizes = [64, 16], strides = [1, 1]} : vector<64x192xbf16> to vector<64x16xbf16>
    %cst_181 = arith.constant dense<0.000000e+00> : vector<64x64xf32>
    %440 = tpu.matmul %437, %438, %cst_181 {dimension_numbers = #tpu.dot_dimension_numbers<[1], [1], [0], [0], [0, 0, 1, 0], [], []>} : vector<64x16xbf16>, vector<64x16xbf16>, vector<64x64xf32> -> vector<64x64xf32>
    %cst_182 = arith.constant 2.500000e-01 : f32
    %441 = vector.broadcast %cst_182 : f32 to vector<64x64xf32>
    %442 = arith.mulf %440, %441 : vector<64x64xf32>
    %cst_183 = arith.constant dense<0xFF800000> : vector<64xf32>
    %443 = vector.multi_reduction <maximumf>, %442, %cst_183 [1] : vector<64x64xf32> to vector<64xf32>
    %444 = vector.shape_cast %443 : vector<64xf32> to vector<64x1xf32>
    %445 = vector.broadcast %444 : vector<64x1xf32> to vector<64x64xf32>
    %446 = arith.subf %442, %445 : vector<64x64xf32>
    %447 = math.exp %446 : vector<64x64xf32>
    %cst_184 = arith.constant dense<0.000000e+00> : vector<64xf32>
    %448 = vector.multi_reduction <add>, %447, %cst_184 [1] : vector<64x64xf32> to vector<64xf32>
    %449 = vector.shape_cast %448 : vector<64xf32> to vector<64x1xf32>
    %450 = tpu.reciprocal %449 {approx = true} : vector<64x1xf32> -> vector<64x1xf32>
    %451 = vector.broadcast %450 : vector<64x1xf32> to vector<64x64xf32>
    %452 = arith.mulf %447, %451 : vector<64x64xf32>
    %453 = arith.truncf %452 : vector<64x64xf32> to vector<64x64xbf16>
    %cst_185 = arith.constant dense<0.000000e+00> : vector<64x16xf32>
    %454 = tpu.matmul %453, %439, %cst_185 {dimension_numbers = #tpu.dot_dimension_numbers<[1], [0], [0], [1], [0, 0, 1, 1], [], []>} : vector<64x64xbf16>, vector<64x16xbf16>, vector<64x16xf32> -> vector<64x16xf32>
    %455 = arith.truncf %454 : vector<64x16xf32> to vector<64x16xbf16>
    %c0_186 = arith.constant 0 : index
    %c0_187 = arith.constant 0 : index
    %456 = vector.load %arg30[%c0_186, %c0_187] : memref<64x64xbf16, #tpu.memory_space<vmem>>, vector<16x64xbf16>
    %cst_188 = arith.constant dense<0.000000e+00> : vector<64x64xf32>
    %457 = tpu.matmul %455, %456, %cst_188 {dimension_numbers = #tpu.dot_dimension_numbers<[1], [0], [0], [1], [0, 0, 1, 1], [], []>} : vector<64x16xbf16>, vector<16x64xbf16>, vector<64x64xf32> -> vector<64x64xf32>
    %458 = vector.extract_strided_slice %436 {offsets = [0, 16], sizes = [64, 16], strides = [1, 1]} : vector<64x192xbf16> to vector<64x16xbf16>
    %459 = vector.extract_strided_slice %436 {offsets = [0, 80], sizes = [64, 16], strides = [1, 1]} : vector<64x192xbf16> to vector<64x16xbf16>
    %460 = vector.extract_strided_slice %436 {offsets = [0, 144], sizes = [64, 16], strides = [1, 1]} : vector<64x192xbf16> to vector<64x16xbf16>
    %cst_189 = arith.constant dense<0.000000e+00> : vector<64x64xf32>
    %461 = tpu.matmul %458, %459, %cst_189 {dimension_numbers = #tpu.dot_dimension_numbers<[1], [1], [0], [0], [0, 0, 1, 0], [], []>} : vector<64x16xbf16>, vector<64x16xbf16>, vector<64x64xf32> -> vector<64x64xf32>
    %cst_190 = arith.constant 2.500000e-01 : f32
    %462 = vector.broadcast %cst_190 : f32 to vector<64x64xf32>
    %463 = arith.mulf %461, %462 : vector<64x64xf32>
    %cst_191 = arith.constant dense<0xFF800000> : vector<64xf32>
    %464 = vector.multi_reduction <maximumf>, %463, %cst_191 [1] : vector<64x64xf32> to vector<64xf32>
    %465 = vector.shape_cast %464 : vector<64xf32> to vector<64x1xf32>
    %466 = vector.broadcast %465 : vector<64x1xf32> to vector<64x64xf32>
    %467 = arith.subf %463, %466 : vector<64x64xf32>
    %468 = math.exp %467 : vector<64x64xf32>
    %cst_192 = arith.constant dense<0.000000e+00> : vector<64xf32>
    %469 = vector.multi_reduction <add>, %468, %cst_192 [1] : vector<64x64xf32> to vector<64xf32>
    %470 = vector.shape_cast %469 : vector<64xf32> to vector<64x1xf32>
    %471 = tpu.reciprocal %470 {approx = true} : vector<64x1xf32> -> vector<64x1xf32>
    %472 = vector.broadcast %471 : vector<64x1xf32> to vector<64x64xf32>
    %473 = arith.mulf %468, %472 : vector<64x64xf32>
    %474 = arith.truncf %473 : vector<64x64xf32> to vector<64x64xbf16>
    %cst_193 = arith.constant dense<0.000000e+00> : vector<64x16xf32>
    %475 = tpu.matmul %474, %460, %cst_193 {dimension_numbers = #tpu.dot_dimension_numbers<[1], [0], [0], [1], [0, 0, 1, 1], [], []>} : vector<64x64xbf16>, vector<64x16xbf16>, vector<64x16xf32> -> vector<64x16xf32>
    %476 = arith.truncf %475 : vector<64x16xf32> to vector<64x16xbf16>
    %c16_194 = arith.constant 16 : index
    %c0_195 = arith.constant 0 : index
    %477 = vector.load %arg30[%c16_194, %c0_195] : memref<64x64xbf16, #tpu.memory_space<vmem>>, vector<16x64xbf16>
    %cst_196 = arith.constant dense<0.000000e+00> : vector<64x64xf32>
    %478 = tpu.matmul %476, %477, %cst_196 {dimension_numbers = #tpu.dot_dimension_numbers<[1], [0], [0], [1], [0, 0, 1, 1], [], []>} : vector<64x16xbf16>, vector<16x64xbf16>, vector<64x64xf32> -> vector<64x64xf32>
    %479 = arith.addf %457, %478 : vector<64x64xf32>
    %480 = vector.extract_strided_slice %436 {offsets = [0, 32], sizes = [64, 16], strides = [1, 1]} : vector<64x192xbf16> to vector<64x16xbf16>
    %481 = vector.extract_strided_slice %436 {offsets = [0, 96], sizes = [64, 16], strides = [1, 1]} : vector<64x192xbf16> to vector<64x16xbf16>
    %482 = vector.extract_strided_slice %436 {offsets = [0, 160], sizes = [64, 16], strides = [1, 1]} : vector<64x192xbf16> to vector<64x16xbf16>
    %cst_197 = arith.constant dense<0.000000e+00> : vector<64x64xf32>
    %483 = tpu.matmul %480, %481, %cst_197 {dimension_numbers = #tpu.dot_dimension_numbers<[1], [1], [0], [0], [0, 0, 1, 0], [], []>} : vector<64x16xbf16>, vector<64x16xbf16>, vector<64x64xf32> -> vector<64x64xf32>
    %cst_198 = arith.constant 2.500000e-01 : f32
    %484 = vector.broadcast %cst_198 : f32 to vector<64x64xf32>
    %485 = arith.mulf %483, %484 : vector<64x64xf32>
    %cst_199 = arith.constant dense<0xFF800000> : vector<64xf32>
    %486 = vector.multi_reduction <maximumf>, %485, %cst_199 [1] : vector<64x64xf32> to vector<64xf32>
    %487 = vector.shape_cast %486 : vector<64xf32> to vector<64x1xf32>
    %488 = vector.broadcast %487 : vector<64x1xf32> to vector<64x64xf32>
    %489 = arith.subf %485, %488 : vector<64x64xf32>
    %490 = math.exp %489 : vector<64x64xf32>
    %cst_200 = arith.constant dense<0.000000e+00> : vector<64xf32>
    %491 = vector.multi_reduction <add>, %490, %cst_200 [1] : vector<64x64xf32> to vector<64xf32>
    %492 = vector.shape_cast %491 : vector<64xf32> to vector<64x1xf32>
    %493 = tpu.reciprocal %492 {approx = true} : vector<64x1xf32> -> vector<64x1xf32>
    %494 = vector.broadcast %493 : vector<64x1xf32> to vector<64x64xf32>
    %495 = arith.mulf %490, %494 : vector<64x64xf32>
    %496 = arith.truncf %495 : vector<64x64xf32> to vector<64x64xbf16>
    %cst_201 = arith.constant dense<0.000000e+00> : vector<64x16xf32>
    %497 = tpu.matmul %496, %482, %cst_201 {dimension_numbers = #tpu.dot_dimension_numbers<[1], [0], [0], [1], [0, 0, 1, 1], [], []>} : vector<64x64xbf16>, vector<64x16xbf16>, vector<64x16xf32> -> vector<64x16xf32>
    %498 = arith.truncf %497 : vector<64x16xf32> to vector<64x16xbf16>
    %c32_202 = arith.constant 32 : index
    %c0_203 = arith.constant 0 : index
    %499 = vector.load %arg30[%c32_202, %c0_203] : memref<64x64xbf16, #tpu.memory_space<vmem>>, vector<16x64xbf16>
    %cst_204 = arith.constant dense<0.000000e+00> : vector<64x64xf32>
    %500 = tpu.matmul %498, %499, %cst_204 {dimension_numbers = #tpu.dot_dimension_numbers<[1], [0], [0], [1], [0, 0, 1, 1], [], []>} : vector<64x16xbf16>, vector<16x64xbf16>, vector<64x64xf32> -> vector<64x64xf32>
    %501 = arith.addf %479, %500 : vector<64x64xf32>
    %502 = vector.extract_strided_slice %436 {offsets = [0, 48], sizes = [64, 16], strides = [1, 1]} : vector<64x192xbf16> to vector<64x16xbf16>
    %503 = vector.extract_strided_slice %436 {offsets = [0, 112], sizes = [64, 16], strides = [1, 1]} : vector<64x192xbf16> to vector<64x16xbf16>
    %504 = vector.extract_strided_slice %436 {offsets = [0, 176], sizes = [64, 16], strides = [1, 1]} : vector<64x192xbf16> to vector<64x16xbf16>
    %cst_205 = arith.constant dense<0.000000e+00> : vector<64x64xf32>
    %505 = tpu.matmul %502, %503, %cst_205 {dimension_numbers = #tpu.dot_dimension_numbers<[1], [1], [0], [0], [0, 0, 1, 0], [], []>} : vector<64x16xbf16>, vector<64x16xbf16>, vector<64x64xf32> -> vector<64x64xf32>
    %cst_206 = arith.constant 2.500000e-01 : f32
    %506 = vector.broadcast %cst_206 : f32 to vector<64x64xf32>
    %507 = arith.mulf %505, %506 : vector<64x64xf32>
    %cst_207 = arith.constant dense<0xFF800000> : vector<64xf32>
    %508 = vector.multi_reduction <maximumf>, %507, %cst_207 [1] : vector<64x64xf32> to vector<64xf32>
    %509 = vector.shape_cast %508 : vector<64xf32> to vector<64x1xf32>
    %510 = vector.broadcast %509 : vector<64x1xf32> to vector<64x64xf32>
    %511 = arith.subf %507, %510 : vector<64x64xf32>
    %512 = math.exp %511 : vector<64x64xf32>
    %cst_208 = arith.constant dense<0.000000e+00> : vector<64xf32>
    %513 = vector.multi_reduction <add>, %512, %cst_208 [1] : vector<64x64xf32> to vector<64xf32>
    %514 = vector.shape_cast %513 : vector<64xf32> to vector<64x1xf32>
    %515 = tpu.reciprocal %514 {approx = true} : vector<64x1xf32> -> vector<64x1xf32>
    %516 = vector.broadcast %515 : vector<64x1xf32> to vector<64x64xf32>
    %517 = arith.mulf %512, %516 : vector<64x64xf32>
    %518 = arith.truncf %517 : vector<64x64xf32> to vector<64x64xbf16>
    %cst_209 = arith.constant dense<0.000000e+00> : vector<64x16xf32>
    %519 = tpu.matmul %518, %504, %cst_209 {dimension_numbers = #tpu.dot_dimension_numbers<[1], [0], [0], [1], [0, 0, 1, 1], [], []>} : vector<64x64xbf16>, vector<64x16xbf16>, vector<64x16xf32> -> vector<64x16xf32>
    %520 = arith.truncf %519 : vector<64x16xf32> to vector<64x16xbf16>
    %c48_210 = arith.constant 48 : index
    %c0_211 = arith.constant 0 : index
    %521 = vector.load %arg30[%c48_210, %c0_211] : memref<64x64xbf16, #tpu.memory_space<vmem>>, vector<16x64xbf16>
    %cst_212 = arith.constant dense<0.000000e+00> : vector<64x64xf32>
    %522 = tpu.matmul %520, %521, %cst_212 {dimension_numbers = #tpu.dot_dimension_numbers<[1], [0], [0], [1], [0, 0, 1, 1], [], []>} : vector<64x16xbf16>, vector<16x64xbf16>, vector<64x64xf32> -> vector<64x64xf32>
    %523 = arith.addf %501, %522 : vector<64x64xf32>
    %524 = tpu.concatenate %435, %523 in 0 : vector<64x64xf32>, vector<64x64xf32> -> vector<128x64xf32>
    %525 = arith.addf %316, %524 : vector<128x64xf32>
    %c0_213 = arith.constant 0 : index
    %c0_214 = arith.constant 0 : index
    %526 = vector.load %arg31[%c0_213, %c0_214] : memref<1x64xf32, #tpu.memory_space<vmem>>, vector<1x64xf32>
    %527 = vector.broadcast %526 : vector<1x64xf32> to vector<128x64xf32>
    %528 = arith.addf %525, %527 : vector<128x64xf32>
    %cst_215 = arith.constant dense<0.000000e+00> : vector<128xf32>
    %529 = vector.multi_reduction <add>, %528, %cst_215 [1] : vector<128x64xf32> to vector<128xf32>
    %530 = vector.shape_cast %529 : vector<128xf32> to vector<128x1xf32>
    %cst_216 = arith.constant 6.400000e+01 : f32
    %531 = vector.broadcast %cst_216 : f32 to vector<128x1xf32>
    %532 = arith.divf %530, %531 : vector<128x1xf32>
    %533 = vector.broadcast %532 : vector<128x1xf32> to vector<128x64xf32>
    %534 = arith.subf %528, %533 : vector<128x64xf32>
    %535 = arith.mulf %534, %534 : vector<128x64xf32>
    %cst_217 = arith.constant dense<0.000000e+00> : vector<128xf32>
    %536 = vector.multi_reduction <add>, %535, %cst_217 [1] : vector<128x64xf32> to vector<128xf32>
    %537 = vector.shape_cast %536 : vector<128xf32> to vector<128x1xf32>
    %cst_218 = arith.constant 6.400000e+01 : f32
    %538 = vector.broadcast %cst_218 : f32 to vector<128x1xf32>
    %539 = arith.divf %537, %538 : vector<128x1xf32>
    %540 = vector.broadcast %532 : vector<128x1xf32> to vector<128x64xf32>
    %541 = arith.subf %528, %540 : vector<128x64xf32>
    %cst_219 = arith.constant 9.99999974E-6 : f32
    %542 = vector.broadcast %cst_219 : f32 to vector<128x1xf32>
    %543 = arith.addf %539, %542 : vector<128x1xf32>
    %544 = math.rsqrt %543 : vector<128x1xf32>
    %545 = vector.broadcast %544 : vector<128x1xf32> to vector<128x64xf32>
    %546 = arith.mulf %541, %545 : vector<128x64xf32>
    %c0_220 = arith.constant 0 : index
    %c0_221 = arith.constant 0 : index
    %547 = vector.load %arg32[%c0_220, %c0_221] : memref<1x64xf32, #tpu.memory_space<vmem>>, vector<1x64xf32>
    %548 = vector.broadcast %547 : vector<1x64xf32> to vector<128x64xf32>
    %549 = arith.mulf %546, %548 : vector<128x64xf32>
    %c0_222 = arith.constant 0 : index
    %c0_223 = arith.constant 0 : index
    %550 = vector.load %arg33[%c0_222, %c0_223] : memref<1x64xf32, #tpu.memory_space<vmem>>, vector<1x64xf32>
    %551 = vector.broadcast %550 : vector<1x64xf32> to vector<128x64xf32>
    %552 = arith.addf %549, %551 : vector<128x64xf32>
    %553 = arith.truncf %552 : vector<128x64xf32> to vector<128x64xbf16>
    %c0_224 = arith.constant 0 : index
    %c0_225 = arith.constant 0 : index
    %554 = vector.load %arg34[%c0_224, %c0_225] : memref<64x128xbf16, #tpu.memory_space<vmem>>, vector<64x128xbf16>
    %cst_226 = arith.constant dense<0.000000e+00> : vector<128x128xf32>
    %555 = tpu.matmul %553, %554, %cst_226 {dimension_numbers = #tpu.dot_dimension_numbers<[1], [0], [0], [1], [0, 0, 1, 1], [], []>} : vector<128x64xbf16>, vector<64x128xbf16>, vector<128x128xf32> -> vector<128x128xf32>
    %c0_227 = arith.constant 0 : index
    %c0_228 = arith.constant 0 : index
    %556 = vector.load %arg35[%c0_227, %c0_228] : memref<1x128xf32, #tpu.memory_space<vmem>>, vector<1x128xf32>
    %557 = vector.broadcast %556 : vector<1x128xf32> to vector<128x128xf32>
    %558 = arith.addf %555, %557 : vector<128x128xf32>
    %cst_229 = arith.constant 0.000000e+00 : f32
    %559 = vector.broadcast %cst_229 : f32 to vector<128x128xf32>
    %560 = arith.maximumf %558, %559 : vector<128x128xf32>
    %561 = arith.truncf %560 : vector<128x128xf32> to vector<128x128xbf16>
    %c0_230 = arith.constant 0 : index
    %c0_231 = arith.constant 0 : index
    %562 = vector.load %arg36[%c0_230, %c0_231] : memref<128x64xbf16, #tpu.memory_space<vmem>>, vector<128x64xbf16>
    %cst_232 = arith.constant dense<0.000000e+00> : vector<128x64xf32>
    %563 = tpu.matmul %561, %562, %cst_232 {dimension_numbers = #tpu.dot_dimension_numbers<[1], [0], [0], [1], [0, 0, 1, 1], [], []>} : vector<128x128xbf16>, vector<128x64xbf16>, vector<128x64xf32> -> vector<128x64xf32>
    %564 = arith.addf %528, %563 : vector<128x64xf32>
    %c0_233 = arith.constant 0 : index
    %c0_234 = arith.constant 0 : index
    %565 = vector.load %arg37[%c0_233, %c0_234] : memref<1x64xf32, #tpu.memory_space<vmem>>, vector<1x64xf32>
    %566 = vector.broadcast %565 : vector<1x64xf32> to vector<128x64xf32>
    %567 = arith.addf %564, %566 : vector<128x64xf32>
    %568 = vector.extract_strided_slice %567 {offsets = [0, 0], sizes = [64, 64], strides = [1, 1]} : vector<128x64xf32> to vector<64x64xf32>
    %cst_235 = arith.constant dense<0.000000e+00> : vector<64xf32>
    %569 = vector.multi_reduction <add>, %568, %cst_235 [0] : vector<64x64xf32> to vector<64xf32>
    %570 = vector.shape_cast %569 : vector<64xf32> to vector<1x64xf32>
    %cst_236 = arith.constant 6.400000e+01 : f32
    %571 = vector.broadcast %cst_236 : f32 to vector<1x64xf32>
    %572 = arith.divf %570, %571 : vector<1x64xf32>
    %573 = vector.extract_strided_slice %567 {offsets = [64, 0], sizes = [64, 64], strides = [1, 1]} : vector<128x64xf32> to vector<64x64xf32>
    %cst_237 = arith.constant dense<0.000000e+00> : vector<64xf32>
    %574 = vector.multi_reduction <add>, %573, %cst_237 [0] : vector<64x64xf32> to vector<64xf32>
    %575 = vector.shape_cast %574 : vector<64xf32> to vector<1x64xf32>
    %cst_238 = arith.constant 6.400000e+01 : f32
    %576 = vector.broadcast %cst_238 : f32 to vector<1x64xf32>
    %577 = arith.divf %575, %576 : vector<1x64xf32>
    %578 = tpu.concatenate %572, %577 in 0 : vector<1x64xf32>, vector<1x64xf32> -> vector<2x64xf32>
    %579 = arith.truncf %578 : vector<2x64xf32> to vector<2x64xbf16>
    %c0_239 = arith.constant 0 : index
    %c0_240 = arith.constant 0 : index
    %580 = vector.load %arg38[%c0_239, %c0_240] : memref<64x128xbf16, #tpu.memory_space<vmem>>, vector<64x128xbf16>
    %cst_241 = arith.constant dense<0.000000e+00> : vector<2x128xf32>
    %581 = tpu.matmul %579, %580, %cst_241 {dimension_numbers = #tpu.dot_dimension_numbers<[1], [0], [0], [1], [0, 0, 1, 1], [], []>} : vector<2x64xbf16>, vector<64x128xbf16>, vector<2x128xf32> -> vector<2x128xf32>
    %c0_242 = arith.constant 0 : index
    %c0_243 = arith.constant 0 : index
    %582 = vector.load %arg39[%c0_242, %c0_243] : memref<1x128xf32, #tpu.memory_space<vmem>>, vector<1x128xf32>
    %583 = vector.broadcast %582 : vector<1x128xf32> to vector<2x128xf32>
    %584 = arith.addf %581, %583 : vector<2x128xf32>
    %cst_244 = arith.constant 0.000000e+00 : f32
    %585 = vector.broadcast %cst_244 : f32 to vector<2x128xf32>
    %586 = arith.maximumf %584, %585 : vector<2x128xf32>
    %587 = arith.truncf %586 : vector<2x128xf32> to vector<2x128xbf16>
    %c0_245 = arith.constant 0 : index
    %c0_246 = arith.constant 0 : index
    %588 = vector.load %arg40[%c0_245, %c0_246] : memref<128x64xbf16, #tpu.memory_space<vmem>>, vector<128x64xbf16>
    %cst_247 = arith.constant dense<0.000000e+00> : vector<2x64xf32>
    %589 = tpu.matmul %587, %588, %cst_247 {dimension_numbers = #tpu.dot_dimension_numbers<[1], [0], [0], [1], [0, 0, 1, 1], [], []>} : vector<2x128xbf16>, vector<128x64xbf16>, vector<2x64xf32> -> vector<2x64xf32>
    %c0_248 = arith.constant 0 : index
    %c0_249 = arith.constant 0 : index
    %590 = vector.load %arg41[%c0_248, %c0_249] : memref<1x64xf32, #tpu.memory_space<vmem>>, vector<1x64xf32>
    %591 = vector.broadcast %590 : vector<1x64xf32> to vector<2x64xf32>
    %592 = arith.addf %589, %591 : vector<2x64xf32>
    %cst_250 = arith.constant 0.000000e+00 : f32
    %593 = vector.broadcast %cst_250 : f32 to vector<2x64xf32>
    %594 = arith.maximumf %592, %593 : vector<2x64xf32>
    %595 = arith.truncf %594 : vector<2x64xf32> to vector<2x64xbf16>
    %c0_251 = arith.constant 0 : index
    %c0_252 = arith.constant 0 : index
    %596 = vector.load %arg42[%c0_251, %c0_252] : memref<64x128xbf16, #tpu.memory_space<vmem>>, vector<64x128xbf16>
    %cst_253 = arith.constant dense<0.000000e+00> : vector<2x128xf32>
    %597 = tpu.matmul %595, %596, %cst_253 {dimension_numbers = #tpu.dot_dimension_numbers<[1], [0], [0], [1], [0, 0, 1, 1], [], []>} : vector<2x64xbf16>, vector<64x128xbf16>, vector<2x128xf32> -> vector<2x128xf32>
    %c0_254 = arith.constant 0 : index
    %c0_255 = arith.constant 0 : index
    %598 = vector.load %arg43[%c0_254, %c0_255] : memref<1x128xf32, #tpu.memory_space<vmem>>, vector<1x128xf32>
    %599 = vector.broadcast %598 : vector<1x128xf32> to vector<2x128xf32>
    %600 = arith.addf %597, %599 : vector<2x128xf32>
    %c0_256 = arith.constant 0 : index
    %c0_257 = arith.constant 0 : index
    %601 = vector.load %arg44[%c0_256, %c0_257] : memref<2x128xf32, #tpu.memory_space<vmem>>, vector<2x128xf32>
    tpu.vector_store %arg44[%c0_256, %c0_257], %600 {strides = array<i32>} : memref<2x128xf32, #tpu.memory_space<vmem>>, vector<2x128xf32>,
    return
  }
  func.func @transform_0(%arg0: i32) -> (i32, i32) {
    %c0_i32 = arith.constant 0 : i32
    %c0_i32_0 = arith.constant 0 : i32
    %c0_i32_1 = arith.constant 0 : i32
    return %c0_i32, %c0_i32_0 : i32, i32
  }
  func.func @transform_1(%arg0: i32) -> (i32, i32) {
    %c0_i32 = arith.constant 0 : i32
    %c0_i32_0 = arith.constant 0 : i32
    %c0_i32_1 = arith.constant 0 : i32
    return %c0_i32, %c0_i32_0 : i32, i32
  }
  func.func @transform_2(%arg0: i32) -> (i32, i32) {
    %c0_i32 = arith.constant 0 : i32
    %c0_i32_0 = arith.constant 0 : i32
    %c0_i32_1 = arith.constant 0 : i32
    return %c0_i32, %c0_i32_0 : i32, i32
  }
  func.func @transform_3(%arg0: i32) -> (i32, i32) {
    %c0_i32 = arith.constant 0 : i32
    %c0_i32_0 = arith.constant 0 : i32
    %c0_i32_1 = arith.constant 0 : i32
    return %c0_i32, %c0_i32_0 : i32, i32
  }
  func.func @transform_4(%arg0: i32) -> (i32, i32) {
    %c0_i32 = arith.constant 0 : i32
    %c0_i32_0 = arith.constant 0 : i32
    %c0_i32_1 = arith.constant 0 : i32
    return %c0_i32, %c0_i32_0 : i32, i32
  }
  func.func @transform_5(%arg0: i32) -> (i32, i32) {
    %c0_i32 = arith.constant 0 : i32
    %c0_i32_0 = arith.constant 0 : i32
    %c0_i32_1 = arith.constant 0 : i32
    return %c0_i32, %c0_i32_0 : i32, i32
  }
  func.func @transform_6(%arg0: i32) -> (i32, i32) {
    %c0_i32 = arith.constant 0 : i32
    %c0_i32_0 = arith.constant 0 : i32
    %c0_i32_1 = arith.constant 0 : i32
    return %c0_i32, %c0_i32_0 : i32, i32
  }
  func.func @transform_7(%arg0: i32) -> (i32, i32) {
    %c0_i32 = arith.constant 0 : i32
    %c0_i32_0 = arith.constant 0 : i32
    %c0_i32_1 = arith.constant 0 : i32
    return %c0_i32, %c0_i32_0 : i32, i32
  }
  func.func @transform_8(%arg0: i32) -> (i32, i32) {
    %c0_i32 = arith.constant 0 : i32
    %c0_i32_0 = arith.constant 0 : i32
    %c0_i32_1 = arith.constant 0 : i32
    return %c0_i32, %c0_i32_0 : i32, i32
  }
  func.func @transform_9(%arg0: i32) -> (i32, i32) {
    %c0_i32 = arith.constant 0 : i32
    %c0_i32_0 = arith.constant 0 : i32
    %c0_i32_1 = arith.constant 0 : i32
    return %c0_i32, %c0_i32_0 : i32, i32
  }
  func.func @transform_10(%arg0: i32) -> (i32, i32) {
    %c0_i32 = arith.constant 0 : i32
    %c0_i32_0 = arith.constant 0 : i32
    %c0_i32_1 = arith.constant 0 : i32
    return %c0_i32, %c0_i32_0 : i32, i32
  }
  func.func @transform_11(%arg0: i32) -> (i32, i32) {
    %c0_i32 = arith.constant 0 : i32
    %c0_i32_0 = arith.constant 0 : i32
    %c0_i32_1 = arith.constant 0 : i32
    return %c0_i32, %c0_i32_0 : i32, i32
  }
  func.func @transform_12(%arg0: i32) -> (i32, i32) {
    %c0_i32 = arith.constant 0 : i32
    %c0_i32_0 = arith.constant 0 : i32
    %c0_i32_1 = arith.constant 0 : i32
    return %c0_i32, %c0_i32_0 : i32, i32
  }
  func.func @transform_13(%arg0: i32) -> (i32, i32) {
    %c0_i32 = arith.constant 0 : i32
    %c0_i32_0 = arith.constant 0 : i32
    %c0_i32_1 = arith.constant 0 : i32
    return %c0_i32, %c0_i32_0 : i32, i32
  }
  func.func @transform_14(%arg0: i32) -> (i32, i32) {
    %c0_i32 = arith.constant 0 : i32
    %c0_i32_0 = arith.constant 0 : i32
    %c0_i32_1 = arith.constant 0 : i32
    return %c0_i32, %c0_i32_0 : i32, i32
  }
  func.func @transform_15(%arg0: i32) -> (i32, i32) {
    %c0_i32 = arith.constant 0 : i32
    %c0_i32_0 = arith.constant 0 : i32
    %c0_i32_1 = arith.constant 0 : i32
    return %c0_i32, %c0_i32_0 : i32, i32
  }
  func.func @transform_16(%arg0: i32) -> (i32, i32) {
    %c0_i32 = arith.constant 0 : i32
    %c0_i32_0 = arith.constant 0 : i32
    %c0_i32_1 = arith.constant 0 : i32
    return %c0_i32, %c0_i32_0 : i32, i32
  }
  func.func @transform_17(%arg0: i32) -> (i32, i32) {
    %c0_i32 = arith.constant 0 : i32
    %c0_i32_0 = arith.constant 0 : i32
    %c0_i32_1 = arith.constant 0 : i32
    return %c0_i32, %c0_i32_0 : i32, i32
  }
  func.func @transform_18(%arg0: i32) -> (i32, i32) {
    %c0_i32 = arith.constant 0 : i32
    %c0_i32_0 = arith.constant 0 : i32
    %c0_i32_1 = arith.constant 0 : i32
    return %c0_i32, %c0_i32_0 : i32, i32
  }
  func.func @transform_19(%arg0: i32) -> (i32, i32) {
    %c0_i32 = arith.constant 0 : i32
    %c0_i32_0 = arith.constant 0 : i32
    %c0_i32_1 = arith.constant 0 : i32
    return %c0_i32, %c0_i32_0 : i32, i32
  }
  func.func @transform_20(%arg0: i32) -> (i32, i32) {
    %c0_i32 = arith.constant 0 : i32
    %c0_i32_0 = arith.constant 0 : i32
    %c0_i32_1 = arith.constant 0 : i32
    return %c0_i32, %c0_i32_0 : i32, i32
  }
  func.func @transform_21(%arg0: i32) -> (i32, i32) {
    %c0_i32 = arith.constant 0 : i32
    %c0_i32_0 = arith.constant 0 : i32
    %c0_i32_1 = arith.constant 0 : i32
    return %c0_i32, %c0_i32_0 : i32, i32
  }
  func.func @transform_22(%arg0: i32) -> (i32, i32) {
    %c0_i32 = arith.constant 0 : i32
    %c0_i32_0 = arith.constant 0 : i32
    %c0_i32_1 = arith.constant 0 : i32
    return %c0_i32, %c0_i32_0 : i32, i32
  }
  func.func @transform_23(%arg0: i32) -> (i32, i32) {
    %c0_i32 = arith.constant 0 : i32
    %c0_i32_0 = arith.constant 0 : i32
    %c0_i32_1 = arith.constant 0 : i32
    return %c0_i32, %c0_i32_0 : i32, i32
  }
  func.func @transform_24(%arg0: i32) -> (i32, i32) {
    %c0_i32 = arith.constant 0 : i32
    %c0_i32_0 = arith.constant 0 : i32
    %c0_i32_1 = arith.constant 0 : i32
    return %c0_i32, %c0_i32_0 : i32, i32
  }
  func.func @transform_25(%arg0: i32) -> (i32, i32) {
    %c0_i32 = arith.constant 0 : i32
    %c0_i32_0 = arith.constant 0 : i32
    %c0_i32_1 = arith.constant 0 : i32
    return %c0_i32, %c0_i32_0 : i32, i32
  }
  func.func @transform_26(%arg0: i32) -> (i32, i32) {
    %c0_i32 = arith.constant 0 : i32
    %c0_i32_0 = arith.constant 0 : i32
    %c0_i32_1 = arith.constant 0 : i32
    return %c0_i32, %c0_i32_0 : i32, i32
  }
  func.func @transform_27(%arg0: i32) -> (i32, i32) {
    %c0_i32 = arith.constant 0 : i32
    %c0_i32_0 = arith.constant 0 : i32
    %c0_i32_1 = arith.constant 0 : i32
    return %c0_i32, %c0_i32_0 : i32, i32
  }
  func.func @transform_28(%arg0: i32) -> (i32, i32) {
    %c0_i32 = arith.constant 0 : i32
    %c0_i32_0 = arith.constant 0 : i32
    %c0_i32_1 = arith.constant 0 : i32
    return %c0_i32, %c0_i32_0 : i32, i32
  }
  func.func @transform_29(%arg0: i32) -> (i32, i32) {
    %c0_i32 = arith.constant 0 : i32
    %c0_i32_0 = arith.constant 0 : i32
    %c0_i32_1 = arith.constant 0 : i32
    return %c0_i32, %c0_i32_0 : i32, i32
  }
  func.func @transform_30(%arg0: i32) -> (i32, i32) {
    %c0_i32 = arith.constant 0 : i32
    %c0_i32_0 = arith.constant 0 : i32
    %c0_i32_1 = arith.constant 0 : i32
    return %c0_i32, %c0_i32_0 : i32, i32
  }
  func.func @transform_31(%arg0: i32) -> (i32, i32) {
    %c0_i32 = arith.constant 0 : i32
    %c0_i32_0 = arith.constant 0 : i32
    %c0_i32_1 = arith.constant 0 : i32
    return %c0_i32, %c0_i32_0 : i32, i32
  }
  func.func @transform_32(%arg0: i32) -> (i32, i32) {
    %c0_i32 = arith.constant 0 : i32
    %c0_i32_0 = arith.constant 0 : i32
    %c0_i32_1 = arith.constant 0 : i32
    return %c0_i32, %c0_i32_0 : i32, i32
  }
  func.func @transform_33(%arg0: i32) -> (i32, i32) {
    %c0_i32 = arith.constant 0 : i32
    %c0_i32_0 = arith.constant 0 : i32
    %c0_i32_1 = arith.constant 0 : i32
    return %c0_i32, %c0_i32_0 : i32, i32
  }
  func.func @transform_34(%arg0: i32) -> (i32, i32) {
    %c0_i32 = arith.constant 0 : i32
    %c0_i32_0 = arith.constant 0 : i32
    %c0_i32_1 = arith.constant 0 : i32
    return %c0_i32, %c0_i32_0 : i32, i32
  }
  func.func @transform_35(%arg0: i32) -> (i32, i32) {
    %c0_i32 = arith.constant 0 : i32
    %c0_i32_0 = arith.constant 0 : i32
    %c0_i32_1 = arith.constant 0 : i32
    return %c0_i32, %c0_i32_0 : i32, i32
  }
  func.func @transform_36(%arg0: i32) -> (i32, i32) {
    %c0_i32 = arith.constant 0 : i32
    %c0_i32_0 = arith.constant 0 : i32
    %c0_i32_1 = arith.constant 0 : i32
    return %c0_i32, %c0_i32_0 : i32, i32
  }
  func.func @transform_37(%arg0: i32) -> (i32, i32) {
    %c0_i32 = arith.constant 0 : i32
    %c0_i32_0 = arith.constant 0 : i32
    %c0_i32_1 = arith.constant 0 : i32
    return %c0_i32, %c0_i32_0 : i32, i32
  }
  func.func @transform_38(%arg0: i32) -> (i32, i32) {
    %c0_i32 = arith.constant 0 : i32
    %c0_i32_0 = arith.constant 0 : i32
    %c0_i32_1 = arith.constant 0 : i32
    return %c0_i32, %c0_i32_0 : i32, i32
  }
  func.func @transform_39(%arg0: i32) -> (i32, i32) {
    %c0_i32 = arith.constant 0 : i32
    %c0_i32_0 = arith.constant 0 : i32
    %c0_i32_1 = arith.constant 0 : i32
    return %c0_i32, %c0_i32_0 : i32, i32
  }
  func.func @transform_40(%arg0: i32) -> (i32, i32) {
    %c0_i32 = arith.constant 0 : i32
    %c0_i32_0 = arith.constant 0 : i32
    %c0_i32_1 = arith.constant 0 : i32
    return %c0_i32, %c0_i32_0 : i32, i32
  }
  func.func @transform_41(%arg0: i32) -> (i32, i32) {
    %c0_i32 = arith.constant 0 : i32
    %c0_i32_0 = arith.constant 0 : i32
    %c0_i32_1 = arith.constant 0 : i32
    return %c0_i32, %c0_i32_0 : i32, i32
  }
  func.func @transform_42(%arg0: i32) -> (i32, i32) {
    %c0_i32 = arith.constant 0 : i32
    %c0_i32_0 = arith.constant 0 : i32
    %c0_i32_1 = arith.constant 0 : i32
    return %c0_i32, %c0_i32_0 : i32, i32
  }
  func.func @transform_43(%arg0: i32) -> (i32, i32) {
    %c0_i32 = arith.constant 0 : i32
    %c0_i32_0 = arith.constant 0 : i32
    %c0_i32_1 = arith.constant 0 : i32
    return %c0_i32, %c0_i32_0 : i32, i32
  }
}

</mosaic_0001>

<llo_original>
// kernel: novel_hybrid_transformer.1
$region0: #{novel_hybrid_transformer.1}
  #allocation0 [shape = 'u32[]', space=smem, size = 0x4, offset = 0x4, fixed_abs, tag = 'smem constant byte address 0x4 - core index']
  #allocation1 [shape = 'u32[144,128]{1,0:T(1,128)}', space=vmem, size = 0x12000, scoped, tag = 'internal scratch']
  %s0 = inlined_call_operand.smem [shape: u32[44], index: -1, kind: input, shape index: {}]
  %s1 = sld [smem:[%s0]]
  %s2 = scalar_lea.smem %s0, 1
  %s3 = sld [smem:[%s2]]
  %s4 = scalar_lea.smem %s0, 2
  %s5 = sld [smem:[%s4]]
  %s6 = scalar_lea.smem %s0, 3
  %s7 = sld [smem:[%s6]]
  %s8 = scalar_lea.smem %s0, 4
  %s9 = sld [smem:[%s8]]
  %s10 = scalar_lea.smem %s0, 5
  %s11 = sld [smem:[%s10]]
  %s12 = scalar_lea.smem %s0, 6
  %s13 = sld [smem:[%s12]]
  %s14 = scalar_lea.smem %s0, 7
  %s15 = sld [smem:[%s14]]
  %s16 = scalar_lea.smem %s0, 8
  %s17 = sld [smem:[%s16]]
  %s18 = scalar_lea.smem %s0, 9
  %s19 = sld [smem:[%s18]]
  %s20 = scalar_lea.smem %s0, 10
  %s21 = sld [smem:[%s20]]
  %s22 = scalar_lea.smem %s0, 11
  %s23 = sld [smem:[%s22]]
  %s24 = scalar_lea.smem %s0, 12
  %s25 = sld [smem:[%s24]]
  %s26 = scalar_lea.smem %s0, 13
  %s27 = sld [smem:[%s26]]
  %s28 = scalar_lea.smem %s0, 14
  %s29 = sld [smem:[%s28]]
  %s30 = scalar_lea.smem %s0, 15
  %s31 = sld [smem:[%s30]]
  %s32 = scalar_lea.smem %s0, 16
  %s33 = sld [smem:[%s32]]
  %s34 = scalar_lea.smem %s0, 17
  %s35 = sld [smem:[%s34]]
  %s36 = scalar_lea.smem %s0, 18
  %s37 = sld [smem:[%s36]]
  %s38 = scalar_lea.smem %s0, 19
  %s39 = sld [smem:[%s38]]
  %s40 = scalar_lea.smem %s0, 20
  %s41 = sld [smem:[%s40]]
  %s42 = scalar_lea.smem %s0, 21
  %s43 = sld [smem:[%s42]]
  %s44 = scalar_lea.smem %s0, 22
  %s45 = sld [smem:[%s44]]
  %s46 = scalar_lea.smem %s0, 23
  %s47 = sld [smem:[%s46]]
  %s48 = scalar_lea.smem %s0, 24
  %s49 = sld [smem:[%s48]]
  %s50 = scalar_lea.smem %s0, 25
  %s51 = sld [smem:[%s50]]
  %s52 = scalar_lea.smem %s0, 26
  %s53 = sld [smem:[%s52]]
  %s54 = scalar_lea.smem %s0, 27
  %s55 = sld [smem:[%s54]]
  %s56 = scalar_lea.smem %s0, 28
  %s57 = sld [smem:[%s56]]
  %s58 = scalar_lea.smem %s0, 29
  %s59 = sld [smem:[%s58]]
  %s60 = scalar_lea.smem %s0, 30
  %s61 = sld [smem:[%s60]]
  %s62 = scalar_lea.smem %s0, 31
  %s63 = sld [smem:[%s62]]
  %s64 = scalar_lea.smem %s0, 32
  %s65 = sld [smem:[%s64]]
  %s66 = scalar_lea.smem %s0, 33
  %s67 = sld [smem:[%s66]]
  %s68 = scalar_lea.smem %s0, 34
  %s69 = sld [smem:[%s68]]
  %s70 = scalar_lea.smem %s0, 35
  %s71 = sld [smem:[%s70]]
  %s72 = scalar_lea.smem %s0, 36
  %s73 = sld [smem:[%s72]]
  %s74 = scalar_lea.smem %s0, 37
  %s75 = sld [smem:[%s74]]
  %s76 = scalar_lea.smem %s0, 38
  %s77 = sld [smem:[%s76]]
  %s78 = scalar_lea.smem %s0, 39
  %s79 = sld [smem:[%s78]]
  %s80 = scalar_lea.smem %s0, 40
  %s81 = sld [smem:[%s80]]
  %s82 = scalar_lea.smem %s0, 41
  %s83 = sld [smem:[%s82]]
  %s84 = scalar_lea.smem %s0, 42
  %s85 = sld [smem:[%s84]]
  %s86 = scalar_lea.smem %s0, 43
  %s87 = sld [smem:[%s86]]
  %s88 = sld [smem:[#allocation0]]
  $region182: #{novel_hybrid_transformer.1} parent=0
    _
  %s90 = ssub.s32 1, %s88
  %s91 = scalar_select 0, %s90, %s88
  $region1: #{novel_hybrid_transformer.1} parent=0
    #allocation2 [shape = 'u8[1024]{0}', space=vmem, size = 0x400, scoped, tag = 'output window, operand 0, single buffered']
    #allocation3 [shape = 's32[1]{0}', space=sflag, size = 0x4, scoped, tag = 'scoped memory for novel_hybrid_transformer.1']
    %92 = vsyncpa [#allocation3], 0
    // Predicated region
    $region2: #{novel_hybrid_transformer.1} parent=1 // pred_check
      _
    $region3: #{novel_hybrid_transformer.1} parent=1 // pred_check_branch
      %94 = sbr.rel (0) target = $region5
    $region4: #{novel_hybrid_transformer.1} parent=1 // pred_region
      _
    $region5: #{novel_hybrid_transformer.1} parent=1 // pred_fallthru
      _
    // Predicated region
    $region6: #{novel_hybrid_transformer.1} parent=1 // pred_check
      _
    $region7: #{novel_hybrid_transformer.1} parent=1 // pred_check_branch
      %96 = sbr.rel (0) target = $region9
    $region8: #{novel_hybrid_transformer.1} parent=1 // pred_region
      _
    $region9: #{novel_hybrid_transformer.1} parent=1 // pred_fallthru
      _
    // Predicated region
    $region10: #{novel_hybrid_transformer.1} parent=1 // pred_check
      _
    $region11: #{novel_hybrid_transformer.1} parent=1 // pred_check_branch
      %98 = sbr.rel (0) target = $region13
    $region12: #{novel_hybrid_transformer.1} parent=1 // pred_region
      _
    $region13: #{novel_hybrid_transformer.1} parent=1 // pred_fallthru
      _
    // Predicated region
    $region14: #{novel_hybrid_transformer.1} parent=1 // pred_check
      _
    $region15: #{novel_hybrid_transformer.1} parent=1 // pred_check_branch
      %100 = sbr.rel (0) target = $region17
    $region16: #{novel_hybrid_transformer.1} parent=1 // pred_region
      _
    $region17: #{novel_hybrid_transformer.1} parent=1 // pred_fallthru
      _
    // Predicated region
    $region18: #{novel_hybrid_transformer.1} parent=1 // pred_check
      _
    $region19: #{novel_hybrid_transformer.1} parent=1 // pred_check_branch
      %102 = sbr.rel (0) target = $region21
    $region20: #{novel_hybrid_transformer.1} parent=1 // pred_region
      _
    $region21: #{novel_hybrid_transformer.1} parent=1 // pred_fallthru
      _
    // Predicated region
    $region22: #{novel_hybrid_transformer.1} parent=1 // pred_check
      _
    $region23: #{novel_hybrid_transformer.1} parent=1 // pred_check_branch
      %104 = sbr.rel (0) target = $region25
    $region24: #{novel_hybrid_transformer.1} parent=1 // pred_region
      _
    $region25: #{novel_hybrid_transformer.1} parent=1 // pred_fallthru
      _
    // Predicated region
    $region26: #{novel_hybrid_transformer.1} parent=1 // pred_check
      _
    $region27: #{novel_hybrid_transformer.1} parent=1 // pred_check_branch
      %106 = sbr.rel (0) target = $region29
    $region28: #{novel_hybrid_transformer.1} parent=1 // pred_region
      _
    $region29: #{novel_hybrid_transformer.1} parent=1 // pred_fallthru
      _
    // Predicated region
    $region30: #{novel_hybrid_transformer.1} parent=1 // pred_check
      _
    $region31: #{novel_hybrid_transformer.1} parent=1 // pred_check_branch
      %108 = sbr.rel (0) target = $region33
    $region32: #{novel_hybrid_transformer.1} parent=1 // pred_region
      _
    $region33: #{novel_hybrid_transformer.1} parent=1 // pred_fallthru
      _
    // Predicated region
    $region34: #{novel_hybrid_transformer.1} parent=1 // pred_check
      _
    $region35: #{novel_hybrid_transformer.1} parent=1 // pred_check_branch
      %110 = sbr.rel (0) target = $region37
    $region36: #{novel_hybrid_transformer.1} parent=1 // pred_region
      _
    $region37: #{novel_hybrid_transformer.1} parent=1 // pred_fallthru
      _
    // Predicated region
    $region38: #{novel_hybrid_transformer.1} parent=1 // pred_check
      _
    $region39: #{novel_hybrid_transformer.1} parent=1 // pred_check_branch
      %112 = sbr.rel (0) target = $region41
    $region40: #{novel_hybrid_transformer.1} parent=1 // pred_region
      _
    $region41: #{novel_hybrid_transformer.1} parent=1 // pred_fallthru
      _
    // Predicated region
    $region42: #{novel_hybrid_transformer.1} parent=1 // pred_check
      _
    $region43: #{novel_hybrid_transformer.1} parent=1 // pred_check_branch
      %114 = sbr.rel (0) target = $region45
    $region44: #{novel_hybrid_transformer.1} parent=1 // pred_region
      _
    $region45: #{novel_hybrid_transformer.1} parent=1 // pred_fallthru
      _
    // Predicated region
    $region46: #{novel_hybrid_transformer.1} parent=1 // pred_check
      _
    $region47: #{novel_hybrid_transformer.1} parent=1 // pred_check_branch
      %116 = sbr.rel (0) target = $region49
    $region48: #{novel_hybrid_transformer.1} parent=1 // pred_region
      _
    $region49: #{novel_hybrid_transformer.1} parent=1 // pred_fallthru
      _
    // Predicated region
    $region50: #{novel_hybrid_transformer.1} parent=1 // pred_check
      _
    $region51: #{novel_hybrid_transformer.1} parent=1 // pred_check_branch
      %118 = sbr.rel (0) target = $region53
    $region52: #{novel_hybrid_transformer.1} parent=1 // pred_region
      _
    $region53: #{novel_hybrid_transformer.1} parent=1 // pred_fallthru
      _
    // Predicated region
    $region54: #{novel_hybrid_transformer.1} parent=1 // pred_check
      _
    $region55: #{novel_hybrid_transformer.1} parent=1 // pred_check_branch
      %120 = sbr.rel (0) target = $region57
    $region56: #{novel_hybrid_transformer.1} parent=1 // pred_region
      _
    $region57: #{novel_hybrid_transformer.1} parent=1 // pred_fallthru
      _
    // Predicated region
    $region58: #{novel_hybrid_transformer.1} parent=1 // pred_check
      _
    $region59: #{novel_hybrid_transformer.1} parent=1 // pred_check_branch
      %122 = sbr.rel (0) target = $region61
    $region60: #{novel_hybrid_transformer.1} parent=1 // pred_region
      _
    $region61: #{novel_hybrid_transformer.1} parent=1 // pred_fallthru
      _
    // Predicated region
    $region62: #{novel_hybrid_transformer.1} parent=1 // pred_check
      _
    $region63: #{novel_hybrid_transformer.1} parent=1 // pred_check_branch
      %124 = sbr.rel (0) target = $region65
    $region64: #{novel_hybrid_transformer.1} parent=1 // pred_region
      _
    $region65: #{novel_hybrid_transformer.1} parent=1 // pred_fallthru
      _
    // Predicated region
    $region66: #{novel_hybrid_transformer.1} parent=1 // pred_check
      _
    $region67: #{novel_hybrid_transformer.1} parent=1 // pred_check_branch
      %126 = sbr.rel (0) target = $region69
    $region68: #{novel_hybrid_transformer.1} parent=1 // pred_region
      _
    $region69: #{novel_hybrid_transformer.1} parent=1 // pred_fallthru
      _
    // Predicated region
    $region70: #{novel_hybrid_transformer.1} parent=1 // pred_check
      _
    $region71: #{novel_hybrid_transformer.1} parent=1 // pred_check_branch
      %128 = sbr.rel (0) target = $region73
    $region72: #{novel_hybrid_transformer.1} parent=1 // pred_region
      _
    $region73: #{novel_hybrid_transformer.1} parent=1 // pred_fallthru
      _
    // Predicated region
    $region74: #{novel_hybrid_transformer.1} parent=1 // pred_check
      _
    $region75: #{novel_hybrid_transformer.1} parent=1 // pred_check_branch
      %130 = sbr.rel (0) target = $region77
    $region76: #{novel_hybrid_transformer.1} parent=1 // pred_region
      _
    $region77: #{novel_hybrid_transformer.1} parent=1 // pred_fallthru
      _
    // Predicated region
    $region78: #{novel_hybrid_transformer.1} parent=1 // pred_check
      _
    $region79: #{novel_hybrid_transformer.1} parent=1 // pred_check_branch
      %132 = sbr.rel (0) target = $region81
    $region80: #{novel_hybrid_transformer.1} parent=1 // pred_region
      _
    $region81: #{novel_hybrid_transformer.1} parent=1 // pred_fallthru
      _
    // Predicated region
    $region82: #{novel_hybrid_transformer.1} parent=1 // pred_check
      _
    $region83: #{novel_hybrid_transformer.1} parent=1 // pred_check_branch
      %134 = sbr.rel (0) target = $region85
    $region84: #{novel_hybrid_transformer.1} parent=1 // pred_region
      _
    $region85: #{novel_hybrid_transformer.1} parent=1 // pred_fallthru
      _
    // Predicated region
    $region86: #{novel_hybrid_transformer.1} parent=1 // pred_check
      _
    $region87: #{novel_hybrid_transformer.1} parent=1 // pred_check_branch
      %136 = sbr.rel (0) target = $region89
    $region88: #{novel_hybrid_transformer.1} parent=1 // pred_region
      _
    $region89: #{novel_hybrid_transformer.1} parent=1 // pred_fallthru
      _
    // Predicated region
    $region90: #{novel_hybrid_transformer.1} parent=1 // pred_check
      _
    $region91: #{novel_hybrid_transformer.1} parent=1 // pred_check_branch
      %138 = sbr.rel (0) target = $region93
    $region92: #{novel_hybrid_transformer.1} parent=1 // pred_region
      _
    $region93: #{novel_hybrid_transformer.1} parent=1 // pred_fallthru
      _
    // Predicated region
    $region94: #{novel_hybrid_transformer.1} parent=1 // pred_check
      _
    $region95: #{novel_hybrid_transformer.1} parent=1 // pred_check_branch
      %140 = sbr.rel (0) target = $region97
    $region96: #{novel_hybrid_transformer.1} parent=1 // pred_region
      _
    $region97: #{novel_hybrid_transformer.1} parent=1 // pred_fallthru
      _
    // Predicated region
    $region98: #{novel_hybrid_transformer.1} parent=1 // pred_check
      _
    $region99: #{novel_hybrid_transformer.1} parent=1 // pred_check_branch
      %142 = sbr.rel (0) target = $region101
    $region100: #{novel_hybrid_transformer.1} parent=1 // pred_region
      _
    $region101: #{novel_hybrid_transformer.1} parent=1 // pred_fallthru
      _
    // Predicated region
    $region102: #{novel_hybrid_transformer.1} parent=1 // pred_check
      _
    $region103: #{novel_hybrid_transformer.1} parent=1 // pred_check_branch
      %144 = sbr.rel (0) target = $region105
    $region104: #{novel_hybrid_transformer.1} parent=1 // pred_region
      _
    $region105: #{novel_hybrid_transformer.1} parent=1 // pred_fallthru
      _
    // Predicated region
    $region106: #{novel_hybrid_transformer.1} parent=1 // pred_check
      _
    $region107: #{novel_hybrid_transformer.1} parent=1 // pred_check_branch
      %146 = sbr.rel (0) target = $region109
    $region108: #{novel_hybrid_transformer.1} parent=1 // pred_region
      _
    $region109: #{novel_hybrid_transformer.1} parent=1 // pred_fallthru
      _
    // Predicated region
    $region110: #{novel_hybrid_transformer.1} parent=1 // pred_check
      _
    $region111: #{novel_hybrid_transformer.1} parent=1 // pred_check_branch
      %148 = sbr.rel (0) target = $region113
    $region112: #{novel_hybrid_transformer.1} parent=1 // pred_region
      _
    $region113: #{novel_hybrid_transformer.1} parent=1 // pred_fallthru
      _
    // Predicated region
    $region114: #{novel_hybrid_transformer.1} parent=1 // pred_check
      _
    $region115: #{novel_hybrid_transformer.1} parent=1 // pred_check_branch
      %150 = sbr.rel (0) target = $region117
    $region116: #{novel_hybrid_transformer.1} parent=1 // pred_region
      _
    $region117: #{novel_hybrid_transformer.1} parent=1 // pred_fallthru
      _
    // Predicated region
    $region118: #{novel_hybrid_transformer.1} parent=1 // pred_check
      _
    $region119: #{novel_hybrid_transformer.1} parent=1 // pred_check_branch
      %152 = sbr.rel (0) target = $region121
    $region120: #{novel_hybrid_transformer.1} parent=1 // pred_region
      _
    $region121: #{novel_hybrid_transformer.1} parent=1 // pred_fallthru
      _
    // Predicated region
    $region122: #{novel_hybrid_transformer.1} parent=1 // pred_check
      _
    $region123: #{novel_hybrid_transformer.1} parent=1 // pred_check_branch
      %154 = sbr.rel (0) target = $region125
    $region124: #{novel_hybrid_transformer.1} parent=1 // pred_region
      _
    $region125: #{novel_hybrid_transformer.1} parent=1 // pred_fallthru
      _
    // Predicated region
    $region126: #{novel_hybrid_transformer.1} parent=1 // pred_check
      _
    $region127: #{novel_hybrid_transformer.1} parent=1 // pred_check_branch
      %156 = sbr.rel (0) target = $region129
    $region128: #{novel_hybrid_transformer.1} parent=1 // pred_region
      _
    $region129: #{novel_hybrid_transformer.1} parent=1 // pred_fallthru
      _
    // Predicated region
    $region130: #{novel_hybrid_transformer.1} parent=1 // pred_check
      _
    $region131: #{novel_hybrid_transformer.1} parent=1 // pred_check_branch
      %158 = sbr.rel (0) target = $region133
    $region132: #{novel_hybrid_transformer.1} parent=1 // pred_region
      _
    $region133: #{novel_hybrid_transformer.1} parent=1 // pred_fallthru
      _
    // Predicated region
    $region134: #{novel_hybrid_transformer.1} parent=1 // pred_check
      _
    $region135: #{novel_hybrid_transformer.1} parent=1 // pred_check_branch
      %160 = sbr.rel (0) target = $region137
    $region136: #{novel_hybrid_transformer.1} parent=1 // pred_region
      _
    $region137: #{novel_hybrid_transformer.1} parent=1 // pred_fallthru
      _
    // Predicated region
    $region138: #{novel_hybrid_transformer.1} parent=1 // pred_check
      _
    $region139: #{novel_hybrid_transformer.1} parent=1 // pred_check_branch
      %162 = sbr.rel (0) target = $region141
    $region140: #{novel_hybrid_transformer.1} parent=1 // pred_region
      _
    $region141: #{novel_hybrid_transformer.1} parent=1 // pred_fallthru
      _
    // Predicated region
    $region142: #{novel_hybrid_transformer.1} parent=1 // pred_check
      _
    $region143: #{novel_hybrid_transformer.1} parent=1 // pred_check_branch
      %164 = sbr.rel (0) target = $region145
    $region144: #{novel_hybrid_transformer.1} parent=1 // pred_region
      _
    $region145: #{novel_hybrid_transformer.1} parent=1 // pred_fallthru
      _
    // Predicated region
    $region146: #{novel_hybrid_transformer.1} parent=1 // pred_check
      _
    $region147: #{novel_hybrid_transformer.1} parent=1 // pred_check_branch
      %166 = sbr.rel (0) target = $region149
    $region148: #{novel_hybrid_transformer.1} parent=1 // pred_region
      _
    $region149: #{novel_hybrid_transformer.1} parent=1 // pred_fallthru
      _
    // Predicated region
    $region150: #{novel_hybrid_transformer.1} parent=1 // pred_check
      _
    $region151: #{novel_hybrid_transformer.1} parent=1 // pred_check_branch
      %168 = sbr.rel (0) target = $region153
    $region152: #{novel_hybrid_transformer.1} parent=1 // pred_region
      _
    $region153: #{novel_hybrid_transformer.1} parent=1 // pred_fallthru
      _
    // Predicated region
    $region154: #{novel_hybrid_transformer.1} parent=1 // pred_check
      _
    $region155: #{novel_hybrid_transformer.1} parent=1 // pred_check_branch
      %170 = sbr.rel (0) target = $region157
    $region156: #{novel_hybrid_transformer.1} parent=1 // pred_region
      _
    $region157: #{novel_hybrid_transformer.1} parent=1 // pred_fallthru
      _
    // Predicated region
    $region158: #{novel_hybrid_transformer.1} parent=1 // pred_check
      _
    $region159: #{novel_hybrid_transformer.1} parent=1 // pred_check_branch
      %172 = sbr.rel (0) target = $region161
    $region160: #{novel_hybrid_transformer.1} parent=1 // pred_region
      _
    $region161: #{novel_hybrid_transformer.1} parent=1 // pred_fallthru
      _
    // Predicated region
    $region162: #{novel_hybrid_transformer.1} parent=1 // pred_check
      _
    $region163: #{novel_hybrid_transformer.1} parent=1 // pred_check_branch
      %174 = sbr.rel (0) target = $region165
    $region164: #{novel_hybrid_transformer.1} parent=1 // pred_region
      _
    $region165: #{novel_hybrid_transformer.1} parent=1 // pred_fallthru
      _
    // Predicated region
    $region166: #{novel_hybrid_transformer.1} parent=1 // pred_check
      _
    $region167: #{novel_hybrid_transformer.1} parent=1 // pred_check_branch
      %176 = sbr.rel (0) target = $region169
    $region168: #{novel_hybrid_transformer.1} parent=1 // pred_region
      _
    $region169: #{novel_hybrid_transformer.1} parent=1 // pred_fallthru
      _
    // Predicated region
    $region170: #{novel_hybrid_transformer.1} parent=1 // pred_check
      _
    $region171: #{novel_hybrid_transformer.1} parent=1 // pred_check_branch
      %178 = sbr.rel (0) target = $region173
    $region172: #{novel_hybrid_transformer.1} parent=1 // pred_region
      _
    $region173: #{novel_hybrid_transformer.1} parent=1 // pred_fallthru
      _
    %v180 = vld [vmem:[%s5] sm:$0xff]
    %v181 = vld [vmem:[%s5 + $0x8] sm:$0xff]
    %v182 = vld [vmem:[%s5 + $0x10] sm:$0xff]
    %v183 = vld [vmem:[%s5 + $0x18] sm:$0xff]
    %v184 = vld [vmem:[%s5 + $0x20] sm:$0xff]
    %v185 = vld [vmem:[%s5 + $0x28] sm:$0xff]
    %v186 = vld [vmem:[%s5 + $0x30] sm:$0xff]
    %v187 = vld [vmem:[%s5 + $0x38] sm:$0xff]
    %v188 = vld [vmem:[%s5 + $0x40] sm:$0xff]
    %v189 = vld [vmem:[%s5 + $0x48] sm:$0xff]
    %v190 = vld [vmem:[%s5 + $0x50] sm:$0xff]
    %v191 = vld [vmem:[%s5 + $0x58] sm:$0xff]
    %v192 = vld [vmem:[%s5 + $0x60] sm:$0xff]
    %v193 = vld [vmem:[%s5 + $0x68] sm:$0xff]
    %v194 = vld [vmem:[%s5 + $0x70] sm:$0xff]
    %v195 = vld [vmem:[%s5 + $0x78] sm:$0xff]
    %v196 = vld [vmem:[%s1] sm:$0xff]
    %v197 = vld [vmem:[%s1 + $0x8] sm:$0xf]
    %v198 = vld [vmem:[%s1 + $0xc] sm:$0xff]
    %v199 = vld [vmem:[%s1 + $0x14] sm:$0xf]
    %v200 = vld [vmem:[%s1 + $0x18] sm:$0xff]
    %v201 = vld [vmem:[%s1 + $0x20] sm:$0xf]
    %v202 = vld [vmem:[%s1 + $0x24] sm:$0xff]
    %v203 = vld [vmem:[%s1 + $0x2c] sm:$0xf]
    %v204 = vld [vmem:[%s1 + $0x30] sm:$0xff]
    %v205 = vld [vmem:[%s1 + $0x38] sm:$0xf]
    %v206 = vld [vmem:[%s1 + $0x3c] sm:$0xff]
    %v207 = vld [vmem:[%s1 + $0x44] sm:$0xf]
    %v208 = vld [vmem:[%s1 + $0x48] sm:$0xff]
    %v209 = vld [vmem:[%s1 + $0x50] sm:$0xf]
    %v210 = vld [vmem:[%s1 + $0x54] sm:$0xff]
    %v211 = vld [vmem:[%s1 + $0x5c] sm:$0xf]
    %v212 = vld [vmem:[%s1 + $0x60] sm:$0xff]
    %v213 = vld [vmem:[%s1 + $0x68] sm:$0xf]
    %v214 = vld [vmem:[%s1 + $0x6c] sm:$0xff]
    %v215 = vld [vmem:[%s1 + $0x74] sm:$0xf]
    %v216 = vld [vmem:[%s1 + $0x78] sm:$0xff]
    %v217 = vld [vmem:[%s1 + $0x80] sm:$0xf]
    %v218 = vld [vmem:[%s1 + $0x84] sm:$0xff]
    %v219 = vld [vmem:[%s1 + $0x8c] sm:$0xf]
    %v220 = vld [vmem:[%s1 + $0x90] sm:$0xff]
    %v221 = vld [vmem:[%s1 + $0x98] sm:$0xf]
    %v222 = vld [vmem:[%s1 + $0x9c] sm:$0xff]
    %v223 = vld [vmem:[%s1 + $0xa4] sm:$0xf]
    %v224 = vld [vmem:[%s1 + $0xa8] sm:$0xff]
    %v225 = vld [vmem:[%s1 + $0xb0] sm:$0xf]
    %v226 = vld [vmem:[%s1 + $0xb4] sm:$0xff]
    %v227 = vld [vmem:[%s1 + $0xbc] sm:$0xf]
    %v228 = vld [vmem:[%s7] sm:$0xf]
    %v229 = vld [vmem:[%s7 + $0x4] sm:$0xf]
    %v230 = vld [vmem:[%s7 + $0x8] sm:$0xf]
    %v231 = vld [vmem:[%s7 + $0xc] sm:$0xf]
    %v232 = vld [vmem:[%s7 + $0x10] sm:$0xf]
    %v233 = vld [vmem:[%s7 + $0x14] sm:$0xf]
    %v234 = vld [vmem:[%s7 + $0x18] sm:$0xf]
    %v235 = vld [vmem:[%s7 + $0x1c] sm:$0xf]
    %v236 = vld [vmem:[%s7 + $0x20] sm:$0xf]
    %v237 = vld [vmem:[%s7 + $0x24] sm:$0xf]
    %v238 = vld [vmem:[%s7 + $0x28] sm:$0xf]
    %v239 = vld [vmem:[%s7 + $0x2c] sm:$0xf]
    %v240 = vld [vmem:[%s7 + $0x30] sm:$0xf]
    %v241 = vld [vmem:[%s7 + $0x34] sm:$0xf]
    %v242 = vld [vmem:[%s7 + $0x38] sm:$0xf]
    %v243 = vld [vmem:[%s7 + $0x3c] sm:$0xf]
    %v244 = vld [vmem:[%s7 + $0x40] sm:$0xf]
    %v245 = vld [vmem:[%s7 + $0x44] sm:$0xf]
    %v246 = vld [vmem:[%s7 + $0x48] sm:$0xf]
    %v247 = vld [vmem:[%s7 + $0x4c] sm:$0xf]
    %v248 = vld [vmem:[%s7 + $0x50] sm:$0xf]
    %v249 = vld [vmem:[%s7 + $0x54] sm:$0xf]
    %v250 = vld [vmem:[%s7 + $0x58] sm:$0xf]
    %v251 = vld [vmem:[%s7 + $0x5c] sm:$0xf]
    %v252 = vld [vmem:[%s7 + $0x60] sm:$0xf]
    %v253 = vld [vmem:[%s7 + $0x64] sm:$0xf]
    %v254 = vld [vmem:[%s7 + $0x68] sm:$0xf]
    %v255 = vld [vmem:[%s7 + $0x6c] sm:$0xf]
    %v256 = vld [vmem:[%s7 + $0x70] sm:$0xf]
    %v257 = vld [vmem:[%s7 + $0x74] sm:$0xf]
    %v258 = vld [vmem:[%s7 + $0x78] sm:$0xf]
    %v259 = vld [vmem:[%s7 + $0x7c] sm:$0xf]
    %v260 = vld [vmem:[%s7 + $0x80] sm:$0xf]
    %v261 = vld [vmem:[%s7 + $0x84] sm:$0xf]
    %v262 = vld [vmem:[%s7 + $0x88] sm:$0xf]
    %v263 = vld [vmem:[%s7 + $0x8c] sm:$0xf]
    %v264 = vld [vmem:[%s9] sm:$0x1]
    %v266 = vlaneseq
    %v267 = vshrl.u32 %v266, 7
    %v268 = vsub.s32 0, %v267
    %v269 = vrot.slane %v264, %v268
    %v303 = vunpack.c.l.b16 %v196
    %v304 = vunpack.c.h.b16 %v196
    %v305 = vunpack.c.l.b16 %v197
    %v306 = vunpack.c.l.b16 %v198
    %v307 = vunpack.c.h.b16 %v198
    %v308 = vunpack.c.l.b16 %v199
    %v309 = vunpack.c.l.b16 %v200
    %v310 = vunpack.c.h.b16 %v200
    %v311 = vunpack.c.l.b16 %v201
    %v312 = vunpack.c.l.b16 %v202
    %v313 = vunpack.c.h.b16 %v202
    %v314 = vunpack.c.l.b16 %v203
    %v315 = vunpack.c.l.b16 %v204
    %v316 = vunpack.c.h.b16 %v204
    %v317 = vunpack.c.l.b16 %v205
    %v318 = vunpack.c.l.b16 %v206
    %v319 = vunpack.c.h.b16 %v206
    %v320 = vunpack.c.l.b16 %v207
    %v321 = vunpack.c.l.b16 %v208
    %v322 = vunpack.c.h.b16 %v208
    %v323 = vunpack.c.l.b16 %v209
    %v324 = vunpack.c.l.b16 %v210
    %v325 = vunpack.c.h.b16 %v210
    %v326 = vunpack.c.l.b16 %v211
    %v327 = vunpack.c.l.b16 %v212
    %v328 = vunpack.c.h.b16 %v212
    %v329 = vunpack.c.l.b16 %v213
    %v330 = vunpack.c.l.b16 %v214
    %v331 = vunpack.c.h.b16 %v214
    %v332 = vunpack.c.l.b16 %v215
    %v333 = vunpack.c.l.b16 %v216
    %v334 = vunpack.c.h.b16 %v216
    %v335 = vunpack.c.l.b16 %v217
    %v336 = vunpack.c.l.b16 %v218
    %v337 = vunpack.c.h.b16 %v218
    %v338 = vunpack.c.l.b16 %v219
    %v339 = vunpack.c.l.b16 %v220
    %v340 = vunpack.c.h.b16 %v220
    %v341 = vunpack.c.l.b16 %v221
    %v342 = vunpack.c.l.b16 %v222
    %v343 = vunpack.c.h.b16 %v222
    %v344 = vunpack.c.l.b16 %v223
    %v345 = vunpack.c.l.b16 %v224
    %v346 = vunpack.c.h.b16 %v224
    %v347 = vunpack.c.l.b16 %v225
    %v348 = vunpack.c.l.b16 %v226
    %v349 = vunpack.c.h.b16 %v226
    %v350 = vunpack.c.l.b16 %v227
    %v351 = vpack.c.b16 %v306, %v303
    %v352 = vpack.c.b16 %v307, %v304
    %v353 = vpack.c.b16 %v308, %v305
    %v354 = vpack.c.b16 %v312, %v309
    %v355 = vpack.c.b16 %v313, %v310
    %v356 = vpack.c.b16 %v314, %v311
    %v357 = vpack.c.b16 %v318, %v315
    %v358 = vpack.c.b16 %v319, %v316
    %v359 = vpack.c.b16 %v320, %v317
    %v360 = vpack.c.b16 %v324, %v321
    %v361 = vpack.c.b16 %v325, %v322
    %v362 = vpack.c.b16 %v326, %v323
    %v363 = vpack.c.b16 %v330, %v327
    %v364 = vpack.c.b16 %v331, %v328
    %v365 = vpack.c.b16 %v332, %v329
    %v366 = vpack.c.b16 %v336, %v333
    %v367 = vpack.c.b16 %v337, %v334
    %v368 = vpack.c.b16 %v338, %v335
    %v369 = vpack.c.b16 %v342, %v339
    %v370 = vpack.c.b16 %v343, %v340
    %v371 = vpack.c.b16 %v344, %v341
    %v372 = vpack.c.b16 %v348, %v345
    %v373 = vpack.c.b16 %v349, %v346
    %v374 = vpack.c.b16 %v350, %v347
    %v427 = vunpack.c.l.b16 %v228
    %v428 = vunpack.c.l.b16 %v229
    %v429 = vunpack.c.l.b16 %v230
    %v430 = vunpack.c.l.b16 %v231
    %v431 = vunpack.c.l.b16 %v232
    %v432 = vunpack.c.l.b16 %v233
    %v433 = vunpack.c.l.b16 %v234
    %v434 = vunpack.c.l.b16 %v235
    %v435 = vunpack.c.l.b16 %v236
    %v436 = vunpack.c.l.b16 %v237
    %v437 = vunpack.c.l.b16 %v238
    %v438 = vunpack.c.l.b16 %v239
    %v439 = vunpack.c.l.b16 %v240
    %v440 = vunpack.c.l.b16 %v241
    %v441 = vunpack.c.l.b16 %v242
    %v442 = vunpack.c.l.b16 %v243
    %v443 = vunpack.c.l.b16 %v244
    %v444 = vunpack.c.l.b16 %v245
    %v445 = vunpack.c.l.b16 %v246
    %v446 = vunpack.c.l.b16 %v247
    %v447 = vunpack.c.l.b16 %v248
    %v448 = vunpack.c.l.b16 %v249
    %v449 = vunpack.c.l.b16 %v250
    %v450 = vunpack.c.l.b16 %v251
    %v451 = vunpack.c.l.b16 %v252
    %v452 = vunpack.c.l.b16 %v253
    %v453 = vunpack.c.l.b16 %v254
    %v454 = vunpack.c.l.b16 %v255
    %v455 = vunpack.c.l.b16 %v256
    %v456 = vunpack.c.l.b16 %v257
    %v457 = vunpack.c.l.b16 %v258
    %v458 = vunpack.c.l.b16 %v259
    %v459 = vunpack.c.l.b16 %v260
    %v460 = vunpack.c.l.b16 %v261
    %v461 = vunpack.c.l.b16 %v262
    %v462 = vunpack.c.l.b16 %v263
    %v463 = vpack.c.b16 %v428, %v427
    %v464 = vpack.c.b16 %v430, %v429
    %v465 = vpack.c.b16 %v432, %v431
    %v466 = vpack.c.b16 %v434, %v433
    %v467 = vpack.c.b16 %v436, %v435
    %v468 = vpack.c.b16 %v438, %v437
    %v469 = vpack.c.b16 %v440, %v439
    %v470 = vpack.c.b16 %v442, %v441
    %v471 = vpack.c.b16 %v444, %v443
    %v472 = vpack.c.b16 %v446, %v445
    %v473 = vpack.c.b16 %v448, %v447
    %v474 = vpack.c.b16 %v450, %v449
    %v475 = vpack.c.b16 %v452, %v451
    %v476 = vpack.c.b16 %v454, %v453
    %v477 = vpack.c.b16 %v456, %v455
    %v478 = vpack.c.b16 %v458, %v457
    %v479 = vpack.c.b16 %v460, %v459
    %v480 = vpack.c.b16 %v462, %v461
    %vm499 = vcmask 261120
    %v501 = vsel %vm499, %v353, 0
    %v504 = vsel %vm499, %v356, 0
    %v507 = vsel %vm499, %v359, 0
    %v510 = vsel %vm499, %v362, 0
    %v513 = vsel %vm499, %v365, 0
    %v516 = vsel %vm499, %v368, 0
    %v519 = vsel %vm499, %v371, 0
    %v522 = vsel %vm499, %v374, 0
    %524 = vmatprep.subr.bf16.mxu0 0
    %525 = vmatpush1.bf16.msra.mxu0 %v463
    %526 = vmatprep.subr.bf16.mxu0 0
    %527 = vmatpush1.bf16.msra.mxu0 %v464
    %528 = vmatprep.subr.bf16.mxu0 0
    %529 = vmatpush1.bf16.msra.mxu0 %v465
    %530 = vmatprep.subr.bf16.mxu0 0
    %531 = vmatpush1.bf16.msra.mxu0 %v466
    %532 = vmatprep.subr.bf16.mxu0 0
    %533 = vmatpush1.bf16.msra.mxu0 %v467
    %534 = vmatprep.subr.bf16.mxu0 0
    %535 = vmatpush1.bf16.msra.mxu0 %v468
    %536 = vmatprep.subr.bf16.mxu0 0
    %537 = vmatpush1.bf16.msra.mxu0 %v469
    %538 = vmatprep.subr.bf16.mxu0 0
    %539 = vmatpush1.bf16.msra.mxu0 %v470
    %540 = vmatprep.subr.bf16.mxu0 0
    %541 = vmatpush1.bf16.msra.mxu0 %v471
    %542 = vmatprep.subr.bf16.mxu0 0
    %543 = vmatpush1.bf16.msra.mxu0 %v472
    %544 = vmatprep.subr.bf16.mxu0 0
    %545 = vmatpush1.bf16.msra.mxu0 %v473
    %546 = vmatprep.subr.bf16.mxu0 0
    %547 = vmatpush1.bf16.msra.mxu0 %v474
    %548 = vmatprep.subr.bf16.mxu0 0
    %549 = vmatpush1.bf16.msra.mxu0 %v475
    %550 = vmatprep.subr.bf16.mxu0 0
    %551 = vmatpush1.bf16.msra.mxu0 %v476
    %552 = vmatprep.subr.bf16.mxu0 0
    %553 = vmatpush1.bf16.msra.mxu0 %v477
    %554 = vmatprep.subr.bf16.mxu0 0
    %555 = vmatpush1.bf16.msra.mxu0 %v478
    %556 = vmatprep.mubr.bf16.mxu0 %v352
    %557 = vmatmul.mubr.bf16.gmra.mrb[0].mxu0 %v351
    %v558 = vpop.f32.mrb[0].mxu0
    %v559 = vadd.f32 %v269, %v558
    %v560 = vpop.f32.mrb[0].mxu0
    %v561 = vpop.f32.mrb[0].mxu0
    %v562 = vadd.f32 %v269, %v561
    %v563 = vpop.f32.mrb[0].mxu0
    %564 = vmatprep.mubr.bf16.mxu0 %v355
    %565 = vmatmul.mubr.bf16.gmra.mrb[0].mxu0 %v354
    %v566 = vpop.f32.mrb[0].mxu0
    %v567 = vadd.f32 %v269, %v566
    %v568 = vpop.f32.mrb[0].mxu0
    %v569 = vpop.f32.mrb[0].mxu0
    %v570 = vadd.f32 %v269, %v569
    %v571 = vpop.f32.mrb[0].mxu0
    %572 = vmatprep.mubr.bf16.mxu0 %v358
    %573 = vmatmul.mubr.bf16.gmra.mrb[0].mxu0 %v357
    %v574 = vpop.f32.mrb[0].mxu0
    %v575 = vadd.f32 %v269, %v574
    %v576 = vpop.f32.mrb[0].mxu0
    %v577 = vpop.f32.mrb[0].mxu0
    %v578 = vadd.f32 %v269, %v577
    %v579 = vpop.f32.mrb[0].mxu0
    %580 = vmatprep.mubr.bf16.mxu0 %v361
    %581 = vmatmul.mubr.bf16.gmra.mrb[0].mxu0 %v360
    %v582 = vpop.f32.mrb[0].mxu0
    %v583 = vadd.f32 %v269, %v582
    %v584 = vpop.f32.mrb[0].mxu0
    %v585 = vpop.f32.mrb[0].mxu0
    %v586 = vadd.f32 %v269, %v585
    %v587 = vpop.f32.mrb[0].mxu0
    %588 = vmatprep.mubr.bf16.mxu0 %v364
    %589 = vmatmul.mubr.bf16.gmra.mrb[0].mxu0 %v363
    %v590 = vpop.f32.mrb[0].mxu0
    %v591 = vadd.f32 %v269, %v590
    %v592 = vpop.f32.mrb[0].mxu0
    %v593 = vpop.f32.mrb[0].mxu0
    %v594 = vadd.f32 %v269, %v593
    %v595 = vpop.f32.mrb[0].mxu0
    %596 = vmatprep.mubr.bf16.mxu0 %v367
    %597 = vmatmul.mubr.bf16.gmra.mrb[0].mxu0 %v366
    %v598 = vpop.f32.mrb[0].mxu0
    %v599 = vadd.f32 %v269, %v598
    %v600 = vpop.f32.mrb[0].mxu0
    %v601 = vpop.f32.mrb[0].mxu0
    %v602 = vadd.f32 %v269, %v601
    %v603 = vpop.f32.mrb[0].mxu0
    %604 = vmatprep.mubr.bf16.mxu0 %v370
    %605 = vmatmul.mubr.bf16.gmra.mrb[0].mxu0 %v369
    %v606 = vpop.f32.mrb[0].mxu0
    %v607 = vadd.f32 %v269, %v606
    %v608 = vpop.f32.mrb[0].mxu0
    %v609 = vpop.f32.mrb[0].mxu0
    %v610 = vadd.f32 %v269, %v609
    %v611 = vpop.f32.mrb[0].mxu0
    %612 = vmatprep.mubr.bf16.mxu0 %v373
    %613 = vmatmul.mubr.bf16.gmra.mrb[0].mxu0 %v372
    %v614 = vpop.f32.mrb[0].mxu0
    %v615 = vadd.f32 %v269, %v614
    %v616 = vpop.f32.mrb[0].mxu0
    %v617 = vpop.f32.mrb[0].mxu0
    %v618 = vadd.f32 %v269, %v617
    %v619 = vpop.f32.mrb[0].mxu0
    %620 = vdwg.mxu0
    %621 = vmatprep.subr.bf16.mxu0 0
    %622 = vmatpush1.bf16.msra.mxu0 %v479
    %623 = vmatprep.subr.bf16.mxu0 0
    %624 = vmatpush1.bf16.msra.mxu0 %v480
    %625 = vmatprep.subr.bf16.mxu0 0
    %626 = vmatpush1.bf16.msra.mxu0 0
    %627 = vmatprep.subr.bf16.mxu0 0
    %628 = vmatpush1.bf16.msra.mxu0 0
    %629 = vmatprep.subr.bf16.mxu0 0
    %630 = vmatpush1.bf16.msra.mxu0 0
    %631 = vmatprep.subr.bf16.mxu0 0
    %632 = vmatpush1.bf16.msra.mxu0 0
    %633 = vmatprep.subr.bf16.mxu0 0
    %634 = vmatpush1.bf16.msra.mxu0 0
    %635 = vmatprep.subr.bf16.mxu0 0
    %636 = vmatpush1.bf16.msra.mxu0 0
    %637 = vmatprep.subr.bf16.mxu0 0
    %638 = vmatpush1.bf16.msra.mxu0 0
    %639 = vmatprep.subr.bf16.mxu0 0
    %640 = vmatpush1.bf16.msra.mxu0 0
    %641 = vmatprep.subr.bf16.mxu0 0
    %642 = vmatpush1.bf16.msra.mxu0 0
    %643 = vmatprep.subr.bf16.mxu0 0
    %644 = vmatpush1.bf16.msra.mxu0 0
    %645 = vmatprep.subr.bf16.mxu0 0
    %646 = vmatpush1.bf16.msra.mxu0 0
    %647 = vmatprep.subr.bf16.mxu0 0
    %648 = vmatpush1.bf16.msra.mxu0 0
    %649 = vmatprep.subr.bf16.mxu0 0
    %650 = vmatpush1.bf16.msra.mxu0 0
    %651 = vmatprep.subr.bf16.mxu0 0
    %652 = vmatpush1.bf16.msra.mxu0 0
    %653 = vmatprep.mubr.bf16.mxu0 0
    %654 = vmatmul.mubr.bf16.gmra.mrb[0].mxu0 %v501
    %v655 = vpop.f32.mrb[0].mxu0
    %v656 = vadd.f32 %v559, %v655
    %v657 = vpop.f32.mrb[0].mxu0
    %v658 = vpop.f32.mrb[0].mxu0
    %v659 = vadd.f32 %v562, %v658
    %v660 = vpop.f32.mrb[0].mxu0
    %661 = vmatprep.mubr.bf16.mxu0 0
    %662 = vmatmul.mubr.bf16.gmra.mrb[0].mxu0 %v504
    %v663 = vpop.f32.mrb[0].mxu0
    %v664 = vadd.f32 %v567, %v663
    %v665 = vpop.f32.mrb[0].mxu0
    %v666 = vpop.f32.mrb[0].mxu0
    %v667 = vadd.f32 %v570, %v666
    %v668 = vpop.f32.mrb[0].mxu0
    %669 = vmatprep.mubr.bf16.mxu0 0
    %670 = vmatmul.mubr.bf16.gmra.mrb[0].mxu0 %v507
    %v671 = vpop.f32.mrb[0].mxu0
    %v672 = vadd.f32 %v575, %v671
    %v673 = vpop.f32.mrb[0].mxu0
    %v674 = vpop.f32.mrb[0].mxu0
    %v675 = vadd.f32 %v578, %v674
    %v676 = vpop.f32.mrb[0].mxu0
    %677 = vmatprep.mubr.bf16.mxu0 0
    %678 = vmatmul.mubr.bf16.gmra.mrb[0].mxu0 %v510
    %v679 = vpop.f32.mrb[0].mxu0
    %v680 = vadd.f32 %v583, %v679
    %v681 = vpop.f32.mrb[0].mxu0
    %v682 = vpop.f32.mrb[0].mxu0
    %v683 = vadd.f32 %v586, %v682
    %v684 = vpop.f32.mrb[0].mxu0
    %685 = vmatprep.mubr.bf16.mxu0 0
    %686 = vmatmul.mubr.bf16.gmra.mrb[0].mxu0 %v513
    %v687 = vpop.f32.mrb[0].mxu0
    %v688 = vadd.f32 %v591, %v687
    %v689 = vpop.f32.mrb[0].mxu0
    %v690 = vpop.f32.mrb[0].mxu0
    %v691 = vadd.f32 %v594, %v690
    %v692 = vpop.f32.mrb[0].mxu0
    %693 = vmatprep.mubr.bf16.mxu0 0
    %694 = vmatmul.mubr.bf16.gmra.mrb[0].mxu0 %v516
    %v695 = vpop.f32.mrb[0].mxu0
    %v696 = vadd.f32 %v599, %v695
    %v697 = vpop.f32.mrb[0].mxu0
    %v698 = vpop.f32.mrb[0].mxu0
    %v699 = vadd.f32 %v602, %v698
    %v700 = vpop.f32.mrb[0].mxu0
    %701 = vmatprep.mubr.bf16.mxu0 0
    %702 = vmatmul.mubr.bf16.gmra.mrb[0].mxu0 %v519
    %v703 = vpop.f32.mrb[0].mxu0
    %v704 = vadd.f32 %v607, %v703
    %v705 = vpop.f32.mrb[0].mxu0
    %v706 = vpop.f32.mrb[0].mxu0
    %v707 = vadd.f32 %v610, %v706
    %v708 = vpop.f32.mrb[0].mxu0
    %709 = vmatprep.mubr.bf16.mxu0 0
    %710 = vmatmul.mubr.bf16.gmra.mrb[0].mxu0 %v522
    %v711 = vpop.f32.mrb[0].mxu0
    %v712 = vadd.f32 %v615, %v711
    %v713 = vpop.f32.mrb[0].mxu0
    %v714 = vpop.f32.mrb[0].mxu0
    %v715 = vadd.f32 %v618, %v714
    %v716 = vpop.f32.mrb[0].mxu0
    %717 = vdwg.mxu0
    %v718 = vmax.f32 %v656, 0.0
    %v719 = vmax.f32 %v659, 0.0
    %v720 = vmax.f32 %v664, 0.0
    %v721 = vmax.f32 %v667, 0.0
    %v722 = vmax.f32 %v672, 0.0
    %v723 = vmax.f32 %v675, 0.0
    %v724 = vmax.f32 %v680, 0.0
    %v725 = vmax.f32 %v683, 0.0
    %v726 = vmax.f32 %v688, 0.0
    %v727 = vmax.f32 %v691, 0.0
    %v728 = vmax.f32 %v696, 0.0
    %v729 = vmax.f32 %v699, 0.0
    %v730 = vmax.f32 %v704, 0.0
    %v731 = vmax.f32 %v707, 0.0
    %v732 = vmax.f32 %v712, 0.0
    %v733 = vmax.f32 %v715, 0.0
    %v734 = vld [vmem:[%s3] sm:$0xff]
    %v735 = vld [vmem:[%s3 + $0x8] sm:$0xf]
    %v736 = vld [vmem:[%s3 + $0xc] sm:$0xff]
    %v737 = vld [vmem:[%s3 + $0x14] sm:$0xf]
    %v738 = vld [vmem:[%s3 + $0x18] sm:$0xff]
    %v739 = vld [vmem:[%s3 + $0x20] sm:$0xf]
    %v740 = vld [vmem:[%s3 + $0x24] sm:$0xff]
    %v741 = vld [vmem:[%s3 + $0x2c] sm:$0xf]
    %v742 = vld [vmem:[%s3 + $0x30] sm:$0xff]
    %v743 = vld [vmem:[%s3 + $0x38] sm:$0xf]
    %v744 = vld [vmem:[%s3 + $0x3c] sm:$0xff]
    %v745 = vld [vmem:[%s3 + $0x44] sm:$0xf]
    %v746 = vld [vmem:[%s3 + $0x48] sm:$0xff]
    %v747 = vld [vmem:[%s3 + $0x50] sm:$0xf]
    %v748 = vld [vmem:[%s3 + $0x54] sm:$0xff]
    %v749 = vld [vmem:[%s3 + $0x5c] sm:$0xf]
    %v750 = vld [vmem:[%s3 + $0x60] sm:$0xff]
    %v751 = vld [vmem:[%s3 + $0x68] sm:$0xf]
    %v752 = vld [vmem:[%s3 + $0x6c] sm:$0xff]
    %v753 = vld [vmem:[%s3 + $0x74] sm:$0xf]
    %v754 = vld [vmem:[%s3 + $0x78] sm:$0xff]
    %v755 = vld [vmem:[%s3 + $0x80] sm:$0xf]
    %v756 = vld [vmem:[%s3 + $0x84] sm:$0xff]
    %v757 = vld [vmem:[%s3 + $0x8c] sm:$0xf]
    %v758 = vld [vmem:[%s3 + $0x90] sm:$0xff]
    %v759 = vld [vmem:[%s3 + $0x98] sm:$0xf]
    %v760 = vld [vmem:[%s3 + $0x9c] sm:$0xff]
    %v761 = vld [vmem:[%s3 + $0xa4] sm:$0xf]
    %v762 = vld [vmem:[%s3 + $0xa8] sm:$0xff]
    %v763 = vld [vmem:[%s3 + $0xb0] sm:$0xf]
    %v764 = vld [vmem:[%s3 + $0xb4] sm:$0xff]
    %v765 = vld [vmem:[%s3 + $0xbc] sm:$0xf]
    %v766 = vld [vmem:[%s11] sm:$0xf]
    %v767 = vld [vmem:[%s11 + $0x4] sm:$0xf]
    %v768 = vld [vmem:[%s11 + $0x8] sm:$0xf]
    %v769 = vld [vmem:[%s11 + $0xc] sm:$0xf]
    %v770 = vld [vmem:[%s11 + $0x10] sm:$0xf]
    %v771 = vld [vmem:[%s11 + $0x14] sm:$0xf]
    %v772 = vld [vmem:[%s11 + $0x18] sm:$0xf]
    %v773 = vld [vmem:[%s11 + $0x1c] sm:$0xf]
    %v774 = vld [vmem:[%s11 + $0x20] sm:$0xf]
    %v775 = vld [vmem:[%s11 + $0x24] sm:$0xf]
    %v776 = vld [vmem:[%s11 + $0x28] sm:$0xf]
    %v777 = vld [vmem:[%s11 + $0x2c] sm:$0xf]
    %v778 = vld [vmem:[%s11 + $0x30] sm:$0xf]
    %v779 = vld [vmem:[%s11 + $0x34] sm:$0xf]
    %v780 = vld [vmem:[%s11 + $0x38] sm:$0xf]
    %v781 = vld [vmem:[%s11 + $0x3c] sm:$0xf]
    %v782 = vld [vmem:[%s11 + $0x40] sm:$0xf]
    %v783 = vld [vmem:[%s11 + $0x44] sm:$0xf]
    %v784 = vld [vmem:[%s11 + $0x48] sm:$0xf]
    %v785 = vld [vmem:[%s11 + $0x4c] sm:$0xf]
    %v786 = vld [vmem:[%s11 + $0x50] sm:$0xf]
    %v787 = vld [vmem:[%s11 + $0x54] sm:$0xf]
    %v788 = vld [vmem:[%s11 + $0x58] sm:$0xf]
    %v789 = vld [vmem:[%s11 + $0x5c] sm:$0xf]
    %v790 = vld [vmem:[%s11 + $0x60] sm:$0xf]
    %v791 = vld [vmem:[%s11 + $0x64] sm:$0xf]
    %v792 = vld [vmem:[%s11 + $0x68] sm:$0xf]
    %v793 = vld [vmem:[%s11 + $0x6c] sm:$0xf]
    %v794 = vld [vmem:[%s11 + $0x70] sm:$0xf]
    %v795 = vld [vmem:[%s11 + $0x74] sm:$0xf]
    %v796 = vld [vmem:[%s11 + $0x78] sm:$0xf]
    %v797 = vld [vmem:[%s11 + $0x7c] sm:$0xf]
    %v798 = vld [vmem:[%s11 + $0x80] sm:$0xf]
    %v799 = vld [vmem:[%s11 + $0x84] sm:$0xf]
    %v800 = vld [vmem:[%s11 + $0x88] sm:$0xf]
    %v801 = vld [vmem:[%s11 + $0x8c] sm:$0xf]
    %v802 = vld [vmem:[%s13] sm:$0x1]
    %v804 = vlaneseq
    %v805 = vshrl.u32 %v804, 7
    %v806 = vsub.s32 0, %v805
    %v807 = vrot.slane %v802, %v806
    %v841 = vunpack.c.l.b16 %v734
    %v842 = vunpack.c.h.b16 %v734
    %v843 = vunpack.c.l.b16 %v735
    %v844 = vunpack.c.l.b16 %v736
    %v845 = vunpack.c.h.b16 %v736
    %v846 = vunpack.c.l.b16 %v737
    %v847 = vunpack.c.l.b16 %v738
    %v848 = vunpack.c.h.b16 %v738
    %v849 = vunpack.c.l.b16 %v739
    %v850 = vunpack.c.l.b16 %v740
    %v851 = vunpack.c.h.b16 %v740
    %v852 = vunpack.c.l.b16 %v741
    %v853 = vunpack.c.l.b16 %v742
    %v854 = vunpack.c.h.b16 %v742
    %v855 = vunpack.c.l.b16 %v743
    %v856 = vunpack.c.l.b16 %v744
    %v857 = vunpack.c.h.b16 %v744
    %v858 = vunpack.c.l.b16 %v745
    %v859 = vunpack.c.l.b16 %v746
    %v860 = vunpack.c.h.b16 %v746
    %v861 = vunpack.c.l.b16 %v747
    %v862 = vunpack.c.l.b16 %v748
    %v863 = vunpack.c.h.b16 %v748
    %v864 = vunpack.c.l.b16 %v749
    %v865 = vunpack.c.l.b16 %v750
    %v866 = vunpack.c.h.b16 %v750
    %v867 = vunpack.c.l.b16 %v751
    %v868 = vunpack.c.l.b16 %v752
    %v869 = vunpack.c.h.b16 %v752
    %v870 = vunpack.c.l.b16 %v753
    %v871 = vunpack.c.l.b16 %v754
    %v872 = vunpack.c.h.b16 %v754
    %v873 = vunpack.c.l.b16 %v755
    %v874 = vunpack.c.l.b16 %v756
    %v875 = vunpack.c.h.b16 %v756
    %v876 = vunpack.c.l.b16 %v757
    %v877 = vunpack.c.l.b16 %v758
    %v878 = vunpack.c.h.b16 %v758
    %v879 = vunpack.c.l.b16 %v759
    %v880 = vunpack.c.l.b16 %v760
    %v881 = vunpack.c.h.b16 %v760
    %v882 = vunpack.c.l.b16 %v761
    %v883 = vunpack.c.l.b16 %v762
    %v884 = vunpack.c.h.b16 %v762
    %v885 = vunpack.c.l.b16 %v763
    %v886 = vunpack.c.l.b16 %v764
    %v887 = vunpack.c.h.b16 %v764
    %v888 = vunpack.c.l.b16 %v765
    %v889 = vpack.c.b16 %v844, %v841
    %v890 = vpack.c.b16 %v845, %v842
    %v891 = vpack.c.b16 %v846, %v843
    %v892 = vpack.c.b16 %v850, %v847
    %v893 = vpack.c.b16 %v851, %v848
    %v894 = vpack.c.b16 %v852, %v849
    %v895 = vpack.c.b16 %v856, %v853
    %v896 = vpack.c.b16 %v857, %v854
    %v897 = vpack.c.b16 %v858, %v855
    %v898 = vpack.c.b16 %v862, %v859
    %v899 = vpack.c.b16 %v863, %v860
    %v900 = vpack.c.b16 %v864, %v861
    %v901 = vpack.c.b16 %v868, %v865
    %v902 = vpack.c.b16 %v869, %v866
    %v903 = vpack.c.b16 %v870, %v867
    %v904 = vpack.c.b16 %v874, %v871
    %v905 = vpack.c.b16 %v875, %v872
    %v906 = vpack.c.b16 %v876, %v873
    %v907 = vpack.c.b16 %v880, %v877
    %v908 = vpack.c.b16 %v881, %v878
    %v909 = vpack.c.b16 %v882, %v879
    %v910 = vpack.c.b16 %v886, %v883
    %v911 = vpack.c.b16 %v887, %v884
    %v912 = vpack.c.b16 %v888, %v885
    %v965 = vunpack.c.l.b16 %v766
    %v966 = vunpack.c.l.b16 %v767
    %v967 = vunpack.c.l.b16 %v768
    %v968 = vunpack.c.l.b16 %v769
    %v969 = vunpack.c.l.b16 %v770
    %v970 = vunpack.c.l.b16 %v771
    %v971 = vunpack.c.l.b16 %v772
    %v972 = vunpack.c.l.b16 %v773
    %v973 = vunpack.c.l.b16 %v774
    %v974 = vunpack.c.l.b16 %v775
    %v975 = vunpack.c.l.b16 %v776
    %v976 = vunpack.c.l.b16 %v777
    %v977 = vunpack.c.l.b16 %v778
    %v978 = vunpack.c.l.b16 %v779
    %v979 = vunpack.c.l.b16 %v780
    %v980 = vunpack.c.l.b16 %v781
    %v981 = vunpack.c.l.b16 %v782
    %v982 = vunpack.c.l.b16 %v783
    %v983 = vunpack.c.l.b16 %v784
    %v984 = vunpack.c.l.b16 %v785
    %v985 = vunpack.c.l.b16 %v786
    %v986 = vunpack.c.l.b16 %v787
    %v987 = vunpack.c.l.b16 %v788
    %v988 = vunpack.c.l.b16 %v789
    %v989 = vunpack.c.l.b16 %v790
    %v990 = vunpack.c.l.b16 %v791
    %v991 = vunpack.c.l.b16 %v792
    %v992 = vunpack.c.l.b16 %v793
    %v993 = vunpack.c.l.b16 %v794
    %v994 = vunpack.c.l.b16 %v795
    %v995 = vunpack.c.l.b16 %v796
    %v996 = vunpack.c.l.b16 %v797
    %v997 = vunpack.c.l.b16 %v798
    %v998 = vunpack.c.l.b16 %v799
    %v999 = vunpack.c.l.b16 %v800
    %v1000 = vunpack.c.l.b16 %v801
    %v1001 = vpack.c.b16 %v966, %v965
    %v1002 = vpack.c.b16 %v968, %v967
    %v1003 = vpack.c.b16 %v970, %v969
    %v1004 = vpack.c.b16 %v972, %v971
    %v1005 = vpack.c.b16 %v974, %v973
    %v1006 = vpack.c.b16 %v976, %v975
    %v1007 = vpack.c.b16 %v978, %v977
    %v1008 = vpack.c.b16 %v980, %v979
    %v1009 = vpack.c.b16 %v982, %v981
    %v1010 = vpack.c.b16 %v984, %v983
    %v1011 = vpack.c.b16 %v986, %v985
    %v1012 = vpack.c.b16 %v988, %v987
    %v1013 = vpack.c.b16 %v990, %v989
    %v1014 = vpack.c.b16 %v992, %v991
    %v1015 = vpack.c.b16 %v994, %v993
    %v1016 = vpack.c.b16 %v996, %v995
    %v1017 = vpack.c.b16 %v998, %v997
    %v1018 = vpack.c.b16 %v1000, %v999
    %v1038 = vsel %vm499, %v891, 0
    %v1041 = vsel %vm499, %v894, 0
    %v1044 = vsel %vm499, %v897, 0
    %v1047 = vsel %vm499, %v900, 0
    %v1050 = vsel %vm499, %v903, 0
    %v1053 = vsel %vm499, %v906, 0
    %v1056 = vsel %vm499, %v909, 0
    %v1059 = vsel %vm499, %v912, 0
    %1061 = vmatprep.subr.bf16.mxu0 0
    %1062 = vmatpush1.bf16.msra.mxu0 %v1001
    %1063 = vmatprep.subr.bf16.mxu0 0
    %1064 = vmatpush1.bf16.msra.mxu0 %v1002
    %1065 = vmatprep.subr.bf16.mxu0 0
    %1066 = vmatpush1.bf16.msra.mxu0 %v1003
    %1067 = vmatprep.subr.bf16.mxu0 0
    %1068 = vmatpush1.bf16.msra.mxu0 %v1004
    %1069 = vmatprep.subr.bf16.mxu0 0
    %1070 = vmatpush1.bf16.msra.mxu0 %v1005
    %1071 = vmatprep.subr.bf16.mxu0 0
    %1072 = vmatpush1.bf16.msra.mxu0 %v1006
    %1073 = vmatprep.subr.bf16.mxu0 0
    %1074 = vmatpush1.bf16.msra.mxu0 %v1007
    %1075 = vmatprep.subr.bf16.mxu0 0
    %1076 = vmatpush1.bf16.msra.mxu0 %v1008
    %1077 = vmatprep.subr.bf16.mxu0 0
    %1078 = vmatpush1.bf16.msra.mxu0 %v1009
    %1079 = vmatprep.subr.bf16.mxu0 0
    %1080 = vmatpush1.bf16.msra.mxu0 %v1010
    %1081 = vmatprep.subr.bf16.mxu0 0
    %1082 = vmatpush1.bf16.msra.mxu0 %v1011
    %1083 = vmatprep.subr.bf16.mxu0 0
    %1084 = vmatpush1.bf16.msra.mxu0 %v1012
    %1085 = vmatprep.subr.bf16.mxu0 0
    %1086 = vmatpush1.bf16.msra.mxu0 %v1013
    %1087 = vmatprep.subr.bf16.mxu0 0
    %1088 = vmatpush1.bf16.msra.mxu0 %v1014
    %1089 = vmatprep.subr.bf16.mxu0 0
    %1090 = vmatpush1.bf16.msra.mxu0 %v1015
    %1091 = vmatprep.subr.bf16.mxu0 0
    %1092 = vmatpush1.bf16.msra.mxu0 %v1016
    %1093 = vmatprep.mubr.bf16.mxu0 %v890
    %1094 = vmatmul.mubr.bf16.gmra.mrb[0].mxu0 %v889
    %v1095 = vpop.f32.mrb[0].mxu0
    %v1096 = vadd.f32 %v807, %v1095
    %v1097 = vpop.f32.mrb[0].mxu0
    %v1098 = vpop.f32.mrb[0].mxu0
    %v1099 = vadd.f32 %v807, %v1098
    %v1100 = vpop.f32.mrb[0].mxu0
    %1101 = vmatprep.mubr.bf16.mxu0 %v893
    %1102 = vmatmul.mubr.bf16.gmra.mrb[0].mxu0 %v892
    %v1103 = vpop.f32.mrb[0].mxu0
    %v1104 = vadd.f32 %v807, %v1103
    %v1105 = vpop.f32.mrb[0].mxu0
    %v1106 = vpop.f32.mrb[0].mxu0
    %v1107 = vadd.f32 %v807, %v1106
    %v1108 = vpop.f32.mrb[0].mxu0
    %1109 = vmatprep.mubr.bf16.mxu0 %v896
    %1110 = vmatmul.mubr.bf16.gmra.mrb[0].mxu0 %v895
    %v1111 = vpop.f32.mrb[0].mxu0
    %v1112 = vadd.f32 %v807, %v1111
    %v1113 = vpop.f32.mrb[0].mxu0
    %v1114 = vpop.f32.mrb[0].mxu0
    %v1115 = vadd.f32 %v807, %v1114
    %v1116 = vpop.f32.mrb[0].mxu0
    %1117 = vmatprep.mubr.bf16.mxu0 %v899
    %1118 = vmatmul.mubr.bf16.gmra.mrb[0].mxu0 %v898
    %v1119 = vpop.f32.mrb[0].mxu0
    %v1120 = vadd.f32 %v807, %v1119
    %v1121 = vpop.f32.mrb[0].mxu0
    %v1122 = vpop.f32.mrb[0].mxu0
    %v1123 = vadd.f32 %v807, %v1122
    %v1124 = vpop.f32.mrb[0].mxu0
    %1125 = vmatprep.mubr.bf16.mxu0 %v902
    %1126 = vmatmul.mubr.bf16.gmra.mrb[0].mxu0 %v901
    %v1127 = vpop.f32.mrb[0].mxu0
    %v1128 = vadd.f32 %v807, %v1127
    %v1129 = vpop.f32.mrb[0].mxu0
    %v1130 = vpop.f32.mrb[0].mxu0
    %v1131 = vadd.f32 %v807, %v1130
    %v1132 = vpop.f32.mrb[0].mxu0
    %1133 = vmatprep.mubr.bf16.mxu0 %v905
    %1134 = vmatmul.mubr.bf16.gmra.mrb[0].mxu0 %v904
    %v1135 = vpop.f32.mrb[0].mxu0
    %v1136 = vadd.f32 %v807, %v1135
    %v1137 = vpop.f32.mrb[0].mxu0
    %v1138 = vpop.f32.mrb[0].mxu0
    %v1139 = vadd.f32 %v807, %v1138
    %v1140 = vpop.f32.mrb[0].mxu0
    %1141 = vmatprep.mubr.bf16.mxu0 %v908
    %1142 = vmatmul.mubr.bf16.gmra.mrb[0].mxu0 %v907
    %v1143 = vpop.f32.mrb[0].mxu0
    %v1144 = vadd.f32 %v807, %v1143
    %v1145 = vpop.f32.mrb[0].mxu0
    %v1146 = vpop.f32.mrb[0].mxu0
    %v1147 = vadd.f32 %v807, %v1146
    %v1148 = vpop.f32.mrb[0].mxu0
    %1149 = vmatprep.mubr.bf16.mxu0 %v911
    %1150 = vmatmul.mubr.bf16.gmra.mrb[0].mxu0 %v910
    %v1151 = vpop.f32.mrb[0].mxu0
    %v1152 = vadd.f32 %v807, %v1151
    %v1153 = vpop.f32.mrb[0].mxu0
    %v1154 = vpop.f32.mrb[0].mxu0
    %v1155 = vadd.f32 %v807, %v1154
    %v1156 = vpop.f32.mrb[0].mxu0
    %1157 = vdwg.mxu0
    %1158 = vmatprep.subr.bf16.mxu0 0
    %1159 = vmatpush1.bf16.msra.mxu0 %v1017
    %1160 = vmatprep.subr.bf16.mxu0 0
    %1161 = vmatpush1.bf16.msra.mxu0 %v1018
    %1162 = vmatprep.subr.bf16.mxu0 0
    %1163 = vmatpush1.bf16.msra.mxu0 0
    %1164 = vmatprep.subr.bf16.mxu0 0
    %1165 = vmatpush1.bf16.msra.mxu0 0
    %1166 = vmatprep.subr.bf16.mxu0 0
    %1167 = vmatpush1.bf16.msra.mxu0 0
    %1168 = vmatprep.subr.bf16.mxu0 0
    %1169 = vmatpush1.bf16.msra.mxu0 0
    %1170 = vmatprep.subr.bf16.mxu0 0
    %1171 = vmatpush1.bf16.msra.mxu0 0
    %1172 = vmatprep.subr.bf16.mxu0 0
    %1173 = vmatpush1.bf16.msra.mxu0 0
    %1174 = vmatprep.subr.bf16.mxu0 0
    %1175 = vmatpush1.bf16.msra.mxu0 0
    %1176 = vmatprep.subr.bf16.mxu0 0
    %1177 = vmatpush1.bf16.msra.mxu0 0
    %1178 = vmatprep.subr.bf16.mxu0 0
    %1179 = vmatpush1.bf16.msra.mxu0 0
    %1180 = vmatprep.subr.bf16.mxu0 0
    %1181 = vmatpush1.bf16.msra.mxu0 0
    %1182 = vmatprep.subr.bf16.mxu0 0
    %1183 = vmatpush1.bf16.msra.mxu0 0
    %1184 = vmatprep.subr.bf16.mxu0 0
    %1185 = vmatpush1.bf16.msra.mxu0 0
    %1186 = vmatprep.subr.bf16.mxu0 0
    %1187 = vmatpush1.bf16.msra.mxu0 0
    %1188 = vmatprep.subr.bf16.mxu0 0
    %1189 = vmatpush1.bf16.msra.mxu0 0
    %1190 = vmatprep.mubr.bf16.mxu0 0
    %1191 = vmatmul.mubr.bf16.gmra.mrb[0].mxu0 %v1038
    %v1192 = vpop.f32.mrb[0].mxu0
    %v1193 = vadd.f32 %v1096, %v1192
    %v1194 = vpop.f32.mrb[0].mxu0
    %v1195 = vpop.f32.mrb[0].mxu0
    %v1196 = vadd.f32 %v1099, %v1195
    %v1197 = vpop.f32.mrb[0].mxu0
    %1198 = vmatprep.mubr.bf16.mxu0 0
    %1199 = vmatmul.mubr.bf16.gmra.mrb[0].mxu0 %v1041
    %v1200 = vpop.f32.mrb[0].mxu0
    %v1201 = vadd.f32 %v1104, %v1200
    %v1202 = vpop.f32.mrb[0].mxu0
    %v1203 = vpop.f32.mrb[0].mxu0
    %v1204 = vadd.f32 %v1107, %v1203
    %v1205 = vpop.f32.mrb[0].mxu0
    %1206 = vmatprep.mubr.bf16.mxu0 0
    %1207 = vmatmul.mubr.bf16.gmra.mrb[0].mxu0 %v1044
    %v1208 = vpop.f32.mrb[0].mxu0
    %v1209 = vadd.f32 %v1112, %v1208
    %v1210 = vpop.f32.mrb[0].mxu0
    %v1211 = vpop.f32.mrb[0].mxu0
    %v1212 = vadd.f32 %v1115, %v1211
    %v1213 = vpop.f32.mrb[0].mxu0
    %1214 = vmatprep.mubr.bf16.mxu0 0
    %1215 = vmatmul.mubr.bf16.gmra.mrb[0].mxu0 %v1047
    %v1216 = vpop.f32.mrb[0].mxu0
    %v1217 = vadd.f32 %v1120, %v1216
    %v1218 = vpop.f32.mrb[0].mxu0
    %v1219 = vpop.f32.mrb[0].mxu0
    %v1220 = vadd.f32 %v1123, %v1219
    %v1221 = vpop.f32.mrb[0].mxu0
    %1222 = vmatprep.mubr.bf16.mxu0 0
    %1223 = vmatmul.mubr.bf16.gmra.mrb[0].mxu0 %v1050
    %v1224 = vpop.f32.mrb[0].mxu0
    %v1225 = vadd.f32 %v1128, %v1224
    %v1226 = vpop.f32.mrb[0].mxu0
    %v1227 = vpop.f32.mrb[0].mxu0
    %v1228 = vadd.f32 %v1131, %v1227
    %v1229 = vpop.f32.mrb[0].mxu0
    %1230 = vmatprep.mubr.bf16.mxu0 0
    %1231 = vmatmul.mubr.bf16.gmra.mrb[0].mxu0 %v1053
    %v1232 = vpop.f32.mrb[0].mxu0
    %v1233 = vadd.f32 %v1136, %v1232
    %v1234 = vpop.f32.mrb[0].mxu0
    %v1235 = vpop.f32.mrb[0].mxu0
    %v1236 = vadd.f32 %v1139, %v1235
    %v1237 = vpop.f32.mrb[0].mxu0
    %1238 = vmatprep.mubr.bf16.mxu0 0
    %1239 = vmatmul.mubr.bf16.gmra.mrb[0].mxu0 %v1056
    %v1240 = vpop.f32.mrb[0].mxu0
    %v1241 = vadd.f32 %v1144, %v1240
    %v1242 = vpop.f32.mrb[0].mxu0
    %v1243 = vpop.f32.mrb[0].mxu0
    %v1244 = vadd.f32 %v1147, %v1243
    %v1245 = vpop.f32.mrb[0].mxu0
    %1246 = vmatprep.mubr.bf16.mxu0 0
    %1247 = vmatmul.mubr.bf16.gmra.mrb[0].mxu0 %v1059
    %v1248 = vpop.f32.mrb[0].mxu0
    %v1249 = vadd.f32 %v1152, %v1248
    %v1250 = vpop.f32.mrb[0].mxu0
    %v1251 = vpop.f32.mrb[0].mxu0
    %v1252 = vadd.f32 %v1155, %v1251
    %v1253 = vpop.f32.mrb[0].mxu0
    %1254 = vdwg.mxu0
    %v1255 = vmax.f32 %v1193, 0.0
    %v1256 = vmax.f32 %v1196, 0.0
    %v1257 = vmax.f32 %v1201, 0.0
    %v1258 = vmax.f32 %v1204, 0.0
    %v1259 = vmax.f32 %v1209, 0.0
    %v1260 = vmax.f32 %v1212, 0.0
    %v1261 = vmax.f32 %v1217, 0.0
    %v1262 = vmax.f32 %v1220, 0.0
    %v1263 = vmax.f32 %v1225, 0.0
    %v1264 = vmax.f32 %v1228, 0.0
    %v1265 = vmax.f32 %v1233, 0.0
    %v1266 = vmax.f32 %v1236, 0.0
    %v1267 = vmax.f32 %v1241, 0.0
    %v1268 = vmax.f32 %v1244, 0.0
    %v1269 = vmax.f32 %v1249, 0.0
    %v1270 = vmax.f32 %v1252, 0.0
    %v1271 = vsel %vm499, %v180, 0.0
    %v1272 = vsel %vm499, %v181, 0.0
    %v1273 = vadd.f32 %v1271, %v1272
    %v1274 = vsel %vm499, %v182, 0.0
    %v1275 = vadd.f32 %v1273, %v1274
    %v1276 = vsel %vm499, %v183, 0.0
    %v1277 = vadd.f32 %v1275, %v1276
    %v1278 = vsel %vm499, %v184, 0.0
    %v1279 = vadd.f32 %v1277, %v1278
    %v1280 = vsel %vm499, %v185, 0.0
    %v1281 = vadd.f32 %v1279, %v1280
    %v1282 = vsel %vm499, %v186, 0.0
    %v1283 = vadd.f32 %v1281, %v1282
    %v1284 = vsel %vm499, %v187, 0.0
    %v1285 = vadd.f32 %v1283, %v1284
    %v1286 = vrot.slane %v1285, 4
    %v1287 = vadd.f32 %v1285, %v1286
    %v1288 = vrot.slane %v1287, 2
    %v1289 = vadd.f32 %v1287, %v1288
    %v1290 = vrot.slane %v1289, 1
    %v1291 = vadd.f32 %v1289, %v1290
    %v1292 = vrcp.pop 64.0
    %v1293 = vmul.f32 %v1291, %v1292
    %v1294 = vsel %vm499, %v188, 0.0
    %v1295 = vsel %vm499, %v189, 0.0
    %v1296 = vadd.f32 %v1294, %v1295
    %v1297 = vsel %vm499, %v190, 0.0
    %v1298 = vadd.f32 %v1296, %v1297
    %v1299 = vsel %vm499, %v191, 0.0
    %v1300 = vadd.f32 %v1298, %v1299
    %v1301 = vsel %vm499, %v192, 0.0
    %v1302 = vadd.f32 %v1300, %v1301
    %v1303 = vsel %vm499, %v193, 0.0
    %v1304 = vadd.f32 %v1302, %v1303
    %v1305 = vsel %vm499, %v194, 0.0
    %v1306 = vadd.f32 %v1304, %v1305
    %v1307 = vsel %vm499, %v195, 0.0
    %v1308 = vadd.f32 %v1306, %v1307
    %v1309 = vrot.slane %v1308, 4
    %v1310 = vadd.f32 %v1308, %v1309
    %v1311 = vrot.slane %v1310, 2
    %v1312 = vadd.f32 %v1310, %v1311
    %v1313 = vrot.slane %v1312, 1
    %v1314 = vadd.f32 %v1312, %v1313
    %v1315 = vmul.f32 %v1314, %v1292
    %vm1316 = vcmask 1040384
    %v1317 = vsel %vm1316, %v1293, %v1315
    %v1318 = vpack.c.bf16 %v1317, %v1317
    %v1319 = vld [vmem:[%s15] sm:$0xf]
    %v1320 = vld [vmem:[%s15 + $0x4] sm:$0xf]
    %v1321 = vld [vmem:[%s15 + $0x8] sm:$0xf]
    %v1322 = vld [vmem:[%s15 + $0xc] sm:$0xf]
    %v1323 = vld [vmem:[%s17] sm:$0x1]
    %v1325 = vlaneseq
    %v1326 = vshrl.u32 %v1325, 7
    %v1327 = vsub.s32 0, %v1326
    %v1328 = vrot.slane %v1323, %v1327
    %v1334 = vunpack.c.l.b16 %v1319
    %v1335 = vunpack.c.l.b16 %v1320
    %v1336 = vunpack.c.l.b16 %v1321
    %v1337 = vunpack.c.l.b16 %v1322
    %v1338 = vpack.c.b16 %v1335, %v1334
    %v1339 = vpack.c.b16 %v1337, %v1336
    %v1343 = vsel %vm499, %v1318, 0
    %1345 = vmatprep.subr.bf16.mxu0 0
    %1346 = vmatpush1.bf16.msra.mxu0 %v1338
    %1347 = vmatprep.subr.bf16.mxu0 0
    %1348 = vmatpush1.bf16.msra.mxu0 %v1339
    %1349 = vmatprep.subr.bf16.mxu0 0
    %1350 = vmatpush1.bf16.msra.mxu0 0
    %1351 = vmatprep.subr.bf16.mxu0 0
    %1352 = vmatpush1.bf16.msra.mxu0 0
    %1353 = vmatprep.subr.bf16.mxu0 0
    %1354 = vmatpush1.bf16.msra.mxu0 0
    %1355 = vmatprep.subr.bf16.mxu0 0
    %1356 = vmatpush1.bf16.msra.mxu0 0
    %1357 = vmatprep.subr.bf16.mxu0 0
    %1358 = vmatpush1.bf16.msra.mxu0 0
    %1359 = vmatprep.subr.bf16.mxu0 0
    %1360 = vmatpush1.bf16.msra.mxu0 0
    %1361 = vmatprep.subr.bf16.mxu0 0
    %1362 = vmatpush1.bf16.msra.mxu0 0
    %1363 = vmatprep.subr.bf16.mxu0 0
    %1364 = vmatpush1.bf16.msra.mxu0 0
    %1365 = vmatprep.subr.bf16.mxu0 0
    %1366 = vmatpush1.bf16.msra.mxu0 0
    %1367 = vmatprep.subr.bf16.mxu0 0
    %1368 = vmatpush1.bf16.msra.mxu0 0
    %1369 = vmatprep.subr.bf16.mxu0 0
    %1370 = vmatpush1.bf16.msra.mxu0 0
    %1371 = vmatprep.subr.bf16.mxu0 0
    %1372 = vmatpush1.bf16.msra.mxu0 0
    %1373 = vmatprep.subr.bf16.mxu0 0
    %1374 = vmatpush1.bf16.msra.mxu0 0
    %1375 = vmatprep.subr.bf16.mxu0 0
    %1376 = vmatpush1.bf16.msra.mxu0 0
    %1377 = vmatprep.mubr.bf16.mxu0 0
    %1378 = vmatmul.mubr.bf16.gmra.mrb[0].mxu0 %v1343
    %v1379 = vpop.f32.mrb[0].mxu0
    %v1380 = vadd.f32 %v1328, %v1379
    %v1381 = vpop.f32.mrb[0].mxu0
    %v1382 = vpop.f32.mrb[0].mxu0
    %v1383 = vpop.f32.mrb[0].mxu0
    %1384 = vdwg.mxu0
    %v1385 = vmax.f32 %v1380, 0.0
    %v1386 = vpack.c.bf16 %v1385, %v1385
    %v1387 = vld [vmem:[%s19] sm:$0x3]
    %v1388 = vld [vmem:[%s21] sm:$0x1]
    %v1390 = vlaneseq
    %v1391 = vshrl.u32 %v1390, 7
    %v1392 = vsub.s32 0, %v1391
    %v1393 = vrot.slane %v1388, %v1392
    %vm1395 = vcmask 31744
    %v1397 = vsel %vm1395, %v1386, 0
    %vm1399 = vcmask 1041408
    %v1401 = vsel %vm1399, %v1387, 0
    %1403 = vmatprep.subr.bf16.mxu0 0
    %1404 = vmatpush1.bf16.msra.mxu0 %v1401
    %1405 = vmatprep.subr.bf16.mxu0 0
    %1406 = vmatpush1.bf16.msra.mxu0 0
    %1407 = vmatprep.subr.bf16.mxu0 0
    %1408 = vmatpush1.bf16.msra.mxu0 0
    %1409 = vmatprep.subr.bf16.mxu0 0
    %1410 = vmatpush1.bf16.msra.mxu0 0
    %1411 = vmatprep.subr.bf16.mxu0 0
    %1412 = vmatpush1.bf16.msra.mxu0 0
    %1413 = vmatprep.subr.bf16.mxu0 0
    %1414 = vmatpush1.bf16.msra.mxu0 0
    %1415 = vmatprep.subr.bf16.mxu0 0
    %1416 = vmatpush1.bf16.msra.mxu0 0
    %1417 = vmatprep.subr.bf16.mxu0 0
    %1418 = vmatpush1.bf16.msra.mxu0 0
    %1419 = vmatprep.subr.bf16.mxu0 0
    %1420 = vmatpush1.bf16.msra.mxu0 0
    %1421 = vmatprep.subr.bf16.mxu0 0
    %1422 = vmatpush1.bf16.msra.mxu0 0
    %1423 = vmatprep.subr.bf16.mxu0 0
    %1424 = vmatpush1.bf16.msra.mxu0 0
    %1425 = vmatprep.subr.bf16.mxu0 0
    %1426 = vmatpush1.bf16.msra.mxu0 0
    %1427 = vmatprep.subr.bf16.mxu0 0
    %1428 = vmatpush1.bf16.msra.mxu0 0
    %1429 = vmatprep.subr.bf16.mxu0 0
    %1430 = vmatpush1.bf16.msra.mxu0 0
    %1431 = vmatprep.subr.bf16.mxu0 0
    %1432 = vmatpush1.bf16.msra.mxu0 0
    %1433 = vmatprep.subr.bf16.mxu0 0
    %1434 = vmatpush1.bf16.msra.mxu0 0
    %1435 = vmatprep.mubr.bf16.mxu0 0
    %1436 = vmatmul.mubr.bf16.gmra.mrb[0].mxu0 %v1397
    %v1437 = vpop.f32.mrb[0].mxu0
    %v1438 = vadd.f32 %v1393, %v1437
    %v1439 = vpop.f32.mrb[0].mxu0
    %v1440 = vpop.f32.mrb[0].mxu0
    %v1441 = vpop.f32.mrb[0].mxu0
    %1442 = vdwg.mxu0
    %v1443 = vxor.u32 %v1438, 2147483648
    %v1444 = vmul.f32 %v1443, 1.442695
    %v1445 = vpow.pop %v1444
    %v1446 = vadd.f32 %v1445, 1.0
    %v1447 = vrcp.pop %v1446
    %v1448 = vmul.f32 1.0, %v1447
    %v1449 = vlaneseq
    %v1450 = vshrl.u32 %v1449, 7
    %v1451 = vsub.s32 0, %v1450
    %v1452 = vrot.slane %v1448, %v1451
    %v1453 = vmul.f32 %v180, %v1452
    %v1454 = vmul.f32 %v181, %v1452
    %v1455 = vmul.f32 %v182, %v1452
    %v1456 = vmul.f32 %v183, %v1452
    %v1457 = vmul.f32 %v184, %v1452
    %v1458 = vmul.f32 %v185, %v1452
    %v1459 = vmul.f32 %v186, %v1452
    %v1460 = vmul.f32 %v187, %v1452
    %v1461 = vlaneseq
    %v1462 = vshrl.u32 %v1461, 7
    %v1463 = vsub.s32 1, %v1462
    %v1464 = vrot.slane %v1448, %v1463
    %v1465 = vmul.f32 %v188, %v1464
    %v1466 = vmul.f32 %v189, %v1464
    %v1467 = vmul.f32 %v190, %v1464
    %v1468 = vmul.f32 %v191, %v1464
    %v1469 = vmul.f32 %v192, %v1464
    %v1470 = vmul.f32 %v193, %v1464
    %v1471 = vmul.f32 %v194, %v1464
    %v1472 = vmul.f32 %v195, %v1464
    %v1473 = vadd.f32 %v718, %v1255
    %v1474 = vadd.f32 %v719, %v1256
    %v1475 = vadd.f32 %v720, %v1257
    %v1476 = vadd.f32 %v721, %v1258
    %v1477 = vadd.f32 %v722, %v1259
    %v1478 = vadd.f32 %v723, %v1260
    %v1479 = vadd.f32 %v724, %v1261
    %v1480 = vadd.f32 %v725, %v1262
    %v1481 = vadd.f32 %v726, %v1263
    %v1482 = vadd.f32 %v727, %v1264
    %v1483 = vadd.f32 %v728, %v1265
    %v1484 = vadd.f32 %v729, %v1266
    %v1485 = vadd.f32 %v730, %v1267
    %v1486 = vadd.f32 %v731, %v1268
    %v1487 = vadd.f32 %v732, %v1269
    %v1488 = vadd.f32 %v733, %v1270
    %v1489 = vadd.f32 %v1473, %v1453
    %v1490 = vadd.f32 %v1474, %v1454
    %v1491 = vadd.f32 %v1475, %v1455
    %v1492 = vadd.f32 %v1476, %v1456
    %v1493 = vadd.f32 %v1477, %v1457
    %v1494 = vadd.f32 %v1478, %v1458
    %v1495 = vadd.f32 %v1479, %v1459
    %v1496 = vadd.f32 %v1480, %v1460
    %v1497 = vadd.f32 %v1481, %v1465
    %v1498 = vadd.f32 %v1482, %v1466
    %v1499 = vadd.f32 %v1483, %v1467
    %v1500 = vadd.f32 %v1484, %v1468
    %v1501 = vadd.f32 %v1485, %v1469
    %v1502 = vadd.f32 %v1486, %v1470
    %v1503 = vadd.f32 %v1487, %v1471
    %v1504 = vadd.f32 %v1488, %v1472
    %v1505 = vmax.f32 %v1489, 0.0
    %v1506 = vmax.f32 %v1490, 0.0
    %v1507 = vmax.f32 %v1491, 0.0
    %v1508 = vmax.f32 %v1492, 0.0
    %v1509 = vmax.f32 %v1493, 0.0
    %v1510 = vmax.f32 %v1494, 0.0
    %v1511 = vmax.f32 %v1495, 0.0
    %v1512 = vmax.f32 %v1496, 0.0
    %v1513 = vmax.f32 %v1497, 0.0
    %v1514 = vmax.f32 %v1498, 0.0
    %v1515 = vmax.f32 %v1499, 0.0
    %v1516 = vmax.f32 %v1500, 0.0
    %v1517 = vmax.f32 %v1501, 0.0
    %v1518 = vmax.f32 %v1502, 0.0
    %v1519 = vmax.f32 %v1503, 0.0
    %v1520 = vmax.f32 %v1504, 0.0
    %v1521 = vpack.c.bf16 %v1506, %v1505
    %v1522 = vpack.c.bf16 %v1508, %v1507
    %v1523 = vpack.c.bf16 %v1510, %v1509
    %v1524 = vpack.c.bf16 %v1512, %v1511
    %v1525 = vpack.c.bf16 %v1514, %v1513
    %v1526 = vpack.c.bf16 %v1516, %v1515
    %v1527 = vpack.c.bf16 %v1518, %v1517
    %v1528 = vpack.c.bf16 %v1520, %v1519
    %v1529 = vld [vmem:[%s23] sm:$0xf]
    %v1530 = vld [vmem:[%s23 + $0x4] sm:$0xf]
    %v1531 = vld [vmem:[%s23 + $0x8] sm:$0xf]
    %v1532 = vld [vmem:[%s23 + $0xc] sm:$0xf]
    %v1533 = vld [vmem:[%s25] sm:$0x1]
    %v1535 = vlaneseq
    %v1536 = vshrl.u32 %v1535, 7
    %v1537 = vsub.s32 0, %v1536
    %v1538 = vrot.slane %v1533, %v1537
    %v1544 = vunpack.c.l.b16 %v1529
    %v1545 = vunpack.c.l.b16 %v1530
    %v1546 = vunpack.c.l.b16 %v1531
    %v1547 = vunpack.c.l.b16 %v1532
    %v1548 = vpack.c.b16 %v1545, %v1544
    %v1549 = vpack.c.b16 %v1547, %v1546
    %v1553 = vsel %vm499, %v1521, 0
    %v1556 = vsel %vm499, %v1522, 0
    %v1559 = vsel %vm499, %v1523, 0
    %v1562 = vsel %vm499, %v1524, 0
    %v1565 = vsel %vm499, %v1525, 0
    %v1568 = vsel %vm499, %v1526, 0
    %v1571 = vsel %vm499, %v1527, 0
    %v1574 = vsel %vm499, %v1528, 0
    %1576 = vmatprep.subr.bf16.mxu0 0
    %1577 = vmatpush1.bf16.msra.mxu0 %v1548
    %1578 = vmatprep.subr.bf16.mxu0 0
    %1579 = vmatpush1.bf16.msra.mxu0 %v1549
    %1580 = vmatprep.subr.bf16.mxu0 0
    %1581 = vmatpush1.bf16.msra.mxu0 0
    %1582 = vmatprep.subr.bf16.mxu0 0
    %1583 = vmatpush1.bf16.msra.mxu0 0
    %1584 = vmatprep.subr.bf16.mxu0 0
    %1585 = vmatpush1.bf16.msra.mxu0 0
    %1586 = vmatprep.subr.bf16.mxu0 0
    %1587 = vmatpush1.bf16.msra.mxu0 0
    %1588 = vmatprep.subr.bf16.mxu0 0
    %1589 = vmatpush1.bf16.msra.mxu0 0
    %1590 = vmatprep.subr.bf16.mxu0 0
    %1591 = vmatpush1.bf16.msra.mxu0 0
    %1592 = vmatprep.subr.bf16.mxu0 0
    %1593 = vmatpush1.bf16.msra.mxu0 0
    %1594 = vmatprep.subr.bf16.mxu0 0
    %1595 = vmatpush1.bf16.msra.mxu0 0
    %1596 = vmatprep.subr.bf16.mxu0 0
    %1597 = vmatpush1.bf16.msra.mxu0 0
    %1598 = vmatprep.subr.bf16.mxu0 0
    %1599 = vmatpush1.bf16.msra.mxu0 0
    %1600 = vmatprep.subr.bf16.mxu0 0
    %1601 = vmatpush1.bf16.msra.mxu0 0
    %1602 = vmatprep.subr.bf16.mxu0 0
    %1603 = vmatpush1.bf16.msra.mxu0 0
    %1604 = vmatprep.subr.bf16.mxu0 0
    %1605 = vmatpush1.bf16.msra.mxu0 0
    %1606 = vmatprep.subr.bf16.mxu0 0
    %1607 = vmatpush1.bf16.msra.mxu0 0
    %1608 = vmatprep.mubr.bf16.mxu0 0
    %1609 = vmatmul.mubr.bf16.gmra.mrb[0].mxu0 %v1553
    %v1610 = vpop.f32.mrb[0].mxu0
    %v1611 = vadd.f32 %v1538, %v1610
    %v1612 = vpop.f32.mrb[0].mxu0
    %v1613 = vpop.f32.mrb[0].mxu0
    %v1614 = vadd.f32 %v1538, %v1613
    %v1615 = vpop.f32.mrb[0].mxu0
    %1616 = vmatprep.mubr.bf16.mxu0 0
    %1617 = vmatmul.mubr.bf16.gmra.mrb[0].mxu0 %v1556
    %v1618 = vpop.f32.mrb[0].mxu0
    %v1619 = vadd.f32 %v1538, %v1618
    %v1620 = vpop.f32.mrb[0].mxu0
    %v1621 = vpop.f32.mrb[0].mxu0
    %v1622 = vadd.f32 %v1538, %v1621
    %v1623 = vpop.f32.mrb[0].mxu0
    %1624 = vmatprep.mubr.bf16.mxu0 0
    %1625 = vmatmul.mubr.bf16.gmra.mrb[0].mxu0 %v1559
    %v1626 = vpop.f32.mrb[0].mxu0
    %v1627 = vadd.f32 %v1538, %v1626
    %v1628 = vpop.f32.mrb[0].mxu0
    %v1629 = vpop.f32.mrb[0].mxu0
    %v1630 = vadd.f32 %v1538, %v1629
    %v1631 = vpop.f32.mrb[0].mxu0
    %1632 = vmatprep.mubr.bf16.mxu0 0
    %1633 = vmatmul.mubr.bf16.gmra.mrb[0].mxu0 %v1562
    %v1634 = vpop.f32.mrb[0].mxu0
    %v1635 = vadd.f32 %v1538, %v1634
    %v1636 = vpop.f32.mrb[0].mxu0
    %v1637 = vpop.f32.mrb[0].mxu0
    %v1638 = vadd.f32 %v1538, %v1637
    %v1639 = vpop.f32.mrb[0].mxu0
    %1640 = vmatprep.mubr.bf16.mxu0 0
    %1641 = vmatmul.mubr.bf16.gmra.mrb[0].mxu0 %v1565
    %v1642 = vpop.f32.mrb[0].mxu0
    %v1643 = vadd.f32 %v1538, %v1642
    %v1644 = vpop.f32.mrb[0].mxu0
    %v1645 = vpop.f32.mrb[0].mxu0
    %v1646 = vadd.f32 %v1538, %v1645
    %v1647 = vpop.f32.mrb[0].mxu0
    %1648 = vmatprep.mubr.bf16.mxu0 0
    %1649 = vmatmul.mubr.bf16.gmra.mrb[0].mxu0 %v1568
    %v1650 = vpop.f32.mrb[0].mxu0
    %v1651 = vadd.f32 %v1538, %v1650
    %v1652 = vpop.f32.mrb[0].mxu0
    %v1653 = vpop.f32.mrb[0].mxu0
    %v1654 = vadd.f32 %v1538, %v1653
    %v1655 = vpop.f32.mrb[0].mxu0
    %1656 = vmatprep.mubr.bf16.mxu0 0
    %1657 = vmatmul.mubr.bf16.gmra.mrb[0].mxu0 %v1571
    %v1658 = vpop.f32.mrb[0].mxu0
    %v1659 = vadd.f32 %v1538, %v1658
    %v1660 = vpop.f32.mrb[0].mxu0
    %v1661 = vpop.f32.mrb[0].mxu0
    %v1662 = vadd.f32 %v1538, %v1661
    %v1663 = vpop.f32.mrb[0].mxu0
    %1664 = vmatprep.mubr.bf16.mxu0 0
    %1665 = vmatmul.mubr.bf16.gmra.mrb[0].mxu0 %v1574
    %v1666 = vpop.f32.mrb[0].mxu0
    %v1667 = vadd.f32 %v1538, %v1666
    %v1668 = vpop.f32.mrb[0].mxu0
    %v1669 = vpop.f32.mrb[0].mxu0
    %v1670 = vadd.f32 %v1538, %v1669
    %v1671 = vpop.f32.mrb[0].mxu0
    %1672 = vdwg.mxu0
    %vm1673 = vcmask 523264
    %v1674 = vsel %vm1673, %v1611, 0.0
    %1675 = vadd.xlane.f32.xlu0 %v1674
    %v1676 = vpop.xlane.xlu0 %1675
    %v1677 = vsel %vm1673, %v1614, 0.0
    %1678 = vadd.xlane.f32.xlu0 %v1677
    %v1679 = vpop.xlane.xlu0 %1678
    %v1680 = vsel %vm1673, %v1619, 0.0
    %1681 = vadd.xlane.f32.xlu0 %v1680
    %v1682 = vpop.xlane.xlu0 %1681
    %v1683 = vsel %vm1673, %v1622, 0.0
    %1684 = vadd.xlane.f32.xlu0 %v1683
    %v1685 = vpop.xlane.xlu0 %1684
    %v1686 = vsel %vm1673, %v1627, 0.0
    %1687 = vadd.xlane.f32.xlu0 %v1686
    %v1688 = vpop.xlane.xlu0 %1687
    %v1689 = vsel %vm1673, %v1630, 0.0
    %1690 = vadd.xlane.f32.xlu0 %v1689
    %v1691 = vpop.xlane.xlu0 %1690
    %v1692 = vsel %vm1673, %v1635, 0.0
    %1693 = vadd.xlane.f32.xlu0 %v1692
    %v1694 = vpop.xlane.xlu0 %1693
    %v1695 = vsel %vm1673, %v1638, 0.0
    %1696 = vadd.xlane.f32.xlu0 %v1695
    %v1697 = vpop.xlane.xlu0 %1696
    %v1698 = vsel %vm1673, %v1643, 0.0
    %1699 = vadd.xlane.f32.xlu0 %v1698
    %v1700 = vpop.xlane.xlu0 %1699
    %v1701 = vsel %vm1673, %v1646, 0.0
    %1702 = vadd.xlane.f32.xlu0 %v1701
    %v1703 = vpop.xlane.xlu0 %1702
    %v1704 = vsel %vm1673, %v1651, 0.0
    %1705 = vadd.xlane.f32.xlu0 %v1704
    %v1706 = vpop.xlane.xlu0 %1705
    %v1707 = vsel %vm1673, %v1654, 0.0
    %1708 = vadd.xlane.f32.xlu0 %v1707
    %v1709 = vpop.xlane.xlu0 %1708
    %v1710 = vsel %vm1673, %v1659, 0.0
    %1711 = vadd.xlane.f32.xlu0 %v1710
    %v1712 = vpop.xlane.xlu0 %1711
    %v1713 = vsel %vm1673, %v1662, 0.0
    %1714 = vadd.xlane.f32.xlu0 %v1713
    %v1715 = vpop.xlane.xlu0 %1714
    %v1716 = vsel %vm1673, %v1667, 0.0
    %1717 = vadd.xlane.f32.xlu0 %v1716
    %v1718 = vpop.xlane.xlu0 %1717
    %v1719 = vsel %vm1673, %v1670, 0.0
    %1720 = vadd.xlane.f32.xlu0 %v1719
    %v1721 = vpop.xlane.xlu0 %1720
    %v1722 = vmul.f32 %v1676, %v1292
    %v1723 = vmul.f32 %v1679, %v1292
    %v1724 = vmul.f32 %v1682, %v1292
    %v1725 = vmul.f32 %v1685, %v1292
    %v1726 = vmul.f32 %v1688, %v1292
    %v1727 = vmul.f32 %v1691, %v1292
    %v1728 = vmul.f32 %v1694, %v1292
    %v1729 = vmul.f32 %v1697, %v1292
    %v1730 = vmul.f32 %v1700, %v1292
    %v1731 = vmul.f32 %v1703, %v1292
    %v1732 = vmul.f32 %v1706, %v1292
    %v1733 = vmul.f32 %v1709, %v1292
    %v1734 = vmul.f32 %v1712, %v1292
    %v1735 = vmul.f32 %v1715, %v1292
    %v1736 = vmul.f32 %v1718, %v1292
    %v1737 = vmul.f32 %v1721, %v1292
    %v1738 = vsub.f32 %v1611, %v1722
    %v1739 = vsub.f32 %v1614, %v1723
    %v1740 = vsub.f32 %v1619, %v1724
    %v1741 = vsub.f32 %v1622, %v1725
    %v1742 = vsub.f32 %v1627, %v1726
    %v1743 = vsub.f32 %v1630, %v1727
    %v1744 = vsub.f32 %v1635, %v1728
    %v1745 = vsub.f32 %v1638, %v1729
    %v1746 = vsub.f32 %v1643, %v1730
    %v1747 = vsub.f32 %v1646, %v1731
    %v1748 = vsub.f32 %v1651, %v1732
    %v1749 = vsub.f32 %v1654, %v1733
    %v1750 = vsub.f32 %v1659, %v1734
    %v1751 = vsub.f32 %v1662, %v1735
    %v1752 = vsub.f32 %v1667, %v1736
    %v1753 = vsub.f32 %v1670, %v1737
    %v1754 = vmul.f32 %v1738, %v1738
    %v1755 = vmul.f32 %v1739, %v1739
    %v1756 = vmul.f32 %v1740, %v1740
    %v1757 = vmul.f32 %v1741, %v1741
    %v1758 = vmul.f32 %v1742, %v1742
    %v1759 = vmul.f32 %v1743, %v1743
    %v1760 = vmul.f32 %v1744, %v1744
    %v1761 = vmul.f32 %v1745, %v1745
    %v1762 = vmul.f32 %v1746, %v1746
    %v1763 = vmul.f32 %v1747, %v1747
    %v1764 = vmul.f32 %v1748, %v1748
    %v1765 = vmul.f32 %v1749, %v1749
    %v1766 = vmul.f32 %v1750, %v1750
    %v1767 = vmul.f32 %v1751, %v1751
    %v1768 = vmul.f32 %v1752, %v1752
    %v1769 = vmul.f32 %v1753, %v1753
    %v1770 = vsel %vm1673, %v1754, 0.0
    %1771 = vadd.xlane.f32.xlu0 %v1770
    %v1772 = vpop.xlane.xlu0 %1771
    %v1773 = vsel %vm1673, %v1755, 0.0
    %1774 = vadd.xlane.f32.xlu0 %v1773
    %v1775 = vpop.xlane.xlu0 %1774
    %v1776 = vsel %vm1673, %v1756, 0.0
    %1777 = vadd.xlane.f32.xlu0 %v1776
    %v1778 = vpop.xlane.xlu0 %1777
    %v1779 = vsel %vm1673, %v1757, 0.0
    %1780 = vadd.xlane.f32.xlu0 %v1779
    %v1781 = vpop.xlane.xlu0 %1780
    %v1782 = vsel %vm1673, %v1758, 0.0
    %1783 = vadd.xlane.f32.xlu0 %v1782
    %v1784 = vpop.xlane.xlu0 %1783
    %v1785 = vsel %vm1673, %v1759, 0.0
    %1786 = vadd.xlane.f32.xlu0 %v1785
    %v1787 = vpop.xlane.xlu0 %1786
    %v1788 = vsel %vm1673, %v1760, 0.0
    %1789 = vadd.xlane.f32.xlu0 %v1788
    %v1790 = vpop.xlane.xlu0 %1789
    %v1791 = vsel %vm1673, %v1761, 0.0
    %1792 = vadd.xlane.f32.xlu0 %v1791
    %v1793 = vpop.xlane.xlu0 %1792
    %v1794 = vsel %vm1673, %v1762, 0.0
    %1795 = vadd.xlane.f32.xlu0 %v1794
    %v1796 = vpop.xlane.xlu0 %1795
    %v1797 = vsel %vm1673, %v1763, 0.0
    %1798 = vadd.xlane.f32.xlu0 %v1797
    %v1799 = vpop.xlane.xlu0 %1798
    %v1800 = vsel %vm1673, %v1764, 0.0
    %1801 = vadd.xlane.f32.xlu0 %v1800
    %v1802 = vpop.xlane.xlu0 %1801
    %v1803 = vsel %vm1673, %v1765, 0.0
    %1804 = vadd.xlane.f32.xlu0 %v1803
    %v1805 = vpop.xlane.xlu0 %1804
    %v1806 = vsel %vm1673, %v1766, 0.0
    %1807 = vadd.xlane.f32.xlu0 %v1806
    %v1808 = vpop.xlane.xlu0 %1807
    %v1809 = vsel %vm1673, %v1767, 0.0
    %1810 = vadd.xlane.f32.xlu0 %v1809
    %v1811 = vpop.xlane.xlu0 %1810
    %v1812 = vsel %vm1673, %v1768, 0.0
    %1813 = vadd.xlane.f32.xlu0 %v1812
    %v1814 = vpop.xlane.xlu0 %1813
    %v1815 = vsel %vm1673, %v1769, 0.0
    %1816 = vadd.xlane.f32.xlu0 %v1815
    %v1817 = vpop.xlane.xlu0 %1816
    %v1818 = vmul.f32 %v1772, %v1292
    %v1819 = vmul.f32 %v1775, %v1292
    %v1820 = vmul.f32 %v1778, %v1292
    %v1821 = vmul.f32 %v1781, %v1292
    %v1822 = vmul.f32 %v1784, %v1292
    %v1823 = vmul.f32 %v1787, %v1292
    %v1824 = vmul.f32 %v1790, %v1292
    %v1825 = vmul.f32 %v1793, %v1292
    %v1826 = vmul.f32 %v1796, %v1292
    %v1827 = vmul.f32 %v1799, %v1292
    %v1828 = vmul.f32 %v1802, %v1292
    %v1829 = vmul.f32 %v1805, %v1292
    %v1830 = vmul.f32 %v1808, %v1292
    %v1831 = vmul.f32 %v1811, %v1292
    %v1832 = vmul.f32 %v1814, %v1292
    %v1833 = vmul.f32 %v1817, %v1292
    %v1834 = vadd.f32 %v1818, 1e-05
    %v1835 = vadd.f32 %v1819, 1e-05
    %v1836 = vadd.f32 %v1820, 1e-05
    %v1837 = vadd.f32 %v1821, 1e-05
    %v1838 = vadd.f32 %v1822, 1e-05
    %v1839 = vadd.f32 %v1823, 1e-05
    %v1840 = vadd.f32 %v1824, 1e-05
    %v1841 = vadd.f32 %v1825, 1e-05
    %v1842 = vadd.f32 %v1826, 1e-05
    %v1843 = vadd.f32 %v1827, 1e-05
    %v1844 = vadd.f32 %v1828, 1e-05
    %v1845 = vadd.f32 %v1829, 1e-05
    %v1846 = vadd.f32 %v1830, 1e-05
    %v1847 = vadd.f32 %v1831, 1e-05
    %v1848 = vadd.f32 %v1832, 1e-05
    %v1849 = vadd.f32 %v1833, 1e-05
    %v1850 = vrsqrt.pop %v1834
    %v1851 = vrsqrt.pop %v1835
    %v1852 = vrsqrt.pop %v1836
    %v1853 = vrsqrt.pop %v1837
    %v1854 = vrsqrt.pop %v1838
    %v1855 = vrsqrt.pop %v1839
    %v1856 = vrsqrt.pop %v1840
    %v1857 = vrsqrt.pop %v1841
    %v1858 = vrsqrt.pop %v1842
    %v1859 = vrsqrt.pop %v1843
    %v1860 = vrsqrt.pop %v1844
    %v1861 = vrsqrt.pop %v1845
    %v1862 = vrsqrt.pop %v1846
    %v1863 = vrsqrt.pop %v1847
    %v1864 = vrsqrt.pop %v1848
    %v1865 = vrsqrt.pop %v1849
    %v1866 = vmul.f32 %v1738, %v1850
    %v1867 = vmul.f32 %v1739, %v1851
    %v1868 = vmul.f32 %v1740, %v1852
    %v1869 = vmul.f32 %v1741, %v1853
    %v1870 = vmul.f32 %v1742, %v1854
    %v1871 = vmul.f32 %v1743, %v1855
    %v1872 = vmul.f32 %v1744, %v1856
    %v1873 = vmul.f32 %v1745, %v1857
    %v1874 = vmul.f32 %v1746, %v1858
    %v1875 = vmul.f32 %v1747, %v1859
    %v1876 = vmul.f32 %v1748, %v1860
    %v1877 = vmul.f32 %v1749, %v1861
    %v1878 = vmul.f32 %v1750, %v1862
    %v1879 = vmul.f32 %v1751, %v1863
    %v1880 = vmul.f32 %v1752, %v1864
    %v1881 = vmul.f32 %v1753, %v1865
    %v1882 = vld [vmem:[%s27] sm:$0x1]
    %v1884 = vlaneseq
    %v1885 = vshrl.u32 %v1884, 7
    %v1886 = vsub.s32 0, %v1885
    %v1887 = vrot.slane %v1882, %v1886
    %v1889 = vmul.f32 %v1866, %v1887
    %v1890 = vmul.f32 %v1867, %v1887
    %v1891 = vmul.f32 %v1868, %v1887
    %v1892 = vmul.f32 %v1869, %v1887
    %v1893 = vmul.f32 %v1870, %v1887
    %v1894 = vmul.f32 %v1871, %v1887
    %v1895 = vmul.f32 %v1872, %v1887
    %v1896 = vmul.f32 %v1873, %v1887
    %v1897 = vmul.f32 %v1874, %v1887
    %v1898 = vmul.f32 %v1875, %v1887
    %v1899 = vmul.f32 %v1876, %v1887
    %v1900 = vmul.f32 %v1877, %v1887
    %v1901 = vmul.f32 %v1878, %v1887
    %v1902 = vmul.f32 %v1879, %v1887
    %v1903 = vmul.f32 %v1880, %v1887
    %v1904 = vmul.f32 %v1881, %v1887
    %v1905 = vld [vmem:[%s29] sm:$0x1]
    %v1907 = vlaneseq
    %v1908 = vshrl.u32 %v1907, 7
    %v1909 = vsub.s32 0, %v1908
    %v1910 = vrot.slane %v1905, %v1909
    %v1912 = vadd.f32 %v1889, %v1910
    %v1913 = vadd.f32 %v1890, %v1910
    %v1914 = vadd.f32 %v1891, %v1910
    %v1915 = vadd.f32 %v1892, %v1910
    %v1916 = vadd.f32 %v1893, %v1910
    %v1917 = vadd.f32 %v1894, %v1910
    %v1918 = vadd.f32 %v1895, %v1910
    %v1919 = vadd.f32 %v1896, %v1910
    %v1920 = vadd.f32 %v1897, %v1910
    %v1921 = vadd.f32 %v1898, %v1910
    %v1922 = vadd.f32 %v1899, %v1910
    %v1923 = vadd.f32 %v1900, %v1910
    %v1924 = vadd.f32 %v1901, %v1910
    %v1925 = vadd.f32 %v1902, %v1910
    %v1926 = vadd.f32 %v1903, %v1910
    %v1927 = vadd.f32 %v1904, %v1910
    %v1928 = vpack.c.bf16 %v1913, %v1912
    %v1929 = vpack.c.bf16 %v1915, %v1914
    %v1930 = vpack.c.bf16 %v1917, %v1916
    %v1931 = vpack.c.bf16 %v1919, %v1918
    %v1932 = vpack.c.bf16 %v1921, %v1920
    %v1933 = vpack.c.bf16 %v1923, %v1922
    %v1934 = vpack.c.bf16 %v1925, %v1924
    %v1935 = vpack.c.bf16 %v1927, %v1926
    %v1936 = vld [vmem:[%s31] sm:$0xff]
    %v1937 = vld [vmem:[%s31 + $0x8] sm:$0xff]
    %v1938 = vld [vmem:[%s31 + $0x10] sm:$0xff]
    %v1939 = vld [vmem:[%s31 + $0x18] sm:$0xff]
    %v1940 = vld [vmem:[%s31 + $0x20] sm:$0xff]
    %v1941 = vld [vmem:[%s31 + $0x28] sm:$0xff]
    %v1942 = vld [vmem:[%s31 + $0x30] sm:$0xff]
    %v1943 = vld [vmem:[%s31 + $0x38] sm:$0xff]
    %v1944 = vld [vmem:[%s33] sm:$0x3]
    %v1946 = vlaneseq
    %v1947 = vshrl.u32 %v1946, 7
    %v1948 = vsub.s32 0, %v1947
    %v1949 = vrot.slane %v1944, %v1948
    %v1950 = vlaneseq
    %v1951 = vshrl.u32 %v1950, 7
    %v1952 = vsub.s32 1, %v1951
    %v1953 = vrot.slane %v1944, %v1952
    %v1964 = vunpack.c.l.b16 %v1936
    %v1965 = vunpack.c.h.b16 %v1936
    %v1966 = vunpack.c.l.b16 %v1937
    %v1967 = vunpack.c.h.b16 %v1937
    %v1968 = vunpack.c.l.b16 %v1938
    %v1969 = vunpack.c.h.b16 %v1938
    %v1970 = vunpack.c.l.b16 %v1939
    %v1971 = vunpack.c.h.b16 %v1939
    %v1972 = vunpack.c.l.b16 %v1940
    %v1973 = vunpack.c.h.b16 %v1940
    %v1974 = vunpack.c.l.b16 %v1941
    %v1975 = vunpack.c.h.b16 %v1941
    %v1976 = vunpack.c.l.b16 %v1942
    %v1977 = vunpack.c.h.b16 %v1942
    %v1978 = vunpack.c.l.b16 %v1943
    %v1979 = vunpack.c.h.b16 %v1943
    %v1980 = vpack.c.b16 %v1966, %v1964
    %v1981 = vpack.c.b16 %v1967, %v1965
    %v1982 = vpack.c.b16 %v1970, %v1968
    %v1983 = vpack.c.b16 %v1971, %v1969
    %v1984 = vpack.c.b16 %v1974, %v1972
    %v1985 = vpack.c.b16 %v1975, %v1973
    %v1986 = vpack.c.b16 %v1978, %v1976
    %v1987 = vpack.c.b16 %v1979, %v1977
    %v1997 = vsel %vm1673, %v1928, 0
    %v2000 = vsel %vm1673, %v1929, 0
    %v2003 = vsel %vm1673, %v1930, 0
    %v2006 = vsel %vm1673, %v1931, 0
    %v2009 = vsel %vm1673, %v1932, 0
    %v2012 = vsel %vm1673, %v1933, 0
    %v2015 = vsel %vm1673, %v1934, 0
    %v2018 = vsel %vm1673, %v1935, 0
    %2020 = vmatprep.subr.bf16.mxu0 %v1981
    %2021 = vmatpush1.bf16.msra.mxu0 %v1980
    %2022 = vmatprep.subr.bf16.mxu0 %v1983
    %2023 = vmatpush1.bf16.msra.mxu0 %v1982
    %2024 = vmatprep.subr.bf16.mxu0 %v1985
    %2025 = vmatpush1.bf16.msra.mxu0 %v1984
    %2026 = vmatprep.subr.bf16.mxu0 %v1987
    %2027 = vmatpush1.bf16.msra.mxu0 %v1986
    %2028 = vmatprep.subr.bf16.mxu0 0
    %2029 = vmatpush1.bf16.msra.mxu0 0
    %2030 = vmatprep.subr.bf16.mxu0 0
    %2031 = vmatpush1.bf16.msra.mxu0 0
    %2032 = vmatprep.subr.bf16.mxu0 0
    %2033 = vmatpush1.bf16.msra.mxu0 0
    %2034 = vmatprep.subr.bf16.mxu0 0
    %2035 = vmatpush1.bf16.msra.mxu0 0
    %2036 = vmatprep.subr.bf16.mxu0 0
    %2037 = vmatpush1.bf16.msra.mxu0 0
    %2038 = vmatprep.subr.bf16.mxu0 0
    %2039 = vmatpush1.bf16.msra.mxu0 0
    %2040 = vmatprep.subr.bf16.mxu0 0
    %2041 = vmatpush1.bf16.msra.mxu0 0
    %2042 = vmatprep.subr.bf16.mxu0 0
    %2043 = vmatpush1.bf16.msra.mxu0 0
    %2044 = vmatprep.subr.bf16.mxu0 0
    %2045 = vmatpush1.bf16.msra.mxu0 0
    %2046 = vmatprep.subr.bf16.mxu0 0
    %2047 = vmatpush1.bf16.msra.mxu0 0
    %2048 = vmatprep.subr.bf16.mxu0 0
    %2049 = vmatpush1.bf16.msra.mxu0 0
    %2050 = vmatprep.subr.bf16.mxu0 0
    %2051 = vmatpush1.bf16.msra.mxu0 0
    %2052 = vmatprep.mubr.bf16.mxu0 0
    %2053 = vmatmul.mubr.bf16.gmra.mrb[0].mxu0 %v1997
    %v2054 = vpop.f32.mrb[0].mxu0
    %v2055 = vadd.f32 %v1949, %v2054
    %v2056 = vpop.f32.mrb[0].mxu0
    %v2057 = vadd.f32 %v1953, %v2056
    %v2058 = vpop.f32.mrb[0].mxu0
    %v2059 = vadd.f32 %v1949, %v2058
    %v2060 = vpop.f32.mrb[0].mxu0
    %v2061 = vadd.f32 %v1953, %v2060
    %2062 = vmatprep.mubr.bf16.mxu0 0
    %2063 = vmatmul.mubr.bf16.gmra.mrb[0].mxu0 %v2000
    %v2064 = vpop.f32.mrb[0].mxu0
    %v2065 = vadd.f32 %v1949, %v2064
    %v2066 = vpop.f32.mrb[0].mxu0
    %v2067 = vadd.f32 %v1953, %v2066
    %v2068 = vpop.f32.mrb[0].mxu0
    %v2069 = vadd.f32 %v1949, %v2068
    %v2070 = vpop.f32.mrb[0].mxu0
    %v2071 = vadd.f32 %v1953, %v2070
    %2072 = vmatprep.mubr.bf16.mxu0 0
    %2073 = vmatmul.mubr.bf16.gmra.mrb[0].mxu0 %v2003
    %v2074 = vpop.f32.mrb[0].mxu0
    %v2075 = vadd.f32 %v1949, %v2074
    %v2076 = vpop.f32.mrb[0].mxu0
    %v2077 = vadd.f32 %v1953, %v2076
    %v2078 = vpop.f32.mrb[0].mxu0
    %v2079 = vadd.f32 %v1949, %v2078
    %v2080 = vpop.f32.mrb[0].mxu0
    %v2081 = vadd.f32 %v1953, %v2080
    %2082 = vmatprep.mubr.bf16.mxu0 0
    %2083 = vmatmul.mubr.bf16.gmra.mrb[0].mxu0 %v2006
    %v2084 = vpop.f32.mrb[0].mxu0
    %v2085 = vadd.f32 %v1949, %v2084
    %v2086 = vpop.f32.mrb[0].mxu0
    %v2087 = vadd.f32 %v1953, %v2086
    %v2088 = vpop.f32.mrb[0].mxu0
    %v2089 = vadd.f32 %v1949, %v2088
    %v2090 = vpop.f32.mrb[0].mxu0
    %v2091 = vadd.f32 %v1953, %v2090
    %2092 = vmatprep.mubr.bf16.mxu0 0
    %2093 = vmatmul.mubr.bf16.gmra.mrb[0].mxu0 %v2009
    %v2094 = vpop.f32.mrb[0].mxu0
    %v2095 = vadd.f32 %v1949, %v2094
    %v2096 = vpop.f32.mrb[0].mxu0
    %v2097 = vadd.f32 %v1953, %v2096
    %v2098 = vpop.f32.mrb[0].mxu0
    %v2099 = vadd.f32 %v1949, %v2098
    %v2100 = vpop.f32.mrb[0].mxu0
    %v2101 = vadd.f32 %v1953, %v2100
    %2102 = vmatprep.mubr.bf16.mxu0 0
    %2103 = vmatmul.mubr.bf16.gmra.mrb[0].mxu0 %v2012
    %v2104 = vpop.f32.mrb[0].mxu0
    %v2105 = vadd.f32 %v1949, %v2104
    %v2106 = vpop.f32.mrb[0].mxu0
    %v2107 = vadd.f32 %v1953, %v2106
    %v2108 = vpop.f32.mrb[0].mxu0
    %v2109 = vadd.f32 %v1949, %v2108
    %v2110 = vpop.f32.mrb[0].mxu0
    %v2111 = vadd.f32 %v1953, %v2110
    %2112 = vmatprep.mubr.bf16.mxu0 0
    %2113 = vmatmul.mubr.bf16.gmra.mrb[0].mxu0 %v2015
    %v2114 = vpop.f32.mrb[0].mxu0
    %v2115 = vadd.f32 %v1949, %v2114
    %v2116 = vpop.f32.mrb[0].mxu0
    %v2117 = vadd.f32 %v1953, %v2116
    %v2118 = vpop.f32.mrb[0].mxu0
    %v2119 = vadd.f32 %v1949, %v2118
    %v2120 = vpop.f32.mrb[0].mxu0
    %v2121 = vadd.f32 %v1953, %v2120
    %2122 = vmatprep.mubr.bf16.mxu0 0
    %2123 = vmatmul.mubr.bf16.gmra.mrb[0].mxu0 %v2018
    %v2124 = vpop.f32.mrb[0].mxu0
    %v2125 = vadd.f32 %v1949, %v2124
    %v2126 = vpop.f32.mrb[0].mxu0
    %v2127 = vadd.f32 %v1953, %v2126
    %v2128 = vpop.f32.mrb[0].mxu0
    %v2129 = vadd.f32 %v1949, %v2128
    %v2130 = vpop.f32.mrb[0].mxu0
    %v2131 = vadd.f32 %v1953, %v2130
    %2132 = vdwg.mxu0
    %v2133 = vpack.c.bf16 %v2059, %v2055
    %v2134 = vpack.c.bf16 %v2061, %v2057
    %v2135 = vpack.c.bf16 %v2069, %v2065
    %v2136 = vpack.c.bf16 %v2071, %v2067
    %v2137 = vpack.c.bf16 %v2079, %v2075
    %v2138 = vpack.c.bf16 %v2081, %v2077
    %v2139 = vpack.c.bf16 %v2089, %v2085
    %v2140 = vpack.c.bf16 %v2091, %v2087
    %v2141 = vpack.c.bf16 %v2099, %v2095
    %v2142 = vpack.c.bf16 %v2101, %v2097
    %v2143 = vpack.c.bf16 %v2109, %v2105
    %v2144 = vpack.c.bf16 %v2111, %v2107
    %v2145 = vpack.c.bf16 %v2119, %v2115
    %v2146 = vpack.c.bf16 %v2121, %v2117
    %v2147 = vpack.c.bf16 %v2129, %v2125
    %v2148 = vpack.c.bf16 %v2131, %v2127
    %2153 = vrot.lane.b32.xlu0 %v2133, 64
    %v2154 = vpop.permute.xlu0 %2153
    %2155 = vrot.lane.b32.xlu0 %v2135, 64
    %v2156 = vpop.permute.xlu0 %2155
    %2157 = vrot.lane.b32.xlu0 %v2137, 64
    %v2158 = vpop.permute.xlu0 %2157
    %2159 = vrot.lane.b32.xlu0 %v2139, 64
    %v2160 = vpop.permute.xlu0 %2159
    %vm2161 = vcmask 130048
    %v2163 = vsel %vm2161, %v2133, 0
    %v2166 = vsel %vm2161, %v2135, 0
    %v2169 = vsel %vm2161, %v2137, 0
    %v2172 = vsel %vm2161, %v2139, 0
    %v2175 = vsel %vm2161, %v2154, 0
    %v2178 = vsel %vm2161, %v2156, 0
    %v2181 = vsel %vm2161, %v2158, 0
    %v2184 = vsel %vm2161, %v2160, 0
    %2186 = vmatprep.subr.bf16.mxu0 0
    %2187 = vmatpush1.bf16.xpose.msra.mxu0 %v2175
    %2188 = vmatprep.subr.bf16.mxu0 0
    %2189 = vmatpush1.bf16.xpose.msra.mxu0 %v2178
    %2190 = vmatprep.subr.bf16.mxu0 0
    %2191 = vmatpush1.bf16.xpose.msra.mxu0 %v2181
    %2192 = vmatprep.subr.bf16.mxu0 0
    %2193 = vmatpush1.bf16.xpose.msra.mxu0 %v2184
    %2194 = vmatprep.subr.bf16.mxu0 0
    %2195 = vmatpush1.bf16.xpose.msra.mxu0 0
    %2196 = vmatprep.subr.bf16.mxu0 0
    %2197 = vmatpush1.bf16.xpose.msra.mxu0 0
    %2198 = vmatprep.subr.bf16.mxu0 0
    %2199 = vmatpush1.bf16.xpose.msra.mxu0 0
    %2200 = vmatprep.subr.bf16.mxu0 0
    %2201 = vmatpush1.bf16.xpose.msra.mxu0 0
    %2202 = vmatprep.subr.bf16.mxu0 0
    %2203 = vmatpush1.bf16.xpose.msra.mxu0 0
    %2204 = vmatprep.subr.bf16.mxu0 0
    %2205 = vmatpush1.bf16.xpose.msra.mxu0 0
    %2206 = vmatprep.subr.bf16.mxu0 0
    %2207 = vmatpush1.bf16.xpose.msra.mxu0 0
    %2208 = vmatprep.subr.bf16.mxu0 0
    %2209 = vmatpush1.bf16.xpose.msra.mxu0 0
    %2210 = vmatprep.subr.bf16.mxu0 0
    %2211 = vmatpush1.bf16.xpose.msra.mxu0 0
    %2212 = vmatprep.subr.bf16.mxu0 0
    %2213 = vmatpush1.bf16.xpose.msra.mxu0 0
    %2214 = vmatprep.subr.bf16.mxu0 0
    %2215 = vmatpush1.bf16.xpose.msra.mxu0 0
    %2216 = vmatprep.subr.bf16.mxu0 0
    %2217 = vmatpush1.bf16.xpose.msra.mxu0 0
    %2218 = vmatprep.mubr.bf16.mxu0 0
    %2219 = vmatmul.mubr.bf16.gmra.mrb[0].mxu0 %v2163
    %v2220 = vpop.f32.mrb[0].mxu0
    %v2221 = vadd.f32 0.0, %v2220
    %v2222 = vpop.f32.mrb[0].mxu0
    %v2223 = vpop.f32.mrb[0].mxu0
    %v2224 = vadd.f32 0.0, %v2223
    %v2225 = vpop.f32.mrb[0].mxu0
    %2226 = vmatprep.mubr.bf16.mxu0 0
    %2227 = vmatmul.mubr.bf16.gmra.mrb[0].mxu0 %v2166
    %v2228 = vpop.f32.mrb[0].mxu0
    %v2229 = vadd.f32 0.0, %v2228
    %v2230 = vpop.f32.mrb[0].mxu0
    %v2231 = vpop.f32.mrb[0].mxu0
    %v2232 = vadd.f32 0.0, %v2231
    %v2233 = vpop.f32.mrb[0].mxu0
    %2234 = vmatprep.mubr.bf16.mxu0 0
    %2235 = vmatmul.mubr.bf16.gmra.mrb[0].mxu0 %v2169
    %v2236 = vpop.f32.mrb[0].mxu0
    %v2237 = vadd.f32 0.0, %v2236
    %v2238 = vpop.f32.mrb[0].mxu0
    %v2239 = vpop.f32.mrb[0].mxu0
    %v2240 = vadd.f32 0.0, %v2239
    %v2241 = vpop.f32.mrb[0].mxu0
    %2242 = vmatprep.mubr.bf16.mxu0 0
    %2243 = vmatmul.mubr.bf16.gmra.mrb[0].mxu0 %v2172
    %v2244 = vpop.f32.mrb[0].mxu0
    %v2245 = vadd.f32 0.0, %v2244
    %v2246 = vpop.f32.mrb[0].mxu0
    %v2247 = vpop.f32.mrb[0].mxu0
    %v2248 = vadd.f32 0.0, %v2247
    %v2249 = vpop.f32.mrb[0].mxu0
    %2250 = vdwg.mxu0
    %v2251 = vmul.f32 %v2221, 0.25
    %v2252 = vmul.f32 %v2224, 0.25
    %v2253 = vmul.f32 %v2229, 0.25
    %v2254 = vmul.f32 %v2232, 0.25
    %v2255 = vmul.f32 %v2237, 0.25
    %v2256 = vmul.f32 %v2240, 0.25
    %v2257 = vmul.f32 %v2245, 0.25
    %v2258 = vmul.f32 %v2248, 0.25
    %v2259 = vsel %vm1673, %v2251, -inf
    %2260 = vmax.xlane.f32.xlu0 %v2259
    %v2261 = vpop.xlane.xlu0 %2260
    %v2262 = vsel %vm1673, %v2252, -inf
    %2263 = vmax.xlane.f32.xlu0 %v2262
    %v2264 = vpop.xlane.xlu0 %2263
    %v2265 = vsel %vm1673, %v2253, -inf
    %2266 = vmax.xlane.f32.xlu0 %v2265
    %v2267 = vpop.xlane.xlu0 %2266
    %v2268 = vsel %vm1673, %v2254, -inf
    %2269 = vmax.xlane.f32.xlu0 %v2268
    %v2270 = vpop.xlane.xlu0 %2269
    %v2271 = vsel %vm1673, %v2255, -inf
    %2272 = vmax.xlane.f32.xlu0 %v2271
    %v2273 = vpop.xlane.xlu0 %2272
    %v2274 = vsel %vm1673, %v2256, -inf
    %2275 = vmax.xlane.f32.xlu0 %v2274
    %v2276 = vpop.xlane.xlu0 %2275
    %v2277 = vsel %vm1673, %v2257, -inf
    %2278 = vmax.xlane.f32.xlu0 %v2277
    %v2279 = vpop.xlane.xlu0 %2278
    %v2280 = vsel %vm1673, %v2258, -inf
    %2281 = vmax.xlane.f32.xlu0 %v2280
    %v2282 = vpop.xlane.xlu0 %2281
    %v2283 = vsub.f32 %v2251, %v2261
    %v2284 = vsub.f32 %v2252, %v2264
    %v2285 = vsub.f32 %v2253, %v2267
    %v2286 = vsub.f32 %v2254, %v2270
    %v2287 = vsub.f32 %v2255, %v2273
    %v2288 = vsub.f32 %v2256, %v2276
    %v2289 = vsub.f32 %v2257, %v2279
    %v2290 = vsub.f32 %v2258, %v2282
    %v2291 = vmul.f32 %v2283, 1.442695
    %v2292 = vpow.pop %v2291
    %v2293 = vmul.f32 %v2284, 1.442695
    %v2294 = vpow.pop %v2293
    %v2295 = vmul.f32 %v2285, 1.442695
    %v2296 = vpow.pop %v2295
    %v2297 = vmul.f32 %v2286, 1.442695
    %v2298 = vpow.pop %v2297
    %v2299 = vmul.f32 %v2287, 1.442695
    %v2300 = vpow.pop %v2299
    %v2301 = vmul.f32 %v2288, 1.442695
    %v2302 = vpow.pop %v2301
    %v2303 = vmul.f32 %v2289, 1.442695
    %v2304 = vpow.pop %v2303
    %v2305 = vmul.f32 %v2290, 1.442695
    %v2306 = vpow.pop %v2305
    %v2307 = vsel %vm1673, %v2292, 0.0
    %2308 = vadd.xlane.f32.xlu0 %v2307
    %v2309 = vpop.xlane.xlu0 %2308
    %v2310 = vsel %vm1673, %v2294, 0.0
    %2311 = vadd.xlane.f32.xlu0 %v2310
    %v2312 = vpop.xlane.xlu0 %2311
    %v2313 = vsel %vm1673, %v2296, 0.0
    %2314 = vadd.xlane.f32.xlu0 %v2313
    %v2315 = vpop.xlane.xlu0 %2314
    %v2316 = vsel %vm1673, %v2298, 0.0
    %2317 = vadd.xlane.f32.xlu0 %v2316
    %v2318 = vpop.xlane.xlu0 %2317
    %v2319 = vsel %vm1673, %v2300, 0.0
    %2320 = vadd.xlane.f32.xlu0 %v2319
    %v2321 = vpop.xlane.xlu0 %2320
    %v2322 = vsel %vm1673, %v2302, 0.0
    %2323 = vadd.xlane.f32.xlu0 %v2322
    %v2324 = vpop.xlane.xlu0 %2323
    %v2325 = vsel %vm1673, %v2304, 0.0
    %2326 = vadd.xlane.f32.xlu0 %v2325
    %v2327 = vpop.xlane.xlu0 %2326
    %v2328 = vsel %vm1673, %v2306, 0.0
    %2329 = vadd.xlane.f32.xlu0 %v2328
    %v2330 = vpop.xlane.xlu0 %2329
    %v2331 = vrcp.pop %v2309
    %v2332 = vrcp.pop %v2312
    %v2333 = vrcp.pop %v2315
    %v2334 = vrcp.pop %v2318
    %v2335 = vrcp.pop %v2321
    %v2336 = vrcp.pop %v2324
    %v2337 = vrcp.pop %v2327
    %v2338 = vrcp.pop %v2330
    %v2339 = vmul.f32 %v2292, %v2331
    %v2340 = vmul.f32 %v2294, %v2332
    %v2341 = vmul.f32 %v2296, %v2333
    %v2342 = vmul.f32 %v2298, %v2334
    %v2343 = vmul.f32 %v2300, %v2335
    %v2344 = vmul.f32 %v2302, %v2336
    %v2345 = vmul.f32 %v2304, %v2337
    %v2346 = vmul.f32 %v2306, %v2338
    %v2347 = vpack.c.bf16 %v2340, %v2339
    %v2348 = vpack.c.bf16 %v2342, %v2341
    %v2349 = vpack.c.bf16 %v2344, %v2343
    %v2350 = vpack.c.bf16 %v2346, %v2345
    %v2352 = vsel %vm1673, %v2347, 0
    %v2355 = vsel %vm1673, %v2348, 0
    %v2358 = vsel %vm1673, %v2349, 0
    %v2361 = vsel %vm1673, %v2350, 0
    %2363 = vmatprep.subr.bf16.mxu0 0
    %2364 = vmatpush1.bf16.msra.mxu0 %v2134
    %2365 = vmatprep.subr.bf16.mxu0 0
    %2366 = vmatpush1.bf16.msra.mxu0 %v2136
    %2367 = vmatprep.subr.bf16.mxu0 0
    %2368 = vmatpush1.bf16.msra.mxu0 %v2138
    %2369 = vmatprep.subr.bf16.mxu0 0
    %2370 = vmatpush1.bf16.msra.mxu0 %v2140
    %2371 = vmatprep.subr.bf16.mxu0 0
    %2372 = vmatpush1.bf16.msra.mxu0 0
    %2373 = vmatprep.subr.bf16.mxu0 0
    %2374 = vmatpush1.bf16.msra.mxu0 0
    %2375 = vmatprep.subr.bf16.mxu0 0
    %2376 = vmatpush1.bf16.msra.mxu0 0
    %2377 = vmatprep.subr.bf16.mxu0 0
    %2378 = vmatpush1.bf16.msra.mxu0 0
    %2379 = vmatprep.subr.bf16.mxu0 0
    %2380 = vmatpush1.bf16.msra.mxu0 0
    %2381 = vmatprep.subr.bf16.mxu0 0
    %2382 = vmatpush1.bf16.msra.mxu0 0
    %2383 = vmatprep.subr.bf16.mxu0 0
    %2384 = vmatpush1.bf16.msra.mxu0 0
    %2385 = vmatprep.subr.bf16.mxu0 0
    %2386 = vmatpush1.bf16.msra.mxu0 0
    %2387 = vmatprep.subr.bf16.mxu0 0
    %2388 = vmatpush1.bf16.msra.mxu0 0
    %2389 = vmatprep.subr.bf16.mxu0 0
    %2390 = vmatpush1.bf16.msra.mxu0 0
    %2391 = vmatprep.subr.bf16.mxu0 0
    %2392 = vmatpush1.bf16.msra.mxu0 0
    %2393 = vmatprep.subr.bf16.mxu0 0
    %2394 = vmatpush1.bf16.msra.mxu0 0
    %2395 = vmatprep.mubr.bf16.mxu0 0
    %2396 = vmatmul.mubr.bf16.gmra.mrb[0].mxu0 %v2352
    %v2397 = vpop.f32.mrb[0].mxu0
    %v2398 = vadd.f32 0.0, %v2397
    %v2399 = vpop.f32.mrb[0].mxu0
    %v2400 = vpop.f32.mrb[0].mxu0
    %v2401 = vadd.f32 0.0, %v2400
    %v2402 = vpop.f32.mrb[0].mxu0
    %2403 = vmatprep.mubr.bf16.mxu0 0
    %2404 = vmatmul.mubr.bf16.gmra.mrb[0].mxu0 %v2355
    %v2405 = vpop.f32.mrb[0].mxu0
    %v2406 = vadd.f32 0.0, %v2405
    %v2407 = vpop.f32.mrb[0].mxu0
    %v2408 = vpop.f32.mrb[0].mxu0
    %v2409 = vadd.f32 0.0, %v2408
    %v2410 = vpop.f32.mrb[0].mxu0
    %2411 = vmatprep.mubr.bf16.mxu0 0
    %2412 = vmatmul.mubr.bf16.gmra.mrb[0].mxu0 %v2358
    %v2413 = vpop.f32.mrb[0].mxu0
    %v2414 = vadd.f32 0.0, %v2413
    %v2415 = vpop.f32.mrb[0].mxu0
    %v2416 = vpop.f32.mrb[0].mxu0
    %v2417 = vadd.f32 0.0, %v2416
    %v2418 = vpop.f32.mrb[0].mxu0
    %2419 = vmatprep.mubr.bf16.mxu0 0
    %2420 = vmatmul.mubr.bf16.gmra.mrb[0].mxu0 %v2361
    %v2421 = vpop.f32.mrb[0].mxu0
    %v2422 = vadd.f32 0.0, %v2421
    %v2423 = vpop.f32.mrb[0].mxu0
    %v2424 = vpop.f32.mrb[0].mxu0
    %v2425 = vadd.f32 0.0, %v2424
    %v2426 = vpop.f32.mrb[0].mxu0
    %2427 = vdwg.mxu0
    %v2428 = vpack.c.bf16 %v2401, %v2398
    %v2429 = vpack.c.bf16 %v2409, %v2406
    %v2430 = vpack.c.bf16 %v2417, %v2414
    %v2431 = vpack.c.bf16 %v2425, %v2422
    %v2432 = vld [vmem:[%s35] sm:$0xf]
    %v2433 = vld [vmem:[%s35 + $0x4] sm:$0xf]
    %2434 = vrot.lane.b32.xlu0 %v2133, 112
    %v2435 = vpop.permute.xlu0 %2434
    %2436 = vrot.lane.b32.xlu0 %v2135, 112
    %v2437 = vpop.permute.xlu0 %2436
    %2438 = vrot.lane.b32.xlu0 %v2137, 112
    %v2439 = vpop.permute.xlu0 %2438
    %2440 = vrot.lane.b32.xlu0 %v2139, 112
    %v2441 = vpop.permute.xlu0 %2440
    %2442 = vrot.lane.b32.xlu0 %v2133, 48
    %v2443 = vpop.permute.xlu0 %2442
    %2444 = vrot.lane.b32.xlu0 %v2135, 48
    %v2445 = vpop.permute.xlu0 %2444
    %2446 = vrot.lane.b32.xlu0 %v2137, 48
    %v2447 = vpop.permute.xlu0 %2446
    %2448 = vrot.lane.b32.xlu0 %v2139, 48
    %v2449 = vpop.permute.xlu0 %2448
    %v2451 = vsel %vm2161, %v2435, 0
    %v2454 = vsel %vm2161, %v2437, 0
    %v2457 = vsel %vm2161, %v2439, 0
    %v2460 = vsel %vm2161, %v2441, 0
    %v2463 = vsel %vm2161, %v2443, 0
    %v2466 = vsel %vm2161, %v2445, 0
    %v2469 = vsel %vm2161, %v2447, 0
    %v2472 = vsel %vm2161, %v2449, 0
    %2474 = vmatprep.subr.bf16.mxu0 0
    %2475 = vmatpush1.bf16.xpose.msra.mxu0 %v2463
    %2476 = vmatprep.subr.bf16.mxu0 0
    %2477 = vmatpush1.bf16.xpose.msra.mxu0 %v2466
    %2478 = vmatprep.subr.bf16.mxu0 0
    %2479 = vmatpush1.bf16.xpose.msra.mxu0 %v2469
    %2480 = vmatprep.subr.bf16.mxu0 0
    %2481 = vmatpush1.bf16.xpose.msra.mxu0 %v2472
    %2482 = vmatprep.subr.bf16.mxu0 0
    %2483 = vmatpush1.bf16.xpose.msra.mxu0 0
    %2484 = vmatprep.subr.bf16.mxu0 0
    %2485 = vmatpush1.bf16.xpose.msra.mxu0 0
    %2486 = vmatprep.subr.bf16.mxu0 0
    %2487 = vmatpush1.bf16.xpose.msra.mxu0 0
    %2488 = vmatprep.subr.bf16.mxu0 0
    %2489 = vmatpush1.bf16.xpose.msra.mxu0 0
    %2490 = vmatprep.subr.bf16.mxu0 0
    %2491 = vmatpush1.bf16.xpose.msra.mxu0 0
    %2492 = vmatprep.subr.bf16.mxu0 0
    %2493 = vmatpush1.bf16.xpose.msra.mxu0 0
    %2494 = vmatprep.subr.bf16.mxu0 0
    %2495 = vmatpush1.bf16.xpose.msra.mxu0 0
    %2496 = vmatprep.subr.bf16.mxu0 0
    %2497 = vmatpush1.bf16.xpose.msra.mxu0 0
    %2498 = vmatprep.subr.bf16.mxu0 0
    %2499 = vmatpush1.bf16.xpose.msra.mxu0 0
    %2500 = vmatprep.subr.bf16.mxu0 0
    %2501 = vmatpush1.bf16.xpose.msra.mxu0 0
    %2502 = vmatprep.subr.bf16.mxu0 0
    %2503 = vmatpush1.bf16.xpose.msra.mxu0 0
    %2504 = vmatprep.subr.bf16.mxu0 0
    %2505 = vmatpush1.bf16.xpose.msra.mxu0 0
    %2506 = vmatprep.mubr.bf16.mxu0 0
    %2507 = vmatmul.mubr.bf16.gmra.mrb[0].mxu0 %v2451
    %v2508 = vpop.f32.mrb[0].mxu0
    %v2509 = vadd.f32 0.0, %v2508
    %v2510 = vpop.f32.mrb[0].mxu0
    %v2511 = vpop.f32.mrb[0].mxu0
    %v2512 = vadd.f32 0.0, %v2511
    %v2513 = vpop.f32.mrb[0].mxu0
    %2514 = vmatprep.mubr.bf16.mxu0 0
    %2515 = vmatmul.mubr.bf16.gmra.mrb[0].mxu0 %v2454
    %v2516 = vpop.f32.mrb[0].mxu0
    %v2517 = vadd.f32 0.0, %v2516
    %v2518 = vpop.f32.mrb[0].mxu0
    %v2519 = vpop.f32.mrb[0].mxu0
    %v2520 = vadd.f32 0.0, %v2519
    %v2521 = vpop.f32.mrb[0].mxu0
    %2522 = vmatprep.mubr.bf16.mxu0 0
    %2523 = vmatmul.mubr.bf16.gmra.mrb[0].mxu0 %v2457
    %v2524 = vpop.f32.mrb[0].mxu0
    %v2525 = vadd.f32 0.0, %v2524
    %v2526 = vpop.f32.mrb[0].mxu0
    %v2527 = vpop.f32.mrb[0].mxu0
    %v2528 = vadd.f32 0.0, %v2527
    %v2529 = vpop.f32.mrb[0].mxu0
    %2530 = vmatprep.mubr.bf16.mxu0 0
    %2531 = vmatmul.mubr.bf16.gmra.mrb[0].mxu0 %v2460
    %v2532 = vpop.f32.mrb[0].mxu0
    %v2533 = vadd.f32 0.0, %v2532
    %v2534 = vpop.f32.mrb[0].mxu0
    %v2535 = vpop.f32.mrb[0].mxu0
    %v2536 = vadd.f32 0.0, %v2535
    %v2537 = vpop.f32.mrb[0].mxu0
    %2538 = vdwg.mxu0
    %v2539 = vmul.f32 %v2509, 0.25
    %v2540 = vmul.f32 %v2512, 0.25
    %v2541 = vmul.f32 %v2517, 0.25
    %v2542 = vmul.f32 %v2520, 0.25
    %v2543 = vmul.f32 %v2525, 0.25
    %v2544 = vmul.f32 %v2528, 0.25
    %v2545 = vmul.f32 %v2533, 0.25
    %v2546 = vmul.f32 %v2536, 0.25
    %v2547 = vsel %vm1673, %v2539, -inf
    %2548 = vmax.xlane.f32.xlu0 %v2547
    %v2549 = vpop.xlane.xlu0 %2548
    %v2550 = vsel %vm1673, %v2540, -inf
    %2551 = vmax.xlane.f32.xlu0 %v2550
    %v2552 = vpop.xlane.xlu0 %2551
    %v2553 = vsel %vm1673, %v2541, -inf
    %2554 = vmax.xlane.f32.xlu0 %v2553
    %v2555 = vpop.xlane.xlu0 %2554
    %v2556 = vsel %vm1673, %v2542, -inf
    %2557 = vmax.xlane.f32.xlu0 %v2556
    %v2558 = vpop.xlane.xlu0 %2557
    %v2559 = vsel %vm1673, %v2543, -inf
    %2560 = vmax.xlane.f32.xlu0 %v2559
    %v2561 = vpop.xlane.xlu0 %2560
    %v2562 = vsel %vm1673, %v2544, -inf
    %2563 = vmax.xlane.f32.xlu0 %v2562
    %v2564 = vpop.xlane.xlu0 %2563
    %v2565 = vsel %vm1673, %v2545, -inf
    %2566 = vmax.xlane.f32.xlu0 %v2565
    %v2567 = vpop.xlane.xlu0 %2566
    %v2568 = vsel %vm1673, %v2546, -inf
    %2569 = vmax.xlane.f32.xlu0 %v2568
    %v2570 = vpop.xlane.xlu0 %2569
    %v2571 = vsub.f32 %v2539, %v2549
    %v2572 = vsub.f32 %v2540, %v2552
    %v2573 = vsub.f32 %v2541, %v2555
    %v2574 = vsub.f32 %v2542, %v2558
    %v2575 = vsub.f32 %v2543, %v2561
    %v2576 = vsub.f32 %v2544, %v2564
    %v2577 = vsub.f32 %v2545, %v2567
    %v2578 = vsub.f32 %v2546, %v2570
    %v2579 = vmul.f32 %v2571, 1.442695
    %v2580 = vpow.pop %v2579
    %v2581 = vmul.f32 %v2572, 1.442695
    %v2582 = vpow.pop %v2581
    %v2583 = vmul.f32 %v2573, 1.442695
    %v2584 = vpow.pop %v2583
    %v2585 = vmul.f32 %v2574, 1.442695
    %v2586 = vpow.pop %v2585
    %v2587 = vmul.f32 %v2575, 1.442695
    %v2588 = vpow.pop %v2587
    %v2589 = vmul.f32 %v2576, 1.442695
    %v2590 = vpow.pop %v2589
    %v2591 = vmul.f32 %v2577, 1.442695
    %v2592 = vpow.pop %v2591
    %v2593 = vmul.f32 %v2578, 1.442695
    %v2594 = vpow.pop %v2593
    %v2595 = vsel %vm1673, %v2580, 0.0
    %2596 = vadd.xlane.f32.xlu0 %v2595
    %v2597 = vpop.xlane.xlu0 %2596
    %v2598 = vsel %vm1673, %v2582, 0.0
    %2599 = vadd.xlane.f32.xlu0 %v2598
    %v2600 = vpop.xlane.xlu0 %2599
    %v2601 = vsel %vm1673, %v2584, 0.0
    %2602 = vadd.xlane.f32.xlu0 %v2601
    %v2603 = vpop.xlane.xlu0 %2602
    %v2604 = vsel %vm1673, %v2586, 0.0
    %2605 = vadd.xlane.f32.xlu0 %v2604
    %v2606 = vpop.xlane.xlu0 %2605
    %v2607 = vsel %vm1673, %v2588, 0.0
    %2608 = vadd.xlane.f32.xlu0 %v2607
    %v2609 = vpop.xlane.xlu0 %2608
    %v2610 = vsel %vm1673, %v2590, 0.0
    %2611 = vadd.xlane.f32.xlu0 %v2610
    %v2612 = vpop.xlane.xlu0 %2611
    %v2613 = vsel %vm1673, %v2592, 0.0
    %2614 = vadd.xlane.f32.xlu0 %v2613
    %v2615 = vpop.xlane.xlu0 %2614
    %v2616 = vsel %vm1673, %v2594, 0.0
    %2617 = vadd.xlane.f32.xlu0 %v2616
    %v2618 = vpop.xlane.xlu0 %2617
    %v2619 = vrcp.pop %v2597
    %v2620 = vrcp.pop %v2600
    %v2621 = vrcp.pop %v2603
    %v2622 = vrcp.pop %v2606
    %v2623 = vrcp.pop %v2609
    %v2624 = vrcp.pop %v2612
    %v2625 = vrcp.pop %v2615
    %v2626 = vrcp.pop %v2618
    %v2627 = vmul.f32 %v2580, %v2619
    %v2628 = vmul.f32 %v2582, %v2620
    %v2629 = vmul.f32 %v2584, %v2621
    %v2630 = vmul.f32 %v2586, %v2622
    %v2631 = vmul.f32 %v2588, %v2623
    %v2632 = vmul.f32 %v2590, %v2624
    %v2633 = vmul.f32 %v2592, %v2625
    %v2634 = vmul.f32 %v2594, %v2626
    %v2635 = vpack.c.bf16 %v2628, %v2627
    %v2636 = vpack.c.bf16 %v2630, %v2629
    %v2637 = vpack.c.bf16 %v2632, %v2631
    %v2638 = vpack.c.bf16 %v2634, %v2633
    %2643 = vrot.lane.b32.xlu0 %v2134, 112
    %v2644 = vpop.permute.xlu0 %2643
    %2645 = vrot.lane.b32.xlu0 %v2136, 112
    %v2646 = vpop.permute.xlu0 %2645
    %2647 = vrot.lane.b32.xlu0 %v2138, 112
    %v2648 = vpop.permute.xlu0 %2647
    %2649 = vrot.lane.b32.xlu0 %v2140, 112
    %v2650 = vpop.permute.xlu0 %2649
    %v2656 = vsel %vm1673, %v2635, 0
    %v2659 = vsel %vm1673, %v2636, 0
    %v2662 = vsel %vm1673, %v2637, 0
    %v2665 = vsel %vm1673, %v2638, 0
    %2667 = vmatprep.subr.bf16.mxu0 0
    %2668 = vmatpush1.bf16.msra.mxu0 %v2644
    %2669 = vmatprep.subr.bf16.mxu0 0
    %2670 = vmatpush1.bf16.msra.mxu0 %v2646
    %2671 = vmatprep.subr.bf16.mxu0 0
    %2672 = vmatpush1.bf16.msra.mxu0 %v2648
    %2673 = vmatprep.subr.bf16.mxu0 0
    %2674 = vmatpush1.bf16.msra.mxu0 %v2650
    %2675 = vmatprep.subr.bf16.mxu0 0
    %2676 = vmatpush1.bf16.msra.mxu0 0
    %2677 = vmatprep.subr.bf16.mxu0 0
    %2678 = vmatpush1.bf16.msra.mxu0 0
    %2679 = vmatprep.subr.bf16.mxu0 0
    %2680 = vmatpush1.bf16.msra.mxu0 0
    %2681 = vmatprep.subr.bf16.mxu0 0
    %2682 = vmatpush1.bf16.msra.mxu0 0
    %2683 = vmatprep.subr.bf16.mxu0 0
    %2684 = vmatpush1.bf16.msra.mxu0 0
    %2685 = vmatprep.subr.bf16.mxu0 0
    %2686 = vmatpush1.bf16.msra.mxu0 0
    %2687 = vmatprep.subr.bf16.mxu0 0
    %2688 = vmatpush1.bf16.msra.mxu0 0
    %2689 = vmatprep.subr.bf16.mxu0 0
    %2690 = vmatpush1.bf16.msra.mxu0 0
    %2691 = vmatprep.subr.bf16.mxu0 0
    %2692 = vmatpush1.bf16.msra.mxu0 0
    %2693 = vmatprep.subr.bf16.mxu0 0
    %2694 = vmatpush1.bf16.msra.mxu0 0
    %2695 = vmatprep.subr.bf16.mxu0 0
    %2696 = vmatpush1.bf16.msra.mxu0 0
    %2697 = vmatprep.subr.bf16.mxu0 0
    %2698 = vmatpush1.bf16.msra.mxu0 0
    %2699 = vmatprep.mubr.bf16.mxu0 0
    %2700 = vmatmul.mubr.bf16.gmra.mrb[0].mxu0 %v2656
    %v2701 = vpop.f32.mrb[0].mxu0
    %v2702 = vadd.f32 0.0, %v2701
    %v2703 = vpop.f32.mrb[0].mxu0
    %v2704 = vpop.f32.mrb[0].mxu0
    %v2705 = vadd.f32 0.0, %v2704
    %v2706 = vpop.f32.mrb[0].mxu0
    %2707 = vmatprep.mubr.bf16.mxu0 0
    %2708 = vmatmul.mubr.bf16.gmra.mrb[0].mxu0 %v2659
    %v2709 = vpop.f32.mrb[0].mxu0
    %v2710 = vadd.f32 0.0, %v2709
    %v2711 = vpop.f32.mrb[0].mxu0
    %v2712 = vpop.f32.mrb[0].mxu0
    %v2713 = vadd.f32 0.0, %v2712
    %v2714 = vpop.f32.mrb[0].mxu0
    %2715 = vmatprep.mubr.bf16.mxu0 0
    %2716 = vmatmul.mubr.bf16.gmra.mrb[0].mxu0 %v2662
    %v2717 = vpop.f32.mrb[0].mxu0
    %v2718 = vadd.f32 0.0, %v2717
    %v2719 = vpop.f32.mrb[0].mxu0
    %v2720 = vpop.f32.mrb[0].mxu0
    %v2721 = vadd.f32 0.0, %v2720
    %v2722 = vpop.f32.mrb[0].mxu0
    %2723 = vmatprep.mubr.bf16.mxu0 0
    %2724 = vmatmul.mubr.bf16.gmra.mrb[0].mxu0 %v2665
    %v2725 = vpop.f32.mrb[0].mxu0
    %v2726 = vadd.f32 0.0, %v2725
    %v2727 = vpop.f32.mrb[0].mxu0
    %v2728 = vpop.f32.mrb[0].mxu0
    %v2729 = vadd.f32 0.0, %v2728
    %v2730 = vpop.f32.mrb[0].mxu0
    %2731 = vdwg.mxu0
    %v2732 = vpack.c.bf16 %v2705, %v2702
    %v2733 = vpack.c.bf16 %v2713, %v2710
    %v2734 = vpack.c.bf16 %v2721, %v2718
    %v2735 = vpack.c.bf16 %v2729, %v2726
    %v2736 = vld [vmem:[%s35 + $0x8] sm:$0xf]
    %v2737 = vld [vmem:[%s35 + $0xc] sm:$0xf]
    %v2740 = vunpack.c.l.b16 %v2736
    %v2741 = vunpack.c.l.b16 %v2737
    %v2742 = vpack.c.b16 %v2741, %v2740
    %v2745 = vsel %vm2161, %v2732, 0
    %v2748 = vsel %vm2161, %v2733, 0
    %v2751 = vsel %vm2161, %v2734, 0
    %v2754 = vsel %vm2161, %v2735, 0
    %2756 = vmatprep.subr.bf16.mxu0 0
    %2757 = vmatpush1.bf16.msra.mxu0 %v2742
    %2758 = vmatprep.subr.bf16.mxu0 0
    %2759 = vmatpush1.bf16.msra.mxu0 0
    %2760 = vmatprep.subr.bf16.mxu0 0
    %2761 = vmatpush1.bf16.msra.mxu0 0
    %2762 = vmatprep.subr.bf16.mxu0 0
    %2763 = vmatpush1.bf16.msra.mxu0 0
    %2764 = vmatprep.subr.bf16.mxu0 0
    %2765 = vmatpush1.bf16.msra.mxu0 0
    %2766 = vmatprep.subr.bf16.mxu0 0
    %2767 = vmatpush1.bf16.msra.mxu0 0
    %2768 = vmatprep.subr.bf16.mxu0 0
    %2769 = vmatpush1.bf16.msra.mxu0 0
    %2770 = vmatprep.subr.bf16.mxu0 0
    %2771 = vmatpush1.bf16.msra.mxu0 0
    %2772 = vmatprep.subr.bf16.mxu0 0
    %2773 = vmatpush1.bf16.msra.mxu0 0
    %2774 = vmatprep.subr.bf16.mxu0 0
    %2775 = vmatpush1.bf16.msra.mxu0 0
    %2776 = vmatprep.subr.bf16.mxu0 0
    %2777 = vmatpush1.bf16.msra.mxu0 0
    %2778 = vmatprep.subr.bf16.mxu0 0
    %2779 = vmatpush1.bf16.msra.mxu0 0
    %2780 = vmatprep.subr.bf16.mxu0 0
    %2781 = vmatpush1.bf16.msra.mxu0 0
    %2782 = vmatprep.subr.bf16.mxu0 0
    %2783 = vmatpush1.bf16.msra.mxu0 0
    %2784 = vmatprep.subr.bf16.mxu0 0
    %2785 = vmatpush1.bf16.msra.mxu0 0
    %2786 = vmatprep.subr.bf16.mxu0 0
    %2787 = vmatpush1.bf16.msra.mxu0 0
    %2788 = vmatprep.mubr.bf16.mxu0 0
    %2789 = vmatmul.mubr.bf16.gmra.mrb[0].mxu0 %v2745
    %v2790 = vpop.f32.mrb[0].mxu0
    %v2791 = vadd.f32 0.0, %v2790
    %v2792 = vpop.f32.mrb[0].mxu0
    %v2793 = vpop.f32.mrb[0].mxu0
    %v2794 = vadd.f32 0.0, %v2793
    %v2795 = vpop.f32.mrb[0].mxu0
    %2796 = vmatprep.mubr.bf16.mxu0 0
    %2797 = vmatmul.mubr.bf16.gmra.mrb[0].mxu0 %v2748
    %v2798 = vpop.f32.mrb[0].mxu0
    %v2799 = vadd.f32 0.0, %v2798
    %v2800 = vpop.f32.mrb[0].mxu0
    %v2801 = vpop.f32.mrb[0].mxu0
    %v2802 = vadd.f32 0.0, %v2801
    %v2803 = vpop.f32.mrb[0].mxu0
    %2804 = vmatprep.mubr.bf16.mxu0 0
    %2805 = vmatmul.mubr.bf16.gmra.mrb[0].mxu0 %v2751
    %v2806 = vpop.f32.mrb[0].mxu0
    %v2807 = vadd.f32 0.0, %v2806
    %v2808 = vpop.f32.mrb[0].mxu0
    %v2809 = vpop.f32.mrb[0].mxu0
    %v2810 = vadd.f32 0.0, %v2809
    %v2811 = vpop.f32.mrb[0].mxu0
    %2812 = vmatprep.mubr.bf16.mxu0 0
    %2813 = vmatmul.mubr.bf16.gmra.mrb[0].mxu0 %v2754
    %v2814 = vpop.f32.mrb[0].mxu0
    %v2815 = vadd.f32 0.0, %v2814
    %v2816 = vpop.f32.mrb[0].mxu0
    %v2817 = vpop.f32.mrb[0].mxu0
    %v2818 = vadd.f32 0.0, %v2817
    %v2819 = vpop.f32.mrb[0].mxu0
    %2820 = vdwg.mxu0
    %v2823 = vunpack.c.l.b16 %v2432
    %v2824 = vunpack.c.l.b16 %v2433
    %v2825 = vpack.c.b16 %v2824, %v2823
    %v2828 = vsel %vm2161, %v2428, 0
    %v2831 = vsel %vm2161, %v2429, 0
    %v2834 = vsel %vm2161, %v2430, 0
    %v2837 = vsel %vm2161, %v2431, 0
    %2839 = vmatprep.subr.bf16.mxu0 0
    %2840 = vmatpush1.bf16.msra.mxu0 %v2825
    %2841 = vmatprep.subr.bf16.mxu0 0
    %2842 = vmatpush1.bf16.msra.mxu0 0
    %2843 = vmatprep.subr.bf16.mxu0 0
    %2844 = vmatpush1.bf16.msra.mxu0 0
    %2845 = vmatprep.subr.bf16.mxu0 0
    %2846 = vmatpush1.bf16.msra.mxu0 0
    %2847 = vmatprep.subr.bf16.mxu0 0
    %2848 = vmatpush1.bf16.msra.mxu0 0
    %2849 = vmatprep.subr.bf16.mxu0 0
    %2850 = vmatpush1.bf16.msra.mxu0 0
    %2851 = vmatprep.subr.bf16.mxu0 0
    %2852 = vmatpush1.bf16.msra.mxu0 0
    %2853 = vmatprep.subr.bf16.mxu0 0
    %2854 = vmatpush1.bf16.msra.mxu0 0
    %2855 = vmatprep.subr.bf16.mxu0 0
    %2856 = vmatpush1.bf16.msra.mxu0 0
    %2857 = vmatprep.subr.bf16.mxu0 0
    %2858 = vmatpush1.bf16.msra.mxu0 0
    %2859 = vmatprep.subr.bf16.mxu0 0
    %2860 = vmatpush1.bf16.msra.mxu0 0
    %2861 = vmatprep.subr.bf16.mxu0 0
    %2862 = vmatpush1.bf16.msra.mxu0 0
    %2863 = vmatprep.subr.bf16.mxu0 0
    %2864 = vmatpush1.bf16.msra.mxu0 0
    %2865 = vmatprep.subr.bf16.mxu0 0
    %2866 = vmatpush1.bf16.msra.mxu0 0
    %2867 = vmatprep.subr.bf16.mxu0 0
    %2868 = vmatpush1.bf16.msra.mxu0 0
    %2869 = vmatprep.subr.bf16.mxu0 0
    %2870 = vmatpush1.bf16.msra.mxu0 0
    %2871 = vmatprep.mubr.bf16.mxu0 0
    %2872 = vmatmul.mubr.bf16.gmra.mrb[0].mxu0 %v2828
    %v2873 = vpop.f32.mrb[0].mxu0
    %v2874 = vadd.f32 %v2791, %v2873
    %v2875 = vpop.f32.mrb[0].mxu0
    %v2876 = vpop.f32.mrb[0].mxu0
    %v2877 = vadd.f32 %v2794, %v2876
    %v2878 = vpop.f32.mrb[0].mxu0
    %2879 = vmatprep.mubr.bf16.mxu0 0
    %2880 = vmatmul.mubr.bf16.gmra.mrb[0].mxu0 %v2831
    %v2881 = vpop.f32.mrb[0].mxu0
    %v2882 = vadd.f32 %v2799, %v2881
    %v2883 = vpop.f32.mrb[0].mxu0
    %v2884 = vpop.f32.mrb[0].mxu0
    %v2885 = vadd.f32 %v2802, %v2884
    %v2886 = vpop.f32.mrb[0].mxu0
    %2887 = vmatprep.mubr.bf16.mxu0 0
    %2888 = vmatmul.mubr.bf16.gmra.mrb[0].mxu0 %v2834
    %v2889 = vpop.f32.mrb[0].mxu0
    %v2890 = vadd.f32 %v2807, %v2889
    %v2891 = vpop.f32.mrb[0].mxu0
    %v2892 = vpop.f32.mrb[0].mxu0
    %v2893 = vadd.f32 %v2810, %v2892
    %v2894 = vpop.f32.mrb[0].mxu0
    %2895 = vmatprep.mubr.bf16.mxu0 0
    %2896 = vmatmul.mubr.bf16.gmra.mrb[0].mxu0 %v2837
    %v2897 = vpop.f32.mrb[0].mxu0
    %v2898 = vadd.f32 %v2815, %v2897
    %v2899 = vpop.f32.mrb[0].mxu0
    %v2900 = vpop.f32.mrb[0].mxu0
    %v2901 = vadd.f32 %v2818, %v2900
    %v2902 = vpop.f32.mrb[0].mxu0
    %2903 = vdwg.mxu0
    %2904 = vrot.lane.b32.xlu0 %v2133, 96
    %v2905 = vpop.permute.xlu0 %2904
    %2906 = vrot.lane.b32.xlu0 %v2135, 96
    %v2907 = vpop.permute.xlu0 %2906
    %2908 = vrot.lane.b32.xlu0 %v2137, 96
    %v2909 = vpop.permute.xlu0 %2908
    %2910 = vrot.lane.b32.xlu0 %v2139, 96
    %v2911 = vpop.permute.xlu0 %2910
    %2912 = vrot.lane.b32.xlu0 %v2133, 32
    %v2913 = vpop.permute.xlu0 %2912
    %2914 = vrot.lane.b32.xlu0 %v2135, 32
    %v2915 = vpop.permute.xlu0 %2914
    %2916 = vrot.lane.b32.xlu0 %v2137, 32
    %v2917 = vpop.permute.xlu0 %2916
    %2918 = vrot.lane.b32.xlu0 %v2139, 32
    %v2919 = vpop.permute.xlu0 %2918
    %v2921 = vsel %vm2161, %v2905, 0
    %v2924 = vsel %vm2161, %v2907, 0
    %v2927 = vsel %vm2161, %v2909, 0
    %v2930 = vsel %vm2161, %v2911, 0
    %v2933 = vsel %vm2161, %v2913, 0
    %v2936 = vsel %vm2161, %v2915, 0
    %v2939 = vsel %vm2161, %v2917, 0
    %v2942 = vsel %vm2161, %v2919, 0
    %2944 = vmatprep.subr.bf16.mxu0 0
    %2945 = vmatpush1.bf16.xpose.msra.mxu0 %v2933
    %2946 = vmatprep.subr.bf16.mxu0 0
    %2947 = vmatpush1.bf16.xpose.msra.mxu0 %v2936
    %2948 = vmatprep.subr.bf16.mxu0 0
    %2949 = vmatpush1.bf16.xpose.msra.mxu0 %v2939
    %2950 = vmatprep.subr.bf16.mxu0 0
    %2951 = vmatpush1.bf16.xpose.msra.mxu0 %v2942
    %2952 = vmatprep.subr.bf16.mxu0 0
    %2953 = vmatpush1.bf16.xpose.msra.mxu0 0
    %2954 = vmatprep.subr.bf16.mxu0 0
    %2955 = vmatpush1.bf16.xpose.msra.mxu0 0
    %2956 = vmatprep.subr.bf16.mxu0 0
    %2957 = vmatpush1.bf16.xpose.msra.mxu0 0
    %2958 = vmatprep.subr.bf16.mxu0 0
    %2959 = vmatpush1.bf16.xpose.msra.mxu0 0
    %2960 = vmatprep.subr.bf16.mxu0 0
    %2961 = vmatpush1.bf16.xpose.msra.mxu0 0
    %2962 = vmatprep.subr.bf16.mxu0 0
    %2963 = vmatpush1.bf16.xpose.msra.mxu0 0
    %2964 = vmatprep.subr.bf16.mxu0 0
    %2965 = vmatpush1.bf16.xpose.msra.mxu0 0
    %2966 = vmatprep.subr.bf16.mxu0 0
    %2967 = vmatpush1.bf16.xpose.msra.mxu0 0
    %2968 = vmatprep.subr.bf16.mxu0 0
    %2969 = vmatpush1.bf16.xpose.msra.mxu0 0
    %2970 = vmatprep.subr.bf16.mxu0 0
    %2971 = vmatpush1.bf16.xpose.msra.mxu0 0
    %2972 = vmatprep.subr.bf16.mxu0 0
    %2973 = vmatpush1.bf16.xpose.msra.mxu0 0
    %2974 = vmatprep.subr.bf16.mxu0 0
    %2975 = vmatpush1.bf16.xpose.msra.mxu0 0
    %2976 = vmatprep.mubr.bf16.mxu0 0
    %2977 = vmatmul.mubr.bf16.gmra.mrb[0].mxu0 %v2921
    %v2978 = vpop.f32.mrb[0].mxu0
    %v2979 = vadd.f32 0.0, %v2978
    %v2980 = vpop.f32.mrb[0].mxu0
    %v2981 = vpop.f32.mrb[0].mxu0
    %v2982 = vadd.f32 0.0, %v2981
    %v2983 = vpop.f32.mrb[0].mxu0
    %2984 = vmatprep.mubr.bf16.mxu0 0
    %2985 = vmatmul.mubr.bf16.gmra.mrb[0].mxu0 %v2924
    %v2986 = vpop.f32.mrb[0].mxu0
    %v2987 = vadd.f32 0.0, %v2986
    %v2988 = vpop.f32.mrb[0].mxu0
    %v2989 = vpop.f32.mrb[0].mxu0
    %v2990 = vadd.f32 0.0, %v2989
    %v2991 = vpop.f32.mrb[0].mxu0
    %2992 = vmatprep.mubr.bf16.mxu0 0
    %2993 = vmatmul.mubr.bf16.gmra.mrb[0].mxu0 %v2927
    %v2994 = vpop.f32.mrb[0].mxu0
    %v2995 = vadd.f32 0.0, %v2994
    %v2996 = vpop.f32.mrb[0].mxu0
    %v2997 = vpop.f32.mrb[0].mxu0
    %v2998 = vadd.f32 0.0, %v2997
    %v2999 = vpop.f32.mrb[0].mxu0
    %3000 = vmatprep.mubr.bf16.mxu0 0
    %3001 = vmatmul.mubr.bf16.gmra.mrb[0].mxu0 %v2930
    %v3002 = vpop.f32.mrb[0].mxu0
    %v3003 = vadd.f32 0.0, %v3002
    %v3004 = vpop.f32.mrb[0].mxu0
    %v3005 = vpop.f32.mrb[0].mxu0
    %v3006 = vadd.f32 0.0, %v3005
    %v3007 = vpop.f32.mrb[0].mxu0
    %3008 = vdwg.mxu0
    %v3009 = vmul.f32 %v2979, 0.25
    %v3010 = vmul.f32 %v2982, 0.25
    %v3011 = vmul.f32 %v2987, 0.25
    %v3012 = vmul.f32 %v2990, 0.25
    %v3013 = vmul.f32 %v2995, 0.25
    %v3014 = vmul.f32 %v2998, 0.25
    %v3015 = vmul.f32 %v3003, 0.25
    %v3016 = vmul.f32 %v3006, 0.25
    %v3017 = vsel %vm1673, %v3009, -inf
    %3018 = vmax.xlane.f32.xlu0 %v3017
    %v3019 = vpop.xlane.xlu0 %3018
    %v3020 = vsel %vm1673, %v3010, -inf
    %3021 = vmax.xlane.f32.xlu0 %v3020
    %v3022 = vpop.xlane.xlu0 %3021
    %v3023 = vsel %vm1673, %v3011, -inf
    %3024 = vmax.xlane.f32.xlu0 %v3023
    %v3025 = vpop.xlane.xlu0 %3024
    %v3026 = vsel %vm1673, %v3012, -inf
    %3027 = vmax.xlane.f32.xlu0 %v3026
    %v3028 = vpop.xlane.xlu0 %3027
    %v3029 = vsel %vm1673, %v3013, -inf
    %3030 = vmax.xlane.f32.xlu0 %v3029
    %v3031 = vpop.xlane.xlu0 %3030
    %v3032 = vsel %vm1673, %v3014, -inf
    %3033 = vmax.xlane.f32.xlu0 %v3032
    %v3034 = vpop.xlane.xlu0 %3033
    %v3035 = vsel %vm1673, %v3015, -inf
    %3036 = vmax.xlane.f32.xlu0 %v3035
    %v3037 = vpop.xlane.xlu0 %3036
    %v3038 = vsel %vm1673, %v3016, -inf
    %3039 = vmax.xlane.f32.xlu0 %v3038
    %v3040 = vpop.xlane.xlu0 %3039
    %v3041 = vsub.f32 %v3009, %v3019
    %v3042 = vsub.f32 %v3010, %v3022
    %v3043 = vsub.f32 %v3011, %v3025
    %v3044 = vsub.f32 %v3012, %v3028
    %v3045 = vsub.f32 %v3013, %v3031
    %v3046 = vsub.f32 %v3014, %v3034
    %v3047 = vsub.f32 %v3015, %v3037
    %v3048 = vsub.f32 %v3016, %v3040
    %v3049 = vmul.f32 %v3041, 1.442695
    %v3050 = vpow.pop %v3049
    %v3051 = vmul.f32 %v3042, 1.442695
    %v3052 = vpow.pop %v3051
    %v3053 = vmul.f32 %v3043, 1.442695
    %v3054 = vpow.pop %v3053
    %v3055 = vmul.f32 %v3044, 1.442695
    %v3056 = vpow.pop %v3055
    %v3057 = vmul.f32 %v3045, 1.442695
    %v3058 = vpow.pop %v3057
    %v3059 = vmul.f32 %v3046, 1.442695
    %v3060 = vpow.pop %v3059
    %v3061 = vmul.f32 %v3047, 1.442695
    %v3062 = vpow.pop %v3061
    %v3063 = vmul.f32 %v3048, 1.442695
    %v3064 = vpow.pop %v3063
    %v3065 = vsel %vm1673, %v3050, 0.0
    %3066 = vadd.xlane.f32.xlu0 %v3065
    %v3067 = vpop.xlane.xlu0 %3066
    %v3068 = vsel %vm1673, %v3052, 0.0
    %3069 = vadd.xlane.f32.xlu0 %v3068
    %v3070 = vpop.xlane.xlu0 %3069
    %v3071 = vsel %vm1673, %v3054, 0.0
    %3072 = vadd.xlane.f32.xlu0 %v3071
    %v3073 = vpop.xlane.xlu0 %3072
    %v3074 = vsel %vm1673, %v3056, 0.0
    %3075 = vadd.xlane.f32.xlu0 %v3074
    %v3076 = vpop.xlane.xlu0 %3075
    %v3077 = vsel %vm1673, %v3058, 0.0
    %3078 = vadd.xlane.f32.xlu0 %v3077
    %v3079 = vpop.xlane.xlu0 %3078
    %v3080 = vsel %vm1673, %v3060, 0.0
    %3081 = vadd.xlane.f32.xlu0 %v3080
    %v3082 = vpop.xlane.xlu0 %3081
    %v3083 = vsel %vm1673, %v3062, 0.0
    %3084 = vadd.xlane.f32.xlu0 %v3083
    %v3085 = vpop.xlane.xlu0 %3084
    %v3086 = vsel %vm1673, %v3064, 0.0
    %3087 = vadd.xlane.f32.xlu0 %v3086
    %v3088 = vpop.xlane.xlu0 %3087
    %v3089 = vrcp.pop %v3067
    %v3090 = vrcp.pop %v3070
    %v3091 = vrcp.pop %v3073
    %v3092 = vrcp.pop %v3076
    %v3093 = vrcp.pop %v3079
    %v3094 = vrcp.pop %v3082
    %v3095 = vrcp.pop %v3085
    %v3096 = vrcp.pop %v3088
    %v3097 = vmul.f32 %v3050, %v3089
    %v3098 = vmul.f32 %v3052, %v3090
    %v3099 = vmul.f32 %v3054, %v3091
    %v3100 = vmul.f32 %v3056, %v3092
    %v3101 = vmul.f32 %v3058, %v3093
    %v3102 = vmul.f32 %v3060, %v3094
    %v3103 = vmul.f32 %v3062, %v3095
    %v3104 = vmul.f32 %v3064, %v3096
    %v3105 = vpack.c.bf16 %v3098, %v3097
    %v3106 = vpack.c.bf16 %v3100, %v3099
    %v3107 = vpack.c.bf16 %v3102, %v3101
    %v3108 = vpack.c.bf16 %v3104, %v3103
    %3109 = vrot.lane.b32.xlu0 %v2134, 96
    %v3110 = vpop.permute.xlu0 %3109
    %3111 = vrot.lane.b32.xlu0 %v2136, 96
    %v3112 = vpop.permute.xlu0 %3111
    %3113 = vrot.lane.b32.xlu0 %v2138, 96
    %v3114 = vpop.permute.xlu0 %3113
    %3115 = vrot.lane.b32.xlu0 %v2140, 96
    %v3116 = vpop.permute.xlu0 %3115
    %v3122 = vsel %vm1673, %v3105, 0
    %v3125 = vsel %vm1673, %v3106, 0
    %v3128 = vsel %vm1673, %v3107, 0
    %v3131 = vsel %vm1673, %v3108, 0
    %3133 = vmatprep.subr.bf16.mxu0 0
    %3134 = vmatpush1.bf16.msra.mxu0 %v3110
    %3135 = vmatprep.subr.bf16.mxu0 0
    %3136 = vmatpush1.bf16.msra.mxu0 %v3112
    %3137 = vmatprep.subr.bf16.mxu0 0
    %3138 = vmatpush1.bf16.msra.mxu0 %v3114
    %3139 = vmatprep.subr.bf16.mxu0 0
    %3140 = vmatpush1.bf16.msra.mxu0 %v3116
    %3141 = vmatprep.subr.bf16.mxu0 0
    %3142 = vmatpush1.bf16.msra.mxu0 0
    %3143 = vmatprep.subr.bf16.mxu0 0
    %3144 = vmatpush1.bf16.msra.mxu0 0
    %3145 = vmatprep.subr.bf16.mxu0 0
    %3146 = vmatpush1.bf16.msra.mxu0 0
    %3147 = vmatprep.subr.bf16.mxu0 0
    %3148 = vmatpush1.bf16.msra.mxu0 0
    %3149 = vmatprep.subr.bf16.mxu0 0
    %3150 = vmatpush1.bf16.msra.mxu0 0
    %3151 = vmatprep.subr.bf16.mxu0 0
    %3152 = vmatpush1.bf16.msra.mxu0 0
    %3153 = vmatprep.subr.bf16.mxu0 0
    %3154 = vmatpush1.bf16.msra.mxu0 0
    %3155 = vmatprep.subr.bf16.mxu0 0
    %3156 = vmatpush1.bf16.msra.mxu0 0
    %3157 = vmatprep.subr.bf16.mxu0 0
    %3158 = vmatpush1.bf16.msra.mxu0 0
    %3159 = vmatprep.subr.bf16.mxu0 0
    %3160 = vmatpush1.bf16.msra.mxu0 0
    %3161 = vmatprep.subr.bf16.mxu0 0
    %3162 = vmatpush1.bf16.msra.mxu0 0
    %3163 = vmatprep.subr.bf16.mxu0 0
    %3164 = vmatpush1.bf16.msra.mxu0 0
    %3165 = vmatprep.mubr.bf16.mxu0 0
    %3166 = vmatmul.mubr.bf16.gmra.mrb[0].mxu0 %v3122
    %v3167 = vpop.f32.mrb[0].mxu0
    %v3168 = vadd.f32 0.0, %v3167
    %v3169 = vpop.f32.mrb[0].mxu0
    %v3170 = vpop.f32.mrb[0].mxu0
    %v3171 = vadd.f32 0.0, %v3170
    %v3172 = vpop.f32.mrb[0].mxu0
    %3173 = vmatprep.mubr.bf16.mxu0 0
    %3174 = vmatmul.mubr.bf16.gmra.mrb[0].mxu0 %v3125
    %v3175 = vpop.f32.mrb[0].mxu0
    %v3176 = vadd.f32 0.0, %v3175
    %v3177 = vpop.f32.mrb[0].mxu0
    %v3178 = vpop.f32.mrb[0].mxu0
    %v3179 = vadd.f32 0.0, %v3178
    %v3180 = vpop.f32.mrb[0].mxu0
    %3181 = vmatprep.mubr.bf16.mxu0 0
    %3182 = vmatmul.mubr.bf16.gmra.mrb[0].mxu0 %v3128
    %v3183 = vpop.f32.mrb[0].mxu0
    %v3184 = vadd.f32 0.0, %v3183
    %v3185 = vpop.f32.mrb[0].mxu0
    %v3186 = vpop.f32.mrb[0].mxu0
    %v3187 = vadd.f32 0.0, %v3186
    %v3188 = vpop.f32.mrb[0].mxu0
    %3189 = vmatprep.mubr.bf16.mxu0 0
    %3190 = vmatmul.mubr.bf16.gmra.mrb[0].mxu0 %v3131
    %v3191 = vpop.f32.mrb[0].mxu0
    %v3192 = vadd.f32 0.0, %v3191
    %v3193 = vpop.f32.mrb[0].mxu0
    %v3194 = vpop.f32.mrb[0].mxu0
    %v3195 = vadd.f32 0.0, %v3194
    %v3196 = vpop.f32.mrb[0].mxu0
    %3197 = vdwg.mxu0
    %v3198 = vpack.c.bf16 %v3171, %v3168
    %v3199 = vpack.c.bf16 %v3179, %v3176
    %v3200 = vpack.c.bf16 %v3187, %v3184
    %v3201 = vpack.c.bf16 %v3195, %v3192
    %v3202 = vld [vmem:[%s35 + $0x10] sm:$0xf]
    %v3203 = vld [vmem:[%s35 + $0x14] sm:$0xf]
    %v3206 = vunpack.c.l.b16 %v3202
    %v3207 = vunpack.c.l.b16 %v3203
    %v3208 = vpack.c.b16 %v3207, %v3206
    %v3211 = vsel %vm2161, %v3198, 0
    %v3214 = vsel %vm2161, %v3199, 0
    %v3217 = vsel %vm2161, %v3200, 0
    %v3220 = vsel %vm2161, %v3201, 0
    %3222 = vmatprep.subr.bf16.mxu0 0
    %3223 = vmatpush1.bf16.msra.mxu0 %v3208
    %3224 = vmatprep.subr.bf16.mxu0 0
    %3225 = vmatpush1.bf16.msra.mxu0 0
    %3226 = vmatprep.subr.bf16.mxu0 0
    %3227 = vmatpush1.bf16.msra.mxu0 0
    %3228 = vmatprep.subr.bf16.mxu0 0
    %3229 = vmatpush1.bf16.msra.mxu0 0
    %3230 = vmatprep.subr.bf16.mxu0 0
    %3231 = vmatpush1.bf16.msra.mxu0 0
    %3232 = vmatprep.subr.bf16.mxu0 0
    %3233 = vmatpush1.bf16.msra.mxu0 0
    %3234 = vmatprep.subr.bf16.mxu0 0
    %3235 = vmatpush1.bf16.msra.mxu0 0
    %3236 = vmatprep.subr.bf16.mxu0 0
    %3237 = vmatpush1.bf16.msra.mxu0 0
    %3238 = vmatprep.subr.bf16.mxu0 0
    %3239 = vmatpush1.bf16.msra.mxu0 0
    %3240 = vmatprep.subr.bf16.mxu0 0
    %3241 = vmatpush1.bf16.msra.mxu0 0
    %3242 = vmatprep.subr.bf16.mxu0 0
    %3243 = vmatpush1.bf16.msra.mxu0 0
    %3244 = vmatprep.subr.bf16.mxu0 0
    %3245 = vmatpush1.bf16.msra.mxu0 0
    %3246 = vmatprep.subr.bf16.mxu0 0
    %3247 = vmatpush1.bf16.msra.mxu0 0
    %3248 = vmatprep.subr.bf16.mxu0 0
    %3249 = vmatpush1.bf16.msra.mxu0 0
    %3250 = vmatprep.subr.bf16.mxu0 0
    %3251 = vmatpush1.bf16.msra.mxu0 0
    %3252 = vmatprep.subr.bf16.mxu0 0
    %3253 = vmatpush1.bf16.msra.mxu0 0
    %3254 = vmatprep.mubr.bf16.mxu0 0
    %3255 = vmatmul.mubr.bf16.gmra.mrb[0].mxu0 %v3211
    %v3256 = vpop.f32.mrb[0].mxu0
    %v3257 = vadd.f32 0.0, %v3256
    %v3258 = vpop.f32.mrb[0].mxu0
    %v3259 = vpop.f32.mrb[0].mxu0
    %v3260 = vadd.f32 0.0, %v3259
    %v3261 = vpop.f32.mrb[0].mxu0
    %3262 = vmatprep.mubr.bf16.mxu0 0
    %3263 = vmatmul.mubr.bf16.gmra.mrb[0].mxu0 %v3214
    %v3264 = vpop.f32.mrb[0].mxu0
    %v3265 = vadd.f32 0.0, %v3264
    %v3266 = vpop.f32.mrb[0].mxu0
    %v3267 = vpop.f32.mrb[0].mxu0
    %v3268 = vadd.f32 0.0, %v3267
    %v3269 = vpop.f32.mrb[0].mxu0
    %3270 = vmatprep.mubr.bf16.mxu0 0
    %3271 = vmatmul.mubr.bf16.gmra.mrb[0].mxu0 %v3217
    %v3272 = vpop.f32.mrb[0].mxu0
    %v3273 = vadd.f32 0.0, %v3272
    %v3274 = vpop.f32.mrb[0].mxu0
    %v3275 = vpop.f32.mrb[0].mxu0
    %v3276 = vadd.f32 0.0, %v3275
    %v3277 = vpop.f32.mrb[0].mxu0
    %3278 = vmatprep.mubr.bf16.mxu0 0
    %3279 = vmatmul.mubr.bf16.gmra.mrb[0].mxu0 %v3220
    %v3280 = vpop.f32.mrb[0].mxu0
    %v3281 = vadd.f32 0.0, %v3280
    %v3282 = vpop.f32.mrb[0].mxu0
    %v3283 = vpop.f32.mrb[0].mxu0
    %v3284 = vadd.f32 0.0, %v3283
    %v3285 = vpop.f32.mrb[0].mxu0
    %3286 = vdwg.mxu0
    %v3287 = vadd.f32 %v2874, %v3257
    %v3288 = vadd.f32 %v2877, %v3260
    %v3289 = vadd.f32 %v2882, %v3265
    %v3290 = vadd.f32 %v2885, %v3268
    %v3291 = vadd.f32 %v2890, %v3273
    %v3292 = vadd.f32 %v2893, %v3276
    %v3293 = vadd.f32 %v2898, %v3281
    %v3294 = vadd.f32 %v2901, %v3284
    %3295 = vrot.lane.b32.xlu0 %v2133, 80
    %v3296 = vpop.permute.xlu0 %3295
    %3297 = vrot.lane.b32.xlu0 %v2135, 80
    %v3298 = vpop.permute.xlu0 %3297
    %3299 = vrot.lane.b32.xlu0 %v2137, 80
    %v3300 = vpop.permute.xlu0 %3299
    %3301 = vrot.lane.b32.xlu0 %v2139, 80
    %v3302 = vpop.permute.xlu0 %3301
    %3303 = vrot.lane.b32.xlu0 %v2133, 16
    %v3304 = vpop.permute.xlu0 %3303
    %3305 = vrot.lane.b32.xlu0 %v2135, 16
    %v3306 = vpop.permute.xlu0 %3305
    %3307 = vrot.lane.b32.xlu0 %v2137, 16
    %v3308 = vpop.permute.xlu0 %3307
    %3309 = vrot.lane.b32.xlu0 %v2139, 16
    %v3310 = vpop.permute.xlu0 %3309
    %v3312 = vsel %vm2161, %v3296, 0
    %v3315 = vsel %vm2161, %v3298, 0
    %v3318 = vsel %vm2161, %v3300, 0
    %v3321 = vsel %vm2161, %v3302, 0
    %v3324 = vsel %vm2161, %v3304, 0
    %v3327 = vsel %vm2161, %v3306, 0
    %v3330 = vsel %vm2161, %v3308, 0
    %v3333 = vsel %vm2161, %v3310, 0
    %3335 = vmatprep.subr.bf16.mxu0 0
    %3336 = vmatpush1.bf16.xpose.msra.mxu0 %v3324
    %3337 = vmatprep.subr.bf16.mxu0 0
    %3338 = vmatpush1.bf16.xpose.msra.mxu0 %v3327
    %3339 = vmatprep.subr.bf16.mxu0 0
    %3340 = vmatpush1.bf16.xpose.msra.mxu0 %v3330
    %3341 = vmatprep.subr.bf16.mxu0 0
    %3342 = vmatpush1.bf16.xpose.msra.mxu0 %v3333
    %3343 = vmatprep.subr.bf16.mxu0 0
    %3344 = vmatpush1.bf16.xpose.msra.mxu0 0
    %3345 = vmatprep.subr.bf16.mxu0 0
    %3346 = vmatpush1.bf16.xpose.msra.mxu0 0
    %3347 = vmatprep.subr.bf16.mxu0 0
    %3348 = vmatpush1.bf16.xpose.msra.mxu0 0
    %3349 = vmatprep.subr.bf16.mxu0 0
    %3350 = vmatpush1.bf16.xpose.msra.mxu0 0
    %3351 = vmatprep.subr.bf16.mxu0 0
    %3352 = vmatpush1.bf16.xpose.msra.mxu0 0
    %3353 = vmatprep.subr.bf16.mxu0 0
    %3354 = vmatpush1.bf16.xpose.msra.mxu0 0
    %3355 = vmatprep.subr.bf16.mxu0 0
    %3356 = vmatpush1.bf16.xpose.msra.mxu0 0
    %3357 = vmatprep.subr.bf16.mxu0 0
    %3358 = vmatpush1.bf16.xpose.msra.mxu0 0
    %3359 = vmatprep.subr.bf16.mxu0 0
    %3360 = vmatpush1.bf16.xpose.msra.mxu0 0
    %3361 = vmatprep.subr.bf16.mxu0 0
    %3362 = vmatpush1.bf16.xpose.msra.mxu0 0
    %3363 = vmatprep.subr.bf16.mxu0 0
    %3364 = vmatpush1.bf16.xpose.msra.mxu0 0
    %3365 = vmatprep.subr.bf16.mxu0 0
    %3366 = vmatpush1.bf16.xpose.msra.mxu0 0
    %3367 = vmatprep.mubr.bf16.mxu0 0
    %3368 = vmatmul.mubr.bf16.gmra.mrb[0].mxu0 %v3312
    %v3369 = vpop.f32.mrb[0].mxu0
    %v3370 = vadd.f32 0.0, %v3369
    %v3371 = vpop.f32.mrb[0].mxu0
    %v3372 = vpop.f32.mrb[0].mxu0
    %v3373 = vadd.f32 0.0, %v3372
    %v3374 = vpop.f32.mrb[0].mxu0
    %3375 = vmatprep.mubr.bf16.mxu0 0
    %3376 = vmatmul.mubr.bf16.gmra.mrb[0].mxu0 %v3315
    %v3377 = vpop.f32.mrb[0].mxu0
    %v3378 = vadd.f32 0.0, %v3377
    %v3379 = vpop.f32.mrb[0].mxu0
    %v3380 = vpop.f32.mrb[0].mxu0
    %v3381 = vadd.f32 0.0, %v3380
    %v3382 = vpop.f32.mrb[0].mxu0
    %3383 = vmatprep.mubr.bf16.mxu0 0
    %3384 = vmatmul.mubr.bf16.gmra.mrb[0].mxu0 %v3318
    %v3385 = vpop.f32.mrb[0].mxu0
    %v3386 = vadd.f32 0.0, %v3385
    %v3387 = vpop.f32.mrb[0].mxu0
    %v3388 = vpop.f32.mrb[0].mxu0
    %v3389 = vadd.f32 0.0, %v3388
    %v3390 = vpop.f32.mrb[0].mxu0
    %3391 = vmatprep.mubr.bf16.mxu0 0
    %3392 = vmatmul.mubr.bf16.gmra.mrb[0].mxu0 %v3321
    %v3393 = vpop.f32.mrb[0].mxu0
    %v3394 = vadd.f32 0.0, %v3393
    %v3395 = vpop.f32.mrb[0].mxu0
    %v3396 = vpop.f32.mrb[0].mxu0
    %v3397 = vadd.f32 0.0, %v3396
    %v3398 = vpop.f32.mrb[0].mxu0
    %3399 = vdwg.mxu0
    %v3400 = vmul.f32 %v3370, 0.25
    %v3401 = vmul.f32 %v3373, 0.25
    %v3402 = vmul.f32 %v3378, 0.25
    %v3403 = vmul.f32 %v3381, 0.25
    %v3404 = vmul.f32 %v3386, 0.25
    %v3405 = vmul.f32 %v3389, 0.25
    %v3406 = vmul.f32 %v3394, 0.25
    %v3407 = vmul.f32 %v3397, 0.25
    %v3408 = vsel %vm1673, %v3400, -inf
    %3409 = vmax.xlane.f32.xlu0 %v3408
    %v3410 = vpop.xlane.xlu0 %3409
    %v3411 = vsel %vm1673, %v3401, -inf
    %3412 = vmax.xlane.f32.xlu0 %v3411
    %v3413 = vpop.xlane.xlu0 %3412
    %v3414 = vsel %vm1673, %v3402, -inf
    %3415 = vmax.xlane.f32.xlu0 %v3414
    %v3416 = vpop.xlane.xlu0 %3415
    %v3417 = vsel %vm1673, %v3403, -inf
    %3418 = vmax.xlane.f32.xlu0 %v3417
    %v3419 = vpop.xlane.xlu0 %3418
    %v3420 = vsel %vm1673, %v3404, -inf
    %3421 = vmax.xlane.f32.xlu0 %v3420
    %v3422 = vpop.xlane.xlu0 %3421
    %v3423 = vsel %vm1673, %v3405, -inf
    %3424 = vmax.xlane.f32.xlu0 %v3423
    %v3425 = vpop.xlane.xlu0 %3424
    %v3426 = vsel %vm1673, %v3406, -inf
    %3427 = vmax.xlane.f32.xlu0 %v3426
    %v3428 = vpop.xlane.xlu0 %3427
    %v3429 = vsel %vm1673, %v3407, -inf
    %3430 = vmax.xlane.f32.xlu0 %v3429
    %v3431 = vpop.xlane.xlu0 %3430
    %v3432 = vsub.f32 %v3400, %v3410
    %v3433 = vsub.f32 %v3401, %v3413
    %v3434 = vsub.f32 %v3402, %v3416
    %v3435 = vsub.f32 %v3403, %v3419
    %v3436 = vsub.f32 %v3404, %v3422
    %v3437 = vsub.f32 %v3405, %v3425
    %v3438 = vsub.f32 %v3406, %v3428
    %v3439 = vsub.f32 %v3407, %v3431
    %v3440 = vmul.f32 %v3432, 1.442695
    %v3441 = vpow.pop %v3440
    %v3442 = vmul.f32 %v3433, 1.442695
    %v3443 = vpow.pop %v3442
    %v3444 = vmul.f32 %v3434, 1.442695
    %v3445 = vpow.pop %v3444
    %v3446 = vmul.f32 %v3435, 1.442695
    %v3447 = vpow.pop %v3446
    %v3448 = vmul.f32 %v3436, 1.442695
    %v3449 = vpow.pop %v3448
    %v3450 = vmul.f32 %v3437, 1.442695
    %v3451 = vpow.pop %v3450
    %v3452 = vmul.f32 %v3438, 1.442695
    %v3453 = vpow.pop %v3452
    %v3454 = vmul.f32 %v3439, 1.442695
    %v3455 = vpow.pop %v3454
    %v3456 = vsel %vm1673, %v3441, 0.0
    %3457 = vadd.xlane.f32.xlu0 %v3456
    %v3458 = vpop.xlane.xlu0 %3457
    %v3459 = vsel %vm1673, %v3443, 0.0
    %3460 = vadd.xlane.f32.xlu0 %v3459
    %v3461 = vpop.xlane.xlu0 %3460
    %v3462 = vsel %vm1673, %v3445, 0.0
    %3463 = vadd.xlane.f32.xlu0 %v3462
    %v3464 = vpop.xlane.xlu0 %3463
    %v3465 = vsel %vm1673, %v3447, 0.0
    %3466 = vadd.xlane.f32.xlu0 %v3465
    %v3467 = vpop.xlane.xlu0 %3466
    %v3468 = vsel %vm1673, %v3449, 0.0
    %3469 = vadd.xlane.f32.xlu0 %v3468
    %v3470 = vpop.xlane.xlu0 %3469
    %v3471 = vsel %vm1673, %v3451, 0.0
    %3472 = vadd.xlane.f32.xlu0 %v3471
    %v3473 = vpop.xlane.xlu0 %3472
    %v3474 = vsel %vm1673, %v3453, 0.0
    %3475 = vadd.xlane.f32.xlu0 %v3474
    %v3476 = vpop.xlane.xlu0 %3475
    %v3477 = vsel %vm1673, %v3455, 0.0
    %3478 = vadd.xlane.f32.xlu0 %v3477
    %v3479 = vpop.xlane.xlu0 %3478
    %v3480 = vrcp.pop %v3458
    %v3481 = vrcp.pop %v3461
    %v3482 = vrcp.pop %v3464
    %v3483 = vrcp.pop %v3467
    %v3484 = vrcp.pop %v3470
    %v3485 = vrcp.pop %v3473
    %v3486 = vrcp.pop %v3476
    %v3487 = vrcp.pop %v3479
    %v3488 = vmul.f32 %v3441, %v3480
    %v3489 = vmul.f32 %v3443, %v3481
    %v3490 = vmul.f32 %v3445, %v3482
    %v3491 = vmul.f32 %v3447, %v3483
    %v3492 = vmul.f32 %v3449, %v3484
    %v3493 = vmul.f32 %v3451, %v3485
    %v3494 = vmul.f32 %v3453, %v3486
    %v3495 = vmul.f32 %v3455, %v3487
    %v3496 = vpack.c.bf16 %v3489, %v3488
    %v3497 = vpack.c.bf16 %v3491, %v3490
    %v3498 = vpack.c.bf16 %v3493, %v3492
    %v3499 = vpack.c.bf16 %v3495, %v3494
    %3500 = vrot.lane.b32.xlu0 %v2134, 80
    %v3501 = vpop.permute.xlu0 %3500
    %3502 = vrot.lane.b32.xlu0 %v2136, 80
    %v3503 = vpop.permute.xlu0 %3502
    %3504 = vrot.lane.b32.xlu0 %v2138, 80
    %v3505 = vpop.permute.xlu0 %3504
    %3506 = vrot.lane.b32.xlu0 %v2140, 80
    %v3507 = vpop.permute.xlu0 %3506
    %v3513 = vsel %vm1673, %v3496, 0
    %v3516 = vsel %vm1673, %v3497, 0
    %v3519 = vsel %vm1673, %v3498, 0
    %v3522 = vsel %vm1673, %v3499, 0
    %3524 = vmatprep.subr.bf16.mxu0 0
    %3525 = vmatpush1.bf16.msra.mxu0 %v3501
    %3526 = vmatprep.subr.bf16.mxu0 0
    %3527 = vmatpush1.bf16.msra.mxu0 %v3503
    %3528 = vmatprep.subr.bf16.mxu0 0
    %3529 = vmatpush1.bf16.msra.mxu0 %v3505
    %3530 = vmatprep.subr.bf16.mxu0 0
    %3531 = vmatpush1.bf16.msra.mxu0 %v3507
    %3532 = vmatprep.subr.bf16.mxu0 0
    %3533 = vmatpush1.bf16.msra.mxu0 0
    %3534 = vmatprep.subr.bf16.mxu0 0
    %3535 = vmatpush1.bf16.msra.mxu0 0
    %3536 = vmatprep.subr.bf16.mxu0 0
    %3537 = vmatpush1.bf16.msra.mxu0 0
    %3538 = vmatprep.subr.bf16.mxu0 0
    %3539 = vmatpush1.bf16.msra.mxu0 0
    %3540 = vmatprep.subr.bf16.mxu0 0
    %3541 = vmatpush1.bf16.msra.mxu0 0
    %3542 = vmatprep.subr.bf16.mxu0 0
    %3543 = vmatpush1.bf16.msra.mxu0 0
    %3544 = vmatprep.subr.bf16.mxu0 0
    %3545 = vmatpush1.bf16.msra.mxu0 0
    %3546 = vmatprep.subr.bf16.mxu0 0
    %3547 = vmatpush1.bf16.msra.mxu0 0
    %3548 = vmatprep.subr.bf16.mxu0 0
    %3549 = vmatpush1.bf16.msra.mxu0 0
    %3550 = vmatprep.subr.bf16.mxu0 0
    %3551 = vmatpush1.bf16.msra.mxu0 0
    %3552 = vmatprep.subr.bf16.mxu0 0
    %3553 = vmatpush1.bf16.msra.mxu0 0
    %3554 = vmatprep.subr.bf16.mxu0 0
    %3555 = vmatpush1.bf16.msra.mxu0 0
    %3556 = vmatprep.mubr.bf16.mxu0 0
    %3557 = vmatmul.mubr.bf16.gmra.mrb[0].mxu0 %v3513
    %v3558 = vpop.f32.mrb[0].mxu0
    %v3559 = vadd.f32 0.0, %v3558
    %v3560 = vpop.f32.mrb[0].mxu0
    %v3561 = vpop.f32.mrb[0].mxu0
    %v3562 = vadd.f32 0.0, %v3561
    %v3563 = vpop.f32.mrb[0].mxu0
    %3564 = vmatprep.mubr.bf16.mxu0 0
    %3565 = vmatmul.mubr.bf16.gmra.mrb[0].mxu0 %v3516
    %v3566 = vpop.f32.mrb[0].mxu0
    %v3567 = vadd.f32 0.0, %v3566
    %v3568 = vpop.f32.mrb[0].mxu0
    %v3569 = vpop.f32.mrb[0].mxu0
    %v3570 = vadd.f32 0.0, %v3569
    %v3571 = vpop.f32.mrb[0].mxu0
    %3572 = vmatprep.mubr.bf16.mxu0 0
    %3573 = vmatmul.mubr.bf16.gmra.mrb[0].mxu0 %v3519
    %v3574 = vpop.f32.mrb[0].mxu0
    %v3575 = vadd.f32 0.0, %v3574
    %v3576 = vpop.f32.mrb[0].mxu0
    %v3577 = vpop.f32.mrb[0].mxu0
    %v3578 = vadd.f32 0.0, %v3577
    %v3579 = vpop.f32.mrb[0].mxu0
    %3580 = vmatprep.mubr.bf16.mxu0 0
    %3581 = vmatmul.mubr.bf16.gmra.mrb[0].mxu0 %v3522
    %v3582 = vpop.f32.mrb[0].mxu0
    %v3583 = vadd.f32 0.0, %v3582
    %v3584 = vpop.f32.mrb[0].mxu0
    %v3585 = vpop.f32.mrb[0].mxu0
    %v3586 = vadd.f32 0.0, %v3585
    %v3587 = vpop.f32.mrb[0].mxu0
    %3588 = vdwg.mxu0
    %v3589 = vpack.c.bf16 %v3562, %v3559
    %v3590 = vpack.c.bf16 %v3570, %v3567
    %v3591 = vpack.c.bf16 %v3578, %v3575
    %v3592 = vpack.c.bf16 %v3586, %v3583
    %v3593 = vld [vmem:[%s35 + $0x18] sm:$0xf]
    %v3594 = vld [vmem:[%s35 + $0x1c] sm:$0xf]
    %v3597 = vunpack.c.l.b16 %v3593
    %v3598 = vunpack.c.l.b16 %v3594
    %v3599 = vpack.c.b16 %v3598, %v3597
    %v3602 = vsel %vm2161, %v3589, 0
    %v3605 = vsel %vm2161, %v3590, 0
    %v3608 = vsel %vm2161, %v3591, 0
    %v3611 = vsel %vm2161, %v3592, 0
    %3613 = vmatprep.subr.bf16.mxu0 0
    %3614 = vmatpush1.bf16.msra.mxu0 %v3599
    %3615 = vmatprep.subr.bf16.mxu0 0
    %3616 = vmatpush1.bf16.msra.mxu0 0
    %3617 = vmatprep.subr.bf16.mxu0 0
    %3618 = vmatpush1.bf16.msra.mxu0 0
    %3619 = vmatprep.subr.bf16.mxu0 0
    %3620 = vmatpush1.bf16.msra.mxu0 0
    %3621 = vmatprep.subr.bf16.mxu0 0
    %3622 = vmatpush1.bf16.msra.mxu0 0
    %3623 = vmatprep.subr.bf16.mxu0 0
    %3624 = vmatpush1.bf16.msra.mxu0 0
    %3625 = vmatprep.subr.bf16.mxu0 0
    %3626 = vmatpush1.bf16.msra.mxu0 0
    %3627 = vmatprep.subr.bf16.mxu0 0
    %3628 = vmatpush1.bf16.msra.mxu0 0
    %3629 = vmatprep.subr.bf16.mxu0 0
    %3630 = vmatpush1.bf16.msra.mxu0 0
    %3631 = vmatprep.subr.bf16.mxu0 0
    %3632 = vmatpush1.bf16.msra.mxu0 0
    %3633 = vmatprep.subr.bf16.mxu0 0
    %3634 = vmatpush1.bf16.msra.mxu0 0
    %3635 = vmatprep.subr.bf16.mxu0 0
    %3636 = vmatpush1.bf16.msra.mxu0 0
    %3637 = vmatprep.subr.bf16.mxu0 0
    %3638 = vmatpush1.bf16.msra.mxu0 0
    %3639 = vmatprep.subr.bf16.mxu0 0
    %3640 = vmatpush1.bf16.msra.mxu0 0
    %3641 = vmatprep.subr.bf16.mxu0 0
    %3642 = vmatpush1.bf16.msra.mxu0 0
    %3643 = vmatprep.subr.bf16.mxu0 0
    %3644 = vmatpush1.bf16.msra.mxu0 0
    %3645 = vmatprep.mubr.bf16.mxu0 0
    %3646 = vmatmul.mubr.bf16.gmra.mrb[0].mxu0 %v3602
    %v3647 = vpop.f32.mrb[0].mxu0
    %v3648 = vadd.f32 0.0, %v3647
    %v3649 = vpop.f32.mrb[0].mxu0
    %v3650 = vpop.f32.mrb[0].mxu0
    %v3651 = vadd.f32 0.0, %v3650
    %v3652 = vpop.f32.mrb[0].mxu0
    %3653 = vmatprep.mubr.bf16.mxu0 0
    %3654 = vmatmul.mubr.bf16.gmra.mrb[0].mxu0 %v3605
    %v3655 = vpop.f32.mrb[0].mxu0
    %v3656 = vadd.f32 0.0, %v3655
    %v3657 = vpop.f32.mrb[0].mxu0
    %v3658 = vpop.f32.mrb[0].mxu0
    %v3659 = vadd.f32 0.0, %v3658
    %v3660 = vpop.f32.mrb[0].mxu0
    %3661 = vmatprep.mubr.bf16.mxu0 0
    %3662 = vmatmul.mubr.bf16.gmra.mrb[0].mxu0 %v3608
    %v3663 = vpop.f32.mrb[0].mxu0
    %v3664 = vadd.f32 0.0, %v3663
    %v3665 = vpop.f32.mrb[0].mxu0
    %v3666 = vpop.f32.mrb[0].mxu0
    %v3667 = vadd.f32 0.0, %v3666
    %v3668 = vpop.f32.mrb[0].mxu0
    %3669 = vmatprep.mubr.bf16.mxu0 0
    %3670 = vmatmul.mubr.bf16.gmra.mrb[0].mxu0 %v3611
    %v3671 = vpop.f32.mrb[0].mxu0
    %v3672 = vadd.f32 0.0, %v3671
    %v3673 = vpop.f32.mrb[0].mxu0
    %v3674 = vpop.f32.mrb[0].mxu0
    %v3675 = vadd.f32 0.0, %v3674
    %v3676 = vpop.f32.mrb[0].mxu0
    %3677 = vdwg.mxu0
    %v3678 = vadd.f32 %v3287, %v3648
    %v3679 = vadd.f32 %v3288, %v3651
    %v3680 = vadd.f32 %v3289, %v3656
    %v3681 = vadd.f32 %v3290, %v3659
    %v3682 = vadd.f32 %v3291, %v3664
    %v3683 = vadd.f32 %v3292, %v3667
    %v3684 = vadd.f32 %v3293, %v3672
    %v3685 = vadd.f32 %v3294, %v3675
    %3690 = vrot.lane.b32.xlu0 %v2141, 64
    %v3691 = vpop.permute.xlu0 %3690
    %3692 = vrot.lane.b32.xlu0 %v2143, 64
    %v3693 = vpop.permute.xlu0 %3692
    %3694 = vrot.lane.b32.xlu0 %v2145, 64
    %v3695 = vpop.permute.xlu0 %3694
    %3696 = vrot.lane.b32.xlu0 %v2147, 64
    %v3697 = vpop.permute.xlu0 %3696
    %v3699 = vsel %vm2161, %v2141, 0
    %v3702 = vsel %vm2161, %v2143, 0
    %v3705 = vsel %vm2161, %v2145, 0
    %v3708 = vsel %vm2161, %v2147, 0
    %v3711 = vsel %vm2161, %v3691, 0
    %v3714 = vsel %vm2161, %v3693, 0
    %v3717 = vsel %vm2161, %v3695, 0
    %v3720 = vsel %vm2161, %v3697, 0
    %3722 = vmatprep.subr.bf16.mxu0 0
    %3723 = vmatpush1.bf16.xpose.msra.mxu0 %v3711
    %3724 = vmatprep.subr.bf16.mxu0 0
    %3725 = vmatpush1.bf16.xpose.msra.mxu0 %v3714
    %3726 = vmatprep.subr.bf16.mxu0 0
    %3727 = vmatpush1.bf16.xpose.msra.mxu0 %v3717
    %3728 = vmatprep.subr.bf16.mxu0 0
    %3729 = vmatpush1.bf16.xpose.msra.mxu0 %v3720
    %3730 = vmatprep.subr.bf16.mxu0 0
    %3731 = vmatpush1.bf16.xpose.msra.mxu0 0
    %3732 = vmatprep.subr.bf16.mxu0 0
    %3733 = vmatpush1.bf16.xpose.msra.mxu0 0
    %3734 = vmatprep.subr.bf16.mxu0 0
    %3735 = vmatpush1.bf16.xpose.msra.mxu0 0
    %3736 = vmatprep.subr.bf16.mxu0 0
    %3737 = vmatpush1.bf16.xpose.msra.mxu0 0
    %3738 = vmatprep.subr.bf16.mxu0 0
    %3739 = vmatpush1.bf16.xpose.msra.mxu0 0
    %3740 = vmatprep.subr.bf16.mxu0 0
    %3741 = vmatpush1.bf16.xpose.msra.mxu0 0
    %3742 = vmatprep.subr.bf16.mxu0 0
    %3743 = vmatpush1.bf16.xpose.msra.mxu0 0
    %3744 = vmatprep.subr.bf16.mxu0 0
    %3745 = vmatpush1.bf16.xpose.msra.mxu0 0
    %3746 = vmatprep.subr.bf16.mxu0 0
    %3747 = vmatpush1.bf16.xpose.msra.mxu0 0
    %3748 = vmatprep.subr.bf16.mxu0 0
    %3749 = vmatpush1.bf16.xpose.msra.mxu0 0
    %3750 = vmatprep.subr.bf16.mxu0 0
    %3751 = vmatpush1.bf16.xpose.msra.mxu0 0
    %3752 = vmatprep.subr.bf16.mxu0 0
    %3753 = vmatpush1.bf16.xpose.msra.mxu0 0
    %3754 = vmatprep.mubr.bf16.mxu0 0
    %3755 = vmatmul.mubr.bf16.gmra.mrb[0].mxu0 %v3699
    %v3756 = vpop.f32.mrb[0].mxu0
    %v3757 = vadd.f32 0.0, %v3756
    %v3758 = vpop.f32.mrb[0].mxu0
    %v3759 = vpop.f32.mrb[0].mxu0
    %v3760 = vadd.f32 0.0, %v3759
    %v3761 = vpop.f32.mrb[0].mxu0
    %3762 = vmatprep.mubr.bf16.mxu0 0
    %3763 = vmatmul.mubr.bf16.gmra.mrb[0].mxu0 %v3702
    %v3764 = vpop.f32.mrb[0].mxu0
    %v3765 = vadd.f32 0.0, %v3764
    %v3766 = vpop.f32.mrb[0].mxu0
    %v3767 = vpop.f32.mrb[0].mxu0
    %v3768 = vadd.f32 0.0, %v3767
    %v3769 = vpop.f32.mrb[0].mxu0
    %3770 = vmatprep.mubr.bf16.mxu0 0
    %3771 = vmatmul.mubr.bf16.gmra.mrb[0].mxu0 %v3705
    %v3772 = vpop.f32.mrb[0].mxu0
    %v3773 = vadd.f32 0.0, %v3772
    %v3774 = vpop.f32.mrb[0].mxu0
    %v3775 = vpop.f32.mrb[0].mxu0
    %v3776 = vadd.f32 0.0, %v3775
    %v3777 = vpop.f32.mrb[0].mxu0
    %3778 = vmatprep.mubr.bf16.mxu0 0
    %3779 = vmatmul.mubr.bf16.gmra.mrb[0].mxu0 %v3708
    %v3780 = vpop.f32.mrb[0].mxu0
    %v3781 = vadd.f32 0.0, %v3780
    %v3782 = vpop.f32.mrb[0].mxu0
    %v3783 = vpop.f32.mrb[0].mxu0
    %v3784 = vadd.f32 0.0, %v3783
    %v3785 = vpop.f32.mrb[0].mxu0
    %3786 = vdwg.mxu0
    %v3787 = vmul.f32 %v3757, 0.25
    %v3788 = vmul.f32 %v3760, 0.25
    %v3789 = vmul.f32 %v3765, 0.25
    %v3790 = vmul.f32 %v3768, 0.25
    %v3791 = vmul.f32 %v3773, 0.25
    %v3792 = vmul.f32 %v3776, 0.25
    %v3793 = vmul.f32 %v3781, 0.25
    %v3794 = vmul.f32 %v3784, 0.25
    %v3795 = vsel %vm1673, %v3787, -inf
    %3796 = vmax.xlane.f32.xlu0 %v3795
    %v3797 = vpop.xlane.xlu0 %3796
    %v3798 = vsel %vm1673, %v3788, -inf
    %3799 = vmax.xlane.f32.xlu0 %v3798
    %v3800 = vpop.xlane.xlu0 %3799
    %v3801 = vsel %vm1673, %v3789, -inf
    %3802 = vmax.xlane.f32.xlu0 %v3801
    %v3803 = vpop.xlane.xlu0 %3802
    %v3804 = vsel %vm1673, %v3790, -inf
    %3805 = vmax.xlane.f32.xlu0 %v3804
    %v3806 = vpop.xlane.xlu0 %3805
    %v3807 = vsel %vm1673, %v3791, -inf
    %3808 = vmax.xlane.f32.xlu0 %v3807
    %v3809 = vpop.xlane.xlu0 %3808
    %v3810 = vsel %vm1673, %v3792, -inf
    %3811 = vmax.xlane.f32.xlu0 %v3810
    %v3812 = vpop.xlane.xlu0 %3811
    %v3813 = vsel %vm1673, %v3793, -inf
    %3814 = vmax.xlane.f32.xlu0 %v3813
    %v3815 = vpop.xlane.xlu0 %3814
    %v3816 = vsel %vm1673, %v3794, -inf
    %3817 = vmax.xlane.f32.xlu0 %v3816
    %v3818 = vpop.xlane.xlu0 %3817
    %v3819 = vsub.f32 %v3787, %v3797
    %v3820 = vsub.f32 %v3788, %v3800
    %v3821 = vsub.f32 %v3789, %v3803
    %v3822 = vsub.f32 %v3790, %v3806
    %v3823 = vsub.f32 %v3791, %v3809
    %v3824 = vsub.f32 %v3792, %v3812
    %v3825 = vsub.f32 %v3793, %v3815
    %v3826 = vsub.f32 %v3794, %v3818
    %v3827 = vmul.f32 %v3819, 1.442695
    %v3828 = vpow.pop %v3827
    %v3829 = vmul.f32 %v3820, 1.442695
    %v3830 = vpow.pop %v3829
    %v3831 = vmul.f32 %v3821, 1.442695
    %v3832 = vpow.pop %v3831
    %v3833 = vmul.f32 %v3822, 1.442695
    %v3834 = vpow.pop %v3833
    %v3835 = vmul.f32 %v3823, 1.442695
    %v3836 = vpow.pop %v3835
    %v3837 = vmul.f32 %v3824, 1.442695
    %v3838 = vpow.pop %v3837
    %v3839 = vmul.f32 %v3825, 1.442695
    %v3840 = vpow.pop %v3839
    %v3841 = vmul.f32 %v3826, 1.442695
    %v3842 = vpow.pop %v3841
    %v3843 = vsel %vm1673, %v3828, 0.0
    %3844 = vadd.xlane.f32.xlu0 %v3843
    %v3845 = vpop.xlane.xlu0 %3844
    %v3846 = vsel %vm1673, %v3830, 0.0
    %3847 = vadd.xlane.f32.xlu0 %v3846
    %v3848 = vpop.xlane.xlu0 %3847
    %v3849 = vsel %vm1673, %v3832, 0.0
    %3850 = vadd.xlane.f32.xlu0 %v3849
    %v3851 = vpop.xlane.xlu0 %3850
    %v3852 = vsel %vm1673, %v3834, 0.0
    %3853 = vadd.xlane.f32.xlu0 %v3852
    %v3854 = vpop.xlane.xlu0 %3853
    %v3855 = vsel %vm1673, %v3836, 0.0
    %3856 = vadd.xlane.f32.xlu0 %v3855
    %v3857 = vpop.xlane.xlu0 %3856
    %v3858 = vsel %vm1673, %v3838, 0.0
    %3859 = vadd.xlane.f32.xlu0 %v3858
    %v3860 = vpop.xlane.xlu0 %3859
    %v3861 = vsel %vm1673, %v3840, 0.0
    %3862 = vadd.xlane.f32.xlu0 %v3861
    %v3863 = vpop.xlane.xlu0 %3862
    %v3864 = vsel %vm1673, %v3842, 0.0
    %3865 = vadd.xlane.f32.xlu0 %v3864
    %v3866 = vpop.xlane.xlu0 %3865
    %v3867 = vrcp.pop %v3845
    %v3868 = vrcp.pop %v3848
    %v3869 = vrcp.pop %v3851
    %v3870 = vrcp.pop %v3854
    %v3871 = vrcp.pop %v3857
    %v3872 = vrcp.pop %v3860
    %v3873 = vrcp.pop %v3863
    %v3874 = vrcp.pop %v3866
    %v3875 = vmul.f32 %v3828, %v3867
    %v3876 = vmul.f32 %v3830, %v3868
    %v3877 = vmul.f32 %v3832, %v3869
    %v3878 = vmul.f32 %v3834, %v3870
    %v3879 = vmul.f32 %v3836, %v3871
    %v3880 = vmul.f32 %v3838, %v3872
    %v3881 = vmul.f32 %v3840, %v3873
    %v3882 = vmul.f32 %v3842, %v3874
    %v3883 = vpack.c.bf16 %v3876, %v3875
    %v3884 = vpack.c.bf16 %v3878, %v3877
    %v3885 = vpack.c.bf16 %v3880, %v3879
    %v3886 = vpack.c.bf16 %v3882, %v3881
    %v3888 = vsel %vm1673, %v3883, 0
    %v3891 = vsel %vm1673, %v3884, 0
    %v3894 = vsel %vm1673, %v3885, 0
    %v3897 = vsel %vm1673, %v3886, 0
    %3899 = vmatprep.subr.bf16.mxu0 0
    %3900 = vmatpush1.bf16.msra.mxu0 %v2142
    %3901 = vmatprep.subr.bf16.mxu0 0
    %3902 = vmatpush1.bf16.msra.mxu0 %v2144
    %3903 = vmatprep.subr.bf16.mxu0 0
    %3904 = vmatpush1.bf16.msra.mxu0 %v2146
    %3905 = vmatprep.subr.bf16.mxu0 0
    %3906 = vmatpush1.bf16.msra.mxu0 %v2148
    %3907 = vmatprep.subr.bf16.mxu0 0
    %3908 = vmatpush1.bf16.msra.mxu0 0
    %3909 = vmatprep.subr.bf16.mxu0 0
    %3910 = vmatpush1.bf16.msra.mxu0 0
    %3911 = vmatprep.subr.bf16.mxu0 0
    %3912 = vmatpush1.bf16.msra.mxu0 0
    %3913 = vmatprep.subr.bf16.mxu0 0
    %3914 = vmatpush1.bf16.msra.mxu0 0
    %3915 = vmatprep.subr.bf16.mxu0 0
    %3916 = vmatpush1.bf16.msra.mxu0 0
    %3917 = vmatprep.subr.bf16.mxu0 0
    %3918 = vmatpush1.bf16.msra.mxu0 0
    %3919 = vmatprep.subr.bf16.mxu0 0
    %3920 = vmatpush1.bf16.msra.mxu0 0
    %3921 = vmatprep.subr.bf16.mxu0 0
    %3922 = vmatpush1.bf16.msra.mxu0 0
    %3923 = vmatprep.subr.bf16.mxu0 0
    %3924 = vmatpush1.bf16.msra.mxu0 0
    %3925 = vmatprep.subr.bf16.mxu0 0
    %3926 = vmatpush1.bf16.msra.mxu0 0
    %3927 = vmatprep.subr.bf16.mxu0 0
    %3928 = vmatpush1.bf16.msra.mxu0 0
    %3929 = vmatprep.subr.bf16.mxu0 0
    %3930 = vmatpush1.bf16.msra.mxu0 0
    %3931 = vmatprep.mubr.bf16.mxu0 0
    %3932 = vmatmul.mubr.bf16.gmra.mrb[0].mxu0 %v3888
    %v3933 = vpop.f32.mrb[0].mxu0
    %v3934 = vadd.f32 0.0, %v3933
    %v3935 = vpop.f32.mrb[0].mxu0
    %v3936 = vpop.f32.mrb[0].mxu0
    %v3937 = vadd.f32 0.0, %v3936
    %v3938 = vpop.f32.mrb[0].mxu0
    %3939 = vmatprep.mubr.bf16.mxu0 0
    %3940 = vmatmul.mubr.bf16.gmra.mrb[0].mxu0 %v3891
    %v3941 = vpop.f32.mrb[0].mxu0
    %v3942 = vadd.f32 0.0, %v3941
    %v3943 = vpop.f32.mrb[0].mxu0
    %v3944 = vpop.f32.mrb[0].mxu0
    %v3945 = vadd.f32 0.0, %v3944
    %v3946 = vpop.f32.mrb[0].mxu0
    %3947 = vmatprep.mubr.bf16.mxu0 0
    %3948 = vmatmul.mubr.bf16.gmra.mrb[0].mxu0 %v3894
    %v3949 = vpop.f32.mrb[0].mxu0
    %v3950 = vadd.f32 0.0, %v3949
    %v3951 = vpop.f32.mrb[0].mxu0
    %v3952 = vpop.f32.mrb[0].mxu0
    %v3953 = vadd.f32 0.0, %v3952
    %v3954 = vpop.f32.mrb[0].mxu0
    %3955 = vmatprep.mubr.bf16.mxu0 0
    %3956 = vmatmul.mubr.bf16.gmra.mrb[0].mxu0 %v3897
    %v3957 = vpop.f32.mrb[0].mxu0
    %v3958 = vadd.f32 0.0, %v3957
    %v3959 = vpop.f32.mrb[0].mxu0
    %v3960 = vpop.f32.mrb[0].mxu0
    %v3961 = vadd.f32 0.0, %v3960
    %v3962 = vpop.f32.mrb[0].mxu0
    %3963 = vdwg.mxu0
    %v3964 = vpack.c.bf16 %v3937, %v3934
    %v3965 = vpack.c.bf16 %v3945, %v3942
    %v3966 = vpack.c.bf16 %v3953, %v3950
    %v3967 = vpack.c.bf16 %v3961, %v3958
    %3968 = vrot.lane.b32.xlu0 %v2141, 112
    %v3969 = vpop.permute.xlu0 %3968
    %3970 = vrot.lane.b32.xlu0 %v2143, 112
    %v3971 = vpop.permute.xlu0 %3970
    %3972 = vrot.lane.b32.xlu0 %v2145, 112
    %v3973 = vpop.permute.xlu0 %3972
    %3974 = vrot.lane.b32.xlu0 %v2147, 112
    %v3975 = vpop.permute.xlu0 %3974
    %3976 = vrot.lane.b32.xlu0 %v2141, 48
    %v3977 = vpop.permute.xlu0 %3976
    %3978 = vrot.lane.b32.xlu0 %v2143, 48
    %v3979 = vpop.permute.xlu0 %3978
    %3980 = vrot.lane.b32.xlu0 %v2145, 48
    %v3981 = vpop.permute.xlu0 %3980
    %3982 = vrot.lane.b32.xlu0 %v2147, 48
    %v3983 = vpop.permute.xlu0 %3982
    %v3985 = vsel %vm2161, %v3969, 0
    %v3988 = vsel %vm2161, %v3971, 0
    %v3991 = vsel %vm2161, %v3973, 0
    %v3994 = vsel %vm2161, %v3975, 0
    %v3997 = vsel %vm2161, %v3977, 0
    %v4000 = vsel %vm2161, %v3979, 0
    %v4003 = vsel %vm2161, %v3981, 0
    %v4006 = vsel %vm2161, %v3983, 0
    %4008 = vmatprep.subr.bf16.mxu0 0
    %4009 = vmatpush1.bf16.xpose.msra.mxu0 %v3997
    %4010 = vmatprep.subr.bf16.mxu0 0
    %4011 = vmatpush1.bf16.xpose.msra.mxu0 %v4000
    %4012 = vmatprep.subr.bf16.mxu0 0
    %4013 = vmatpush1.bf16.xpose.msra.mxu0 %v4003
    %4014 = vmatprep.subr.bf16.mxu0 0
    %4015 = vmatpush1.bf16.xpose.msra.mxu0 %v4006
    %4016 = vmatprep.subr.bf16.mxu0 0
    %4017 = vmatpush1.bf16.xpose.msra.mxu0 0
    %4018 = vmatprep.subr.bf16.mxu0 0
    %4019 = vmatpush1.bf16.xpose.msra.mxu0 0
    %4020 = vmatprep.subr.bf16.mxu0 0
    %4021 = vmatpush1.bf16.xpose.msra.mxu0 0
    %4022 = vmatprep.subr.bf16.mxu0 0
    %4023 = vmatpush1.bf16.xpose.msra.mxu0 0
    %4024 = vmatprep.subr.bf16.mxu0 0
    %4025 = vmatpush1.bf16.xpose.msra.mxu0 0
    %4026 = vmatprep.subr.bf16.mxu0 0
    %4027 = vmatpush1.bf16.xpose.msra.mxu0 0
    %4028 = vmatprep.subr.bf16.mxu0 0
    %4029 = vmatpush1.bf16.xpose.msra.mxu0 0
    %4030 = vmatprep.subr.bf16.mxu0 0
    %4031 = vmatpush1.bf16.xpose.msra.mxu0 0
    %4032 = vmatprep.subr.bf16.mxu0 0
    %4033 = vmatpush1.bf16.xpose.msra.mxu0 0
    %4034 = vmatprep.subr.bf16.mxu0 0
    %4035 = vmatpush1.bf16.xpose.msra.mxu0 0
    %4036 = vmatprep.subr.bf16.mxu0 0
    %4037 = vmatpush1.bf16.xpose.msra.mxu0 0
    %4038 = vmatprep.subr.bf16.mxu0 0
    %4039 = vmatpush1.bf16.xpose.msra.mxu0 0
    %4040 = vmatprep.mubr.bf16.mxu0 0
    %4041 = vmatmul.mubr.bf16.gmra.mrb[0].mxu0 %v3985
    %v4042 = vpop.f32.mrb[0].mxu0
    %v4043 = vadd.f32 0.0, %v4042
    %v4044 = vpop.f32.mrb[0].mxu0
    %v4045 = vpop.f32.mrb[0].mxu0
    %v4046 = vadd.f32 0.0, %v4045
    %v4047 = vpop.f32.mrb[0].mxu0
    %4048 = vmatprep.mubr.bf16.mxu0 0
    %4049 = vmatmul.mubr.bf16.gmra.mrb[0].mxu0 %v3988
    %v4050 = vpop.f32.mrb[0].mxu0
    %v4051 = vadd.f32 0.0, %v4050
    %v4052 = vpop.f32.mrb[0].mxu0
    %v4053 = vpop.f32.mrb[0].mxu0
    %v4054 = vadd.f32 0.0, %v4053
    %v4055 = vpop.f32.mrb[0].mxu0
    %4056 = vmatprep.mubr.bf16.mxu0 0
    %4057 = vmatmul.mubr.bf16.gmra.mrb[0].mxu0 %v3991
    %v4058 = vpop.f32.mrb[0].mxu0
    %v4059 = vadd.f32 0.0, %v4058
    %v4060 = vpop.f32.mrb[0].mxu0
    %v4061 = vpop.f32.mrb[0].mxu0
    %v4062 = vadd.f32 0.0, %v4061
    %v4063 = vpop.f32.mrb[0].mxu0
    %4064 = vmatprep.mubr.bf16.mxu0 0
    %4065 = vmatmul.mubr.bf16.gmra.mrb[0].mxu0 %v3994
    %v4066 = vpop.f32.mrb[0].mxu0
    %v4067 = vadd.f32 0.0, %v4066
    %v4068 = vpop.f32.mrb[0].mxu0
    %v4069 = vpop.f32.mrb[0].mxu0
    %v4070 = vadd.f32 0.0, %v4069
    %v4071 = vpop.f32.mrb[0].mxu0
    %4072 = vdwg.mxu0
    %v4073 = vmul.f32 %v4043, 0.25
    %v4074 = vmul.f32 %v4046, 0.25
    %v4075 = vmul.f32 %v4051, 0.25
    %v4076 = vmul.f32 %v4054, 0.25
    %v4077 = vmul.f32 %v4059, 0.25
    %v4078 = vmul.f32 %v4062, 0.25
    %v4079 = vmul.f32 %v4067, 0.25
    %v4080 = vmul.f32 %v4070, 0.25
    %v4081 = vsel %vm1673, %v4073, -inf
    %4082 = vmax.xlane.f32.xlu0 %v4081
    %v4083 = vpop.xlane.xlu0 %4082
    %v4084 = vsel %vm1673, %v4074, -inf
    %4085 = vmax.xlane.f32.xlu0 %v4084
    %v4086 = vpop.xlane.xlu0 %4085
    %v4087 = vsel %vm1673, %v4075, -inf
    %4088 = vmax.xlane.f32.xlu0 %v4087
    %v4089 = vpop.xlane.xlu0 %4088
    %v4090 = vsel %vm1673, %v4076, -inf
    %4091 = vmax.xlane.f32.xlu0 %v4090
    %v4092 = vpop.xlane.xlu0 %4091
    %v4093 = vsel %vm1673, %v4077, -inf
    %4094 = vmax.xlane.f32.xlu0 %v4093
    %v4095 = vpop.xlane.xlu0 %4094
    %v4096 = vsel %vm1673, %v4078, -inf
    %4097 = vmax.xlane.f32.xlu0 %v4096
    %v4098 = vpop.xlane.xlu0 %4097
    %v4099 = vsel %vm1673, %v4079, -inf
    %4100 = vmax.xlane.f32.xlu0 %v4099
    %v4101 = vpop.xlane.xlu0 %4100
    %v4102 = vsel %vm1673, %v4080, -inf
    %4103 = vmax.xlane.f32.xlu0 %v4102
    %v4104 = vpop.xlane.xlu0 %4103
    %v4105 = vsub.f32 %v4073, %v4083
    %v4106 = vsub.f32 %v4074, %v4086
    %v4107 = vsub.f32 %v4075, %v4089
    %v4108 = vsub.f32 %v4076, %v4092
    %v4109 = vsub.f32 %v4077, %v4095
    %v4110 = vsub.f32 %v4078, %v4098
    %v4111 = vsub.f32 %v4079, %v4101
    %v4112 = vsub.f32 %v4080, %v4104
    %v4113 = vmul.f32 %v4105, 1.442695
    %v4114 = vpow.pop %v4113
    %v4115 = vmul.f32 %v4106, 1.442695
    %v4116 = vpow.pop %v4115
    %v4117 = vmul.f32 %v4107, 1.442695
    %v4118 = vpow.pop %v4117
    %v4119 = vmul.f32 %v4108, 1.442695
    %v4120 = vpow.pop %v4119
    %v4121 = vmul.f32 %v4109, 1.442695
    %v4122 = vpow.pop %v4121
    %v4123 = vmul.f32 %v4110, 1.442695
    %v4124 = vpow.pop %v4123
    %v4125 = vmul.f32 %v4111, 1.442695
    %v4126 = vpow.pop %v4125
    %v4127 = vmul.f32 %v4112, 1.442695
    %v4128 = vpow.pop %v4127
    %v4129 = vsel %vm1673, %v4114, 0.0
    %4130 = vadd.xlane.f32.xlu0 %v4129
    %v4131 = vpop.xlane.xlu0 %4130
    %v4132 = vsel %vm1673, %v4116, 0.0
    %4133 = vadd.xlane.f32.xlu0 %v4132
    %v4134 = vpop.xlane.xlu0 %4133
    %v4135 = vsel %vm1673, %v4118, 0.0
    %4136 = vadd.xlane.f32.xlu0 %v4135
    %v4137 = vpop.xlane.xlu0 %4136
    %v4138 = vsel %vm1673, %v4120, 0.0
    %4139 = vadd.xlane.f32.xlu0 %v4138
    %v4140 = vpop.xlane.xlu0 %4139
    %v4141 = vsel %vm1673, %v4122, 0.0
    %4142 = vadd.xlane.f32.xlu0 %v4141
    %v4143 = vpop.xlane.xlu0 %4142
    %v4144 = vsel %vm1673, %v4124, 0.0
    %4145 = vadd.xlane.f32.xlu0 %v4144
    %v4146 = vpop.xlane.xlu0 %4145
    %v4147 = vsel %vm1673, %v4126, 0.0
    %4148 = vadd.xlane.f32.xlu0 %v4147
    %v4149 = vpop.xlane.xlu0 %4148
    %v4150 = vsel %vm1673, %v4128, 0.0
    %4151 = vadd.xlane.f32.xlu0 %v4150
    %v4152 = vpop.xlane.xlu0 %4151
    %v4153 = vrcp.pop %v4131
    %v4154 = vrcp.pop %v4134
    %v4155 = vrcp.pop %v4137
    %v4156 = vrcp.pop %v4140
    %v4157 = vrcp.pop %v4143
    %v4158 = vrcp.pop %v4146
    %v4159 = vrcp.pop %v4149
    %v4160 = vrcp.pop %v4152
    %v4161 = vmul.f32 %v4114, %v4153
    %v4162 = vmul.f32 %v4116, %v4154
    %v4163 = vmul.f32 %v4118, %v4155
    %v4164 = vmul.f32 %v4120, %v4156
    %v4165 = vmul.f32 %v4122, %v4157
    %v4166 = vmul.f32 %v4124, %v4158
    %v4167 = vmul.f32 %v4126, %v4159
    %v4168 = vmul.f32 %v4128, %v4160
    %v4169 = vpack.c.bf16 %v4162, %v4161
    %v4170 = vpack.c.bf16 %v4164, %v4163
    %v4171 = vpack.c.bf16 %v4166, %v4165
    %v4172 = vpack.c.bf16 %v4168, %v4167
    %4177 = vrot.lane.b32.xlu0 %v2142, 112
    %v4178 = vpop.permute.xlu0 %4177
    %4179 = vrot.lane.b32.xlu0 %v2144, 112
    %v4180 = vpop.permute.xlu0 %4179
    %4181 = vrot.lane.b32.xlu0 %v2146, 112
    %v4182 = vpop.permute.xlu0 %4181
    %4183 = vrot.lane.b32.xlu0 %v2148, 112
    %v4184 = vpop.permute.xlu0 %4183
    %v4190 = vsel %vm1673, %v4169, 0
    %v4193 = vsel %vm1673, %v4170, 0
    %v4196 = vsel %vm1673, %v4171, 0
    %v4199 = vsel %vm1673, %v4172, 0
    %4201 = vmatprep.subr.bf16.mxu0 0
    %4202 = vmatpush1.bf16.msra.mxu0 %v4178
    %4203 = vmatprep.subr.bf16.mxu0 0
    %4204 = vmatpush1.bf16.msra.mxu0 %v4180
    %4205 = vmatprep.subr.bf16.mxu0 0
    %4206 = vmatpush1.bf16.msra.mxu0 %v4182
    %4207 = vmatprep.subr.bf16.mxu0 0
    %4208 = vmatpush1.bf16.msra.mxu0 %v4184
    %4209 = vmatprep.subr.bf16.mxu0 0
    %4210 = vmatpush1.bf16.msra.mxu0 0
    %4211 = vmatprep.subr.bf16.mxu0 0
    %4212 = vmatpush1.bf16.msra.mxu0 0
    %4213 = vmatprep.subr.bf16.mxu0 0
    %4214 = vmatpush1.bf16.msra.mxu0 0
    %4215 = vmatprep.subr.bf16.mxu0 0
    %4216 = vmatpush1.bf16.msra.mxu0 0
    %4217 = vmatprep.subr.bf16.mxu0 0
    %4218 = vmatpush1.bf16.msra.mxu0 0
    %4219 = vmatprep.subr.bf16.mxu0 0
    %4220 = vmatpush1.bf16.msra.mxu0 0
    %4221 = vmatprep.subr.bf16.mxu0 0
    %4222 = vmatpush1.bf16.msra.mxu0 0
    %4223 = vmatprep.subr.bf16.mxu0 0
    %4224 = vmatpush1.bf16.msra.mxu0 0
    %4225 = vmatprep.subr.bf16.mxu0 0
    %4226 = vmatpush1.bf16.msra.mxu0 0
    %4227 = vmatprep.subr.bf16.mxu0 0
    %4228 = vmatpush1.bf16.msra.mxu0 0
    %4229 = vmatprep.subr.bf16.mxu0 0
    %4230 = vmatpush1.bf16.msra.mxu0 0
    %4231 = vmatprep.subr.bf16.mxu0 0
    %4232 = vmatpush1.bf16.msra.mxu0 0
    %4233 = vmatprep.mubr.bf16.mxu0 0
    %4234 = vmatmul.mubr.bf16.gmra.mrb[0].mxu0 %v4190
    %v4235 = vpop.f32.mrb[0].mxu0
    %v4236 = vadd.f32 0.0, %v4235
    %v4237 = vpop.f32.mrb[0].mxu0
    %v4238 = vpop.f32.mrb[0].mxu0
    %v4239 = vadd.f32 0.0, %v4238
    %v4240 = vpop.f32.mrb[0].mxu0
    %4241 = vmatprep.mubr.bf16.mxu0 0
    %4242 = vmatmul.mubr.bf16.gmra.mrb[0].mxu0 %v4193
    %v4243 = vpop.f32.mrb[0].mxu0
    %v4244 = vadd.f32 0.0, %v4243
    %v4245 = vpop.f32.mrb[0].mxu0
    %v4246 = vpop.f32.mrb[0].mxu0
    %v4247 = vadd.f32 0.0, %v4246
    %v4248 = vpop.f32.mrb[0].mxu0
    %4249 = vmatprep.mubr.bf16.mxu0 0
    %4250 = vmatmul.mubr.bf16.gmra.mrb[0].mxu0 %v4196
    %v4251 = vpop.f32.mrb[0].mxu0
    %v4252 = vadd.f32 0.0, %v4251
    %v4253 = vpop.f32.mrb[0].mxu0
    %v4254 = vpop.f32.mrb[0].mxu0
    %v4255 = vadd.f32 0.0, %v4254
    %v4256 = vpop.f32.mrb[0].mxu0
    %4257 = vmatprep.mubr.bf16.mxu0 0
    %4258 = vmatmul.mubr.bf16.gmra.mrb[0].mxu0 %v4199
    %v4259 = vpop.f32.mrb[0].mxu0
    %v4260 = vadd.f32 0.0, %v4259
    %v4261 = vpop.f32.mrb[0].mxu0
    %v4262 = vpop.f32.mrb[0].mxu0
    %v4263 = vadd.f32 0.0, %v4262
    %v4264 = vpop.f32.mrb[0].mxu0
    %4265 = vdwg.mxu0
    %v4266 = vpack.c.bf16 %v4239, %v4236
    %v4267 = vpack.c.bf16 %v4247, %v4244
    %v4268 = vpack.c.bf16 %v4255, %v4252
    %v4269 = vpack.c.bf16 %v4263, %v4260
    %v4271 = vsel %vm2161, %v4266, 0
    %v4274 = vsel %vm2161, %v4267, 0
    %v4277 = vsel %vm2161, %v4268, 0
    %v4280 = vsel %vm2161, %v4269, 0
    %4282 = vmatprep.subr.bf16.mxu0 0
    %4283 = vmatpush1.bf16.msra.mxu0 %v2742
    %4284 = vmatprep.subr.bf16.mxu0 0
    %4285 = vmatpush1.bf16.msra.mxu0 0
    %4286 = vmatprep.subr.bf16.mxu0 0
    %4287 = vmatpush1.bf16.msra.mxu0 0
    %4288 = vmatprep.subr.bf16.mxu0 0
    %4289 = vmatpush1.bf16.msra.mxu0 0
    %4290 = vmatprep.subr.bf16.mxu0 0
    %4291 = vmatpush1.bf16.msra.mxu0 0
    %4292 = vmatprep.subr.bf16.mxu0 0
    %4293 = vmatpush1.bf16.msra.mxu0 0
    %4294 = vmatprep.subr.bf16.mxu0 0
    %4295 = vmatpush1.bf16.msra.mxu0 0
    %4296 = vmatprep.subr.bf16.mxu0 0
    %4297 = vmatpush1.bf16.msra.mxu0 0
    %4298 = vmatprep.subr.bf16.mxu0 0
    %4299 = vmatpush1.bf16.msra.mxu0 0
    %4300 = vmatprep.subr.bf16.mxu0 0
    %4301 = vmatpush1.bf16.msra.mxu0 0
    %4302 = vmatprep.subr.bf16.mxu0 0
    %4303 = vmatpush1.bf16.msra.mxu0 0
    %4304 = vmatprep.subr.bf16.mxu0 0
    %4305 = vmatpush1.bf16.msra.mxu0 0
    %4306 = vmatprep.subr.bf16.mxu0 0
    %4307 = vmatpush1.bf16.msra.mxu0 0
    %4308 = vmatprep.subr.bf16.mxu0 0
    %4309 = vmatpush1.bf16.msra.mxu0 0
    %4310 = vmatprep.subr.bf16.mxu0 0
    %4311 = vmatpush1.bf16.msra.mxu0 0
    %4312 = vmatprep.subr.bf16.mxu0 0
    %4313 = vmatpush1.bf16.msra.mxu0 0
    %4314 = vmatprep.mubr.bf16.mxu0 0
    %4315 = vmatmul.mubr.bf16.gmra.mrb[0].mxu0 %v4271
    %v4316 = vpop.f32.mrb[0].mxu0
    %v4317 = vadd.f32 0.0, %v4316
    %v4318 = vpop.f32.mrb[0].mxu0
    %v4319 = vpop.f32.mrb[0].mxu0
    %v4320 = vadd.f32 0.0, %v4319
    %v4321 = vpop.f32.mrb[0].mxu0
    %4322 = vmatprep.mubr.bf16.mxu0 0
    %4323 = vmatmul.mubr.bf16.gmra.mrb[0].mxu0 %v4274
    %v4324 = vpop.f32.mrb[0].mxu0
    %v4325 = vadd.f32 0.0, %v4324
    %v4326 = vpop.f32.mrb[0].mxu0
    %v4327 = vpop.f32.mrb[0].mxu0
    %v4328 = vadd.f32 0.0, %v4327
    %v4329 = vpop.f32.mrb[0].mxu0
    %4330 = vmatprep.mubr.bf16.mxu0 0
    %4331 = vmatmul.mubr.bf16.gmra.mrb[0].mxu0 %v4277
    %v4332 = vpop.f32.mrb[0].mxu0
    %v4333 = vadd.f32 0.0, %v4332
    %v4334 = vpop.f32.mrb[0].mxu0
    %v4335 = vpop.f32.mrb[0].mxu0
    %v4336 = vadd.f32 0.0, %v4335
    %v4337 = vpop.f32.mrb[0].mxu0
    %4338 = vmatprep.mubr.bf16.mxu0 0
    %4339 = vmatmul.mubr.bf16.gmra.mrb[0].mxu0 %v4280
    %v4340 = vpop.f32.mrb[0].mxu0
    %v4341 = vadd.f32 0.0, %v4340
    %v4342 = vpop.f32.mrb[0].mxu0
    %v4343 = vpop.f32.mrb[0].mxu0
    %v4344 = vadd.f32 0.0, %v4343
    %v4345 = vpop.f32.mrb[0].mxu0
    %4346 = vdwg.mxu0
    %v4348 = vsel %vm2161, %v3964, 0
    %v4351 = vsel %vm2161, %v3965, 0
    %v4354 = vsel %vm2161, %v3966, 0
    %v4357 = vsel %vm2161, %v3967, 0
    %4359 = vmatprep.subr.bf16.mxu0 0
    %4360 = vmatpush1.bf16.msra.mxu0 %v2825
    %4361 = vmatprep.subr.bf16.mxu0 0
    %4362 = vmatpush1.bf16.msra.mxu0 0
    %4363 = vmatprep.subr.bf16.mxu0 0
    %4364 = vmatpush1.bf16.msra.mxu0 0
    %4365 = vmatprep.subr.bf16.mxu0 0
    %4366 = vmatpush1.bf16.msra.mxu0 0
    %4367 = vmatprep.subr.bf16.mxu0 0
    %4368 = vmatpush1.bf16.msra.mxu0 0
    %4369 = vmatprep.subr.bf16.mxu0 0
    %4370 = vmatpush1.bf16.msra.mxu0 0
    %4371 = vmatprep.subr.bf16.mxu0 0
    %4372 = vmatpush1.bf16.msra.mxu0 0
    %4373 = vmatprep.subr.bf16.mxu0 0
    %4374 = vmatpush1.bf16.msra.mxu0 0
    %4375 = vmatprep.subr.bf16.mxu0 0
    %4376 = vmatpush1.bf16.msra.mxu0 0
    %4377 = vmatprep.subr.bf16.mxu0 0
    %4378 = vmatpush1.bf16.msra.mxu0 0
    %4379 = vmatprep.subr.bf16.mxu0 0
    %4380 = vmatpush1.bf16.msra.mxu0 0
    %4381 = vmatprep.subr.bf16.mxu0 0
    %4382 = vmatpush1.bf16.msra.mxu0 0
    %4383 = vmatprep.subr.bf16.mxu0 0
    %4384 = vmatpush1.bf16.msra.mxu0 0
    %4385 = vmatprep.subr.bf16.mxu0 0
    %4386 = vmatpush1.bf16.msra.mxu0 0
    %4387 = vmatprep.subr.bf16.mxu0 0
    %4388 = vmatpush1.bf16.msra.mxu0 0
    %4389 = vmatprep.subr.bf16.mxu0 0
    %4390 = vmatpush1.bf16.msra.mxu0 0
    %4391 = vmatprep.mubr.bf16.mxu0 0
    %4392 = vmatmul.mubr.bf16.gmra.mrb[0].mxu0 %v4348
    %v4393 = vpop.f32.mrb[0].mxu0
    %v4394 = vadd.f32 %v4317, %v4393
    %v4395 = vpop.f32.mrb[0].mxu0
    %v4396 = vpop.f32.mrb[0].mxu0
    %v4397 = vadd.f32 %v4320, %v4396
    %v4398 = vpop.f32.mrb[0].mxu0
    %4399 = vmatprep.mubr.bf16.mxu0 0
    %4400 = vmatmul.mubr.bf16.gmra.mrb[0].mxu0 %v4351
    %v4401 = vpop.f32.mrb[0].mxu0
    %v4402 = vadd.f32 %v4325, %v4401
    %v4403 = vpop.f32.mrb[0].mxu0
    %v4404 = vpop.f32.mrb[0].mxu0
    %v4405 = vadd.f32 %v4328, %v4404
    %v4406 = vpop.f32.mrb[0].mxu0
    %4407 = vmatprep.mubr.bf16.mxu0 0
    %4408 = vmatmul.mubr.bf16.gmra.mrb[0].mxu0 %v4354
    %v4409 = vpop.f32.mrb[0].mxu0
    %v4410 = vadd.f32 %v4333, %v4409
    %v4411 = vpop.f32.mrb[0].mxu0
    %v4412 = vpop.f32.mrb[0].mxu0
    %v4413 = vadd.f32 %v4336, %v4412
    %v4414 = vpop.f32.mrb[0].mxu0
    %4415 = vmatprep.mubr.bf16.mxu0 0
    %4416 = vmatmul.mubr.bf16.gmra.mrb[0].mxu0 %v4357
    %v4417 = vpop.f32.mrb[0].mxu0
    %v4418 = vadd.f32 %v4341, %v4417
    %v4419 = vpop.f32.mrb[0].mxu0
    %v4420 = vpop.f32.mrb[0].mxu0
    %v4421 = vadd.f32 %v4344, %v4420
    %v4422 = vpop.f32.mrb[0].mxu0
    %4423 = vdwg.mxu0
    %4424 = vrot.lane.b32.xlu0 %v2141, 96
    %v4425 = vpop.permute.xlu0 %4424
    %4426 = vrot.lane.b32.xlu0 %v2143, 96
    %v4427 = vpop.permute.xlu0 %4426
    %4428 = vrot.lane.b32.xlu0 %v2145, 96
    %v4429 = vpop.permute.xlu0 %4428
    %4430 = vrot.lane.b32.xlu0 %v2147, 96
    %v4431 = vpop.permute.xlu0 %4430
    %4432 = vrot.lane.b32.xlu0 %v2141, 32
    %v4433 = vpop.permute.xlu0 %4432
    %4434 = vrot.lane.b32.xlu0 %v2143, 32
    %v4435 = vpop.permute.xlu0 %4434
    %4436 = vrot.lane.b32.xlu0 %v2145, 32
    %v4437 = vpop.permute.xlu0 %4436
    %4438 = vrot.lane.b32.xlu0 %v2147, 32
    %v4439 = vpop.permute.xlu0 %4438
    %v4441 = vsel %vm2161, %v4425, 0
    %v4444 = vsel %vm2161, %v4427, 0
    %v4447 = vsel %vm2161, %v4429, 0
    %v4450 = vsel %vm2161, %v4431, 0
    %v4453 = vsel %vm2161, %v4433, 0
    %v4456 = vsel %vm2161, %v4435, 0
    %v4459 = vsel %vm2161, %v4437, 0
    %v4462 = vsel %vm2161, %v4439, 0
    %4464 = vmatprep.subr.bf16.mxu0 0
    %4465 = vmatpush1.bf16.xpose.msra.mxu0 %v4453
    %4466 = vmatprep.subr.bf16.mxu0 0
    %4467 = vmatpush1.bf16.xpose.msra.mxu0 %v4456
    %4468 = vmatprep.subr.bf16.mxu0 0
    %4469 = vmatpush1.bf16.xpose.msra.mxu0 %v4459
    %4470 = vmatprep.subr.bf16.mxu0 0
    %4471 = vmatpush1.bf16.xpose.msra.mxu0 %v4462
    %4472 = vmatprep.subr.bf16.mxu0 0
    %4473 = vmatpush1.bf16.xpose.msra.mxu0 0
    %4474 = vmatprep.subr.bf16.mxu0 0
    %4475 = vmatpush1.bf16.xpose.msra.mxu0 0
    %4476 = vmatprep.subr.bf16.mxu0 0
    %4477 = vmatpush1.bf16.xpose.msra.mxu0 0
    %4478 = vmatprep.subr.bf16.mxu0 0
    %4479 = vmatpush1.bf16.xpose.msra.mxu0 0
    %4480 = vmatprep.subr.bf16.mxu0 0
    %4481 = vmatpush1.bf16.xpose.msra.mxu0 0
    %4482 = vmatprep.subr.bf16.mxu0 0
    %4483 = vmatpush1.bf16.xpose.msra.mxu0 0
    %4484 = vmatprep.subr.bf16.mxu0 0
    %4485 = vmatpush1.bf16.xpose.msra.mxu0 0
    %4486 = vmatprep.subr.bf16.mxu0 0
    %4487 = vmatpush1.bf16.xpose.msra.mxu0 0
    %4488 = vmatprep.subr.bf16.mxu0 0
    %4489 = vmatpush1.bf16.xpose.msra.mxu0 0
    %4490 = vmatprep.subr.bf16.mxu0 0
    %4491 = vmatpush1.bf16.xpose.msra.mxu0 0
    %4492 = vmatprep.subr.bf16.mxu0 0
    %4493 = vmatpush1.bf16.xpose.msra.mxu0 0
    %4494 = vmatprep.subr.bf16.mxu0 0
    %4495 = vmatpush1.bf16.xpose.msra.mxu0 0
    %4496 = vmatprep.mubr.bf16.mxu0 0
    %4497 = vmatmul.mubr.bf16.gmra.mrb[0].mxu0 %v4441
    %v4498 = vpop.f32.mrb[0].mxu0
    %v4499 = vadd.f32 0.0, %v4498
    %v4500 = vpop.f32.mrb[0].mxu0
    %v4501 = vpop.f32.mrb[0].mxu0
    %v4502 = vadd.f32 0.0, %v4501
    %v4503 = vpop.f32.mrb[0].mxu0
    %4504 = vmatprep.mubr.bf16.mxu0 0
    %4505 = vmatmul.mubr.bf16.gmra.mrb[0].mxu0 %v4444
    %v4506 = vpop.f32.mrb[0].mxu0
    %v4507 = vadd.f32 0.0, %v4506
    %v4508 = vpop.f32.mrb[0].mxu0
    %v4509 = vpop.f32.mrb[0].mxu0
    %v4510 = vadd.f32 0.0, %v4509
    %v4511 = vpop.f32.mrb[0].mxu0
    %4512 = vmatprep.mubr.bf16.mxu0 0
    %4513 = vmatmul.mubr.bf16.gmra.mrb[0].mxu0 %v4447
    %v4514 = vpop.f32.mrb[0].mxu0
    %v4515 = vadd.f32 0.0, %v4514
    %v4516 = vpop.f32.mrb[0].mxu0
    %v4517 = vpop.f32.mrb[0].mxu0
    %v4518 = vadd.f32 0.0, %v4517
    %v4519 = vpop.f32.mrb[0].mxu0
    %4520 = vmatprep.mubr.bf16.mxu0 0
    %4521 = vmatmul.mubr.bf16.gmra.mrb[0].mxu0 %v4450
    %v4522 = vpop.f32.mrb[0].mxu0
    %v4523 = vadd.f32 0.0, %v4522
    %v4524 = vpop.f32.mrb[0].mxu0
    %v4525 = vpop.f32.mrb[0].mxu0
    %v4526 = vadd.f32 0.0, %v4525
    %v4527 = vpop.f32.mrb[0].mxu0
    %4528 = vdwg.mxu0
    %v4529 = vmul.f32 %v4499, 0.25
    %v4530 = vmul.f32 %v4502, 0.25
    %v4531 = vmul.f32 %v4507, 0.25
    %v4532 = vmul.f32 %v4510, 0.25
    %v4533 = vmul.f32 %v4515, 0.25
    %v4534 = vmul.f32 %v4518, 0.25
    %v4535 = vmul.f32 %v4523, 0.25
    %v4536 = vmul.f32 %v4526, 0.25
    %v4537 = vsel %vm1673, %v4529, -inf
    %4538 = vmax.xlane.f32.xlu0 %v4537
    %v4539 = vpop.xlane.xlu0 %4538
    %v4540 = vsel %vm1673, %v4530, -inf
    %4541 = vmax.xlane.f32.xlu0 %v4540
    %v4542 = vpop.xlane.xlu0 %4541
    %v4543 = vsel %vm1673, %v4531, -inf
    %4544 = vmax.xlane.f32.xlu0 %v4543
    %v4545 = vpop.xlane.xlu0 %4544
    %v4546 = vsel %vm1673, %v4532, -inf
    %4547 = vmax.xlane.f32.xlu0 %v4546
    %v4548 = vpop.xlane.xlu0 %4547
    %v4549 = vsel %vm1673, %v4533, -inf
    %4550 = vmax.xlane.f32.xlu0 %v4549
    %v4551 = vpop.xlane.xlu0 %4550
    %v4552 = vsel %vm1673, %v4534, -inf
    %4553 = vmax.xlane.f32.xlu0 %v4552
    %v4554 = vpop.xlane.xlu0 %4553
    %v4555 = vsel %vm1673, %v4535, -inf
    %4556 = vmax.xlane.f32.xlu0 %v4555
    %v4557 = vpop.xlane.xlu0 %4556
    %v4558 = vsel %vm1673, %v4536, -inf
    %4559 = vmax.xlane.f32.xlu0 %v4558
    %v4560 = vpop.xlane.xlu0 %4559
    %v4561 = vsub.f32 %v4529, %v4539
    %v4562 = vsub.f32 %v4530, %v4542
    %v4563 = vsub.f32 %v4531, %v4545
    %v4564 = vsub.f32 %v4532, %v4548
    %v4565 = vsub.f32 %v4533, %v4551
    %v4566 = vsub.f32 %v4534, %v4554
    %v4567 = vsub.f32 %v4535, %v4557
    %v4568 = vsub.f32 %v4536, %v4560
    %v4569 = vmul.f32 %v4561, 1.442695
    %v4570 = vpow.pop %v4569
    %v4571 = vmul.f32 %v4562, 1.442695
    %v4572 = vpow.pop %v4571
    %v4573 = vmul.f32 %v4563, 1.442695
    %v4574 = vpow.pop %v4573
    %v4575 = vmul.f32 %v4564, 1.442695
    %v4576 = vpow.pop %v4575
    %v4577 = vmul.f32 %v4565, 1.442695
    %v4578 = vpow.pop %v4577
    %v4579 = vmul.f32 %v4566, 1.442695
    %v4580 = vpow.pop %v4579
    %v4581 = vmul.f32 %v4567, 1.442695
    %v4582 = vpow.pop %v4581
    %v4583 = vmul.f32 %v4568, 1.442695
    %v4584 = vpow.pop %v4583
    %v4585 = vsel %vm1673, %v4570, 0.0
    %4586 = vadd.xlane.f32.xlu0 %v4585
    %v4587 = vpop.xlane.xlu0 %4586
    %v4588 = vsel %vm1673, %v4572, 0.0
    %4589 = vadd.xlane.f32.xlu0 %v4588
    %v4590 = vpop.xlane.xlu0 %4589
    %v4591 = vsel %vm1673, %v4574, 0.0
    %4592 = vadd.xlane.f32.xlu0 %v4591
    %v4593 = vpop.xlane.xlu0 %4592
    %v4594 = vsel %vm1673, %v4576, 0.0
    %4595 = vadd.xlane.f32.xlu0 %v4594
    %v4596 = vpop.xlane.xlu0 %4595
    %v4597 = vsel %vm1673, %v4578, 0.0
    %4598 = vadd.xlane.f32.xlu0 %v4597
    %v4599 = vpop.xlane.xlu0 %4598
    %v4600 = vsel %vm1673, %v4580, 0.0
    %4601 = vadd.xlane.f32.xlu0 %v4600
    %v4602 = vpop.xlane.xlu0 %4601
    %v4603 = vsel %vm1673, %v4582, 0.0
    %4604 = vadd.xlane.f32.xlu0 %v4603
    %v4605 = vpop.xlane.xlu0 %4604
    %v4606 = vsel %vm1673, %v4584, 0.0
    %4607 = vadd.xlane.f32.xlu0 %v4606
    %v4608 = vpop.xlane.xlu0 %4607
    %v4609 = vrcp.pop %v4587
    %v4610 = vrcp.pop %v4590
    %v4611 = vrcp.pop %v4593
    %v4612 = vrcp.pop %v4596
    %v4613 = vrcp.pop %v4599
    %v4614 = vrcp.pop %v4602
    %v4615 = vrcp.pop %v4605
    %v4616 = vrcp.pop %v4608
    %v4617 = vmul.f32 %v4570, %v4609
    %v4618 = vmul.f32 %v4572, %v4610
    %v4619 = vmul.f32 %v4574, %v4611
    %v4620 = vmul.f32 %v4576, %v4612
    %v4621 = vmul.f32 %v4578, %v4613
    %v4622 = vmul.f32 %v4580, %v4614
    %v4623 = vmul.f32 %v4582, %v4615
    %v4624 = vmul.f32 %v4584, %v4616
    %v4625 = vpack.c.bf16 %v4618, %v4617
    %v4626 = vpack.c.bf16 %v4620, %v4619
    %v4627 = vpack.c.bf16 %v4622, %v4621
    %v4628 = vpack.c.bf16 %v4624, %v4623
    %4629 = vrot.lane.b32.xlu0 %v2142, 96
    %v4630 = vpop.permute.xlu0 %4629
    %4631 = vrot.lane.b32.xlu0 %v2144, 96
    %v4632 = vpop.permute.xlu0 %4631
    %4633 = vrot.lane.b32.xlu0 %v2146, 96
    %v4634 = vpop.permute.xlu0 %4633
    %4635 = vrot.lane.b32.xlu0 %v2148, 96
    %v4636 = vpop.permute.xlu0 %4635
    %v4642 = vsel %vm1673, %v4625, 0
    %v4645 = vsel %vm1673, %v4626, 0
    %v4648 = vsel %vm1673, %v4627, 0
    %v4651 = vsel %vm1673, %v4628, 0
    %4653 = vmatprep.subr.bf16.mxu0 0
    %4654 = vmatpush1.bf16.msra.mxu0 %v4630
    %4655 = vmatprep.subr.bf16.mxu0 0
    %4656 = vmatpush1.bf16.msra.mxu0 %v4632
    %4657 = vmatprep.subr.bf16.mxu0 0
    %4658 = vmatpush1.bf16.msra.mxu0 %v4634
    %4659 = vmatprep.subr.bf16.mxu0 0
    %4660 = vmatpush1.bf16.msra.mxu0 %v4636
    %4661 = vmatprep.subr.bf16.mxu0 0
    %4662 = vmatpush1.bf16.msra.mxu0 0
    %4663 = vmatprep.subr.bf16.mxu0 0
    %4664 = vmatpush1.bf16.msra.mxu0 0
    %4665 = vmatprep.subr.bf16.mxu0 0
    %4666 = vmatpush1.bf16.msra.mxu0 0
    %4667 = vmatprep.subr.bf16.mxu0 0
    %4668 = vmatpush1.bf16.msra.mxu0 0
    %4669 = vmatprep.subr.bf16.mxu0 0
    %4670 = vmatpush1.bf16.msra.mxu0 0
    %4671 = vmatprep.subr.bf16.mxu0 0
    %4672 = vmatpush1.bf16.msra.mxu0 0
    %4673 = vmatprep.subr.bf16.mxu0 0
    %4674 = vmatpush1.bf16.msra.mxu0 0
    %4675 = vmatprep.subr.bf16.mxu0 0
    %4676 = vmatpush1.bf16.msra.mxu0 0
    %4677 = vmatprep.subr.bf16.mxu0 0
    %4678 = vmatpush1.bf16.msra.mxu0 0
    %4679 = vmatprep.subr.bf16.mxu0 0
    %4680 = vmatpush1.bf16.msra.mxu0 0
    %4681 = vmatprep.subr.bf16.mxu0 0
    %4682 = vmatpush1.bf16.msra.mxu0 0
    %4683 = vmatprep.subr.bf16.mxu0 0
    %4684 = vmatpush1.bf16.msra.mxu0 0
    %4685 = vmatprep.mubr.bf16.mxu0 0
    %4686 = vmatmul.mubr.bf16.gmra.mrb[0].mxu0 %v4642
    %v4687 = vpop.f32.mrb[0].mxu0
    %v4688 = vadd.f32 0.0, %v4687
    %v4689 = vpop.f32.mrb[0].mxu0
    %v4690 = vpop.f32.mrb[0].mxu0
    %v4691 = vadd.f32 0.0, %v4690
    %v4692 = vpop.f32.mrb[0].mxu0
    %4693 = vmatprep.mubr.bf16.mxu0 0
    %4694 = vmatmul.mubr.bf16.gmra.mrb[0].mxu0 %v4645
    %v4695 = vpop.f32.mrb[0].mxu0
    %v4696 = vadd.f32 0.0, %v4695
    %v4697 = vpop.f32.mrb[0].mxu0
    %v4698 = vpop.f32.mrb[0].mxu0
    %v4699 = vadd.f32 0.0, %v4698
    %v4700 = vpop.f32.mrb[0].mxu0
    %4701 = vmatprep.mubr.bf16.mxu0 0
    %4702 = vmatmul.mubr.bf16.gmra.mrb[0].mxu0 %v4648
    %v4703 = vpop.f32.mrb[0].mxu0
    %v4704 = vadd.f32 0.0, %v4703
    %v4705 = vpop.f32.mrb[0].mxu0
    %v4706 = vpop.f32.mrb[0].mxu0
    %v4707 = vadd.f32 0.0, %v4706
    %v4708 = vpop.f32.mrb[0].mxu0
    %4709 = vmatprep.mubr.bf16.mxu0 0
    %4710 = vmatmul.mubr.bf16.gmra.mrb[0].mxu0 %v4651
    %v4711 = vpop.f32.mrb[0].mxu0
    %v4712 = vadd.f32 0.0, %v4711
    %v4713 = vpop.f32.mrb[0].mxu0
    %v4714 = vpop.f32.mrb[0].mxu0
    %v4715 = vadd.f32 0.0, %v4714
    %v4716 = vpop.f32.mrb[0].mxu0
    %4717 = vdwg.mxu0
    %v4718 = vpack.c.bf16 %v4691, %v4688
    %v4719 = vpack.c.bf16 %v4699, %v4696
    %v4720 = vpack.c.bf16 %v4707, %v4704
    %v4721 = vpack.c.bf16 %v4715, %v4712
    %v4723 = vsel %vm2161, %v4718, 0
    %v4726 = vsel %vm2161, %v4719, 0
    %v4729 = vsel %vm2161, %v4720, 0
    %v4732 = vsel %vm2161, %v4721, 0
    %4734 = vmatprep.subr.bf16.mxu0 0
    %4735 = vmatpush1.bf16.msra.mxu0 %v3208
    %4736 = vmatprep.subr.bf16.mxu0 0
    %4737 = vmatpush1.bf16.msra.mxu0 0
    %4738 = vmatprep.subr.bf16.mxu0 0
    %4739 = vmatpush1.bf16.msra.mxu0 0
    %4740 = vmatprep.subr.bf16.mxu0 0
    %4741 = vmatpush1.bf16.msra.mxu0 0
    %4742 = vmatprep.subr.bf16.mxu0 0
    %4743 = vmatpush1.bf16.msra.mxu0 0
    %4744 = vmatprep.subr.bf16.mxu0 0
    %4745 = vmatpush1.bf16.msra.mxu0 0
    %4746 = vmatprep.subr.bf16.mxu0 0
    %4747 = vmatpush1.bf16.msra.mxu0 0
    %4748 = vmatprep.subr.bf16.mxu0 0
    %4749 = vmatpush1.bf16.msra.mxu0 0
    %4750 = vmatprep.subr.bf16.mxu0 0
    %4751 = vmatpush1.bf16.msra.mxu0 0
    %4752 = vmatprep.subr.bf16.mxu0 0
    %4753 = vmatpush1.bf16.msra.mxu0 0
    %4754 = vmatprep.subr.bf16.mxu0 0
    %4755 = vmatpush1.bf16.msra.mxu0 0
    %4756 = vmatprep.subr.bf16.mxu0 0
    %4757 = vmatpush1.bf16.msra.mxu0 0
    %4758 = vmatprep.subr.bf16.mxu0 0
    %4759 = vmatpush1.bf16.msra.mxu0 0
    %4760 = vmatprep.subr.bf16.mxu0 0
    %4761 = vmatpush1.bf16.msra.mxu0 0
    %4762 = vmatprep.subr.bf16.mxu0 0
    %4763 = vmatpush1.bf16.msra.mxu0 0
    %4764 = vmatprep.subr.bf16.mxu0 0
    %4765 = vmatpush1.bf16.msra.mxu0 0
    %4766 = vmatprep.mubr.bf16.mxu0 0
    %4767 = vmatmul.mubr.bf16.gmra.mrb[0].mxu0 %v4723
    %v4768 = vpop.f32.mrb[0].mxu0
    %v4769 = vadd.f32 0.0, %v4768
    %v4770 = vpop.f32.mrb[0].mxu0
    %v4771 = vpop.f32.mrb[0].mxu0
    %v4772 = vadd.f32 0.0, %v4771
    %v4773 = vpop.f32.mrb[0].mxu0
    %4774 = vmatprep.mubr.bf16.mxu0 0
    %4775 = vmatmul.mubr.bf16.gmra.mrb[0].mxu0 %v4726
    %v4776 = vpop.f32.mrb[0].mxu0
    %v4777 = vadd.f32 0.0, %v4776
    %v4778 = vpop.f32.mrb[0].mxu0
    %v4779 = vpop.f32.mrb[0].mxu0
    %v4780 = vadd.f32 0.0, %v4779
    %v4781 = vpop.f32.mrb[0].mxu0
    %4782 = vmatprep.mubr.bf16.mxu0 0
    %4783 = vmatmul.mubr.bf16.gmra.mrb[0].mxu0 %v4729
    %v4784 = vpop.f32.mrb[0].mxu0
    %v4785 = vadd.f32 0.0, %v4784
    %v4786 = vpop.f32.mrb[0].mxu0
    %v4787 = vpop.f32.mrb[0].mxu0
    %v4788 = vadd.f32 0.0, %v4787
    %v4789 = vpop.f32.mrb[0].mxu0
    %4790 = vmatprep.mubr.bf16.mxu0 0
    %4791 = vmatmul.mubr.bf16.gmra.mrb[0].mxu0 %v4732
    %v4792 = vpop.f32.mrb[0].mxu0
    %v4793 = vadd.f32 0.0, %v4792
    %v4794 = vpop.f32.mrb[0].mxu0
    %v4795 = vpop.f32.mrb[0].mxu0
    %v4796 = vadd.f32 0.0, %v4795
    %v4797 = vpop.f32.mrb[0].mxu0
    %4798 = vdwg.mxu0
    %v4799 = vadd.f32 %v4394, %v4769
    %v4800 = vadd.f32 %v4397, %v4772
    %v4801 = vadd.f32 %v4402, %v4777
    %v4802 = vadd.f32 %v4405, %v4780
    %v4803 = vadd.f32 %v4410, %v4785
    %v4804 = vadd.f32 %v4413, %v4788
    %v4805 = vadd.f32 %v4418, %v4793
    %v4806 = vadd.f32 %v4421, %v4796
    %4807 = vrot.lane.b32.xlu0 %v2141, 80
    %v4808 = vpop.permute.xlu0 %4807
    %4809 = vrot.lane.b32.xlu0 %v2143, 80
    %v4810 = vpop.permute.xlu0 %4809
    %4811 = vrot.lane.b32.xlu0 %v2145, 80
    %v4812 = vpop.permute.xlu0 %4811
    %4813 = vrot.lane.b32.xlu0 %v2147, 80
    %v4814 = vpop.permute.xlu0 %4813
    %4815 = vrot.lane.b32.xlu0 %v2141, 16
    %v4816 = vpop.permute.xlu0 %4815
    %4817 = vrot.lane.b32.xlu0 %v2143, 16
    %v4818 = vpop.permute.xlu0 %4817
    %4819 = vrot.lane.b32.xlu0 %v2145, 16
    %v4820 = vpop.permute.xlu0 %4819
    %4821 = vrot.lane.b32.xlu0 %v2147, 16
    %v4822 = vpop.permute.xlu0 %4821
    %v4824 = vsel %vm2161, %v4808, 0
    %v4827 = vsel %vm2161, %v4810, 0
    %v4830 = vsel %vm2161, %v4812, 0
    %v4833 = vsel %vm2161, %v4814, 0
    %v4836 = vsel %vm2161, %v4816, 0
    %v4839 = vsel %vm2161, %v4818, 0
    %v4842 = vsel %vm2161, %v4820, 0
    %v4845 = vsel %vm2161, %v4822, 0
    %4847 = vmatprep.subr.bf16.mxu0 0
    %4848 = vmatpush1.bf16.xpose.msra.mxu0 %v4836
    %4849 = vmatprep.subr.bf16.mxu0 0
    %4850 = vmatpush1.bf16.xpose.msra.mxu0 %v4839
    %4851 = vmatprep.subr.bf16.mxu0 0
    %4852 = vmatpush1.bf16.xpose.msra.mxu0 %v4842
    %4853 = vmatprep.subr.bf16.mxu0 0
    %4854 = vmatpush1.bf16.xpose.msra.mxu0 %v4845
    %4855 = vmatprep.subr.bf16.mxu0 0
    %4856 = vmatpush1.bf16.xpose.msra.mxu0 0
    %4857 = vmatprep.subr.bf16.mxu0 0
    %4858 = vmatpush1.bf16.xpose.msra.mxu0 0
    %4859 = vmatprep.subr.bf16.mxu0 0
    %4860 = vmatpush1.bf16.xpose.msra.mxu0 0
    %4861 = vmatprep.subr.bf16.mxu0 0
    %4862 = vmatpush1.bf16.xpose.msra.mxu0 0
    %4863 = vmatprep.subr.bf16.mxu0 0
    %4864 = vmatpush1.bf16.xpose.msra.mxu0 0
    %4865 = vmatprep.subr.bf16.mxu0 0
    %4866 = vmatpush1.bf16.xpose.msra.mxu0 0
    %4867 = vmatprep.subr.bf16.mxu0 0
    %4868 = vmatpush1.bf16.xpose.msra.mxu0 0
    %4869 = vmatprep.subr.bf16.mxu0 0
    %4870 = vmatpush1.bf16.xpose.msra.mxu0 0
    %4871 = vmatprep.subr.bf16.mxu0 0
    %4872 = vmatpush1.bf16.xpose.msra.mxu0 0
    %4873 = vmatprep.subr.bf16.mxu0 0
    %4874 = vmatpush1.bf16.xpose.msra.mxu0 0
    %4875 = vmatprep.subr.bf16.mxu0 0
    %4876 = vmatpush1.bf16.xpose.msra.mxu0 0
    %4877 = vmatprep.subr.bf16.mxu0 0
    %4878 = vmatpush1.bf16.xpose.msra.mxu0 0
    %4879 = vmatprep.mubr.bf16.mxu0 0
    %4880 = vmatmul.mubr.bf16.gmra.mrb[0].mxu0 %v4824
    %v4881 = vpop.f32.mrb[0].mxu0
    %v4882 = vadd.f32 0.0, %v4881
    %v4883 = vpop.f32.mrb[0].mxu0
    %v4884 = vpop.f32.mrb[0].mxu0
    %v4885 = vadd.f32 0.0, %v4884
    %v4886 = vpop.f32.mrb[0].mxu0
    %4887 = vmatprep.mubr.bf16.mxu0 0
    %4888 = vmatmul.mubr.bf16.gmra.mrb[0].mxu0 %v4827
    %v4889 = vpop.f32.mrb[0].mxu0
    %v4890 = vadd.f32 0.0, %v4889
    %v4891 = vpop.f32.mrb[0].mxu0
    %v4892 = vpop.f32.mrb[0].mxu0
    %v4893 = vadd.f32 0.0, %v4892
    %v4894 = vpop.f32.mrb[0].mxu0
    %4895 = vmatprep.mubr.bf16.mxu0 0
    %4896 = vmatmul.mubr.bf16.gmra.mrb[0].mxu0 %v4830
    %v4897 = vpop.f32.mrb[0].mxu0
    %v4898 = vadd.f32 0.0, %v4897
    %v4899 = vpop.f32.mrb[0].mxu0
    %v4900 = vpop.f32.mrb[0].mxu0
    %v4901 = vadd.f32 0.0, %v4900
    %v4902 = vpop.f32.mrb[0].mxu0
    %4903 = vmatprep.mubr.bf16.mxu0 0
    %4904 = vmatmul.mubr.bf16.gmra.mrb[0].mxu0 %v4833
    %v4905 = vpop.f32.mrb[0].mxu0
    %v4906 = vadd.f32 0.0, %v4905
    %v4907 = vpop.f32.mrb[0].mxu0
    %v4908 = vpop.f32.mrb[0].mxu0
    %v4909 = vadd.f32 0.0, %v4908
    %v4910 = vpop.f32.mrb[0].mxu0
    %4911 = vdwg.mxu0
    %v4912 = vmul.f32 %v4882, 0.25
    %v4913 = vmul.f32 %v4885, 0.25
    %v4914 = vmul.f32 %v4890, 0.25
    %v4915 = vmul.f32 %v4893, 0.25
    %v4916 = vmul.f32 %v4898, 0.25
    %v4917 = vmul.f32 %v4901, 0.25
    %v4918 = vmul.f32 %v4906, 0.25
    %v4919 = vmul.f32 %v4909, 0.25
    %v4920 = vsel %vm1673, %v4912, -inf
    %4921 = vmax.xlane.f32.xlu0 %v4920
    %v4922 = vpop.xlane.xlu0 %4921
    %v4923 = vsel %vm1673, %v4913, -inf
    %4924 = vmax.xlane.f32.xlu0 %v4923
    %v4925 = vpop.xlane.xlu0 %4924
    %v4926 = vsel %vm1673, %v4914, -inf
    %4927 = vmax.xlane.f32.xlu0 %v4926
    %v4928 = vpop.xlane.xlu0 %4927
    %v4929 = vsel %vm1673, %v4915, -inf
    %4930 = vmax.xlane.f32.xlu0 %v4929
    %v4931 = vpop.xlane.xlu0 %4930
    %v4932 = vsel %vm1673, %v4916, -inf
    %4933 = vmax.xlane.f32.xlu0 %v4932
    %v4934 = vpop.xlane.xlu0 %4933
    %v4935 = vsel %vm1673, %v4917, -inf
    %4936 = vmax.xlane.f32.xlu0 %v4935
    %v4937 = vpop.xlane.xlu0 %4936
    %v4938 = vsel %vm1673, %v4918, -inf
    %4939 = vmax.xlane.f32.xlu0 %v4938
    %v4940 = vpop.xlane.xlu0 %4939
    %v4941 = vsel %vm1673, %v4919, -inf
    %4942 = vmax.xlane.f32.xlu0 %v4941
    %v4943 = vpop.xlane.xlu0 %4942
    %v4944 = vsub.f32 %v4912, %v4922
    %v4945 = vsub.f32 %v4913, %v4925
    %v4946 = vsub.f32 %v4914, %v4928
    %v4947 = vsub.f32 %v4915, %v4931
    %v4948 = vsub.f32 %v4916, %v4934
    %v4949 = vsub.f32 %v4917, %v4937
    %v4950 = vsub.f32 %v4918, %v4940
    %v4951 = vsub.f32 %v4919, %v4943
    %v4952 = vmul.f32 %v4944, 1.442695
    %v4953 = vpow.pop %v4952
    %v4954 = vmul.f32 %v4945, 1.442695
    %v4955 = vpow.pop %v4954
    %v4956 = vmul.f32 %v4946, 1.442695
    %v4957 = vpow.pop %v4956
    %v4958 = vmul.f32 %v4947, 1.442695
    %v4959 = vpow.pop %v4958
    %v4960 = vmul.f32 %v4948, 1.442695
    %v4961 = vpow.pop %v4960
    %v4962 = vmul.f32 %v4949, 1.442695
    %v4963 = vpow.pop %v4962
    %v4964 = vmul.f32 %v4950, 1.442695
    %v4965 = vpow.pop %v4964
    %v4966 = vmul.f32 %v4951, 1.442695
    %v4967 = vpow.pop %v4966
    %v4968 = vsel %vm1673, %v4953, 0.0
    %4969 = vadd.xlane.f32.xlu0 %v4968
    %v4970 = vpop.xlane.xlu0 %4969
    %v4971 = vsel %vm1673, %v4955, 0.0
    %4972 = vadd.xlane.f32.xlu0 %v4971
    %v4973 = vpop.xlane.xlu0 %4972
    %v4974 = vsel %vm1673, %v4957, 0.0
    %4975 = vadd.xlane.f32.xlu0 %v4974
    %v4976 = vpop.xlane.xlu0 %4975
    %v4977 = vsel %vm1673, %v4959, 0.0
    %4978 = vadd.xlane.f32.xlu0 %v4977
    %v4979 = vpop.xlane.xlu0 %4978
    %v4980 = vsel %vm1673, %v4961, 0.0
    %4981 = vadd.xlane.f32.xlu0 %v4980
    %v4982 = vpop.xlane.xlu0 %4981
    %v4983 = vsel %vm1673, %v4963, 0.0
    %4984 = vadd.xlane.f32.xlu0 %v4983
    %v4985 = vpop.xlane.xlu0 %4984
    %v4986 = vsel %vm1673, %v4965, 0.0
    %4987 = vadd.xlane.f32.xlu0 %v4986
    %v4988 = vpop.xlane.xlu0 %4987
    %v4989 = vsel %vm1673, %v4967, 0.0
    %4990 = vadd.xlane.f32.xlu0 %v4989
    %v4991 = vpop.xlane.xlu0 %4990
    %v4992 = vrcp.pop %v4970
    %v4993 = vrcp.pop %v4973
    %v4994 = vrcp.pop %v4976
    %v4995 = vrcp.pop %v4979
    %v4996 = vrcp.pop %v4982
    %v4997 = vrcp.pop %v4985
    %v4998 = vrcp.pop %v4988
    %v4999 = vrcp.pop %v4991
    %v5000 = vmul.f32 %v4953, %v4992
    %v5001 = vmul.f32 %v4955, %v4993
    %v5002 = vmul.f32 %v4957, %v4994
    %v5003 = vmul.f32 %v4959, %v4995
    %v5004 = vmul.f32 %v4961, %v4996
    %v5005 = vmul.f32 %v4963, %v4997
    %v5006 = vmul.f32 %v4965, %v4998
    %v5007 = vmul.f32 %v4967, %v4999
    %v5008 = vpack.c.bf16 %v5001, %v5000
    %v5009 = vpack.c.bf16 %v5003, %v5002
    %v5010 = vpack.c.bf16 %v5005, %v5004
    %v5011 = vpack.c.bf16 %v5007, %v5006
    %5012 = vrot.lane.b32.xlu0 %v2142, 80
    %v5013 = vpop.permute.xlu0 %5012
    %5014 = vrot.lane.b32.xlu0 %v2144, 80
    %v5015 = vpop.permute.xlu0 %5014
    %5016 = vrot.lane.b32.xlu0 %v2146, 80
    %v5017 = vpop.permute.xlu0 %5016
    %5018 = vrot.lane.b32.xlu0 %v2148, 80
    %v5019 = vpop.permute.xlu0 %5018
    %v5025 = vsel %vm1673, %v5008, 0
    %v5028 = vsel %vm1673, %v5009, 0
    %v5031 = vsel %vm1673, %v5010, 0
    %v5034 = vsel %vm1673, %v5011, 0
    %5036 = vmatprep.subr.bf16.mxu0 0
    %5037 = vmatpush1.bf16.msra.mxu0 %v5013
    %5038 = vmatprep.subr.bf16.mxu0 0
    %5039 = vmatpush1.bf16.msra.mxu0 %v5015
    %5040 = vmatprep.subr.bf16.mxu0 0
    %5041 = vmatpush1.bf16.msra.mxu0 %v5017
    %5042 = vmatprep.subr.bf16.mxu0 0
    %5043 = vmatpush1.bf16.msra.mxu0 %v5019
    %5044 = vmatprep.subr.bf16.mxu0 0
    %5045 = vmatpush1.bf16.msra.mxu0 0
    %5046 = vmatprep.subr.bf16.mxu0 0
    %5047 = vmatpush1.bf16.msra.mxu0 0
    %5048 = vmatprep.subr.bf16.mxu0 0
    %5049 = vmatpush1.bf16.msra.mxu0 0
    %5050 = vmatprep.subr.bf16.mxu0 0
    %5051 = vmatpush1.bf16.msra.mxu0 0
    %5052 = vmatprep.subr.bf16.mxu0 0
    %5053 = vmatpush1.bf16.msra.mxu0 0
    %5054 = vmatprep.subr.bf16.mxu0 0
    %5055 = vmatpush1.bf16.msra.mxu0 0
    %5056 = vmatprep.subr.bf16.mxu0 0
    %5057 = vmatpush1.bf16.msra.mxu0 0
    %5058 = vmatprep.subr.bf16.mxu0 0
    %5059 = vmatpush1.bf16.msra.mxu0 0
    %5060 = vmatprep.subr.bf16.mxu0 0
    %5061 = vmatpush1.bf16.msra.mxu0 0
    %5062 = vmatprep.subr.bf16.mxu0 0
    %5063 = vmatpush1.bf16.msra.mxu0 0
    %5064 = vmatprep.subr.bf16.mxu0 0
    %5065 = vmatpush1.bf16.msra.mxu0 0
    %5066 = vmatprep.subr.bf16.mxu0 0
    %5067 = vmatpush1.bf16.msra.mxu0 0
    %5068 = vmatprep.mubr.bf16.mxu0 0
    %5069 = vmatmul.mubr.bf16.gmra.mrb[0].mxu0 %v5025
    %v5070 = vpop.f32.mrb[0].mxu0
    %v5071 = vadd.f32 0.0, %v5070
    %v5072 = vpop.f32.mrb[0].mxu0
    %v5073 = vpop.f32.mrb[0].mxu0
    %v5074 = vadd.f32 0.0, %v5073
    %v5075 = vpop.f32.mrb[0].mxu0
    %5076 = vmatprep.mubr.bf16.mxu0 0
    %5077 = vmatmul.mubr.bf16.gmra.mrb[0].mxu0 %v5028
    %v5078 = vpop.f32.mrb[0].mxu0
    %v5079 = vadd.f32 0.0, %v5078
    %v5080 = vpop.f32.mrb[0].mxu0
    %v5081 = vpop.f32.mrb[0].mxu0
    %v5082 = vadd.f32 0.0, %v5081
    %v5083 = vpop.f32.mrb[0].mxu0
    %5084 = vmatprep.mubr.bf16.mxu0 0
    %5085 = vmatmul.mubr.bf16.gmra.mrb[0].mxu0 %v5031
    %v5086 = vpop.f32.mrb[0].mxu0
    %v5087 = vadd.f32 0.0, %v5086
    %v5088 = vpop.f32.mrb[0].mxu0
    %v5089 = vpop.f32.mrb[0].mxu0
    %v5090 = vadd.f32 0.0, %v5089
    %v5091 = vpop.f32.mrb[0].mxu0
    %5092 = vmatprep.mubr.bf16.mxu0 0
    %5093 = vmatmul.mubr.bf16.gmra.mrb[0].mxu0 %v5034
    %v5094 = vpop.f32.mrb[0].mxu0
    %v5095 = vadd.f32 0.0, %v5094
    %v5096 = vpop.f32.mrb[0].mxu0
    %v5097 = vpop.f32.mrb[0].mxu0
    %v5098 = vadd.f32 0.0, %v5097
    %v5099 = vpop.f32.mrb[0].mxu0
    %5100 = vdwg.mxu0
    %v5101 = vpack.c.bf16 %v5074, %v5071
    %v5102 = vpack.c.bf16 %v5082, %v5079
    %v5103 = vpack.c.bf16 %v5090, %v5087
    %v5104 = vpack.c.bf16 %v5098, %v5095
    %v5106 = vsel %vm2161, %v5101, 0
    %v5109 = vsel %vm2161, %v5102, 0
    %v5112 = vsel %vm2161, %v5103, 0
    %v5115 = vsel %vm2161, %v5104, 0
    %5117 = vmatprep.subr.bf16.mxu0 0
    %5118 = vmatpush1.bf16.msra.mxu0 %v3599
    %5119 = vmatprep.subr.bf16.mxu0 0
    %5120 = vmatpush1.bf16.msra.mxu0 0
    %5121 = vmatprep.subr.bf16.mxu0 0
    %5122 = vmatpush1.bf16.msra.mxu0 0
    %5123 = vmatprep.subr.bf16.mxu0 0
    %5124 = vmatpush1.bf16.msra.mxu0 0
    %5125 = vmatprep.subr.bf16.mxu0 0
    %5126 = vmatpush1.bf16.msra.mxu0 0
    %5127 = vmatprep.subr.bf16.mxu0 0
    %5128 = vmatpush1.bf16.msra.mxu0 0
    %5129 = vmatprep.subr.bf16.mxu0 0
    %5130 = vmatpush1.bf16.msra.mxu0 0
    %5131 = vmatprep.subr.bf16.mxu0 0
    %5132 = vmatpush1.bf16.msra.mxu0 0
    %5133 = vmatprep.subr.bf16.mxu0 0
    %5134 = vmatpush1.bf16.msra.mxu0 0
    %5135 = vmatprep.subr.bf16.mxu0 0
    %5136 = vmatpush1.bf16.msra.mxu0 0
    %5137 = vmatprep.subr.bf16.mxu0 0
    %5138 = vmatpush1.bf16.msra.mxu0 0
    %5139 = vmatprep.subr.bf16.mxu0 0
    %5140 = vmatpush1.bf16.msra.mxu0 0
    %5141 = vmatprep.subr.bf16.mxu0 0
    %5142 = vmatpush1.bf16.msra.mxu0 0
    %5143 = vmatprep.subr.bf16.mxu0 0
    %5144 = vmatpush1.bf16.msra.mxu0 0
    %5145 = vmatprep.subr.bf16.mxu0 0
    %5146 = vmatpush1.bf16.msra.mxu0 0
    %5147 = vmatprep.subr.bf16.mxu0 0
    %5148 = vmatpush1.bf16.msra.mxu0 0
    %5149 = vmatprep.mubr.bf16.mxu0 0
    %5150 = vmatmul.mubr.bf16.gmra.mrb[0].mxu0 %v5106
    %v5151 = vpop.f32.mrb[0].mxu0
    %v5152 = vadd.f32 0.0, %v5151
    %v5153 = vpop.f32.mrb[0].mxu0
    %v5154 = vpop.f32.mrb[0].mxu0
    %v5155 = vadd.f32 0.0, %v5154
    %v5156 = vpop.f32.mrb[0].mxu0
    %5157 = vmatprep.mubr.bf16.mxu0 0
    %5158 = vmatmul.mubr.bf16.gmra.mrb[0].mxu0 %v5109
    %v5159 = vpop.f32.mrb[0].mxu0
    %v5160 = vadd.f32 0.0, %v5159
    %v5161 = vpop.f32.mrb[0].mxu0
    %v5162 = vpop.f32.mrb[0].mxu0
    %v5163 = vadd.f32 0.0, %v5162
    %v5164 = vpop.f32.mrb[0].mxu0
    %5165 = vmatprep.mubr.bf16.mxu0 0
    %5166 = vmatmul.mubr.bf16.gmra.mrb[0].mxu0 %v5112
    %v5167 = vpop.f32.mrb[0].mxu0
    %v5168 = vadd.f32 0.0, %v5167
    %v5169 = vpop.f32.mrb[0].mxu0
    %v5170 = vpop.f32.mrb[0].mxu0
    %v5171 = vadd.f32 0.0, %v5170
    %v5172 = vpop.f32.mrb[0].mxu0
    %5173 = vmatprep.mubr.bf16.mxu0 0
    %5174 = vmatmul.mubr.bf16.gmra.mrb[0].mxu0 %v5115
    %v5175 = vpop.f32.mrb[0].mxu0
    %v5176 = vadd.f32 0.0, %v5175
    %v5177 = vpop.f32.mrb[0].mxu0
    %v5178 = vpop.f32.mrb[0].mxu0
    %v5179 = vadd.f32 0.0, %v5178
    %v5180 = vpop.f32.mrb[0].mxu0
    %5181 = vdwg.mxu0
    %v5182 = vadd.f32 %v4799, %v5152
    %v5183 = vadd.f32 %v4800, %v5155
    %v5184 = vadd.f32 %v4801, %v5160
    %v5185 = vadd.f32 %v4802, %v5163
    %v5186 = vadd.f32 %v4803, %v5168
    %v5187 = vadd.f32 %v4804, %v5171
    %v5188 = vadd.f32 %v4805, %v5176
    %v5189 = vadd.f32 %v4806, %v5179
    %v5190 = vadd.f32 %v1611, %v3678
    %v5191 = vadd.f32 %v1614, %v3679
    %v5192 = vadd.f32 %v1619, %v3680
    %v5193 = vadd.f32 %v1622, %v3681
    %v5194 = vadd.f32 %v1627, %v3682
    %v5195 = vadd.f32 %v1630, %v3683
    %v5196 = vadd.f32 %v1635, %v3684
    %v5197 = vadd.f32 %v1638, %v3685
    %v5198 = vadd.f32 %v1643, %v5182
    %v5199 = vadd.f32 %v1646, %v5183
    %v5200 = vadd.f32 %v1651, %v5184
    %v5201 = vadd.f32 %v1654, %v5185
    %v5202 = vadd.f32 %v1659, %v5186
    %v5203 = vadd.f32 %v1662, %v5187
    %v5204 = vadd.f32 %v1667, %v5188
    %v5205 = vadd.f32 %v1670, %v5189
    %v5206 = vld [vmem:[%s37] sm:$0x1]
    %v5208 = vlaneseq
    %v5209 = vshrl.u32 %v5208, 7
    %v5210 = vsub.s32 0, %v5209
    %v5211 = vrot.slane %v5206, %v5210
    %v5213 = vadd.f32 %v5190, %v5211
    %v5214 = vadd.f32 %v5191, %v5211
    %v5215 = vadd.f32 %v5192, %v5211
    %v5216 = vadd.f32 %v5193, %v5211
    %v5217 = vadd.f32 %v5194, %v5211
    %v5218 = vadd.f32 %v5195, %v5211
    %v5219 = vadd.f32 %v5196, %v5211
    %v5220 = vadd.f32 %v5197, %v5211
    %v5221 = vadd.f32 %v5198, %v5211
    %v5222 = vadd.f32 %v5199, %v5211
    %v5223 = vadd.f32 %v5200, %v5211
    %v5224 = vadd.f32 %v5201, %v5211
    %v5225 = vadd.f32 %v5202, %v5211
    %v5226 = vadd.f32 %v5203, %v5211
    %v5227 = vadd.f32 %v5204, %v5211
    %v5228 = vadd.f32 %v5205, %v5211
    %v5229 = vsel %vm1673, %v5213, 0.0
    %5230 = vadd.xlane.f32.xlu0 %v5229
    %v5231 = vpop.xlane.xlu0 %5230
    %v5232 = vsel %vm1673, %v5214, 0.0
    %5233 = vadd.xlane.f32.xlu0 %v5232
    %v5234 = vpop.xlane.xlu0 %5233
    %v5235 = vsel %vm1673, %v5215, 0.0
    %5236 = vadd.xlane.f32.xlu0 %v5235
    %v5237 = vpop.xlane.xlu0 %5236
    %v5238 = vsel %vm1673, %v5216, 0.0
    %5239 = vadd.xlane.f32.xlu0 %v5238
    %v5240 = vpop.xlane.xlu0 %5239
    %v5241 = vsel %vm1673, %v5217, 0.0
    %5242 = vadd.xlane.f32.xlu0 %v5241
    %v5243 = vpop.xlane.xlu0 %5242
    %v5244 = vsel %vm1673, %v5218, 0.0
    %5245 = vadd.xlane.f32.xlu0 %v5244
    %v5246 = vpop.xlane.xlu0 %5245
    %v5247 = vsel %vm1673, %v5219, 0.0
    %5248 = vadd.xlane.f32.xlu0 %v5247
    %v5249 = vpop.xlane.xlu0 %5248
    %v5250 = vsel %vm1673, %v5220, 0.0
    %5251 = vadd.xlane.f32.xlu0 %v5250
    %v5252 = vpop.xlane.xlu0 %5251
    %v5253 = vsel %vm1673, %v5221, 0.0
    %5254 = vadd.xlane.f32.xlu0 %v5253
    %v5255 = vpop.xlane.xlu0 %5254
    %v5256 = vsel %vm1673, %v5222, 0.0
    %5257 = vadd.xlane.f32.xlu0 %v5256
    %v5258 = vpop.xlane.xlu0 %5257
    %v5259 = vsel %vm1673, %v5223, 0.0
    %5260 = vadd.xlane.f32.xlu0 %v5259
    %v5261 = vpop.xlane.xlu0 %5260
    %v5262 = vsel %vm1673, %v5224, 0.0
    %5263 = vadd.xlane.f32.xlu0 %v5262
    %v5264 = vpop.xlane.xlu0 %5263
    %v5265 = vsel %vm1673, %v5225, 0.0
    %5266 = vadd.xlane.f32.xlu0 %v5265
    %v5267 = vpop.xlane.xlu0 %5266
    %v5268 = vsel %vm1673, %v5226, 0.0
    %5269 = vadd.xlane.f32.xlu0 %v5268
    %v5270 = vpop.xlane.xlu0 %5269
    %v5271 = vsel %vm1673, %v5227, 0.0
    %5272 = vadd.xlane.f32.xlu0 %v5271
    %v5273 = vpop.xlane.xlu0 %5272
    %v5274 = vsel %vm1673, %v5228, 0.0
    %5275 = vadd.xlane.f32.xlu0 %v5274
    %v5276 = vpop.xlane.xlu0 %5275
    %v5277 = vmul.f32 %v5231, %v1292
    %v5278 = vmul.f32 %v5234, %v1292
    %v5279 = vmul.f32 %v5237, %v1292
    %v5280 = vmul.f32 %v5240, %v1292
    %v5281 = vmul.f32 %v5243, %v1292
    %v5282 = vmul.f32 %v5246, %v1292
    %v5283 = vmul.f32 %v5249, %v1292
    %v5284 = vmul.f32 %v5252, %v1292
    %v5285 = vmul.f32 %v5255, %v1292
    %v5286 = vmul.f32 %v5258, %v1292
    %v5287 = vmul.f32 %v5261, %v1292
    %v5288 = vmul.f32 %v5264, %v1292
    %v5289 = vmul.f32 %v5267, %v1292
    %v5290 = vmul.f32 %v5270, %v1292
    %v5291 = vmul.f32 %v5273, %v1292
    %v5292 = vmul.f32 %v5276, %v1292
    %v5293 = vsub.f32 %v5213, %v5277
    %v5294 = vsub.f32 %v5214, %v5278
    %v5295 = vsub.f32 %v5215, %v5279
    %v5296 = vsub.f32 %v5216, %v5280
    %v5297 = vsub.f32 %v5217, %v5281
    %v5298 = vsub.f32 %v5218, %v5282
    %v5299 = vsub.f32 %v5219, %v5283
    %v5300 = vsub.f32 %v5220, %v5284
    %v5301 = vsub.f32 %v5221, %v5285
    %v5302 = vsub.f32 %v5222, %v5286
    %v5303 = vsub.f32 %v5223, %v5287
    %v5304 = vsub.f32 %v5224, %v5288
    %v5305 = vsub.f32 %v5225, %v5289
    %v5306 = vsub.f32 %v5226, %v5290
    %v5307 = vsub.f32 %v5227, %v5291
    %v5308 = vsub.f32 %v5228, %v5292
    %v5309 = vmul.f32 %v5293, %v5293
    %v5310 = vmul.f32 %v5294, %v5294
    %v5311 = vmul.f32 %v5295, %v5295
    %v5312 = vmul.f32 %v5296, %v5296
    %v5313 = vmul.f32 %v5297, %v5297
    %v5314 = vmul.f32 %v5298, %v5298
    %v5315 = vmul.f32 %v5299, %v5299
    %v5316 = vmul.f32 %v5300, %v5300
    %v5317 = vmul.f32 %v5301, %v5301
    %v5318 = vmul.f32 %v5302, %v5302
    %v5319 = vmul.f32 %v5303, %v5303
    %v5320 = vmul.f32 %v5304, %v5304
    %v5321 = vmul.f32 %v5305, %v5305
    %v5322 = vmul.f32 %v5306, %v5306
    %v5323 = vmul.f32 %v5307, %v5307
    %v5324 = vmul.f32 %v5308, %v5308
    %v5325 = vsel %vm1673, %v5309, 0.0
    %5326 = vadd.xlane.f32.xlu0 %v5325
    %v5327 = vpop.xlane.xlu0 %5326
    %v5328 = vsel %vm1673, %v5310, 0.0
    %5329 = vadd.xlane.f32.xlu0 %v5328
    %v5330 = vpop.xlane.xlu0 %5329
    %v5331 = vsel %vm1673, %v5311, 0.0
    %5332 = vadd.xlane.f32.xlu0 %v5331
    %v5333 = vpop.xlane.xlu0 %5332
    %v5334 = vsel %vm1673, %v5312, 0.0
    %5335 = vadd.xlane.f32.xlu0 %v5334
    %v5336 = vpop.xlane.xlu0 %5335
    %v5337 = vsel %vm1673, %v5313, 0.0
    %5338 = vadd.xlane.f32.xlu0 %v5337
    %v5339 = vpop.xlane.xlu0 %5338
    %v5340 = vsel %vm1673, %v5314, 0.0
    %5341 = vadd.xlane.f32.xlu0 %v5340
    %v5342 = vpop.xlane.xlu0 %5341
    %v5343 = vsel %vm1673, %v5315, 0.0
    %5344 = vadd.xlane.f32.xlu0 %v5343
    %v5345 = vpop.xlane.xlu0 %5344
    %v5346 = vsel %vm1673, %v5316, 0.0
    %5347 = vadd.xlane.f32.xlu0 %v5346
    %v5348 = vpop.xlane.xlu0 %5347
    %v5349 = vsel %vm1673, %v5317, 0.0
    %5350 = vadd.xlane.f32.xlu0 %v5349
    %v5351 = vpop.xlane.xlu0 %5350
    %v5352 = vsel %vm1673, %v5318, 0.0
    %5353 = vadd.xlane.f32.xlu0 %v5352
    %v5354 = vpop.xlane.xlu0 %5353
    %v5355 = vsel %vm1673, %v5319, 0.0
    %5356 = vadd.xlane.f32.xlu0 %v5355
    %v5357 = vpop.xlane.xlu0 %5356
    %v5358 = vsel %vm1673, %v5320, 0.0
    %5359 = vadd.xlane.f32.xlu0 %v5358
    %v5360 = vpop.xlane.xlu0 %5359
    %v5361 = vsel %vm1673, %v5321, 0.0
    %5362 = vadd.xlane.f32.xlu0 %v5361
    %v5363 = vpop.xlane.xlu0 %5362
    %v5364 = vsel %vm1673, %v5322, 0.0
    %5365 = vadd.xlane.f32.xlu0 %v5364
    %v5366 = vpop.xlane.xlu0 %5365
    %v5367 = vsel %vm1673, %v5323, 0.0
    %5368 = vadd.xlane.f32.xlu0 %v5367
    %v5369 = vpop.xlane.xlu0 %5368
    %v5370 = vsel %vm1673, %v5324, 0.0
    %5371 = vadd.xlane.f32.xlu0 %v5370
    %v5372 = vpop.xlane.xlu0 %5371
    %v5373 = vmul.f32 %v5327, %v1292
    %v5374 = vmul.f32 %v5330, %v1292
    %v5375 = vmul.f32 %v5333, %v1292
    %v5376 = vmul.f32 %v5336, %v1292
    %v5377 = vmul.f32 %v5339, %v1292
    %v5378 = vmul.f32 %v5342, %v1292
    %v5379 = vmul.f32 %v5345, %v1292
    %v5380 = vmul.f32 %v5348, %v1292
    %v5381 = vmul.f32 %v5351, %v1292
    %v5382 = vmul.f32 %v5354, %v1292
    %v5383 = vmul.f32 %v5357, %v1292
    %v5384 = vmul.f32 %v5360, %v1292
    %v5385 = vmul.f32 %v5363, %v1292
    %v5386 = vmul.f32 %v5366, %v1292
    %v5387 = vmul.f32 %v5369, %v1292
    %v5388 = vmul.f32 %v5372, %v1292
    %v5389 = vadd.f32 %v5373, 1e-05
    %v5390 = vadd.f32 %v5374, 1e-05
    %v5391 = vadd.f32 %v5375, 1e-05
    %v5392 = vadd.f32 %v5376, 1e-05
    %v5393 = vadd.f32 %v5377, 1e-05
    %v5394 = vadd.f32 %v5378, 1e-05
    %v5395 = vadd.f32 %v5379, 1e-05
    %v5396 = vadd.f32 %v5380, 1e-05
    %v5397 = vadd.f32 %v5381, 1e-05
    %v5398 = vadd.f32 %v5382, 1e-05
    %v5399 = vadd.f32 %v5383, 1e-05
    %v5400 = vadd.f32 %v5384, 1e-05
    %v5401 = vadd.f32 %v5385, 1e-05
    %v5402 = vadd.f32 %v5386, 1e-05
    %v5403 = vadd.f32 %v5387, 1e-05
    %v5404 = vadd.f32 %v5388, 1e-05
    %v5405 = vrsqrt.pop %v5389
    %v5406 = vrsqrt.pop %v5390
    %v5407 = vrsqrt.pop %v5391
    %v5408 = vrsqrt.pop %v5392
    %v5409 = vrsqrt.pop %v5393
    %v5410 = vrsqrt.pop %v5394
    %v5411 = vrsqrt.pop %v5395
    %v5412 = vrsqrt.pop %v5396
    %v5413 = vrsqrt.pop %v5397
    %v5414 = vrsqrt.pop %v5398
    %v5415 = vrsqrt.pop %v5399
    %v5416 = vrsqrt.pop %v5400
    %v5417 = vrsqrt.pop %v5401
    %v5418 = vrsqrt.pop %v5402
    %v5419 = vrsqrt.pop %v5403
    %v5420 = vrsqrt.pop %v5404
    %v5421 = vmul.f32 %v5293, %v5405
    %v5422 = vmul.f32 %v5294, %v5406
    %v5423 = vmul.f32 %v5295, %v5407
    %v5424 = vmul.f32 %v5296, %v5408
    %v5425 = vmul.f32 %v5297, %v5409
    %v5426 = vmul.f32 %v5298, %v5410
    %v5427 = vmul.f32 %v5299, %v5411
    %v5428 = vmul.f32 %v5300, %v5412
    %v5429 = vmul.f32 %v5301, %v5413
    %v5430 = vmul.f32 %v5302, %v5414
    %v5431 = vmul.f32 %v5303, %v5415
    %v5432 = vmul.f32 %v5304, %v5416
    %v5433 = vmul.f32 %v5305, %v5417
    %v5434 = vmul.f32 %v5306, %v5418
    %v5435 = vmul.f32 %v5307, %v5419
    %v5436 = vmul.f32 %v5308, %v5420
    %v5437 = vld [vmem:[%s39] sm:$0x1]
    %v5439 = vlaneseq
    %v5440 = vshrl.u32 %v5439, 7
    %v5441 = vsub.s32 0, %v5440
    %v5442 = vrot.slane %v5437, %v5441
    %v5444 = vmul.f32 %v5421, %v5442
    %v5445 = vmul.f32 %v5422, %v5442
    %v5446 = vmul.f32 %v5423, %v5442
    %v5447 = vmul.f32 %v5424, %v5442
    %v5448 = vmul.f32 %v5425, %v5442
    %v5449 = vmul.f32 %v5426, %v5442
    %v5450 = vmul.f32 %v5427, %v5442
    %v5451 = vmul.f32 %v5428, %v5442
    %v5452 = vmul.f32 %v5429, %v5442
    %v5453 = vmul.f32 %v5430, %v5442
    %v5454 = vmul.f32 %v5431, %v5442
    %v5455 = vmul.f32 %v5432, %v5442
    %v5456 = vmul.f32 %v5433, %v5442
    %v5457 = vmul.f32 %v5434, %v5442
    %v5458 = vmul.f32 %v5435, %v5442
    %v5459 = vmul.f32 %v5436, %v5442
    %v5460 = vld [vmem:[%s41] sm:$0x1]
    %v5462 = vlaneseq
    %v5463 = vshrl.u32 %v5462, 7
    %v5464 = vsub.s32 0, %v5463
    %v5465 = vrot.slane %v5460, %v5464
    %v5467 = vadd.f32 %v5444, %v5465
    %v5468 = vadd.f32 %v5445, %v5465
    %v5469 = vadd.f32 %v5446, %v5465
    %v5470 = vadd.f32 %v5447, %v5465
    %v5471 = vadd.f32 %v5448, %v5465
    %v5472 = vadd.f32 %v5449, %v5465
    %v5473 = vadd.f32 %v5450, %v5465
    %v5474 = vadd.f32 %v5451, %v5465
    %v5475 = vadd.f32 %v5452, %v5465
    %v5476 = vadd.f32 %v5453, %v5465
    %v5477 = vadd.f32 %v5454, %v5465
    %v5478 = vadd.f32 %v5455, %v5465
    %v5479 = vadd.f32 %v5456, %v5465
    %v5480 = vadd.f32 %v5457, %v5465
    %v5481 = vadd.f32 %v5458, %v5465
    %v5482 = vadd.f32 %v5459, %v5465
    %v5483 = vpack.c.bf16 %v5468, %v5467
    %v5484 = vpack.c.bf16 %v5470, %v5469
    %v5485 = vpack.c.bf16 %v5472, %v5471
    %v5486 = vpack.c.bf16 %v5474, %v5473
    %v5487 = vpack.c.bf16 %v5476, %v5475
    %v5488 = vpack.c.bf16 %v5478, %v5477
    %v5489 = vpack.c.bf16 %v5480, %v5479
    %v5490 = vpack.c.bf16 %v5482, %v5481
    %v5491 = vld [vmem:[%s43] sm:$0xf]
    %v5492 = vld [vmem:[%s43 + $0x4] sm:$0xf]
    %v5493 = vld [vmem:[%s43 + $0x8] sm:$0xf]
    %v5494 = vld [vmem:[%s43 + $0xc] sm:$0xf]
    %v5495 = vld [vmem:[%s43 + $0x10] sm:$0xf]
    %v5496 = vld [vmem:[%s43 + $0x14] sm:$0xf]
    %v5497 = vld [vmem:[%s43 + $0x18] sm:$0xf]
    %v5498 = vld [vmem:[%s43 + $0x1c] sm:$0xf]
    %v5499 = vld [vmem:[%s45] sm:$0x1]
    %v5501 = vlaneseq
    %v5502 = vshrl.u32 %v5501, 7
    %v5503 = vsub.s32 0, %v5502
    %v5504 = vrot.slane %v5499, %v5503
    %v5514 = vunpack.c.l.b16 %v5491
    %v5515 = vunpack.c.l.b16 %v5492
    %v5516 = vunpack.c.l.b16 %v5493
    %v5517 = vunpack.c.l.b16 %v5494
    %v5518 = vunpack.c.l.b16 %v5495
    %v5519 = vunpack.c.l.b16 %v5496
    %v5520 = vunpack.c.l.b16 %v5497
    %v5521 = vunpack.c.l.b16 %v5498
    %v5522 = vpack.c.b16 %v5515, %v5514
    %v5523 = vpack.c.b16 %v5517, %v5516
    %v5524 = vpack.c.b16 %v5519, %v5518
    %v5525 = vpack.c.b16 %v5521, %v5520
    %v5531 = vsel %vm1673, %v5483, 0
    %v5534 = vsel %vm1673, %v5484, 0
    %v5537 = vsel %vm1673, %v5485, 0
    %v5540 = vsel %vm1673, %v5486, 0
    %v5543 = vsel %vm1673, %v5487, 0
    %v5546 = vsel %vm1673, %v5488, 0
    %v5549 = vsel %vm1673, %v5489, 0
    %v5552 = vsel %vm1673, %v5490, 0
    %5554 = vmatprep.subr.bf16.mxu0 0
    %5555 = vmatpush1.bf16.msra.mxu0 %v5522
    %5556 = vmatprep.subr.bf16.mxu0 0
    %5557 = vmatpush1.bf16.msra.mxu0 %v5523
    %5558 = vmatprep.subr.bf16.mxu0 0
    %5559 = vmatpush1.bf16.msra.mxu0 %v5524
    %5560 = vmatprep.subr.bf16.mxu0 0
    %5561 = vmatpush1.bf16.msra.mxu0 %v5525
    %5562 = vmatprep.subr.bf16.mxu0 0
    %5563 = vmatpush1.bf16.msra.mxu0 0
    %5564 = vmatprep.subr.bf16.mxu0 0
    %5565 = vmatpush1.bf16.msra.mxu0 0
    %5566 = vmatprep.subr.bf16.mxu0 0
    %5567 = vmatpush1.bf16.msra.mxu0 0
    %5568 = vmatprep.subr.bf16.mxu0 0
    %5569 = vmatpush1.bf16.msra.mxu0 0
    %5570 = vmatprep.subr.bf16.mxu0 0
    %5571 = vmatpush1.bf16.msra.mxu0 0
    %5572 = vmatprep.subr.bf16.mxu0 0
    %5573 = vmatpush1.bf16.msra.mxu0 0
    %5574 = vmatprep.subr.bf16.mxu0 0
    %5575 = vmatpush1.bf16.msra.mxu0 0
    %5576 = vmatprep.subr.bf16.mxu0 0
    %5577 = vmatpush1.bf16.msra.mxu0 0
    %5578 = vmatprep.subr.bf16.mxu0 0
    %5579 = vmatpush1.bf16.msra.mxu0 0
    %5580 = vmatprep.subr.bf16.mxu0 0
    %5581 = vmatpush1.bf16.msra.mxu0 0
    %5582 = vmatprep.subr.bf16.mxu0 0
    %5583 = vmatpush1.bf16.msra.mxu0 0
    %5584 = vmatprep.subr.bf16.mxu0 0
    %5585 = vmatpush1.bf16.msra.mxu0 0
    %5586 = vmatprep.mubr.bf16.mxu0 0
    %5587 = vmatmul.mubr.bf16.gmra.mrb[0].mxu0 %v5531
    %v5588 = vpop.f32.mrb[0].mxu0
    %v5589 = vadd.f32 %v5504, %v5588
    %v5590 = vpop.f32.mrb[0].mxu0
    %v5591 = vpop.f32.mrb[0].mxu0
    %v5592 = vadd.f32 %v5504, %v5591
    %v5593 = vpop.f32.mrb[0].mxu0
    %5594 = vmatprep.mubr.bf16.mxu0 0
    %5595 = vmatmul.mubr.bf16.gmra.mrb[0].mxu0 %v5534
    %v5596 = vpop.f32.mrb[0].mxu0
    %v5597 = vadd.f32 %v5504, %v5596
    %v5598 = vpop.f32.mrb[0].mxu0
    %v5599 = vpop.f32.mrb[0].mxu0
    %v5600 = vadd.f32 %v5504, %v5599
    %v5601 = vpop.f32.mrb[0].mxu0
    %5602 = vmatprep.mubr.bf16.mxu0 0
    %5603 = vmatmul.mubr.bf16.gmra.mrb[0].mxu0 %v5537
    %v5604 = vpop.f32.mrb[0].mxu0
    %v5605 = vadd.f32 %v5504, %v5604
    %v5606 = vpop.f32.mrb[0].mxu0
    %v5607 = vpop.f32.mrb[0].mxu0
    %v5608 = vadd.f32 %v5504, %v5607
    %v5609 = vpop.f32.mrb[0].mxu0
    %5610 = vmatprep.mubr.bf16.mxu0 0
    %5611 = vmatmul.mubr.bf16.gmra.mrb[0].mxu0 %v5540
    %v5612 = vpop.f32.mrb[0].mxu0
    %v5613 = vadd.f32 %v5504, %v5612
    %v5614 = vpop.f32.mrb[0].mxu0
    %v5615 = vpop.f32.mrb[0].mxu0
    %v5616 = vadd.f32 %v5504, %v5615
    %v5617 = vpop.f32.mrb[0].mxu0
    %5618 = vmatprep.mubr.bf16.mxu0 0
    %5619 = vmatmul.mubr.bf16.gmra.mrb[0].mxu0 %v5543
    %v5620 = vpop.f32.mrb[0].mxu0
    %v5621 = vadd.f32 %v5504, %v5620
    %v5622 = vpop.f32.mrb[0].mxu0
    %v5623 = vpop.f32.mrb[0].mxu0
    %v5624 = vadd.f32 %v5504, %v5623
    %v5625 = vpop.f32.mrb[0].mxu0
    %5626 = vmatprep.mubr.bf16.mxu0 0
    %5627 = vmatmul.mubr.bf16.gmra.mrb[0].mxu0 %v5546
    %v5628 = vpop.f32.mrb[0].mxu0
    %v5629 = vadd.f32 %v5504, %v5628
    %v5630 = vpop.f32.mrb[0].mxu0
    %v5631 = vpop.f32.mrb[0].mxu0
    %v5632 = vadd.f32 %v5504, %v5631
    %v5633 = vpop.f32.mrb[0].mxu0
    %5634 = vmatprep.mubr.bf16.mxu0 0
    %5635 = vmatmul.mubr.bf16.gmra.mrb[0].mxu0 %v5549
    %v5636 = vpop.f32.mrb[0].mxu0
    %v5637 = vadd.f32 %v5504, %v5636
    %v5638 = vpop.f32.mrb[0].mxu0
    %v5639 = vpop.f32.mrb[0].mxu0
    %v5640 = vadd.f32 %v5504, %v5639
    %v5641 = vpop.f32.mrb[0].mxu0
    %5642 = vmatprep.mubr.bf16.mxu0 0
    %5643 = vmatmul.mubr.bf16.gmra.mrb[0].mxu0 %v5552
    %v5644 = vpop.f32.mrb[0].mxu0
    %v5645 = vadd.f32 %v5504, %v5644
    %v5646 = vpop.f32.mrb[0].mxu0
    %v5647 = vpop.f32.mrb[0].mxu0
    %v5648 = vadd.f32 %v5504, %v5647
    %v5649 = vpop.f32.mrb[0].mxu0
    %5650 = vdwg.mxu0
    %v5651 = vmax.f32 %v5589, 0.0
    %v5652 = vmax.f32 %v5592, 0.0
    %v5653 = vmax.f32 %v5597, 0.0
    %v5654 = vmax.f32 %v5600, 0.0
    %v5655 = vmax.f32 %v5605, 0.0
    %v5656 = vmax.f32 %v5608, 0.0
    %v5657 = vmax.f32 %v5613, 0.0
    %v5658 = vmax.f32 %v5616, 0.0
    %v5659 = vmax.f32 %v5621, 0.0
    %v5660 = vmax.f32 %v5624, 0.0
    %v5661 = vmax.f32 %v5629, 0.0
    %v5662 = vmax.f32 %v5632, 0.0
    %v5663 = vmax.f32 %v5637, 0.0
    %v5664 = vmax.f32 %v5640, 0.0
    %v5665 = vmax.f32 %v5645, 0.0
    %v5666 = vmax.f32 %v5648, 0.0
    %v5667 = vpack.c.bf16 %v5652, %v5651
    %v5668 = vpack.c.bf16 %v5654, %v5653
    %v5669 = vpack.c.bf16 %v5656, %v5655
    %v5670 = vpack.c.bf16 %v5658, %v5657
    %v5671 = vpack.c.bf16 %v5660, %v5659
    %v5672 = vpack.c.bf16 %v5662, %v5661
    %v5673 = vpack.c.bf16 %v5664, %v5663
    %v5674 = vpack.c.bf16 %v5666, %v5665
    %v5675 = vld [vmem:[%s47] sm:$0xf]
    %v5676 = vld [vmem:[%s47 + $0x4] sm:$0xf]
    %v5677 = vld [vmem:[%s47 + $0x8] sm:$0xf]
    %v5678 = vld [vmem:[%s47 + $0xc] sm:$0xf]
    %v5679 = vld [vmem:[%s47 + $0x10] sm:$0xf]
    %v5680 = vld [vmem:[%s47 + $0x14] sm:$0xf]
    %v5681 = vld [vmem:[%s47 + $0x18] sm:$0xf]
    %v5682 = vld [vmem:[%s47 + $0x1c] sm:$0xf]
    %v5683 = vld [vmem:[%s47 + $0x20] sm:$0xf]
    %v5684 = vld [vmem:[%s47 + $0x24] sm:$0xf]
    %v5685 = vld [vmem:[%s47 + $0x28] sm:$0xf]
    %v5686 = vld [vmem:[%s47 + $0x2c] sm:$0xf]
    %v5687 = vld [vmem:[%s47 + $0x30] sm:$0xf]
    %v5688 = vld [vmem:[%s47 + $0x34] sm:$0xf]
    %v5689 = vld [vmem:[%s47 + $0x38] sm:$0xf]
    %v5690 = vld [vmem:[%s47 + $0x3c] sm:$0xf]
    %v5707 = vunpack.c.l.b16 %v5675
    %v5708 = vunpack.c.l.b16 %v5676
    %v5709 = vunpack.c.l.b16 %v5677
    %v5710 = vunpack.c.l.b16 %v5678
    %v5711 = vunpack.c.l.b16 %v5679
    %v5712 = vunpack.c.l.b16 %v5680
    %v5713 = vunpack.c.l.b16 %v5681
    %v5714 = vunpack.c.l.b16 %v5682
    %v5715 = vunpack.c.l.b16 %v5683
    %v5716 = vunpack.c.l.b16 %v5684
    %v5717 = vunpack.c.l.b16 %v5685
    %v5718 = vunpack.c.l.b16 %v5686
    %v5719 = vunpack.c.l.b16 %v5687
    %v5720 = vunpack.c.l.b16 %v5688
    %v5721 = vunpack.c.l.b16 %v5689
    %v5722 = vunpack.c.l.b16 %v5690
    %v5723 = vpack.c.b16 %v5708, %v5707
    %v5724 = vpack.c.b16 %v5710, %v5709
    %v5725 = vpack.c.b16 %v5712, %v5711
    %v5726 = vpack.c.b16 %v5714, %v5713
    %v5727 = vpack.c.b16 %v5716, %v5715
    %v5728 = vpack.c.b16 %v5718, %v5717
    %v5729 = vpack.c.b16 %v5720, %v5719
    %v5730 = vpack.c.b16 %v5722, %v5721
    %5739 = vmatprep.subr.bf16.mxu0 0
    %5740 = vmatpush1.bf16.msra.mxu0 %v5723
    %5741 = vmatprep.subr.bf16.mxu0 0
    %5742 = vmatpush1.bf16.msra.mxu0 %v5724
    %5743 = vmatprep.subr.bf16.mxu0 0
    %5744 = vmatpush1.bf16.msra.mxu0 %v5725
    %5745 = vmatprep.subr.bf16.mxu0 0
    %5746 = vmatpush1.bf16.msra.mxu0 %v5726
    %5747 = vmatprep.subr.bf16.mxu0 0
    %5748 = vmatpush1.bf16.msra.mxu0 %v5727
    %5749 = vmatprep.subr.bf16.mxu0 0
    %5750 = vmatpush1.bf16.msra.mxu0 %v5728
    %5751 = vmatprep.subr.bf16.mxu0 0
    %5752 = vmatpush1.bf16.msra.mxu0 %v5729
    %5753 = vmatprep.subr.bf16.mxu0 0
    %5754 = vmatpush1.bf16.msra.mxu0 %v5730
    %5755 = vmatprep.subr.bf16.mxu0 0
    %5756 = vmatpush1.bf16.msra.mxu0 0
    %5757 = vmatprep.subr.bf16.mxu0 0
    %5758 = vmatpush1.bf16.msra.mxu0 0
    %5759 = vmatprep.subr.bf16.mxu0 0
    %5760 = vmatpush1.bf16.msra.mxu0 0
    %5761 = vmatprep.subr.bf16.mxu0 0
    %5762 = vmatpush1.bf16.msra.mxu0 0
    %5763 = vmatprep.subr.bf16.mxu0 0
    %5764 = vmatpush1.bf16.msra.mxu0 0
    %5765 = vmatprep.subr.bf16.mxu0 0
    %5766 = vmatpush1.bf16.msra.mxu0 0
    %5767 = vmatprep.subr.bf16.mxu0 0
    %5768 = vmatpush1.bf16.msra.mxu0 0
    %5769 = vmatprep.subr.bf16.mxu0 0
    %5770 = vmatpush1.bf16.msra.mxu0 0
    %5771 = vmatprep.mubr.bf16.mxu0 0
    %5772 = vmatmul.mubr.bf16.gmra.mrb[0].mxu0 %v5667
    %v5773 = vpop.f32.mrb[0].mxu0
    %v5774 = vadd.f32 0.0, %v5773
    %v5775 = vpop.f32.mrb[0].mxu0
    %v5776 = vpop.f32.mrb[0].mxu0
    %v5777 = vadd.f32 0.0, %v5776
    %v5778 = vpop.f32.mrb[0].mxu0
    %5779 = vmatprep.mubr.bf16.mxu0 0
    %5780 = vmatmul.mubr.bf16.gmra.mrb[0].mxu0 %v5668
    %v5781 = vpop.f32.mrb[0].mxu0
    %v5782 = vadd.f32 0.0, %v5781
    %v5783 = vpop.f32.mrb[0].mxu0
    %v5784 = vpop.f32.mrb[0].mxu0
    %v5785 = vadd.f32 0.0, %v5784
    %v5786 = vpop.f32.mrb[0].mxu0
    %5787 = vmatprep.mubr.bf16.mxu0 0
    %5788 = vmatmul.mubr.bf16.gmra.mrb[0].mxu0 %v5669
    %v5789 = vpop.f32.mrb[0].mxu0
    %v5790 = vadd.f32 0.0, %v5789
    %v5791 = vpop.f32.mrb[0].mxu0
    %v5792 = vpop.f32.mrb[0].mxu0
    %v5793 = vadd.f32 0.0, %v5792
    %v5794 = vpop.f32.mrb[0].mxu0
    %5795 = vmatprep.mubr.bf16.mxu0 0
    %5796 = vmatmul.mubr.bf16.gmra.mrb[0].mxu0 %v5670
    %v5797 = vpop.f32.mrb[0].mxu0
    %v5798 = vadd.f32 0.0, %v5797
    %v5799 = vpop.f32.mrb[0].mxu0
    %v5800 = vpop.f32.mrb[0].mxu0
    %v5801 = vadd.f32 0.0, %v5800
    %v5802 = vpop.f32.mrb[0].mxu0
    %5803 = vmatprep.mubr.bf16.mxu0 0
    %5804 = vmatmul.mubr.bf16.gmra.mrb[0].mxu0 %v5671
    %v5805 = vpop.f32.mrb[0].mxu0
    %v5806 = vadd.f32 0.0, %v5805
    %v5807 = vpop.f32.mrb[0].mxu0
    %v5808 = vpop.f32.mrb[0].mxu0
    %v5809 = vadd.f32 0.0, %v5808
    %v5810 = vpop.f32.mrb[0].mxu0
    %5811 = vmatprep.mubr.bf16.mxu0 0
    %5812 = vmatmul.mubr.bf16.gmra.mrb[0].mxu0 %v5672
    %v5813 = vpop.f32.mrb[0].mxu0
    %v5814 = vadd.f32 0.0, %v5813
    %v5815 = vpop.f32.mrb[0].mxu0
    %v5816 = vpop.f32.mrb[0].mxu0
    %v5817 = vadd.f32 0.0, %v5816
    %v5818 = vpop.f32.mrb[0].mxu0
    %5819 = vmatprep.mubr.bf16.mxu0 0
    %5820 = vmatmul.mubr.bf16.gmra.mrb[0].mxu0 %v5673
    %v5821 = vpop.f32.mrb[0].mxu0
    %v5822 = vadd.f32 0.0, %v5821
    %v5823 = vpop.f32.mrb[0].mxu0
    %v5824 = vpop.f32.mrb[0].mxu0
    %v5825 = vadd.f32 0.0, %v5824
    %v5826 = vpop.f32.mrb[0].mxu0
    %5827 = vmatprep.mubr.bf16.mxu0 0
    %5828 = vmatmul.mubr.bf16.gmra.mrb[0].mxu0 %v5674
    %v5829 = vpop.f32.mrb[0].mxu0
    %v5830 = vadd.f32 0.0, %v5829
    %v5831 = vpop.f32.mrb[0].mxu0
    %v5832 = vpop.f32.mrb[0].mxu0
    %v5833 = vadd.f32 0.0, %v5832
    %v5834 = vpop.f32.mrb[0].mxu0
    %5835 = vdwg.mxu0
    %v5836 = vadd.f32 %v5213, %v5774
    %v5837 = vadd.f32 %v5214, %v5777
    %v5838 = vadd.f32 %v5215, %v5782
    %v5839 = vadd.f32 %v5216, %v5785
    %v5840 = vadd.f32 %v5217, %v5790
    %v5841 = vadd.f32 %v5218, %v5793
    %v5842 = vadd.f32 %v5219, %v5798
    %v5843 = vadd.f32 %v5220, %v5801
    %v5844 = vadd.f32 %v5221, %v5806
    %v5845 = vadd.f32 %v5222, %v5809
    %v5846 = vadd.f32 %v5223, %v5814
    %v5847 = vadd.f32 %v5224, %v5817
    %v5848 = vadd.f32 %v5225, %v5822
    %v5849 = vadd.f32 %v5226, %v5825
    %v5850 = vadd.f32 %v5227, %v5830
    %v5851 = vadd.f32 %v5228, %v5833
    %v5852 = vld [vmem:[%s49] sm:$0x1]
    %v5854 = vlaneseq
    %v5855 = vshrl.u32 %v5854, 7
    %v5856 = vsub.s32 0, %v5855
    %v5857 = vrot.slane %v5852, %v5856
    %v5859 = vadd.f32 %v5836, %v5857
    %v5860 = vadd.f32 %v5837, %v5857
    %v5861 = vadd.f32 %v5838, %v5857
    %v5862 = vadd.f32 %v5839, %v5857
    %v5863 = vadd.f32 %v5840, %v5857
    %v5864 = vadd.f32 %v5841, %v5857
    %v5865 = vadd.f32 %v5842, %v5857
    %v5866 = vadd.f32 %v5843, %v5857
    %v5867 = vadd.f32 %v5844, %v5857
    %v5868 = vadd.f32 %v5845, %v5857
    %v5869 = vadd.f32 %v5846, %v5857
    %v5870 = vadd.f32 %v5847, %v5857
    %v5871 = vadd.f32 %v5848, %v5857
    %v5872 = vadd.f32 %v5849, %v5857
    %v5873 = vadd.f32 %v5850, %v5857
    %v5874 = vadd.f32 %v5851, %v5857
    %v5875 = vsel %vm1673, %v5859, 0.0
    %5876 = vadd.xlane.f32.xlu0 %v5875
    %v5877 = vpop.xlane.xlu0 %5876
    %v5878 = vsel %vm1673, %v5860, 0.0
    %5879 = vadd.xlane.f32.xlu0 %v5878
    %v5880 = vpop.xlane.xlu0 %5879
    %v5881 = vsel %vm1673, %v5861, 0.0
    %5882 = vadd.xlane.f32.xlu0 %v5881
    %v5883 = vpop.xlane.xlu0 %5882
    %v5884 = vsel %vm1673, %v5862, 0.0
    %5885 = vadd.xlane.f32.xlu0 %v5884
    %v5886 = vpop.xlane.xlu0 %5885
    %v5887 = vsel %vm1673, %v5863, 0.0
    %5888 = vadd.xlane.f32.xlu0 %v5887
    %v5889 = vpop.xlane.xlu0 %5888
    %v5890 = vsel %vm1673, %v5864, 0.0
    %5891 = vadd.xlane.f32.xlu0 %v5890
    %v5892 = vpop.xlane.xlu0 %5891
    %v5893 = vsel %vm1673, %v5865, 0.0
    %5894 = vadd.xlane.f32.xlu0 %v5893
    %v5895 = vpop.xlane.xlu0 %5894
    %v5896 = vsel %vm1673, %v5866, 0.0
    %5897 = vadd.xlane.f32.xlu0 %v5896
    %v5898 = vpop.xlane.xlu0 %5897
    %v5899 = vsel %vm1673, %v5867, 0.0
    %5900 = vadd.xlane.f32.xlu0 %v5899
    %v5901 = vpop.xlane.xlu0 %5900
    %v5902 = vsel %vm1673, %v5868, 0.0
    %5903 = vadd.xlane.f32.xlu0 %v5902
    %v5904 = vpop.xlane.xlu0 %5903
    %v5905 = vsel %vm1673, %v5869, 0.0
    %5906 = vadd.xlane.f32.xlu0 %v5905
    %v5907 = vpop.xlane.xlu0 %5906
    %v5908 = vsel %vm1673, %v5870, 0.0
    %5909 = vadd.xlane.f32.xlu0 %v5908
    %v5910 = vpop.xlane.xlu0 %5909
    %v5911 = vsel %vm1673, %v5871, 0.0
    %5912 = vadd.xlane.f32.xlu0 %v5911
    %v5913 = vpop.xlane.xlu0 %5912
    %v5914 = vsel %vm1673, %v5872, 0.0
    %5915 = vadd.xlane.f32.xlu0 %v5914
    %v5916 = vpop.xlane.xlu0 %5915
    %v5917 = vsel %vm1673, %v5873, 0.0
    %5918 = vadd.xlane.f32.xlu0 %v5917
    %v5919 = vpop.xlane.xlu0 %5918
    %v5920 = vsel %vm1673, %v5874, 0.0
    %5921 = vadd.xlane.f32.xlu0 %v5920
    %v5922 = vpop.xlane.xlu0 %5921
    %v5923 = vmul.f32 %v5877, %v1292
    %v5924 = vmul.f32 %v5880, %v1292
    %v5925 = vmul.f32 %v5883, %v1292
    %v5926 = vmul.f32 %v5886, %v1292
    %v5927 = vmul.f32 %v5889, %v1292
    %v5928 = vmul.f32 %v5892, %v1292
    %v5929 = vmul.f32 %v5895, %v1292
    %v5930 = vmul.f32 %v5898, %v1292
    %v5931 = vmul.f32 %v5901, %v1292
    %v5932 = vmul.f32 %v5904, %v1292
    %v5933 = vmul.f32 %v5907, %v1292
    %v5934 = vmul.f32 %v5910, %v1292
    %v5935 = vmul.f32 %v5913, %v1292
    %v5936 = vmul.f32 %v5916, %v1292
    %v5937 = vmul.f32 %v5919, %v1292
    %v5938 = vmul.f32 %v5922, %v1292
    %v5939 = vsub.f32 %v5859, %v5923
    %v5940 = vsub.f32 %v5860, %v5924
    %v5941 = vsub.f32 %v5861, %v5925
    %v5942 = vsub.f32 %v5862, %v5926
    %v5943 = vsub.f32 %v5863, %v5927
    %v5944 = vsub.f32 %v5864, %v5928
    %v5945 = vsub.f32 %v5865, %v5929
    %v5946 = vsub.f32 %v5866, %v5930
    %v5947 = vsub.f32 %v5867, %v5931
    %v5948 = vsub.f32 %v5868, %v5932
    %v5949 = vsub.f32 %v5869, %v5933
    %v5950 = vsub.f32 %v5870, %v5934
    %v5951 = vsub.f32 %v5871, %v5935
    %v5952 = vsub.f32 %v5872, %v5936
    %v5953 = vsub.f32 %v5873, %v5937
    %v5954 = vsub.f32 %v5874, %v5938
    %v5955 = vmul.f32 %v5939, %v5939
    %v5956 = vmul.f32 %v5940, %v5940
    %v5957 = vmul.f32 %v5941, %v5941
    %v5958 = vmul.f32 %v5942, %v5942
    %v5959 = vmul.f32 %v5943, %v5943
    %v5960 = vmul.f32 %v5944, %v5944
    %v5961 = vmul.f32 %v5945, %v5945
    %v5962 = vmul.f32 %v5946, %v5946
    %v5963 = vmul.f32 %v5947, %v5947
    %v5964 = vmul.f32 %v5948, %v5948
    %v5965 = vmul.f32 %v5949, %v5949
    %v5966 = vmul.f32 %v5950, %v5950
    %v5967 = vmul.f32 %v5951, %v5951
    %v5968 = vmul.f32 %v5952, %v5952
    %v5969 = vmul.f32 %v5953, %v5953
    %v5970 = vmul.f32 %v5954, %v5954
    %v5971 = vsel %vm1673, %v5955, 0.0
    %5972 = vadd.xlane.f32.xlu0 %v5971
    %v5973 = vpop.xlane.xlu0 %5972
    %v5974 = vsel %vm1673, %v5956, 0.0
    %5975 = vadd.xlane.f32.xlu0 %v5974
    %v5976 = vpop.xlane.xlu0 %5975
    %v5977 = vsel %vm1673, %v5957, 0.0
    %5978 = vadd.xlane.f32.xlu0 %v5977
    %v5979 = vpop.xlane.xlu0 %5978
    %v5980 = vsel %vm1673, %v5958, 0.0
    %5981 = vadd.xlane.f32.xlu0 %v5980
    %v5982 = vpop.xlane.xlu0 %5981
    %v5983 = vsel %vm1673, %v5959, 0.0
    %5984 = vadd.xlane.f32.xlu0 %v5983
    %v5985 = vpop.xlane.xlu0 %5984
    %v5986 = vsel %vm1673, %v5960, 0.0
    %5987 = vadd.xlane.f32.xlu0 %v5986
    %v5988 = vpop.xlane.xlu0 %5987
    %v5989 = vsel %vm1673, %v5961, 0.0
    %5990 = vadd.xlane.f32.xlu0 %v5989
    %v5991 = vpop.xlane.xlu0 %5990
    %v5992 = vsel %vm1673, %v5962, 0.0
    %5993 = vadd.xlane.f32.xlu0 %v5992
    %v5994 = vpop.xlane.xlu0 %5993
    %v5995 = vsel %vm1673, %v5963, 0.0
    %5996 = vadd.xlane.f32.xlu0 %v5995
    %v5997 = vpop.xlane.xlu0 %5996
    %v5998 = vsel %vm1673, %v5964, 0.0
    %5999 = vadd.xlane.f32.xlu0 %v5998
    %v6000 = vpop.xlane.xlu0 %5999
    %v6001 = vsel %vm1673, %v5965, 0.0
    %6002 = vadd.xlane.f32.xlu0 %v6001
    %v6003 = vpop.xlane.xlu0 %6002
    %v6004 = vsel %vm1673, %v5966, 0.0
    %6005 = vadd.xlane.f32.xlu0 %v6004
    %v6006 = vpop.xlane.xlu0 %6005
    %v6007 = vsel %vm1673, %v5967, 0.0
    %6008 = vadd.xlane.f32.xlu0 %v6007
    %v6009 = vpop.xlane.xlu0 %6008
    %v6010 = vsel %vm1673, %v5968, 0.0
    %6011 = vadd.xlane.f32.xlu0 %v6010
    %v6012 = vpop.xlane.xlu0 %6011
    %v6013 = vsel %vm1673, %v5969, 0.0
    %6014 = vadd.xlane.f32.xlu0 %v6013
    %v6015 = vpop.xlane.xlu0 %6014
    %v6016 = vsel %vm1673, %v5970, 0.0
    %6017 = vadd.xlane.f32.xlu0 %v6016
    %v6018 = vpop.xlane.xlu0 %6017
    %v6019 = vmul.f32 %v5973, %v1292
    %v6020 = vmul.f32 %v5976, %v1292
    %v6021 = vmul.f32 %v5979, %v1292
    %v6022 = vmul.f32 %v5982, %v1292
    %v6023 = vmul.f32 %v5985, %v1292
    %v6024 = vmul.f32 %v5988, %v1292
    %v6025 = vmul.f32 %v5991, %v1292
    %v6026 = vmul.f32 %v5994, %v1292
    %v6027 = vmul.f32 %v5997, %v1292
    %v6028 = vmul.f32 %v6000, %v1292
    %v6029 = vmul.f32 %v6003, %v1292
    %v6030 = vmul.f32 %v6006, %v1292
    %v6031 = vmul.f32 %v6009, %v1292
    %v6032 = vmul.f32 %v6012, %v1292
    %v6033 = vmul.f32 %v6015, %v1292
    %v6034 = vmul.f32 %v6018, %v1292
    %v6035 = vadd.f32 %v6019, 1e-05
    %v6036 = vadd.f32 %v6020, 1e-05
    %v6037 = vadd.f32 %v6021, 1e-05
    %v6038 = vadd.f32 %v6022, 1e-05
    %v6039 = vadd.f32 %v6023, 1e-05
    %v6040 = vadd.f32 %v6024, 1e-05
    %v6041 = vadd.f32 %v6025, 1e-05
    %v6042 = vadd.f32 %v6026, 1e-05
    %v6043 = vadd.f32 %v6027, 1e-05
    %v6044 = vadd.f32 %v6028, 1e-05
    %v6045 = vadd.f32 %v6029, 1e-05
    %v6046 = vadd.f32 %v6030, 1e-05
    %v6047 = vadd.f32 %v6031, 1e-05
    %v6048 = vadd.f32 %v6032, 1e-05
    %v6049 = vadd.f32 %v6033, 1e-05
    %v6050 = vadd.f32 %v6034, 1e-05
    %v6051 = vrsqrt.pop %v6035
    %v6052 = vrsqrt.pop %v6036
    %v6053 = vrsqrt.pop %v6037
    %v6054 = vrsqrt.pop %v6038
    %v6055 = vrsqrt.pop %v6039
    %v6056 = vrsqrt.pop %v6040
    %v6057 = vrsqrt.pop %v6041
    %v6058 = vrsqrt.pop %v6042
    %v6059 = vrsqrt.pop %v6043
    %v6060 = vrsqrt.pop %v6044
    %v6061 = vrsqrt.pop %v6045
    %v6062 = vrsqrt.pop %v6046
    %v6063 = vrsqrt.pop %v6047
    %v6064 = vrsqrt.pop %v6048
    %v6065 = vrsqrt.pop %v6049
    %v6066 = vrsqrt.pop %v6050
    %v6067 = vmul.f32 %v5939, %v6051
    %v6068 = vmul.f32 %v5940, %v6052
    %v6069 = vmul.f32 %v5941, %v6053
    %v6070 = vmul.f32 %v5942, %v6054
    %v6071 = vmul.f32 %v5943, %v6055
    %v6072 = vmul.f32 %v5944, %v6056
    %v6073 = vmul.f32 %v5945, %v6057
    %v6074 = vmul.f32 %v5946, %v6058
    %v6075 = vmul.f32 %v5947, %v6059
    %v6076 = vmul.f32 %v5948, %v6060
    %v6077 = vmul.f32 %v5949, %v6061
    %v6078 = vmul.f32 %v5950, %v6062
    %v6079 = vmul.f32 %v5951, %v6063
    %v6080 = vmul.f32 %v5952, %v6064
    %v6081 = vmul.f32 %v5953, %v6065
    %v6082 = vmul.f32 %v5954, %v6066
    %v6083 = vld [vmem:[%s51] sm:$0x1]
    %v6085 = vlaneseq
    %v6086 = vshrl.u32 %v6085, 7
    %v6087 = vsub.s32 0, %v6086
    %v6088 = vrot.slane %v6083, %v6087
    %v6090 = vmul.f32 %v6067, %v6088
    %v6091 = vmul.f32 %v6068, %v6088
    %v6092 = vmul.f32 %v6069, %v6088
    %v6093 = vmul.f32 %v6070, %v6088
    %v6094 = vmul.f32 %v6071, %v6088
    %v6095 = vmul.f32 %v6072, %v6088
    %v6096 = vmul.f32 %v6073, %v6088
    %v6097 = vmul.f32 %v6074, %v6088
    %v6098 = vmul.f32 %v6075, %v6088
    %v6099 = vmul.f32 %v6076, %v6088
    %v6100 = vmul.f32 %v6077, %v6088
    %v6101 = vmul.f32 %v6078, %v6088
    %v6102 = vmul.f32 %v6079, %v6088
    %v6103 = vmul.f32 %v6080, %v6088
    %v6104 = vmul.f32 %v6081, %v6088
    %v6105 = vmul.f32 %v6082, %v6088
    %v6106 = vld [vmem:[%s53] sm:$0x1]
    %v6108 = vlaneseq
    %v6109 = vshrl.u32 %v6108, 7
    %v6110 = vsub.s32 0, %v6109
    %v6111 = vrot.slane %v6106, %v6110
    %v6113 = vadd.f32 %v6090, %v6111
    %v6114 = vadd.f32 %v6091, %v6111
    %v6115 = vadd.f32 %v6092, %v6111
    %v6116 = vadd.f32 %v6093, %v6111
    %v6117 = vadd.f32 %v6094, %v6111
    %v6118 = vadd.f32 %v6095, %v6111
    %v6119 = vadd.f32 %v6096, %v6111
    %v6120 = vadd.f32 %v6097, %v6111
    %v6121 = vadd.f32 %v6098, %v6111
    %v6122 = vadd.f32 %v6099, %v6111
    %v6123 = vadd.f32 %v6100, %v6111
    %v6124 = vadd.f32 %v6101, %v6111
    %v6125 = vadd.f32 %v6102, %v6111
    %v6126 = vadd.f32 %v6103, %v6111
    %v6127 = vadd.f32 %v6104, %v6111
    %v6128 = vadd.f32 %v6105, %v6111
    %v6129 = vpack.c.bf16 %v6114, %v6113
    %v6130 = vpack.c.bf16 %v6116, %v6115
    %v6131 = vpack.c.bf16 %v6118, %v6117
    %v6132 = vpack.c.bf16 %v6120, %v6119
    %v6133 = vpack.c.bf16 %v6122, %v6121
    %v6134 = vpack.c.bf16 %v6124, %v6123
    %v6135 = vpack.c.bf16 %v6126, %v6125
    %v6136 = vpack.c.bf16 %v6128, %v6127
    %v6137 = vld [vmem:[%s55] sm:$0xff]
    %v6138 = vld [vmem:[%s55 + $0x8] sm:$0xff]
    %v6139 = vld [vmem:[%s55 + $0x10] sm:$0xff]
    %v6140 = vld [vmem:[%s55 + $0x18] sm:$0xff]
    %v6141 = vld [vmem:[%s55 + $0x20] sm:$0xff]
    %v6142 = vld [vmem:[%s55 + $0x28] sm:$0xff]
    %v6143 = vld [vmem:[%s55 + $0x30] sm:$0xff]
    %v6144 = vld [vmem:[%s55 + $0x38] sm:$0xff]
    %v6145 = vld [vmem:[%s57] sm:$0x3]
    %v6147 = vlaneseq
    %v6148 = vshrl.u32 %v6147, 7
    %v6149 = vsub.s32 0, %v6148
    %v6150 = vrot.slane %v6145, %v6149
    %v6151 = vlaneseq
    %v6152 = vshrl.u32 %v6151, 7
    %v6153 = vsub.s32 1, %v6152
    %v6154 = vrot.slane %v6145, %v6153
    %v6165 = vunpack.c.l.b16 %v6137
    %v6166 = vunpack.c.h.b16 %v6137
    %v6167 = vunpack.c.l.b16 %v6138
    %v6168 = vunpack.c.h.b16 %v6138
    %v6169 = vunpack.c.l.b16 %v6139
    %v6170 = vunpack.c.h.b16 %v6139
    %v6171 = vunpack.c.l.b16 %v6140
    %v6172 = vunpack.c.h.b16 %v6140
    %v6173 = vunpack.c.l.b16 %v6141
    %v6174 = vunpack.c.h.b16 %v6141
    %v6175 = vunpack.c.l.b16 %v6142
    %v6176 = vunpack.c.h.b16 %v6142
    %v6177 = vunpack.c.l.b16 %v6143
    %v6178 = vunpack.c.h.b16 %v6143
    %v6179 = vunpack.c.l.b16 %v6144
    %v6180 = vunpack.c.h.b16 %v6144
    %v6181 = vpack.c.b16 %v6167, %v6165
    %v6182 = vpack.c.b16 %v6168, %v6166
    %v6183 = vpack.c.b16 %v6171, %v6169
    %v6184 = vpack.c.b16 %v6172, %v6170
    %v6185 = vpack.c.b16 %v6175, %v6173
    %v6186 = vpack.c.b16 %v6176, %v6174
    %v6187 = vpack.c.b16 %v6179, %v6177
    %v6188 = vpack.c.b16 %v6180, %v6178
    %v6198 = vsel %vm1673, %v6129, 0
    %v6201 = vsel %vm1673, %v6130, 0
    %v6204 = vsel %vm1673, %v6131, 0
    %v6207 = vsel %vm1673, %v6132, 0
    %v6210 = vsel %vm1673, %v6133, 0
    %v6213 = vsel %vm1673, %v6134, 0
    %v6216 = vsel %vm1673, %v6135, 0
    %v6219 = vsel %vm1673, %v6136, 0
    %6221 = vmatprep.subr.bf16.mxu0 %v6182
    %6222 = vmatpush1.bf16.msra.mxu0 %v6181
    %6223 = vmatprep.subr.bf16.mxu0 %v6184
    %6224 = vmatpush1.bf16.msra.mxu0 %v6183
    %6225 = vmatprep.subr.bf16.mxu0 %v6186
    %6226 = vmatpush1.bf16.msra.mxu0 %v6185
    %6227 = vmatprep.subr.bf16.mxu0 %v6188
    %6228 = vmatpush1.bf16.msra.mxu0 %v6187
    %6229 = vmatprep.subr.bf16.mxu0 0
    %6230 = vmatpush1.bf16.msra.mxu0 0
    %6231 = vmatprep.subr.bf16.mxu0 0
    %6232 = vmatpush1.bf16.msra.mxu0 0
    %6233 = vmatprep.subr.bf16.mxu0 0
    %6234 = vmatpush1.bf16.msra.mxu0 0
    %6235 = vmatprep.subr.bf16.mxu0 0
    %6236 = vmatpush1.bf16.msra.mxu0 0
    %6237 = vmatprep.subr.bf16.mxu0 0
    %6238 = vmatpush1.bf16.msra.mxu0 0
    %6239 = vmatprep.subr.bf16.mxu0 0
    %6240 = vmatpush1.bf16.msra.mxu0 0
    %6241 = vmatprep.subr.bf16.mxu0 0
    %6242 = vmatpush1.bf16.msra.mxu0 0
    %6243 = vmatprep.subr.bf16.mxu0 0
    %6244 = vmatpush1.bf16.msra.mxu0 0
    %6245 = vmatprep.subr.bf16.mxu0 0
    %6246 = vmatpush1.bf16.msra.mxu0 0
    %6247 = vmatprep.subr.bf16.mxu0 0
    %6248 = vmatpush1.bf16.msra.mxu0 0
    %6249 = vmatprep.subr.bf16.mxu0 0
    %6250 = vmatpush1.bf16.msra.mxu0 0
    %6251 = vmatprep.subr.bf16.mxu0 0
    %6252 = vmatpush1.bf16.msra.mxu0 0
    %6253 = vmatprep.mubr.bf16.mxu0 0
    %6254 = vmatmul.mubr.bf16.gmra.mrb[0].mxu0 %v6198
    %v6255 = vpop.f32.mrb[0].mxu0
    %v6256 = vadd.f32 %v6150, %v6255
    %v6257 = vpop.f32.mrb[0].mxu0
    %v6258 = vadd.f32 %v6154, %v6257
    %v6259 = vpop.f32.mrb[0].mxu0
    %v6260 = vadd.f32 %v6150, %v6259
    %v6261 = vpop.f32.mrb[0].mxu0
    %v6262 = vadd.f32 %v6154, %v6261
    %6263 = vmatprep.mubr.bf16.mxu0 0
    %6264 = vmatmul.mubr.bf16.gmra.mrb[0].mxu0 %v6201
    %v6265 = vpop.f32.mrb[0].mxu0
    %v6266 = vadd.f32 %v6150, %v6265
    %v6267 = vpop.f32.mrb[0].mxu0
    %v6268 = vadd.f32 %v6154, %v6267
    %v6269 = vpop.f32.mrb[0].mxu0
    %v6270 = vadd.f32 %v6150, %v6269
    %v6271 = vpop.f32.mrb[0].mxu0
    %v6272 = vadd.f32 %v6154, %v6271
    %6273 = vmatprep.mubr.bf16.mxu0 0
    %6274 = vmatmul.mubr.bf16.gmra.mrb[0].mxu0 %v6204
    %v6275 = vpop.f32.mrb[0].mxu0
    %v6276 = vadd.f32 %v6150, %v6275
    %v6277 = vpop.f32.mrb[0].mxu0
    %v6278 = vadd.f32 %v6154, %v6277
    %v6279 = vpop.f32.mrb[0].mxu0
    %v6280 = vadd.f32 %v6150, %v6279
    %v6281 = vpop.f32.mrb[0].mxu0
    %v6282 = vadd.f32 %v6154, %v6281
    %6283 = vmatprep.mubr.bf16.mxu0 0
    %6284 = vmatmul.mubr.bf16.gmra.mrb[0].mxu0 %v6207
    %v6285 = vpop.f32.mrb[0].mxu0
    %v6286 = vadd.f32 %v6150, %v6285
    %v6287 = vpop.f32.mrb[0].mxu0
    %v6288 = vadd.f32 %v6154, %v6287
    %v6289 = vpop.f32.mrb[0].mxu0
    %v6290 = vadd.f32 %v6150, %v6289
    %v6291 = vpop.f32.mrb[0].mxu0
    %v6292 = vadd.f32 %v6154, %v6291
    %6293 = vmatprep.mubr.bf16.mxu0 0
    %6294 = vmatmul.mubr.bf16.gmra.mrb[0].mxu0 %v6210
    %v6295 = vpop.f32.mrb[0].mxu0
    %v6296 = vadd.f32 %v6150, %v6295
    %v6297 = vpop.f32.mrb[0].mxu0
    %v6298 = vadd.f32 %v6154, %v6297
    %v6299 = vpop.f32.mrb[0].mxu0
    %v6300 = vadd.f32 %v6150, %v6299
    %v6301 = vpop.f32.mrb[0].mxu0
    %v6302 = vadd.f32 %v6154, %v6301
    %6303 = vmatprep.mubr.bf16.mxu0 0
    %6304 = vmatmul.mubr.bf16.gmra.mrb[0].mxu0 %v6213
    %v6305 = vpop.f32.mrb[0].mxu0
    %v6306 = vadd.f32 %v6150, %v6305
    %v6307 = vpop.f32.mrb[0].mxu0
    %v6308 = vadd.f32 %v6154, %v6307
    %v6309 = vpop.f32.mrb[0].mxu0
    %v6310 = vadd.f32 %v6150, %v6309
    %v6311 = vpop.f32.mrb[0].mxu0
    %v6312 = vadd.f32 %v6154, %v6311
    %6313 = vmatprep.mubr.bf16.mxu0 0
    %6314 = vmatmul.mubr.bf16.gmra.mrb[0].mxu0 %v6216
    %v6315 = vpop.f32.mrb[0].mxu0
    %v6316 = vadd.f32 %v6150, %v6315
    %v6317 = vpop.f32.mrb[0].mxu0
    %v6318 = vadd.f32 %v6154, %v6317
    %v6319 = vpop.f32.mrb[0].mxu0
    %v6320 = vadd.f32 %v6150, %v6319
    %v6321 = vpop.f32.mrb[0].mxu0
    %v6322 = vadd.f32 %v6154, %v6321
    %6323 = vmatprep.mubr.bf16.mxu0 0
    %6324 = vmatmul.mubr.bf16.gmra.mrb[0].mxu0 %v6219
    %v6325 = vpop.f32.mrb[0].mxu0
    %v6326 = vadd.f32 %v6150, %v6325
    %v6327 = vpop.f32.mrb[0].mxu0
    %v6328 = vadd.f32 %v6154, %v6327
    %v6329 = vpop.f32.mrb[0].mxu0
    %v6330 = vadd.f32 %v6150, %v6329
    %v6331 = vpop.f32.mrb[0].mxu0
    %v6332 = vadd.f32 %v6154, %v6331
    %6333 = vdwg.mxu0
    %v6334 = vpack.c.bf16 %v6260, %v6256
    %v6335 = vpack.c.bf16 %v6262, %v6258
    %v6336 = vpack.c.bf16 %v6270, %v6266
    %v6337 = vpack.c.bf16 %v6272, %v6268
    %v6338 = vpack.c.bf16 %v6280, %v6276
    %v6339 = vpack.c.bf16 %v6282, %v6278
    %v6340 = vpack.c.bf16 %v6290, %v6286
    %v6341 = vpack.c.bf16 %v6292, %v6288
    %v6342 = vpack.c.bf16 %v6300, %v6296
    %v6343 = vpack.c.bf16 %v6302, %v6298
    %v6344 = vpack.c.bf16 %v6310, %v6306
    %v6345 = vpack.c.bf16 %v6312, %v6308
    %v6346 = vpack.c.bf16 %v6320, %v6316
    %v6347 = vpack.c.bf16 %v6322, %v6318
    %v6348 = vpack.c.bf16 %v6330, %v6326
    %v6349 = vpack.c.bf16 %v6332, %v6328
    %6354 = vrot.lane.b32.xlu0 %v6334, 64
    %v6355 = vpop.permute.xlu0 %6354
    %6356 = vrot.lane.b32.xlu0 %v6336, 64
    %v6357 = vpop.permute.xlu0 %6356
    %6358 = vrot.lane.b32.xlu0 %v6338, 64
    %v6359 = vpop.permute.xlu0 %6358
    %6360 = vrot.lane.b32.xlu0 %v6340, 64
    %v6361 = vpop.permute.xlu0 %6360
    %v6363 = vsel %vm2161, %v6334, 0
    %v6366 = vsel %vm2161, %v6336, 0
    %v6369 = vsel %vm2161, %v6338, 0
    %v6372 = vsel %vm2161, %v6340, 0
    %v6375 = vsel %vm2161, %v6355, 0
    %v6378 = vsel %vm2161, %v6357, 0
    %v6381 = vsel %vm2161, %v6359, 0
    %v6384 = vsel %vm2161, %v6361, 0
    %6386 = vmatprep.subr.bf16.mxu0 0
    %6387 = vmatpush1.bf16.xpose.msra.mxu0 %v6375
    %6388 = vmatprep.subr.bf16.mxu0 0
    %6389 = vmatpush1.bf16.xpose.msra.mxu0 %v6378
    %6390 = vmatprep.subr.bf16.mxu0 0
    %6391 = vmatpush1.bf16.xpose.msra.mxu0 %v6381
    %6392 = vmatprep.subr.bf16.mxu0 0
    %6393 = vmatpush1.bf16.xpose.msra.mxu0 %v6384
    %6394 = vmatprep.subr.bf16.mxu0 0
    %6395 = vmatpush1.bf16.xpose.msra.mxu0 0
    %6396 = vmatprep.subr.bf16.mxu0 0
    %6397 = vmatpush1.bf16.xpose.msra.mxu0 0
    %6398 = vmatprep.subr.bf16.mxu0 0
    %6399 = vmatpush1.bf16.xpose.msra.mxu0 0
    %6400 = vmatprep.subr.bf16.mxu0 0
    %6401 = vmatpush1.bf16.xpose.msra.mxu0 0
    %6402 = vmatprep.subr.bf16.mxu0 0
    %6403 = vmatpush1.bf16.xpose.msra.mxu0 0
    %6404 = vmatprep.subr.bf16.mxu0 0
    %6405 = vmatpush1.bf16.xpose.msra.mxu0 0
    %6406 = vmatprep.subr.bf16.mxu0 0
    %6407 = vmatpush1.bf16.xpose.msra.mxu0 0
    %6408 = vmatprep.subr.bf16.mxu0 0
    %6409 = vmatpush1.bf16.xpose.msra.mxu0 0
    %6410 = vmatprep.subr.bf16.mxu0 0
    %6411 = vmatpush1.bf16.xpose.msra.mxu0 0
    %6412 = vmatprep.subr.bf16.mxu0 0
    %6413 = vmatpush1.bf16.xpose.msra.mxu0 0
    %6414 = vmatprep.subr.bf16.mxu0 0
    %6415 = vmatpush1.bf16.xpose.msra.mxu0 0
    %6416 = vmatprep.subr.bf16.mxu0 0
    %6417 = vmatpush1.bf16.xpose.msra.mxu0 0
    %6418 = vmatprep.mubr.bf16.mxu0 0
    %6419 = vmatmul.mubr.bf16.gmra.mrb[0].mxu0 %v6363
    %v6420 = vpop.f32.mrb[0].mxu0
    %v6421 = vadd.f32 0.0, %v6420
    %v6422 = vpop.f32.mrb[0].mxu0
    %v6423 = vpop.f32.mrb[0].mxu0
    %v6424 = vadd.f32 0.0, %v6423
    %v6425 = vpop.f32.mrb[0].mxu0
    %6426 = vmatprep.mubr.bf16.mxu0 0
    %6427 = vmatmul.mubr.bf16.gmra.mrb[0].mxu0 %v6366
    %v6428 = vpop.f32.mrb[0].mxu0
    %v6429 = vadd.f32 0.0, %v6428
    %v6430 = vpop.f32.mrb[0].mxu0
    %v6431 = vpop.f32.mrb[0].mxu0
    %v6432 = vadd.f32 0.0, %v6431
    %v6433 = vpop.f32.mrb[0].mxu0
    %6434 = vmatprep.mubr.bf16.mxu0 0
    %6435 = vmatmul.mubr.bf16.gmra.mrb[0].mxu0 %v6369
    %v6436 = vpop.f32.mrb[0].mxu0
    %v6437 = vadd.f32 0.0, %v6436
    %v6438 = vpop.f32.mrb[0].mxu0
    %v6439 = vpop.f32.mrb[0].mxu0
    %v6440 = vadd.f32 0.0, %v6439
    %v6441 = vpop.f32.mrb[0].mxu0
    %6442 = vmatprep.mubr.bf16.mxu0 0
    %6443 = vmatmul.mubr.bf16.gmra.mrb[0].mxu0 %v6372
    %v6444 = vpop.f32.mrb[0].mxu0
    %v6445 = vadd.f32 0.0, %v6444
    %v6446 = vpop.f32.mrb[0].mxu0
    %v6447 = vpop.f32.mrb[0].mxu0
    %v6448 = vadd.f32 0.0, %v6447
    %v6449 = vpop.f32.mrb[0].mxu0
    %6450 = vdwg.mxu0
    %v6451 = vmul.f32 %v6421, 0.25
    %v6452 = vmul.f32 %v6424, 0.25
    %v6453 = vmul.f32 %v6429, 0.25
    %v6454 = vmul.f32 %v6432, 0.25
    %v6455 = vmul.f32 %v6437, 0.25
    %v6456 = vmul.f32 %v6440, 0.25
    %v6457 = vmul.f32 %v6445, 0.25
    %v6458 = vmul.f32 %v6448, 0.25
    %v6459 = vsel %vm1673, %v6451, -inf
    %6460 = vmax.xlane.f32.xlu0 %v6459
    %v6461 = vpop.xlane.xlu0 %6460
    %v6462 = vsel %vm1673, %v6452, -inf
    %6463 = vmax.xlane.f32.xlu0 %v6462
    %v6464 = vpop.xlane.xlu0 %6463
    %v6465 = vsel %vm1673, %v6453, -inf
    %6466 = vmax.xlane.f32.xlu0 %v6465
    %v6467 = vpop.xlane.xlu0 %6466
    %v6468 = vsel %vm1673, %v6454, -inf
    %6469 = vmax.xlane.f32.xlu0 %v6468
    %v6470 = vpop.xlane.xlu0 %6469
    %v6471 = vsel %vm1673, %v6455, -inf
    %6472 = vmax.xlane.f32.xlu0 %v6471
    %v6473 = vpop.xlane.xlu0 %6472
    %v6474 = vsel %vm1673, %v6456, -inf
    %6475 = vmax.xlane.f32.xlu0 %v6474
    %v6476 = vpop.xlane.xlu0 %6475
    %v6477 = vsel %vm1673, %v6457, -inf
    %6478 = vmax.xlane.f32.xlu0 %v6477
    %v6479 = vpop.xlane.xlu0 %6478
    %v6480 = vsel %vm1673, %v6458, -inf
    %6481 = vmax.xlane.f32.xlu0 %v6480
    %v6482 = vpop.xlane.xlu0 %6481
    %v6483 = vsub.f32 %v6451, %v6461
    %v6484 = vsub.f32 %v6452, %v6464
    %v6485 = vsub.f32 %v6453, %v6467
    %v6486 = vsub.f32 %v6454, %v6470
    %v6487 = vsub.f32 %v6455, %v6473
    %v6488 = vsub.f32 %v6456, %v6476
    %v6489 = vsub.f32 %v6457, %v6479
    %v6490 = vsub.f32 %v6458, %v6482
    %v6491 = vmul.f32 %v6483, 1.442695
    %v6492 = vpow.pop %v6491
    %v6493 = vmul.f32 %v6484, 1.442695
    %v6494 = vpow.pop %v6493
    %v6495 = vmul.f32 %v6485, 1.442695
    %v6496 = vpow.pop %v6495
    %v6497 = vmul.f32 %v6486, 1.442695
    %v6498 = vpow.pop %v6497
    %v6499 = vmul.f32 %v6487, 1.442695
    %v6500 = vpow.pop %v6499
    %v6501 = vmul.f32 %v6488, 1.442695
    %v6502 = vpow.pop %v6501
    %v6503 = vmul.f32 %v6489, 1.442695
    %v6504 = vpow.pop %v6503
    %v6505 = vmul.f32 %v6490, 1.442695
    %v6506 = vpow.pop %v6505
    %v6507 = vsel %vm1673, %v6492, 0.0
    %6508 = vadd.xlane.f32.xlu0 %v6507
    %v6509 = vpop.xlane.xlu0 %6508
    %v6510 = vsel %vm1673, %v6494, 0.0
    %6511 = vadd.xlane.f32.xlu0 %v6510
    %v6512 = vpop.xlane.xlu0 %6511
    %v6513 = vsel %vm1673, %v6496, 0.0
    %6514 = vadd.xlane.f32.xlu0 %v6513
    %v6515 = vpop.xlane.xlu0 %6514
    %v6516 = vsel %vm1673, %v6498, 0.0
    %6517 = vadd.xlane.f32.xlu0 %v6516
    %v6518 = vpop.xlane.xlu0 %6517
    %v6519 = vsel %vm1673, %v6500, 0.0
    %6520 = vadd.xlane.f32.xlu0 %v6519
    %v6521 = vpop.xlane.xlu0 %6520
    %v6522 = vsel %vm1673, %v6502, 0.0
    %6523 = vadd.xlane.f32.xlu0 %v6522
    %v6524 = vpop.xlane.xlu0 %6523
    %v6525 = vsel %vm1673, %v6504, 0.0
    %6526 = vadd.xlane.f32.xlu0 %v6525
    %v6527 = vpop.xlane.xlu0 %6526
    %v6528 = vsel %vm1673, %v6506, 0.0
    %6529 = vadd.xlane.f32.xlu0 %v6528
    %v6530 = vpop.xlane.xlu0 %6529
    %v6531 = vrcp.pop %v6509
    %v6532 = vrcp.pop %v6512
    %v6533 = vrcp.pop %v6515
    %v6534 = vrcp.pop %v6518
    %v6535 = vrcp.pop %v6521
    %v6536 = vrcp.pop %v6524
    %v6537 = vrcp.pop %v6527
    %v6538 = vrcp.pop %v6530
    %v6539 = vmul.f32 %v6492, %v6531
    %v6540 = vmul.f32 %v6494, %v6532
    %v6541 = vmul.f32 %v6496, %v6533
    %v6542 = vmul.f32 %v6498, %v6534
    %v6543 = vmul.f32 %v6500, %v6535
    %v6544 = vmul.f32 %v6502, %v6536
    %v6545 = vmul.f32 %v6504, %v6537
    %v6546 = vmul.f32 %v6506, %v6538
    %v6547 = vpack.c.bf16 %v6540, %v6539
    %v6548 = vpack.c.bf16 %v6542, %v6541
    %v6549 = vpack.c.bf16 %v6544, %v6543
    %v6550 = vpack.c.bf16 %v6546, %v6545
    %v6552 = vsel %vm1673, %v6547, 0
    %v6555 = vsel %vm1673, %v6548, 0
    %v6558 = vsel %vm1673, %v6549, 0
    %v6561 = vsel %vm1673, %v6550, 0
    %6563 = vmatprep.subr.bf16.mxu0 0
    %6564 = vmatpush1.bf16.msra.mxu0 %v6335
    %6565 = vmatprep.subr.bf16.mxu0 0
    %6566 = vmatpush1.bf16.msra.mxu0 %v6337
    %6567 = vmatprep.subr.bf16.mxu0 0
    %6568 = vmatpush1.bf16.msra.mxu0 %v6339
    %6569 = vmatprep.subr.bf16.mxu0 0
    %6570 = vmatpush1.bf16.msra.mxu0 %v6341
    %6571 = vmatprep.subr.bf16.mxu0 0
    %6572 = vmatpush1.bf16.msra.mxu0 0
    %6573 = vmatprep.subr.bf16.mxu0 0
    %6574 = vmatpush1.bf16.msra.mxu0 0
    %6575 = vmatprep.subr.bf16.mxu0 0
    %6576 = vmatpush1.bf16.msra.mxu0 0
    %6577 = vmatprep.subr.bf16.mxu0 0
    %6578 = vmatpush1.bf16.msra.mxu0 0
    %6579 = vmatprep.subr.bf16.mxu0 0
    %6580 = vmatpush1.bf16.msra.mxu0 0
    %6581 = vmatprep.subr.bf16.mxu0 0
    %6582 = vmatpush1.bf16.msra.mxu0 0
    %6583 = vmatprep.subr.bf16.mxu0 0
    %6584 = vmatpush1.bf16.msra.mxu0 0
    %6585 = vmatprep.subr.bf16.mxu0 0
    %6586 = vmatpush1.bf16.msra.mxu0 0
    %6587 = vmatprep.subr.bf16.mxu0 0
    %6588 = vmatpush1.bf16.msra.mxu0 0
    %6589 = vmatprep.subr.bf16.mxu0 0
    %6590 = vmatpush1.bf16.msra.mxu0 0
    %6591 = vmatprep.subr.bf16.mxu0 0
    %6592 = vmatpush1.bf16.msra.mxu0 0
    %6593 = vmatprep.subr.bf16.mxu0 0
    %6594 = vmatpush1.bf16.msra.mxu0 0
    %6595 = vmatprep.mubr.bf16.mxu0 0
    %6596 = vmatmul.mubr.bf16.gmra.mrb[0].mxu0 %v6552
    %v6597 = vpop.f32.mrb[0].mxu0
    %v6598 = vadd.f32 0.0, %v6597
    %v6599 = vpop.f32.mrb[0].mxu0
    %v6600 = vpop.f32.mrb[0].mxu0
    %v6601 = vadd.f32 0.0, %v6600
    %v6602 = vpop.f32.mrb[0].mxu0
    %6603 = vmatprep.mubr.bf16.mxu0 0
    %6604 = vmatmul.mubr.bf16.gmra.mrb[0].mxu0 %v6555
    %v6605 = vpop.f32.mrb[0].mxu0
    %v6606 = vadd.f32 0.0, %v6605
    %v6607 = vpop.f32.mrb[0].mxu0
    %v6608 = vpop.f32.mrb[0].mxu0
    %v6609 = vadd.f32 0.0, %v6608
    %v6610 = vpop.f32.mrb[0].mxu0
    %6611 = vmatprep.mubr.bf16.mxu0 0
    %6612 = vmatmul.mubr.bf16.gmra.mrb[0].mxu0 %v6558
    %v6613 = vpop.f32.mrb[0].mxu0
    %v6614 = vadd.f32 0.0, %v6613
    %v6615 = vpop.f32.mrb[0].mxu0
    %v6616 = vpop.f32.mrb[0].mxu0
    %v6617 = vadd.f32 0.0, %v6616
    %v6618 = vpop.f32.mrb[0].mxu0
    %6619 = vmatprep.mubr.bf16.mxu0 0
    %6620 = vmatmul.mubr.bf16.gmra.mrb[0].mxu0 %v6561
    %v6621 = vpop.f32.mrb[0].mxu0
    %v6622 = vadd.f32 0.0, %v6621
    %v6623 = vpop.f32.mrb[0].mxu0
    %v6624 = vpop.f32.mrb[0].mxu0
    %v6625 = vadd.f32 0.0, %v6624
    %v6626 = vpop.f32.mrb[0].mxu0
    %6627 = vdwg.mxu0
    %v6628 = vpack.c.bf16 %v6601, %v6598
    %v6629 = vpack.c.bf16 %v6609, %v6606
    %v6630 = vpack.c.bf16 %v6617, %v6614
    %v6631 = vpack.c.bf16 %v6625, %v6622
    %v6632 = vld [vmem:[%s59] sm:$0xf]
    %v6633 = vld [vmem:[%s59 + $0x4] sm:$0xf]
    %6634 = vrot.lane.b32.xlu0 %v6334, 112
    %v6635 = vpop.permute.xlu0 %6634
    %6636 = vrot.lane.b32.xlu0 %v6336, 112
    %v6637 = vpop.permute.xlu0 %6636
    %6638 = vrot.lane.b32.xlu0 %v6338, 112
    %v6639 = vpop.permute.xlu0 %6638
    %6640 = vrot.lane.b32.xlu0 %v6340, 112
    %v6641 = vpop.permute.xlu0 %6640
    %6642 = vrot.lane.b32.xlu0 %v6334, 48
    %v6643 = vpop.permute.xlu0 %6642
    %6644 = vrot.lane.b32.xlu0 %v6336, 48
    %v6645 = vpop.permute.xlu0 %6644
    %6646 = vrot.lane.b32.xlu0 %v6338, 48
    %v6647 = vpop.permute.xlu0 %6646
    %6648 = vrot.lane.b32.xlu0 %v6340, 48
    %v6649 = vpop.permute.xlu0 %6648
    %v6651 = vsel %vm2161, %v6635, 0
    %v6654 = vsel %vm2161, %v6637, 0
    %v6657 = vsel %vm2161, %v6639, 0
    %v6660 = vsel %vm2161, %v6641, 0
    %v6663 = vsel %vm2161, %v6643, 0
    %v6666 = vsel %vm2161, %v6645, 0
    %v6669 = vsel %vm2161, %v6647, 0
    %v6672 = vsel %vm2161, %v6649, 0
    %6674 = vmatprep.subr.bf16.mxu0 0
    %6675 = vmatpush1.bf16.xpose.msra.mxu0 %v6663
    %6676 = vmatprep.subr.bf16.mxu0 0
    %6677 = vmatpush1.bf16.xpose.msra.mxu0 %v6666
    %6678 = vmatprep.subr.bf16.mxu0 0
    %6679 = vmatpush1.bf16.xpose.msra.mxu0 %v6669
    %6680 = vmatprep.subr.bf16.mxu0 0
    %6681 = vmatpush1.bf16.xpose.msra.mxu0 %v6672
    %6682 = vmatprep.subr.bf16.mxu0 0
    %6683 = vmatpush1.bf16.xpose.msra.mxu0 0
    %6684 = vmatprep.subr.bf16.mxu0 0
    %6685 = vmatpush1.bf16.xpose.msra.mxu0 0
    %6686 = vmatprep.subr.bf16.mxu0 0
    %6687 = vmatpush1.bf16.xpose.msra.mxu0 0
    %6688 = vmatprep.subr.bf16.mxu0 0
    %6689 = vmatpush1.bf16.xpose.msra.mxu0 0
    %6690 = vmatprep.subr.bf16.mxu0 0
    %6691 = vmatpush1.bf16.xpose.msra.mxu0 0
    %6692 = vmatprep.subr.bf16.mxu0 0
    %6693 = vmatpush1.bf16.xpose.msra.mxu0 0
    %6694 = vmatprep.subr.bf16.mxu0 0
    %6695 = vmatpush1.bf16.xpose.msra.mxu0 0
    %6696 = vmatprep.subr.bf16.mxu0 0
    %6697 = vmatpush1.bf16.xpose.msra.mxu0 0
    %6698 = vmatprep.subr.bf16.mxu0 0
    %6699 = vmatpush1.bf16.xpose.msra.mxu0 0
    %6700 = vmatprep.subr.bf16.mxu0 0
    %6701 = vmatpush1.bf16.xpose.msra.mxu0 0
    %6702 = vmatprep.subr.bf16.mxu0 0
    %6703 = vmatpush1.bf16.xpose.msra.mxu0 0
    %6704 = vmatprep.subr.bf16.mxu0 0
    %6705 = vmatpush1.bf16.xpose.msra.mxu0 0
    %6706 = vmatprep.mubr.bf16.mxu0 0
    %6707 = vmatmul.mubr.bf16.gmra.mrb[0].mxu0 %v6651
    %v6708 = vpop.f32.mrb[0].mxu0
    %v6709 = vadd.f32 0.0, %v6708
    %v6710 = vpop.f32.mrb[0].mxu0
    %v6711 = vpop.f32.mrb[0].mxu0
    %v6712 = vadd.f32 0.0, %v6711
    %v6713 = vpop.f32.mrb[0].mxu0
    %6714 = vmatprep.mubr.bf16.mxu0 0
    %6715 = vmatmul.mubr.bf16.gmra.mrb[0].mxu0 %v6654
    %v6716 = vpop.f32.mrb[0].mxu0
    %v6717 = vadd.f32 0.0, %v6716
    %v6718 = vpop.f32.mrb[0].mxu0
    %v6719 = vpop.f32.mrb[0].mxu0
    %v6720 = vadd.f32 0.0, %v6719
    %v6721 = vpop.f32.mrb[0].mxu0
    %6722 = vmatprep.mubr.bf16.mxu0 0
    %6723 = vmatmul.mubr.bf16.gmra.mrb[0].mxu0 %v6657
    %v6724 = vpop.f32.mrb[0].mxu0
    %v6725 = vadd.f32 0.0, %v6724
    %v6726 = vpop.f32.mrb[0].mxu0
    %v6727 = vpop.f32.mrb[0].mxu0
    %v6728 = vadd.f32 0.0, %v6727
    %v6729 = vpop.f32.mrb[0].mxu0
    %6730 = vmatprep.mubr.bf16.mxu0 0
    %6731 = vmatmul.mubr.bf16.gmra.mrb[0].mxu0 %v6660
    %v6732 = vpop.f32.mrb[0].mxu0
    %v6733 = vadd.f32 0.0, %v6732
    %v6734 = vpop.f32.mrb[0].mxu0
    %v6735 = vpop.f32.mrb[0].mxu0
    %v6736 = vadd.f32 0.0, %v6735
    %v6737 = vpop.f32.mrb[0].mxu0
    %6738 = vdwg.mxu0
    %v6739 = vmul.f32 %v6709, 0.25
    %v6740 = vmul.f32 %v6712, 0.25
    %v6741 = vmul.f32 %v6717, 0.25
    %v6742 = vmul.f32 %v6720, 0.25
    %v6743 = vmul.f32 %v6725, 0.25
    %v6744 = vmul.f32 %v6728, 0.25
    %v6745 = vmul.f32 %v6733, 0.25
    %v6746 = vmul.f32 %v6736, 0.25
    %v6747 = vsel %vm1673, %v6739, -inf
    %6748 = vmax.xlane.f32.xlu0 %v6747
    %v6749 = vpop.xlane.xlu0 %6748
    %v6750 = vsel %vm1673, %v6740, -inf
    %6751 = vmax.xlane.f32.xlu0 %v6750
    %v6752 = vpop.xlane.xlu0 %6751
    %v6753 = vsel %vm1673, %v6741, -inf
    %6754 = vmax.xlane.f32.xlu0 %v6753
    %v6755 = vpop.xlane.xlu0 %6754
    %v6756 = vsel %vm1673, %v6742, -inf
    %6757 = vmax.xlane.f32.xlu0 %v6756
    %v6758 = vpop.xlane.xlu0 %6757
    %v6759 = vsel %vm1673, %v6743, -inf
    %6760 = vmax.xlane.f32.xlu0 %v6759
    %v6761 = vpop.xlane.xlu0 %6760
    %v6762 = vsel %vm1673, %v6744, -inf
    %6763 = vmax.xlane.f32.xlu0 %v6762
    %v6764 = vpop.xlane.xlu0 %6763
    %v6765 = vsel %vm1673, %v6745, -inf
    %6766 = vmax.xlane.f32.xlu0 %v6765
    %v6767 = vpop.xlane.xlu0 %6766
    %v6768 = vsel %vm1673, %v6746, -inf
    %6769 = vmax.xlane.f32.xlu0 %v6768
    %v6770 = vpop.xlane.xlu0 %6769
    %v6771 = vsub.f32 %v6739, %v6749
    %v6772 = vsub.f32 %v6740, %v6752
    %v6773 = vsub.f32 %v6741, %v6755
    %v6774 = vsub.f32 %v6742, %v6758
    %v6775 = vsub.f32 %v6743, %v6761
    %v6776 = vsub.f32 %v6744, %v6764
    %v6777 = vsub.f32 %v6745, %v6767
    %v6778 = vsub.f32 %v6746, %v6770
    %v6779 = vmul.f32 %v6771, 1.442695
    %v6780 = vpow.pop %v6779
    %v6781 = vmul.f32 %v6772, 1.442695
    %v6782 = vpow.pop %v6781
    %v6783 = vmul.f32 %v6773, 1.442695
    %v6784 = vpow.pop %v6783
    %v6785 = vmul.f32 %v6774, 1.442695
    %v6786 = vpow.pop %v6785
    %v6787 = vmul.f32 %v6775, 1.442695
    %v6788 = vpow.pop %v6787
    %v6789 = vmul.f32 %v6776, 1.442695
    %v6790 = vpow.pop %v6789
    %v6791 = vmul.f32 %v6777, 1.442695
    %v6792 = vpow.pop %v6791
    %v6793 = vmul.f32 %v6778, 1.442695
    %v6794 = vpow.pop %v6793
    %v6795 = vsel %vm1673, %v6780, 0.0
    %6796 = vadd.xlane.f32.xlu0 %v6795
    %v6797 = vpop.xlane.xlu0 %6796
    %v6798 = vsel %vm1673, %v6782, 0.0
    %6799 = vadd.xlane.f32.xlu0 %v6798
    %v6800 = vpop.xlane.xlu0 %6799
    %v6801 = vsel %vm1673, %v6784, 0.0
    %6802 = vadd.xlane.f32.xlu0 %v6801
    %v6803 = vpop.xlane.xlu0 %6802
    %v6804 = vsel %vm1673, %v6786, 0.0
    %6805 = vadd.xlane.f32.xlu0 %v6804
    %v6806 = vpop.xlane.xlu0 %6805
    %v6807 = vsel %vm1673, %v6788, 0.0
    %6808 = vadd.xlane.f32.xlu0 %v6807
    %v6809 = vpop.xlane.xlu0 %6808
    %v6810 = vsel %vm1673, %v6790, 0.0
    %6811 = vadd.xlane.f32.xlu0 %v6810
    %v6812 = vpop.xlane.xlu0 %6811
    %v6813 = vsel %vm1673, %v6792, 0.0
    %6814 = vadd.xlane.f32.xlu0 %v6813
    %v6815 = vpop.xlane.xlu0 %6814
    %v6816 = vsel %vm1673, %v6794, 0.0
    %6817 = vadd.xlane.f32.xlu0 %v6816
    %v6818 = vpop.xlane.xlu0 %6817
    %v6819 = vrcp.pop %v6797
    %v6820 = vrcp.pop %v6800
    %v6821 = vrcp.pop %v6803
    %v6822 = vrcp.pop %v6806
    %v6823 = vrcp.pop %v6809
    %v6824 = vrcp.pop %v6812
    %v6825 = vrcp.pop %v6815
    %v6826 = vrcp.pop %v6818
    %v6827 = vmul.f32 %v6780, %v6819
    %v6828 = vmul.f32 %v6782, %v6820
    %v6829 = vmul.f32 %v6784, %v6821
    %v6830 = vmul.f32 %v6786, %v6822
    %v6831 = vmul.f32 %v6788, %v6823
    %v6832 = vmul.f32 %v6790, %v6824
    %v6833 = vmul.f32 %v6792, %v6825
    %v6834 = vmul.f32 %v6794, %v6826
    %v6835 = vpack.c.bf16 %v6828, %v6827
    %v6836 = vpack.c.bf16 %v6830, %v6829
    %v6837 = vpack.c.bf16 %v6832, %v6831
    %v6838 = vpack.c.bf16 %v6834, %v6833
    %6843 = vrot.lane.b32.xlu0 %v6335, 112
    %v6844 = vpop.permute.xlu0 %6843
    %6845 = vrot.lane.b32.xlu0 %v6337, 112
    %v6846 = vpop.permute.xlu0 %6845
    %6847 = vrot.lane.b32.xlu0 %v6339, 112
    %v6848 = vpop.permute.xlu0 %6847
    %6849 = vrot.lane.b32.xlu0 %v6341, 112
    %v6850 = vpop.permute.xlu0 %6849
    %v6856 = vsel %vm1673, %v6835, 0
    %v6859 = vsel %vm1673, %v6836, 0
    %v6862 = vsel %vm1673, %v6837, 0
    %v6865 = vsel %vm1673, %v6838, 0
    %6867 = vmatprep.subr.bf16.mxu0 0
    %6868 = vmatpush1.bf16.msra.mxu0 %v6844
    %6869 = vmatprep.subr.bf16.mxu0 0
    %6870 = vmatpush1.bf16.msra.mxu0 %v6846
    %6871 = vmatprep.subr.bf16.mxu0 0
    %6872 = vmatpush1.bf16.msra.mxu0 %v6848
    %6873 = vmatprep.subr.bf16.mxu0 0
    %6874 = vmatpush1.bf16.msra.mxu0 %v6850
    %6875 = vmatprep.subr.bf16.mxu0 0
    %6876 = vmatpush1.bf16.msra.mxu0 0
    %6877 = vmatprep.subr.bf16.mxu0 0
    %6878 = vmatpush1.bf16.msra.mxu0 0
    %6879 = vmatprep.subr.bf16.mxu0 0
    %6880 = vmatpush1.bf16.msra.mxu0 0
    %6881 = vmatprep.subr.bf16.mxu0 0
    %6882 = vmatpush1.bf16.msra.mxu0 0
    %6883 = vmatprep.subr.bf16.mxu0 0
    %6884 = vmatpush1.bf16.msra.mxu0 0
    %6885 = vmatprep.subr.bf16.mxu0 0
    %6886 = vmatpush1.bf16.msra.mxu0 0
    %6887 = vmatprep.subr.bf16.mxu0 0
    %6888 = vmatpush1.bf16.msra.mxu0 0
    %6889 = vmatprep.subr.bf16.mxu0 0
    %6890 = vmatpush1.bf16.msra.mxu0 0
    %6891 = vmatprep.subr.bf16.mxu0 0
    %6892 = vmatpush1.bf16.msra.mxu0 0
    %6893 = vmatprep.subr.bf16.mxu0 0
    %6894 = vmatpush1.bf16.msra.mxu0 0
    %6895 = vmatprep.subr.bf16.mxu0 0
    %6896 = vmatpush1.bf16.msra.mxu0 0
    %6897 = vmatprep.subr.bf16.mxu0 0
    %6898 = vmatpush1.bf16.msra.mxu0 0
    %6899 = vmatprep.mubr.bf16.mxu0 0
    %6900 = vmatmul.mubr.bf16.gmra.mrb[0].mxu0 %v6856
    %v6901 = vpop.f32.mrb[0].mxu0
    %v6902 = vadd.f32 0.0, %v6901
    %v6903 = vpop.f32.mrb[0].mxu0
    %v6904 = vpop.f32.mrb[0].mxu0
    %v6905 = vadd.f32 0.0, %v6904
    %v6906 = vpop.f32.mrb[0].mxu0
    %6907 = vmatprep.mubr.bf16.mxu0 0
    %6908 = vmatmul.mubr.bf16.gmra.mrb[0].mxu0 %v6859
    %v6909 = vpop.f32.mrb[0].mxu0
    %v6910 = vadd.f32 0.0, %v6909
    %v6911 = vpop.f32.mrb[0].mxu0
    %v6912 = vpop.f32.mrb[0].mxu0
    %v6913 = vadd.f32 0.0, %v6912
    %v6914 = vpop.f32.mrb[0].mxu0
    %6915 = vmatprep.mubr.bf16.mxu0 0
    %6916 = vmatmul.mubr.bf16.gmra.mrb[0].mxu0 %v6862
    %v6917 = vpop.f32.mrb[0].mxu0
    %v6918 = vadd.f32 0.0, %v6917
    %v6919 = vpop.f32.mrb[0].mxu0
    %v6920 = vpop.f32.mrb[0].mxu0
    %v6921 = vadd.f32 0.0, %v6920
    %v6922 = vpop.f32.mrb[0].mxu0
    %6923 = vmatprep.mubr.bf16.mxu0 0
    %6924 = vmatmul.mubr.bf16.gmra.mrb[0].mxu0 %v6865
    %v6925 = vpop.f32.mrb[0].mxu0
    %v6926 = vadd.f32 0.0, %v6925
    %v6927 = vpop.f32.mrb[0].mxu0
    %v6928 = vpop.f32.mrb[0].mxu0
    %v6929 = vadd.f32 0.0, %v6928
    %v6930 = vpop.f32.mrb[0].mxu0
    %6931 = vdwg.mxu0
    %v6932 = vpack.c.bf16 %v6905, %v6902
    %v6933 = vpack.c.bf16 %v6913, %v6910
    %v6934 = vpack.c.bf16 %v6921, %v6918
    %v6935 = vpack.c.bf16 %v6929, %v6926
    %v6936 = vld [vmem:[%s59 + $0x8] sm:$0xf]
    %v6937 = vld [vmem:[%s59 + $0xc] sm:$0xf]
    %v6940 = vunpack.c.l.b16 %v6936
    %v6941 = vunpack.c.l.b16 %v6937
    %v6942 = vpack.c.b16 %v6941, %v6940
    %v6945 = vsel %vm2161, %v6932, 0
    %v6948 = vsel %vm2161, %v6933, 0
    %v6951 = vsel %vm2161, %v6934, 0
    %v6954 = vsel %vm2161, %v6935, 0
    %6956 = vmatprep.subr.bf16.mxu0 0
    %6957 = vmatpush1.bf16.msra.mxu0 %v6942
    %6958 = vmatprep.subr.bf16.mxu0 0
    %6959 = vmatpush1.bf16.msra.mxu0 0
    %6960 = vmatprep.subr.bf16.mxu0 0
    %6961 = vmatpush1.bf16.msra.mxu0 0
    %6962 = vmatprep.subr.bf16.mxu0 0
    %6963 = vmatpush1.bf16.msra.mxu0 0
    %6964 = vmatprep.subr.bf16.mxu0 0
    %6965 = vmatpush1.bf16.msra.mxu0 0
    %6966 = vmatprep.subr.bf16.mxu0 0
    %6967 = vmatpush1.bf16.msra.mxu0 0
    %6968 = vmatprep.subr.bf16.mxu0 0
    %6969 = vmatpush1.bf16.msra.mxu0 0
    %6970 = vmatprep.subr.bf16.mxu0 0
    %6971 = vmatpush1.bf16.msra.mxu0 0
    %6972 = vmatprep.subr.bf16.mxu0 0
    %6973 = vmatpush1.bf16.msra.mxu0 0
    %6974 = vmatprep.subr.bf16.mxu0 0
    %6975 = vmatpush1.bf16.msra.mxu0 0
    %6976 = vmatprep.subr.bf16.mxu0 0
    %6977 = vmatpush1.bf16.msra.mxu0 0
    %6978 = vmatprep.subr.bf16.mxu0 0
    %6979 = vmatpush1.bf16.msra.mxu0 0
    %6980 = vmatprep.subr.bf16.mxu0 0
    %6981 = vmatpush1.bf16.msra.mxu0 0
    %6982 = vmatprep.subr.bf16.mxu0 0
    %6983 = vmatpush1.bf16.msra.mxu0 0
    %6984 = vmatprep.subr.bf16.mxu0 0
    %6985 = vmatpush1.bf16.msra.mxu0 0
    %6986 = vmatprep.subr.bf16.mxu0 0
    %6987 = vmatpush1.bf16.msra.mxu0 0
    %6988 = vmatprep.mubr.bf16.mxu0 0
    %6989 = vmatmul.mubr.bf16.gmra.mrb[0].mxu0 %v6945
    %v6990 = vpop.f32.mrb[0].mxu0
    %v6991 = vadd.f32 0.0, %v6990
    %v6992 = vpop.f32.mrb[0].mxu0
    %v6993 = vpop.f32.mrb[0].mxu0
    %v6994 = vadd.f32 0.0, %v6993
    %v6995 = vpop.f32.mrb[0].mxu0
    %6996 = vmatprep.mubr.bf16.mxu0 0
    %6997 = vmatmul.mubr.bf16.gmra.mrb[0].mxu0 %v6948
    %v6998 = vpop.f32.mrb[0].mxu0
    %v6999 = vadd.f32 0.0, %v6998
    %v7000 = vpop.f32.mrb[0].mxu0
    %v7001 = vpop.f32.mrb[0].mxu0
    %v7002 = vadd.f32 0.0, %v7001
    %v7003 = vpop.f32.mrb[0].mxu0
    %7004 = vmatprep.mubr.bf16.mxu0 0
    %7005 = vmatmul.mubr.bf16.gmra.mrb[0].mxu0 %v6951
    %v7006 = vpop.f32.mrb[0].mxu0
    %v7007 = vadd.f32 0.0, %v7006
    %v7008 = vpop.f32.mrb[0].mxu0
    %v7009 = vpop.f32.mrb[0].mxu0
    %v7010 = vadd.f32 0.0, %v7009
    %v7011 = vpop.f32.mrb[0].mxu0
    %7012 = vmatprep.mubr.bf16.mxu0 0
    %7013 = vmatmul.mubr.bf16.gmra.mrb[0].mxu0 %v6954
    %v7014 = vpop.f32.mrb[0].mxu0
    %v7015 = vadd.f32 0.0, %v7014
    %v7016 = vpop.f32.mrb[0].mxu0
    %v7017 = vpop.f32.mrb[0].mxu0
    %v7018 = vadd.f32 0.0, %v7017
    %v7019 = vpop.f32.mrb[0].mxu0
    %7020 = vdwg.mxu0
    %v7023 = vunpack.c.l.b16 %v6632
    %v7024 = vunpack.c.l.b16 %v6633
    %v7025 = vpack.c.b16 %v7024, %v7023
    %v7028 = vsel %vm2161, %v6628, 0
    %v7031 = vsel %vm2161, %v6629, 0
    %v7034 = vsel %vm2161, %v6630, 0
    %v7037 = vsel %vm2161, %v6631, 0
    %7039 = vmatprep.subr.bf16.mxu0 0
    %7040 = vmatpush1.bf16.msra.mxu0 %v7025
    %7041 = vmatprep.subr.bf16.mxu0 0
    %7042 = vmatpush1.bf16.msra.mxu0 0
    %7043 = vmatprep.subr.bf16.mxu0 0
    %7044 = vmatpush1.bf16.msra.mxu0 0
    %7045 = vmatprep.subr.bf16.mxu0 0
    %7046 = vmatpush1.bf16.msra.mxu0 0
    %7047 = vmatprep.subr.bf16.mxu0 0
    %7048 = vmatpush1.bf16.msra.mxu0 0
    %7049 = vmatprep.subr.bf16.mxu0 0
    %7050 = vmatpush1.bf16.msra.mxu0 0
    %7051 = vmatprep.subr.bf16.mxu0 0
    %7052 = vmatpush1.bf16.msra.mxu0 0
    %7053 = vmatprep.subr.bf16.mxu0 0
    %7054 = vmatpush1.bf16.msra.mxu0 0
    %7055 = vmatprep.subr.bf16.mxu0 0
    %7056 = vmatpush1.bf16.msra.mxu0 0
    %7057 = vmatprep.subr.bf16.mxu0 0
    %7058 = vmatpush1.bf16.msra.mxu0 0
    %7059 = vmatprep.subr.bf16.mxu0 0
    %7060 = vmatpush1.bf16.msra.mxu0 0
    %7061 = vmatprep.subr.bf16.mxu0 0
    %7062 = vmatpush1.bf16.msra.mxu0 0
    %7063 = vmatprep.subr.bf16.mxu0 0
    %7064 = vmatpush1.bf16.msra.mxu0 0
    %7065 = vmatprep.subr.bf16.mxu0 0
    %7066 = vmatpush1.bf16.msra.mxu0 0
    %7067 = vmatprep.subr.bf16.mxu0 0
    %7068 = vmatpush1.bf16.msra.mxu0 0
    %7069 = vmatprep.subr.bf16.mxu0 0
    %7070 = vmatpush1.bf16.msra.mxu0 0
    %7071 = vmatprep.mubr.bf16.mxu0 0
    %7072 = vmatmul.mubr.bf16.gmra.mrb[0].mxu0 %v7028
    %v7073 = vpop.f32.mrb[0].mxu0
    %v7074 = vadd.f32 %v6991, %v7073
    %v7075 = vpop.f32.mrb[0].mxu0
    %v7076 = vpop.f32.mrb[0].mxu0
    %v7077 = vadd.f32 %v6994, %v7076
    %v7078 = vpop.f32.mrb[0].mxu0
    %7079 = vmatprep.mubr.bf16.mxu0 0
    %7080 = vmatmul.mubr.bf16.gmra.mrb[0].mxu0 %v7031
    %v7081 = vpop.f32.mrb[0].mxu0
    %v7082 = vadd.f32 %v6999, %v7081
    %v7083 = vpop.f32.mrb[0].mxu0
    %v7084 = vpop.f32.mrb[0].mxu0
    %v7085 = vadd.f32 %v7002, %v7084
    %v7086 = vpop.f32.mrb[0].mxu0
    %7087 = vmatprep.mubr.bf16.mxu0 0
    %7088 = vmatmul.mubr.bf16.gmra.mrb[0].mxu0 %v7034
    %v7089 = vpop.f32.mrb[0].mxu0
    %v7090 = vadd.f32 %v7007, %v7089
    %v7091 = vpop.f32.mrb[0].mxu0
    %v7092 = vpop.f32.mrb[0].mxu0
    %v7093 = vadd.f32 %v7010, %v7092
    %v7094 = vpop.f32.mrb[0].mxu0
    %7095 = vmatprep.mubr.bf16.mxu0 0
    %7096 = vmatmul.mubr.bf16.gmra.mrb[0].mxu0 %v7037
    %v7097 = vpop.f32.mrb[0].mxu0
    %v7098 = vadd.f32 %v7015, %v7097
    %v7099 = vpop.f32.mrb[0].mxu0
    %v7100 = vpop.f32.mrb[0].mxu0
    %v7101 = vadd.f32 %v7018, %v7100
    %v7102 = vpop.f32.mrb[0].mxu0
    %7103 = vdwg.mxu0
    %7104 = vrot.lane.b32.xlu0 %v6334, 96
    %v7105 = vpop.permute.xlu0 %7104
    %7106 = vrot.lane.b32.xlu0 %v6336, 96
    %v7107 = vpop.permute.xlu0 %7106
    %7108 = vrot.lane.b32.xlu0 %v6338, 96
    %v7109 = vpop.permute.xlu0 %7108
    %7110 = vrot.lane.b32.xlu0 %v6340, 96
    %v7111 = vpop.permute.xlu0 %7110
    %7112 = vrot.lane.b32.xlu0 %v6334, 32
    %v7113 = vpop.permute.xlu0 %7112
    %7114 = vrot.lane.b32.xlu0 %v6336, 32
    %v7115 = vpop.permute.xlu0 %7114
    %7116 = vrot.lane.b32.xlu0 %v6338, 32
    %v7117 = vpop.permute.xlu0 %7116
    %7118 = vrot.lane.b32.xlu0 %v6340, 32
    %v7119 = vpop.permute.xlu0 %7118
    %v7121 = vsel %vm2161, %v7105, 0
    %v7124 = vsel %vm2161, %v7107, 0
    %v7127 = vsel %vm2161, %v7109, 0
    %v7130 = vsel %vm2161, %v7111, 0
    %v7133 = vsel %vm2161, %v7113, 0
    %v7136 = vsel %vm2161, %v7115, 0
    %v7139 = vsel %vm2161, %v7117, 0
    %v7142 = vsel %vm2161, %v7119, 0
    %7144 = vmatprep.subr.bf16.mxu0 0
    %7145 = vmatpush1.bf16.xpose.msra.mxu0 %v7133
    %7146 = vmatprep.subr.bf16.mxu0 0
    %7147 = vmatpush1.bf16.xpose.msra.mxu0 %v7136
    %7148 = vmatprep.subr.bf16.mxu0 0
    %7149 = vmatpush1.bf16.xpose.msra.mxu0 %v7139
    %7150 = vmatprep.subr.bf16.mxu0 0
    %7151 = vmatpush1.bf16.xpose.msra.mxu0 %v7142
    %7152 = vmatprep.subr.bf16.mxu0 0
    %7153 = vmatpush1.bf16.xpose.msra.mxu0 0
    %7154 = vmatprep.subr.bf16.mxu0 0
    %7155 = vmatpush1.bf16.xpose.msra.mxu0 0
    %7156 = vmatprep.subr.bf16.mxu0 0
    %7157 = vmatpush1.bf16.xpose.msra.mxu0 0
    %7158 = vmatprep.subr.bf16.mxu0 0
    %7159 = vmatpush1.bf16.xpose.msra.mxu0 0
    %7160 = vmatprep.subr.bf16.mxu0 0
    %7161 = vmatpush1.bf16.xpose.msra.mxu0 0
    %7162 = vmatprep.subr.bf16.mxu0 0
    %7163 = vmatpush1.bf16.xpose.msra.mxu0 0
    %7164 = vmatprep.subr.bf16.mxu0 0
    %7165 = vmatpush1.bf16.xpose.msra.mxu0 0
    %7166 = vmatprep.subr.bf16.mxu0 0
    %7167 = vmatpush1.bf16.xpose.msra.mxu0 0
    %7168 = vmatprep.subr.bf16.mxu0 0
    %7169 = vmatpush1.bf16.xpose.msra.mxu0 0
    %7170 = vmatprep.subr.bf16.mxu0 0
    %7171 = vmatpush1.bf16.xpose.msra.mxu0 0
    %7172 = vmatprep.subr.bf16.mxu0 0
    %7173 = vmatpush1.bf16.xpose.msra.mxu0 0
    %7174 = vmatprep.subr.bf16.mxu0 0
    %7175 = vmatpush1.bf16.xpose.msra.mxu0 0
    %7176 = vmatprep.mubr.bf16.mxu0 0
    %7177 = vmatmul.mubr.bf16.gmra.mrb[0].mxu0 %v7121
    %v7178 = vpop.f32.mrb[0].mxu0
    %v7179 = vadd.f32 0.0, %v7178
    %v7180 = vpop.f32.mrb[0].mxu0
    %v7181 = vpop.f32.mrb[0].mxu0
    %v7182 = vadd.f32 0.0, %v7181
    %v7183 = vpop.f32.mrb[0].mxu0
    %7184 = vmatprep.mubr.bf16.mxu0 0
    %7185 = vmatmul.mubr.bf16.gmra.mrb[0].mxu0 %v7124
    %v7186 = vpop.f32.mrb[0].mxu0
    %v7187 = vadd.f32 0.0, %v7186
    %v7188 = vpop.f32.mrb[0].mxu0
    %v7189 = vpop.f32.mrb[0].mxu0
    %v7190 = vadd.f32 0.0, %v7189
    %v7191 = vpop.f32.mrb[0].mxu0
    %7192 = vmatprep.mubr.bf16.mxu0 0
    %7193 = vmatmul.mubr.bf16.gmra.mrb[0].mxu0 %v7127
    %v7194 = vpop.f32.mrb[0].mxu0
    %v7195 = vadd.f32 0.0, %v7194
    %v7196 = vpop.f32.mrb[0].mxu0
    %v7197 = vpop.f32.mrb[0].mxu0
    %v7198 = vadd.f32 0.0, %v7197
    %v7199 = vpop.f32.mrb[0].mxu0
    %7200 = vmatprep.mubr.bf16.mxu0 0
    %7201 = vmatmul.mubr.bf16.gmra.mrb[0].mxu0 %v7130
    %v7202 = vpop.f32.mrb[0].mxu0
    %v7203 = vadd.f32 0.0, %v7202
    %v7204 = vpop.f32.mrb[0].mxu0
    %v7205 = vpop.f32.mrb[0].mxu0
    %v7206 = vadd.f32 0.0, %v7205
    %v7207 = vpop.f32.mrb[0].mxu0
    %7208 = vdwg.mxu0
    %v7209 = vmul.f32 %v7179, 0.25
    %v7210 = vmul.f32 %v7182, 0.25
    %v7211 = vmul.f32 %v7187, 0.25
    %v7212 = vmul.f32 %v7190, 0.25
    %v7213 = vmul.f32 %v7195, 0.25
    %v7214 = vmul.f32 %v7198, 0.25
    %v7215 = vmul.f32 %v7203, 0.25
    %v7216 = vmul.f32 %v7206, 0.25
    %v7217 = vsel %vm1673, %v7209, -inf
    %7218 = vmax.xlane.f32.xlu0 %v7217
    %v7219 = vpop.xlane.xlu0 %7218
    %v7220 = vsel %vm1673, %v7210, -inf
    %7221 = vmax.xlane.f32.xlu0 %v7220
    %v7222 = vpop.xlane.xlu0 %7221
    %v7223 = vsel %vm1673, %v7211, -inf
    %7224 = vmax.xlane.f32.xlu0 %v7223
    %v7225 = vpop.xlane.xlu0 %7224
    %v7226 = vsel %vm1673, %v7212, -inf
    %7227 = vmax.xlane.f32.xlu0 %v7226
    %v7228 = vpop.xlane.xlu0 %7227
    %v7229 = vsel %vm1673, %v7213, -inf
    %7230 = vmax.xlane.f32.xlu0 %v7229
    %v7231 = vpop.xlane.xlu0 %7230
    %v7232 = vsel %vm1673, %v7214, -inf
    %7233 = vmax.xlane.f32.xlu0 %v7232
    %v7234 = vpop.xlane.xlu0 %7233
    %v7235 = vsel %vm1673, %v7215, -inf
    %7236 = vmax.xlane.f32.xlu0 %v7235
    %v7237 = vpop.xlane.xlu0 %7236
    %v7238 = vsel %vm1673, %v7216, -inf
    %7239 = vmax.xlane.f32.xlu0 %v7238
    %v7240 = vpop.xlane.xlu0 %7239
    %v7241 = vsub.f32 %v7209, %v7219
    %v7242 = vsub.f32 %v7210, %v7222
    %v7243 = vsub.f32 %v7211, %v7225
    %v7244 = vsub.f32 %v7212, %v7228
    %v7245 = vsub.f32 %v7213, %v7231
    %v7246 = vsub.f32 %v7214, %v7234
    %v7247 = vsub.f32 %v7215, %v7237
    %v7248 = vsub.f32 %v7216, %v7240
    %v7249 = vmul.f32 %v7241, 1.442695
    %v7250 = vpow.pop %v7249
    %v7251 = vmul.f32 %v7242, 1.442695
    %v7252 = vpow.pop %v7251
    %v7253 = vmul.f32 %v7243, 1.442695
    %v7254 = vpow.pop %v7253
    %v7255 = vmul.f32 %v7244, 1.442695
    %v7256 = vpow.pop %v7255
    %v7257 = vmul.f32 %v7245, 1.442695
    %v7258 = vpow.pop %v7257
    %v7259 = vmul.f32 %v7246, 1.442695
    %v7260 = vpow.pop %v7259
    %v7261 = vmul.f32 %v7247, 1.442695
    %v7262 = vpow.pop %v7261
    %v7263 = vmul.f32 %v7248, 1.442695
    %v7264 = vpow.pop %v7263
    %v7265 = vsel %vm1673, %v7250, 0.0
    %7266 = vadd.xlane.f32.xlu0 %v7265
    %v7267 = vpop.xlane.xlu0 %7266
    %v7268 = vsel %vm1673, %v7252, 0.0
    %7269 = vadd.xlane.f32.xlu0 %v7268
    %v7270 = vpop.xlane.xlu0 %7269
    %v7271 = vsel %vm1673, %v7254, 0.0
    %7272 = vadd.xlane.f32.xlu0 %v7271
    %v7273 = vpop.xlane.xlu0 %7272
    %v7274 = vsel %vm1673, %v7256, 0.0
    %7275 = vadd.xlane.f32.xlu0 %v7274
    %v7276 = vpop.xlane.xlu0 %7275
    %v7277 = vsel %vm1673, %v7258, 0.0
    %7278 = vadd.xlane.f32.xlu0 %v7277
    %v7279 = vpop.xlane.xlu0 %7278
    %v7280 = vsel %vm1673, %v7260, 0.0
    %7281 = vadd.xlane.f32.xlu0 %v7280
    %v7282 = vpop.xlane.xlu0 %7281
    %v7283 = vsel %vm1673, %v7262, 0.0
    %7284 = vadd.xlane.f32.xlu0 %v7283
    %v7285 = vpop.xlane.xlu0 %7284
    %v7286 = vsel %vm1673, %v7264, 0.0
    %7287 = vadd.xlane.f32.xlu0 %v7286
    %v7288 = vpop.xlane.xlu0 %7287
    %v7289 = vrcp.pop %v7267
    %v7290 = vrcp.pop %v7270
    %v7291 = vrcp.pop %v7273
    %v7292 = vrcp.pop %v7276
    %v7293 = vrcp.pop %v7279
    %v7294 = vrcp.pop %v7282
    %v7295 = vrcp.pop %v7285
    %v7296 = vrcp.pop %v7288
    %v7297 = vmul.f32 %v7250, %v7289
    %v7298 = vmul.f32 %v7252, %v7290
    %v7299 = vmul.f32 %v7254, %v7291
    %v7300 = vmul.f32 %v7256, %v7292
    %v7301 = vmul.f32 %v7258, %v7293
    %v7302 = vmul.f32 %v7260, %v7294
    %v7303 = vmul.f32 %v7262, %v7295
    %v7304 = vmul.f32 %v7264, %v7296
    %v7305 = vpack.c.bf16 %v7298, %v7297
    %v7306 = vpack.c.bf16 %v7300, %v7299
    %v7307 = vpack.c.bf16 %v7302, %v7301
    %v7308 = vpack.c.bf16 %v7304, %v7303
    %7309 = vrot.lane.b32.xlu0 %v6335, 96
    %v7310 = vpop.permute.xlu0 %7309
    %7311 = vrot.lane.b32.xlu0 %v6337, 96
    %v7312 = vpop.permute.xlu0 %7311
    %7313 = vrot.lane.b32.xlu0 %v6339, 96
    %v7314 = vpop.permute.xlu0 %7313
    %7315 = vrot.lane.b32.xlu0 %v6341, 96
    %v7316 = vpop.permute.xlu0 %7315
    %v7322 = vsel %vm1673, %v7305, 0
    %v7325 = vsel %vm1673, %v7306, 0
    %v7328 = vsel %vm1673, %v7307, 0
    %v7331 = vsel %vm1673, %v7308, 0
    %7333 = vmatprep.subr.bf16.mxu0 0
    %7334 = vmatpush1.bf16.msra.mxu0 %v7310
    %7335 = vmatprep.subr.bf16.mxu0 0
    %7336 = vmatpush1.bf16.msra.mxu0 %v7312
    %7337 = vmatprep.subr.bf16.mxu0 0
    %7338 = vmatpush1.bf16.msra.mxu0 %v7314
    %7339 = vmatprep.subr.bf16.mxu0 0
    %7340 = vmatpush1.bf16.msra.mxu0 %v7316
    %7341 = vmatprep.subr.bf16.mxu0 0
    %7342 = vmatpush1.bf16.msra.mxu0 0
    %7343 = vmatprep.subr.bf16.mxu0 0
    %7344 = vmatpush1.bf16.msra.mxu0 0
    %7345 = vmatprep.subr.bf16.mxu0 0
    %7346 = vmatpush1.bf16.msra.mxu0 0
    %7347 = vmatprep.subr.bf16.mxu0 0
    %7348 = vmatpush1.bf16.msra.mxu0 0
    %7349 = vmatprep.subr.bf16.mxu0 0
    %7350 = vmatpush1.bf16.msra.mxu0 0
    %7351 = vmatprep.subr.bf16.mxu0 0
    %7352 = vmatpush1.bf16.msra.mxu0 0
    %7353 = vmatprep.subr.bf16.mxu0 0
    %7354 = vmatpush1.bf16.msra.mxu0 0
    %7355 = vmatprep.subr.bf16.mxu0 0
    %7356 = vmatpush1.bf16.msra.mxu0 0
    %7357 = vmatprep.subr.bf16.mxu0 0
    %7358 = vmatpush1.bf16.msra.mxu0 0
    %7359 = vmatprep.subr.bf16.mxu0 0
    %7360 = vmatpush1.bf16.msra.mxu0 0
    %7361 = vmatprep.subr.bf16.mxu0 0
    %7362 = vmatpush1.bf16.msra.mxu0 0
    %7363 = vmatprep.subr.bf16.mxu0 0
    %7364 = vmatpush1.bf16.msra.mxu0 0
    %7365 = vmatprep.mubr.bf16.mxu0 0
    %7366 = vmatmul.mubr.bf16.gmra.mrb[0].mxu0 %v7322
    %v7367 = vpop.f32.mrb[0].mxu0
    %v7368 = vadd.f32 0.0, %v7367
    %v7369 = vpop.f32.mrb[0].mxu0
    %v7370 = vpop.f32.mrb[0].mxu0
    %v7371 = vadd.f32 0.0, %v7370
    %v7372 = vpop.f32.mrb[0].mxu0
    %7373 = vmatprep.mubr.bf16.mxu0 0
    %7374 = vmatmul.mubr.bf16.gmra.mrb[0].mxu0 %v7325
    %v7375 = vpop.f32.mrb[0].mxu0
    %v7376 = vadd.f32 0.0, %v7375
    %v7377 = vpop.f32.mrb[0].mxu0
    %v7378 = vpop.f32.mrb[0].mxu0
    %v7379 = vadd.f32 0.0, %v7378
    %v7380 = vpop.f32.mrb[0].mxu0
    %7381 = vmatprep.mubr.bf16.mxu0 0
    %7382 = vmatmul.mubr.bf16.gmra.mrb[0].mxu0 %v7328
    %v7383 = vpop.f32.mrb[0].mxu0
    %v7384 = vadd.f32 0.0, %v7383
    %v7385 = vpop.f32.mrb[0].mxu0
    %v7386 = vpop.f32.mrb[0].mxu0
    %v7387 = vadd.f32 0.0, %v7386
    %v7388 = vpop.f32.mrb[0].mxu0
    %7389 = vmatprep.mubr.bf16.mxu0 0
    %7390 = vmatmul.mubr.bf16.gmra.mrb[0].mxu0 %v7331
    %v7391 = vpop.f32.mrb[0].mxu0
    %v7392 = vadd.f32 0.0, %v7391
    %v7393 = vpop.f32.mrb[0].mxu0
    %v7394 = vpop.f32.mrb[0].mxu0
    %v7395 = vadd.f32 0.0, %v7394
    %v7396 = vpop.f32.mrb[0].mxu0
    %7397 = vdwg.mxu0
    %v7398 = vpack.c.bf16 %v7371, %v7368
    %v7399 = vpack.c.bf16 %v7379, %v7376
    %v7400 = vpack.c.bf16 %v7387, %v7384
    %v7401 = vpack.c.bf16 %v7395, %v7392
    %v7402 = vld [vmem:[%s59 + $0x10] sm:$0xf]
    %v7403 = vld [vmem:[%s59 + $0x14] sm:$0xf]
    %v7406 = vunpack.c.l.b16 %v7402
    %v7407 = vunpack.c.l.b16 %v7403
    %v7408 = vpack.c.b16 %v7407, %v7406
    %v7411 = vsel %vm2161, %v7398, 0
    %v7414 = vsel %vm2161, %v7399, 0
    %v7417 = vsel %vm2161, %v7400, 0
    %v7420 = vsel %vm2161, %v7401, 0
    %7422 = vmatprep.subr.bf16.mxu0 0
    %7423 = vmatpush1.bf16.msra.mxu0 %v7408
    %7424 = vmatprep.subr.bf16.mxu0 0
    %7425 = vmatpush1.bf16.msra.mxu0 0
    %7426 = vmatprep.subr.bf16.mxu0 0
    %7427 = vmatpush1.bf16.msra.mxu0 0
    %7428 = vmatprep.subr.bf16.mxu0 0
    %7429 = vmatpush1.bf16.msra.mxu0 0
    %7430 = vmatprep.subr.bf16.mxu0 0
    %7431 = vmatpush1.bf16.msra.mxu0 0
    %7432 = vmatprep.subr.bf16.mxu0 0
    %7433 = vmatpush1.bf16.msra.mxu0 0
    %7434 = vmatprep.subr.bf16.mxu0 0
    %7435 = vmatpush1.bf16.msra.mxu0 0
    %7436 = vmatprep.subr.bf16.mxu0 0
    %7437 = vmatpush1.bf16.msra.mxu0 0
    %7438 = vmatprep.subr.bf16.mxu0 0
    %7439 = vmatpush1.bf16.msra.mxu0 0
    %7440 = vmatprep.subr.bf16.mxu0 0
    %7441 = vmatpush1.bf16.msra.mxu0 0
    %7442 = vmatprep.subr.bf16.mxu0 0
    %7443 = vmatpush1.bf16.msra.mxu0 0
    %7444 = vmatprep.subr.bf16.mxu0 0
    %7445 = vmatpush1.bf16.msra.mxu0 0
    %7446 = vmatprep.subr.bf16.mxu0 0
    %7447 = vmatpush1.bf16.msra.mxu0 0
    %7448 = vmatprep.subr.bf16.mxu0 0
    %7449 = vmatpush1.bf16.msra.mxu0 0
    %7450 = vmatprep.subr.bf16.mxu0 0
    %7451 = vmatpush1.bf16.msra.mxu0 0
    %7452 = vmatprep.subr.bf16.mxu0 0
    %7453 = vmatpush1.bf16.msra.mxu0 0
    %7454 = vmatprep.mubr.bf16.mxu0 0
    %7455 = vmatmul.mubr.bf16.gmra.mrb[0].mxu0 %v7411
    %v7456 = vpop.f32.mrb[0].mxu0
    %v7457 = vadd.f32 0.0, %v7456
    %v7458 = vpop.f32.mrb[0].mxu0
    %v7459 = vpop.f32.mrb[0].mxu0
    %v7460 = vadd.f32 0.0, %v7459
    %v7461 = vpop.f32.mrb[0].mxu0
    %7462 = vmatprep.mubr.bf16.mxu0 0
    %7463 = vmatmul.mubr.bf16.gmra.mrb[0].mxu0 %v7414
    %v7464 = vpop.f32.mrb[0].mxu0
    %v7465 = vadd.f32 0.0, %v7464
    %v7466 = vpop.f32.mrb[0].mxu0
    %v7467 = vpop.f32.mrb[0].mxu0
    %v7468 = vadd.f32 0.0, %v7467
    %v7469 = vpop.f32.mrb[0].mxu0
    %7470 = vmatprep.mubr.bf16.mxu0 0
    %7471 = vmatmul.mubr.bf16.gmra.mrb[0].mxu0 %v7417
    %v7472 = vpop.f32.mrb[0].mxu0
    %v7473 = vadd.f32 0.0, %v7472
    %v7474 = vpop.f32.mrb[0].mxu0
    %v7475 = vpop.f32.mrb[0].mxu0
    %v7476 = vadd.f32 0.0, %v7475
    %v7477 = vpop.f32.mrb[0].mxu0
    %7478 = vmatprep.mubr.bf16.mxu0 0
    %7479 = vmatmul.mubr.bf16.gmra.mrb[0].mxu0 %v7420
    %v7480 = vpop.f32.mrb[0].mxu0
    %v7481 = vadd.f32 0.0, %v7480
    %v7482 = vpop.f32.mrb[0].mxu0
    %v7483 = vpop.f32.mrb[0].mxu0
    %v7484 = vadd.f32 0.0, %v7483
    %v7485 = vpop.f32.mrb[0].mxu0
    %7486 = vdwg.mxu0
    %v7487 = vadd.f32 %v7074, %v7457
    %v7488 = vadd.f32 %v7077, %v7460
    %v7489 = vadd.f32 %v7082, %v7465
    %v7490 = vadd.f32 %v7085, %v7468
    %v7491 = vadd.f32 %v7090, %v7473
    %v7492 = vadd.f32 %v7093, %v7476
    %v7493 = vadd.f32 %v7098, %v7481
    %v7494 = vadd.f32 %v7101, %v7484
    %7495 = vrot.lane.b32.xlu0 %v6334, 80
    %v7496 = vpop.permute.xlu0 %7495
    %7497 = vrot.lane.b32.xlu0 %v6336, 80
    %v7498 = vpop.permute.xlu0 %7497
    %7499 = vrot.lane.b32.xlu0 %v6338, 80
    %v7500 = vpop.permute.xlu0 %7499
    %7501 = vrot.lane.b32.xlu0 %v6340, 80
    %v7502 = vpop.permute.xlu0 %7501
    %7503 = vrot.lane.b32.xlu0 %v6334, 16
    %v7504 = vpop.permute.xlu0 %7503
    %7505 = vrot.lane.b32.xlu0 %v6336, 16
    %v7506 = vpop.permute.xlu0 %7505
    %7507 = vrot.lane.b32.xlu0 %v6338, 16
    %v7508 = vpop.permute.xlu0 %7507
    %7509 = vrot.lane.b32.xlu0 %v6340, 16
    %v7510 = vpop.permute.xlu0 %7509
    %v7512 = vsel %vm2161, %v7496, 0
    %v7515 = vsel %vm2161, %v7498, 0
    %v7518 = vsel %vm2161, %v7500, 0
    %v7521 = vsel %vm2161, %v7502, 0
    %v7524 = vsel %vm2161, %v7504, 0
    %v7527 = vsel %vm2161, %v7506, 0
    %v7530 = vsel %vm2161, %v7508, 0
    %v7533 = vsel %vm2161, %v7510, 0
    %7535 = vmatprep.subr.bf16.mxu0 0
    %7536 = vmatpush1.bf16.xpose.msra.mxu0 %v7524
    %7537 = vmatprep.subr.bf16.mxu0 0
    %7538 = vmatpush1.bf16.xpose.msra.mxu0 %v7527
    %7539 = vmatprep.subr.bf16.mxu0 0
    %7540 = vmatpush1.bf16.xpose.msra.mxu0 %v7530
    %7541 = vmatprep.subr.bf16.mxu0 0
    %7542 = vmatpush1.bf16.xpose.msra.mxu0 %v7533
    %7543 = vmatprep.subr.bf16.mxu0 0
    %7544 = vmatpush1.bf16.xpose.msra.mxu0 0
    %7545 = vmatprep.subr.bf16.mxu0 0
    %7546 = vmatpush1.bf16.xpose.msra.mxu0 0
    %7547 = vmatprep.subr.bf16.mxu0 0
    %7548 = vmatpush1.bf16.xpose.msra.mxu0 0
    %7549 = vmatprep.subr.bf16.mxu0 0
    %7550 = vmatpush1.bf16.xpose.msra.mxu0 0
    %7551 = vmatprep.subr.bf16.mxu0 0
    %7552 = vmatpush1.bf16.xpose.msra.mxu0 0
    %7553 = vmatprep.subr.bf16.mxu0 0
    %7554 = vmatpush1.bf16.xpose.msra.mxu0 0
    %7555 = vmatprep.subr.bf16.mxu0 0
    %7556 = vmatpush1.bf16.xpose.msra.mxu0 0
    %7557 = vmatprep.subr.bf16.mxu0 0
    %7558 = vmatpush1.bf16.xpose.msra.mxu0 0
    %7559 = vmatprep.subr.bf16.mxu0 0
    %7560 = vmatpush1.bf16.xpose.msra.mxu0 0
    %7561 = vmatprep.subr.bf16.mxu0 0
    %7562 = vmatpush1.bf16.xpose.msra.mxu0 0
    %7563 = vmatprep.subr.bf16.mxu0 0
    %7564 = vmatpush1.bf16.xpose.msra.mxu0 0
    %7565 = vmatprep.subr.bf16.mxu0 0
    %7566 = vmatpush1.bf16.xpose.msra.mxu0 0
    %7567 = vmatprep.mubr.bf16.mxu0 0
    %7568 = vmatmul.mubr.bf16.gmra.mrb[0].mxu0 %v7512
    %v7569 = vpop.f32.mrb[0].mxu0
    %v7570 = vadd.f32 0.0, %v7569
    %v7571 = vpop.f32.mrb[0].mxu0
    %v7572 = vpop.f32.mrb[0].mxu0
    %v7573 = vadd.f32 0.0, %v7572
    %v7574 = vpop.f32.mrb[0].mxu0
    %7575 = vmatprep.mubr.bf16.mxu0 0
    %7576 = vmatmul.mubr.bf16.gmra.mrb[0].mxu0 %v7515
    %v7577 = vpop.f32.mrb[0].mxu0
    %v7578 = vadd.f32 0.0, %v7577
    %v7579 = vpop.f32.mrb[0].mxu0
    %v7580 = vpop.f32.mrb[0].mxu0
    %v7581 = vadd.f32 0.0, %v7580
    %v7582 = vpop.f32.mrb[0].mxu0
    %7583 = vmatprep.mubr.bf16.mxu0 0
    %7584 = vmatmul.mubr.bf16.gmra.mrb[0].mxu0 %v7518
    %v7585 = vpop.f32.mrb[0].mxu0
    %v7586 = vadd.f32 0.0, %v7585
    %v7587 = vpop.f32.mrb[0].mxu0
    %v7588 = vpop.f32.mrb[0].mxu0
    %v7589 = vadd.f32 0.0, %v7588
    %v7590 = vpop.f32.mrb[0].mxu0
    %7591 = vmatprep.mubr.bf16.mxu0 0
    %7592 = vmatmul.mubr.bf16.gmra.mrb[0].mxu0 %v7521
    %v7593 = vpop.f32.mrb[0].mxu0
    %v7594 = vadd.f32 0.0, %v7593
    %v7595 = vpop.f32.mrb[0].mxu0
    %v7596 = vpop.f32.mrb[0].mxu0
    %v7597 = vadd.f32 0.0, %v7596
    %v7598 = vpop.f32.mrb[0].mxu0
    %7599 = vdwg.mxu0
    %v7600 = vmul.f32 %v7570, 0.25
    %v7601 = vmul.f32 %v7573, 0.25
    %v7602 = vmul.f32 %v7578, 0.25
    %v7603 = vmul.f32 %v7581, 0.25
    %v7604 = vmul.f32 %v7586, 0.25
    %v7605 = vmul.f32 %v7589, 0.25
    %v7606 = vmul.f32 %v7594, 0.25
    %v7607 = vmul.f32 %v7597, 0.25
    %v7608 = vsel %vm1673, %v7600, -inf
    %7609 = vmax.xlane.f32.xlu0 %v7608
    %v7610 = vpop.xlane.xlu0 %7609
    %v7611 = vsel %vm1673, %v7601, -inf
    %7612 = vmax.xlane.f32.xlu0 %v7611
    %v7613 = vpop.xlane.xlu0 %7612
    %v7614 = vsel %vm1673, %v7602, -inf
    %7615 = vmax.xlane.f32.xlu0 %v7614
    %v7616 = vpop.xlane.xlu0 %7615
    %v7617 = vsel %vm1673, %v7603, -inf
    %7618 = vmax.xlane.f32.xlu0 %v7617
    %v7619 = vpop.xlane.xlu0 %7618
    %v7620 = vsel %vm1673, %v7604, -inf
    %7621 = vmax.xlane.f32.xlu0 %v7620
    %v7622 = vpop.xlane.xlu0 %7621
    %v7623 = vsel %vm1673, %v7605, -inf
    %7624 = vmax.xlane.f32.xlu0 %v7623
    %v7625 = vpop.xlane.xlu0 %7624
    %v7626 = vsel %vm1673, %v7606, -inf
    %7627 = vmax.xlane.f32.xlu0 %v7626
    %v7628 = vpop.xlane.xlu0 %7627
    %v7629 = vsel %vm1673, %v7607, -inf
    %7630 = vmax.xlane.f32.xlu0 %v7629
    %v7631 = vpop.xlane.xlu0 %7630
    %v7632 = vsub.f32 %v7600, %v7610
    %v7633 = vsub.f32 %v7601, %v7613
    %v7634 = vsub.f32 %v7602, %v7616
    %v7635 = vsub.f32 %v7603, %v7619
    %v7636 = vsub.f32 %v7604, %v7622
    %v7637 = vsub.f32 %v7605, %v7625
    %v7638 = vsub.f32 %v7606, %v7628
    %v7639 = vsub.f32 %v7607, %v7631
    %v7640 = vmul.f32 %v7632, 1.442695
    %v7641 = vpow.pop %v7640
    %v7642 = vmul.f32 %v7633, 1.442695
    %v7643 = vpow.pop %v7642
    %v7644 = vmul.f32 %v7634, 1.442695
    %v7645 = vpow.pop %v7644
    %v7646 = vmul.f32 %v7635, 1.442695
    %v7647 = vpow.pop %v7646
    %v7648 = vmul.f32 %v7636, 1.442695
    %v7649 = vpow.pop %v7648
    %v7650 = vmul.f32 %v7637, 1.442695
    %v7651 = vpow.pop %v7650
    %v7652 = vmul.f32 %v7638, 1.442695
    %v7653 = vpow.pop %v7652
    %v7654 = vmul.f32 %v7639, 1.442695
    %v7655 = vpow.pop %v7654
    %v7656 = vsel %vm1673, %v7641, 0.0
    %7657 = vadd.xlane.f32.xlu0 %v7656
    %v7658 = vpop.xlane.xlu0 %7657
    %v7659 = vsel %vm1673, %v7643, 0.0
    %7660 = vadd.xlane.f32.xlu0 %v7659
    %v7661 = vpop.xlane.xlu0 %7660
    %v7662 = vsel %vm1673, %v7645, 0.0
    %7663 = vadd.xlane.f32.xlu0 %v7662
    %v7664 = vpop.xlane.xlu0 %7663
    %v7665 = vsel %vm1673, %v7647, 0.0
    %7666 = vadd.xlane.f32.xlu0 %v7665
    %v7667 = vpop.xlane.xlu0 %7666
    %v7668 = vsel %vm1673, %v7649, 0.0
    %7669 = vadd.xlane.f32.xlu0 %v7668
    %v7670 = vpop.xlane.xlu0 %7669
    %v7671 = vsel %vm1673, %v7651, 0.0
    %7672 = vadd.xlane.f32.xlu0 %v7671
    %v7673 = vpop.xlane.xlu0 %7672
    %v7674 = vsel %vm1673, %v7653, 0.0
    %7675 = vadd.xlane.f32.xlu0 %v7674
    %v7676 = vpop.xlane.xlu0 %7675
    %v7677 = vsel %vm1673, %v7655, 0.0
    %7678 = vadd.xlane.f32.xlu0 %v7677
    %v7679 = vpop.xlane.xlu0 %7678
    %v7680 = vrcp.pop %v7658
    %v7681 = vrcp.pop %v7661
    %v7682 = vrcp.pop %v7664
    %v7683 = vrcp.pop %v7667
    %v7684 = vrcp.pop %v7670
    %v7685 = vrcp.pop %v7673
    %v7686 = vrcp.pop %v7676
    %v7687 = vrcp.pop %v7679
    %v7688 = vmul.f32 %v7641, %v7680
    %v7689 = vmul.f32 %v7643, %v7681
    %v7690 = vmul.f32 %v7645, %v7682
    %v7691 = vmul.f32 %v7647, %v7683
    %v7692 = vmul.f32 %v7649, %v7684
    %v7693 = vmul.f32 %v7651, %v7685
    %v7694 = vmul.f32 %v7653, %v7686
    %v7695 = vmul.f32 %v7655, %v7687
    %v7696 = vpack.c.bf16 %v7689, %v7688
    %v7697 = vpack.c.bf16 %v7691, %v7690
    %v7698 = vpack.c.bf16 %v7693, %v7692
    %v7699 = vpack.c.bf16 %v7695, %v7694
    %7700 = vrot.lane.b32.xlu0 %v6335, 80
    %v7701 = vpop.permute.xlu0 %7700
    %7702 = vrot.lane.b32.xlu0 %v6337, 80
    %v7703 = vpop.permute.xlu0 %7702
    %7704 = vrot.lane.b32.xlu0 %v6339, 80
    %v7705 = vpop.permute.xlu0 %7704
    %7706 = vrot.lane.b32.xlu0 %v6341, 80
    %v7707 = vpop.permute.xlu0 %7706
    %v7713 = vsel %vm1673, %v7696, 0
    %v7716 = vsel %vm1673, %v7697, 0
    %v7719 = vsel %vm1673, %v7698, 0
    %v7722 = vsel %vm1673, %v7699, 0
    %7724 = vmatprep.subr.bf16.mxu0 0
    %7725 = vmatpush1.bf16.msra.mxu0 %v7701
    %7726 = vmatprep.subr.bf16.mxu0 0
    %7727 = vmatpush1.bf16.msra.mxu0 %v7703
    %7728 = vmatprep.subr.bf16.mxu0 0
    %7729 = vmatpush1.bf16.msra.mxu0 %v7705
    %7730 = vmatprep.subr.bf16.mxu0 0
    %7731 = vmatpush1.bf16.msra.mxu0 %v7707
    %7732 = vmatprep.subr.bf16.mxu0 0
    %7733 = vmatpush1.bf16.msra.mxu0 0
    %7734 = vmatprep.subr.bf16.mxu0 0
    %7735 = vmatpush1.bf16.msra.mxu0 0
    %7736 = vmatprep.subr.bf16.mxu0 0
    %7737 = vmatpush1.bf16.msra.mxu0 0
    %7738 = vmatprep.subr.bf16.mxu0 0
    %7739 = vmatpush1.bf16.msra.mxu0 0
    %7740 = vmatprep.subr.bf16.mxu0 0
    %7741 = vmatpush1.bf16.msra.mxu0 0
    %7742 = vmatprep.subr.bf16.mxu0 0
    %7743 = vmatpush1.bf16.msra.mxu0 0
    %7744 = vmatprep.subr.bf16.mxu0 0
    %7745 = vmatpush1.bf16.msra.mxu0 0
    %7746 = vmatprep.subr.bf16.mxu0 0
    %7747 = vmatpush1.bf16.msra.mxu0 0
    %7748 = vmatprep.subr.bf16.mxu0 0
    %7749 = vmatpush1.bf16.msra.mxu0 0
    %7750 = vmatprep.subr.bf16.mxu0 0
    %7751 = vmatpush1.bf16.msra.mxu0 0
    %7752 = vmatprep.subr.bf16.mxu0 0
    %7753 = vmatpush1.bf16.msra.mxu0 0
    %7754 = vmatprep.subr.bf16.mxu0 0
    %7755 = vmatpush1.bf16.msra.mxu0 0
    %7756 = vmatprep.mubr.bf16.mxu0 0
    %7757 = vmatmul.mubr.bf16.gmra.mrb[0].mxu0 %v7713
    %v7758 = vpop.f32.mrb[0].mxu0
    %v7759 = vadd.f32 0.0, %v7758
    %v7760 = vpop.f32.mrb[0].mxu0
    %v7761 = vpop.f32.mrb[0].mxu0
    %v7762 = vadd.f32 0.0, %v7761
    %v7763 = vpop.f32.mrb[0].mxu0
    %7764 = vmatprep.mubr.bf16.mxu0 0
    %7765 = vmatmul.mubr.bf16.gmra.mrb[0].mxu0 %v7716
    %v7766 = vpop.f32.mrb[0].mxu0
    %v7767 = vadd.f32 0.0, %v7766
    %v7768 = vpop.f32.mrb[0].mxu0
    %v7769 = vpop.f32.mrb[0].mxu0
    %v7770 = vadd.f32 0.0, %v7769
    %v7771 = vpop.f32.mrb[0].mxu0
    %7772 = vmatprep.mubr.bf16.mxu0 0
    %7773 = vmatmul.mubr.bf16.gmra.mrb[0].mxu0 %v7719
    %v7774 = vpop.f32.mrb[0].mxu0
    %v7775 = vadd.f32 0.0, %v7774
    %v7776 = vpop.f32.mrb[0].mxu0
    %v7777 = vpop.f32.mrb[0].mxu0
    %v7778 = vadd.f32 0.0, %v7777
    %v7779 = vpop.f32.mrb[0].mxu0
    %7780 = vmatprep.mubr.bf16.mxu0 0
    %7781 = vmatmul.mubr.bf16.gmra.mrb[0].mxu0 %v7722
    %v7782 = vpop.f32.mrb[0].mxu0
    %v7783 = vadd.f32 0.0, %v7782
    %v7784 = vpop.f32.mrb[0].mxu0
    %v7785 = vpop.f32.mrb[0].mxu0
    %v7786 = vadd.f32 0.0, %v7785
    %v7787 = vpop.f32.mrb[0].mxu0
    %7788 = vdwg.mxu0
    %v7789 = vpack.c.bf16 %v7762, %v7759
    %v7790 = vpack.c.bf16 %v7770, %v7767
    %v7791 = vpack.c.bf16 %v7778, %v7775
    %v7792 = vpack.c.bf16 %v7786, %v7783
    %v7793 = vld [vmem:[%s59 + $0x18] sm:$0xf]
    %v7794 = vld [vmem:[%s59 + $0x1c] sm:$0xf]
    %v7797 = vunpack.c.l.b16 %v7793
    %v7798 = vunpack.c.l.b16 %v7794
    %v7799 = vpack.c.b16 %v7798, %v7797
    %v7802 = vsel %vm2161, %v7789, 0
    %v7805 = vsel %vm2161, %v7790, 0
    %v7808 = vsel %vm2161, %v7791, 0
    %v7811 = vsel %vm2161, %v7792, 0
    %7813 = vmatprep.subr.bf16.mxu0 0
    %7814 = vmatpush1.bf16.msra.mxu0 %v7799
    %7815 = vmatprep.subr.bf16.mxu0 0
    %7816 = vmatpush1.bf16.msra.mxu0 0
    %7817 = vmatprep.subr.bf16.mxu0 0
    %7818 = vmatpush1.bf16.msra.mxu0 0
    %7819 = vmatprep.subr.bf16.mxu0 0
    %7820 = vmatpush1.bf16.msra.mxu0 0
    %7821 = vmatprep.subr.bf16.mxu0 0
    %7822 = vmatpush1.bf16.msra.mxu0 0
    %7823 = vmatprep.subr.bf16.mxu0 0
    %7824 = vmatpush1.bf16.msra.mxu0 0
    %7825 = vmatprep.subr.bf16.mxu0 0
    %7826 = vmatpush1.bf16.msra.mxu0 0
    %7827 = vmatprep.subr.bf16.mxu0 0
    %7828 = vmatpush1.bf16.msra.mxu0 0
    %7829 = vmatprep.subr.bf16.mxu0 0
    %7830 = vmatpush1.bf16.msra.mxu0 0
    %7831 = vmatprep.subr.bf16.mxu0 0
    %7832 = vmatpush1.bf16.msra.mxu0 0
    %7833 = vmatprep.subr.bf16.mxu0 0
    %7834 = vmatpush1.bf16.msra.mxu0 0
    %7835 = vmatprep.subr.bf16.mxu0 0
    %7836 = vmatpush1.bf16.msra.mxu0 0
    %7837 = vmatprep.subr.bf16.mxu0 0
    %7838 = vmatpush1.bf16.msra.mxu0 0
    %7839 = vmatprep.subr.bf16.mxu0 0
    %7840 = vmatpush1.bf16.msra.mxu0 0
    %7841 = vmatprep.subr.bf16.mxu0 0
    %7842 = vmatpush1.bf16.msra.mxu0 0
    %7843 = vmatprep.subr.bf16.mxu0 0
    %7844 = vmatpush1.bf16.msra.mxu0 0
    %7845 = vmatprep.mubr.bf16.mxu0 0
    %7846 = vmatmul.mubr.bf16.gmra.mrb[0].mxu0 %v7802
    %v7847 = vpop.f32.mrb[0].mxu0
    %v7848 = vadd.f32 0.0, %v7847
    %v7849 = vpop.f32.mrb[0].mxu0
    %v7850 = vpop.f32.mrb[0].mxu0
    %v7851 = vadd.f32 0.0, %v7850
    %v7852 = vpop.f32.mrb[0].mxu0
    %7853 = vmatprep.mubr.bf16.mxu0 0
    %7854 = vmatmul.mubr.bf16.gmra.mrb[0].mxu0 %v7805
    %v7855 = vpop.f32.mrb[0].mxu0
    %v7856 = vadd.f32 0.0, %v7855
    %v7857 = vpop.f32.mrb[0].mxu0
    %v7858 = vpop.f32.mrb[0].mxu0
    %v7859 = vadd.f32 0.0, %v7858
    %v7860 = vpop.f32.mrb[0].mxu0
    %7861 = vmatprep.mubr.bf16.mxu0 0
    %7862 = vmatmul.mubr.bf16.gmra.mrb[0].mxu0 %v7808
    %v7863 = vpop.f32.mrb[0].mxu0
    %v7864 = vadd.f32 0.0, %v7863
    %v7865 = vpop.f32.mrb[0].mxu0
    %v7866 = vpop.f32.mrb[0].mxu0
    %v7867 = vadd.f32 0.0, %v7866
    %v7868 = vpop.f32.mrb[0].mxu0
    %7869 = vmatprep.mubr.bf16.mxu0 0
    %7870 = vmatmul.mubr.bf16.gmra.mrb[0].mxu0 %v7811
    %v7871 = vpop.f32.mrb[0].mxu0
    %v7872 = vadd.f32 0.0, %v7871
    %v7873 = vpop.f32.mrb[0].mxu0
    %v7874 = vpop.f32.mrb[0].mxu0
    %v7875 = vadd.f32 0.0, %v7874
    %v7876 = vpop.f32.mrb[0].mxu0
    %7877 = vdwg.mxu0
    %v7878 = vadd.f32 %v7487, %v7848
    %v7879 = vadd.f32 %v7488, %v7851
    %v7880 = vadd.f32 %v7489, %v7856
    %v7881 = vadd.f32 %v7490, %v7859
    %v7882 = vadd.f32 %v7491, %v7864
    %v7883 = vadd.f32 %v7492, %v7867
    %v7884 = vadd.f32 %v7493, %v7872
    %v7885 = vadd.f32 %v7494, %v7875
    %7890 = vrot.lane.b32.xlu0 %v6342, 64
    %v7891 = vpop.permute.xlu0 %7890
    %7892 = vrot.lane.b32.xlu0 %v6344, 64
    %v7893 = vpop.permute.xlu0 %7892
    %7894 = vrot.lane.b32.xlu0 %v6346, 64
    %v7895 = vpop.permute.xlu0 %7894
    %7896 = vrot.lane.b32.xlu0 %v6348, 64
    %v7897 = vpop.permute.xlu0 %7896
    %v7899 = vsel %vm2161, %v6342, 0
    %v7902 = vsel %vm2161, %v6344, 0
    %v7905 = vsel %vm2161, %v6346, 0
    %v7908 = vsel %vm2161, %v6348, 0
    %v7911 = vsel %vm2161, %v7891, 0
    %v7914 = vsel %vm2161, %v7893, 0
    %v7917 = vsel %vm2161, %v7895, 0
    %v7920 = vsel %vm2161, %v7897, 0
    %7922 = vmatprep.subr.bf16.mxu0 0
    %7923 = vmatpush1.bf16.xpose.msra.mxu0 %v7911
    %7924 = vmatprep.subr.bf16.mxu0 0
    %7925 = vmatpush1.bf16.xpose.msra.mxu0 %v7914
    %7926 = vmatprep.subr.bf16.mxu0 0
    %7927 = vmatpush1.bf16.xpose.msra.mxu0 %v7917
    %7928 = vmatprep.subr.bf16.mxu0 0
    %7929 = vmatpush1.bf16.xpose.msra.mxu0 %v7920
    %7930 = vmatprep.subr.bf16.mxu0 0
    %7931 = vmatpush1.bf16.xpose.msra.mxu0 0
    %7932 = vmatprep.subr.bf16.mxu0 0
    %7933 = vmatpush1.bf16.xpose.msra.mxu0 0
    %7934 = vmatprep.subr.bf16.mxu0 0
    %7935 = vmatpush1.bf16.xpose.msra.mxu0 0
    %7936 = vmatprep.subr.bf16.mxu0 0
    %7937 = vmatpush1.bf16.xpose.msra.mxu0 0
    %7938 = vmatprep.subr.bf16.mxu0 0
    %7939 = vmatpush1.bf16.xpose.msra.mxu0 0
    %7940 = vmatprep.subr.bf16.mxu0 0
    %7941 = vmatpush1.bf16.xpose.msra.mxu0 0
    %7942 = vmatprep.subr.bf16.mxu0 0
    %7943 = vmatpush1.bf16.xpose.msra.mxu0 0
    %7944 = vmatprep.subr.bf16.mxu0 0
    %7945 = vmatpush1.bf16.xpose.msra.mxu0 0
    %7946 = vmatprep.subr.bf16.mxu0 0
    %7947 = vmatpush1.bf16.xpose.msra.mxu0 0
    %7948 = vmatprep.subr.bf16.mxu0 0
    %7949 = vmatpush1.bf16.xpose.msra.mxu0 0
    %7950 = vmatprep.subr.bf16.mxu0 0
    %7951 = vmatpush1.bf16.xpose.msra.mxu0 0
    %7952 = vmatprep.subr.bf16.mxu0 0
    %7953 = vmatpush1.bf16.xpose.msra.mxu0 0
    %7954 = vmatprep.mubr.bf16.mxu0 0
    %7955 = vmatmul.mubr.bf16.gmra.mrb[0].mxu0 %v7899
    %v7956 = vpop.f32.mrb[0].mxu0
    %v7957 = vadd.f32 0.0, %v7956
    %v7958 = vpop.f32.mrb[0].mxu0
    %v7959 = vpop.f32.mrb[0].mxu0
    %v7960 = vadd.f32 0.0, %v7959
    %v7961 = vpop.f32.mrb[0].mxu0
    %7962 = vmatprep.mubr.bf16.mxu0 0
    %7963 = vmatmul.mubr.bf16.gmra.mrb[0].mxu0 %v7902
    %v7964 = vpop.f32.mrb[0].mxu0
    %v7965 = vadd.f32 0.0, %v7964
    %v7966 = vpop.f32.mrb[0].mxu0
    %v7967 = vpop.f32.mrb[0].mxu0
    %v7968 = vadd.f32 0.0, %v7967
    %v7969 = vpop.f32.mrb[0].mxu0
    %7970 = vmatprep.mubr.bf16.mxu0 0
    %7971 = vmatmul.mubr.bf16.gmra.mrb[0].mxu0 %v7905
    %v7972 = vpop.f32.mrb[0].mxu0
    %v7973 = vadd.f32 0.0, %v7972
    %v7974 = vpop.f32.mrb[0].mxu0
    %v7975 = vpop.f32.mrb[0].mxu0
    %v7976 = vadd.f32 0.0, %v7975
    %v7977 = vpop.f32.mrb[0].mxu0
    %7978 = vmatprep.mubr.bf16.mxu0 0
    %7979 = vmatmul.mubr.bf16.gmra.mrb[0].mxu0 %v7908
    %v7980 = vpop.f32.mrb[0].mxu0
    %v7981 = vadd.f32 0.0, %v7980
    %v7982 = vpop.f32.mrb[0].mxu0
    %v7983 = vpop.f32.mrb[0].mxu0
    %v7984 = vadd.f32 0.0, %v7983
    %v7985 = vpop.f32.mrb[0].mxu0
    %7986 = vdwg.mxu0
    %v7987 = vmul.f32 %v7957, 0.25
    %v7988 = vmul.f32 %v7960, 0.25
    %v7989 = vmul.f32 %v7965, 0.25
    %v7990 = vmul.f32 %v7968, 0.25
    %v7991 = vmul.f32 %v7973, 0.25
    %v7992 = vmul.f32 %v7976, 0.25
    %v7993 = vmul.f32 %v7981, 0.25
    %v7994 = vmul.f32 %v7984, 0.25
    %v7995 = vsel %vm1673, %v7987, -inf
    %7996 = vmax.xlane.f32.xlu0 %v7995
    %v7997 = vpop.xlane.xlu0 %7996
    %v7998 = vsel %vm1673, %v7988, -inf
    %7999 = vmax.xlane.f32.xlu0 %v7998
    %v8000 = vpop.xlane.xlu0 %7999
    %v8001 = vsel %vm1673, %v7989, -inf
    %8002 = vmax.xlane.f32.xlu0 %v8001
    %v8003 = vpop.xlane.xlu0 %8002
    %v8004 = vsel %vm1673, %v7990, -inf
    %8005 = vmax.xlane.f32.xlu0 %v8004
    %v8006 = vpop.xlane.xlu0 %8005
    %v8007 = vsel %vm1673, %v7991, -inf
    %8008 = vmax.xlane.f32.xlu0 %v8007
    %v8009 = vpop.xlane.xlu0 %8008
    %v8010 = vsel %vm1673, %v7992, -inf
    %8011 = vmax.xlane.f32.xlu0 %v8010
    %v8012 = vpop.xlane.xlu0 %8011
    %v8013 = vsel %vm1673, %v7993, -inf
    %8014 = vmax.xlane.f32.xlu0 %v8013
    %v8015 = vpop.xlane.xlu0 %8014
    %v8016 = vsel %vm1673, %v7994, -inf
    %8017 = vmax.xlane.f32.xlu0 %v8016
    %v8018 = vpop.xlane.xlu0 %8017
    %v8019 = vsub.f32 %v7987, %v7997
    %v8020 = vsub.f32 %v7988, %v8000
    %v8021 = vsub.f32 %v7989, %v8003
    %v8022 = vsub.f32 %v7990, %v8006
    %v8023 = vsub.f32 %v7991, %v8009
    %v8024 = vsub.f32 %v7992, %v8012
    %v8025 = vsub.f32 %v7993, %v8015
    %v8026 = vsub.f32 %v7994, %v8018
    %v8027 = vmul.f32 %v8019, 1.442695
    %v8028 = vpow.pop %v8027
    %v8029 = vmul.f32 %v8020, 1.442695
    %v8030 = vpow.pop %v8029
    %v8031 = vmul.f32 %v8021, 1.442695
    %v8032 = vpow.pop %v8031
    %v8033 = vmul.f32 %v8022, 1.442695
    %v8034 = vpow.pop %v8033
    %v8035 = vmul.f32 %v8023, 1.442695
    %v8036 = vpow.pop %v8035
    %v8037 = vmul.f32 %v8024, 1.442695
    %v8038 = vpow.pop %v8037
    %v8039 = vmul.f32 %v8025, 1.442695
    %v8040 = vpow.pop %v8039
    %v8041 = vmul.f32 %v8026, 1.442695
    %v8042 = vpow.pop %v8041
    %v8043 = vsel %vm1673, %v8028, 0.0
    %8044 = vadd.xlane.f32.xlu0 %v8043
    %v8045 = vpop.xlane.xlu0 %8044
    %v8046 = vsel %vm1673, %v8030, 0.0
    %8047 = vadd.xlane.f32.xlu0 %v8046
    %v8048 = vpop.xlane.xlu0 %8047
    %v8049 = vsel %vm1673, %v8032, 0.0
    %8050 = vadd.xlane.f32.xlu0 %v8049
    %v8051 = vpop.xlane.xlu0 %8050
    %v8052 = vsel %vm1673, %v8034, 0.0
    %8053 = vadd.xlane.f32.xlu0 %v8052
    %v8054 = vpop.xlane.xlu0 %8053
    %v8055 = vsel %vm1673, %v8036, 0.0
    %8056 = vadd.xlane.f32.xlu0 %v8055
    %v8057 = vpop.xlane.xlu0 %8056
    %v8058 = vsel %vm1673, %v8038, 0.0
    %8059 = vadd.xlane.f32.xlu0 %v8058
    %v8060 = vpop.xlane.xlu0 %8059
    %v8061 = vsel %vm1673, %v8040, 0.0
    %8062 = vadd.xlane.f32.xlu0 %v8061
    %v8063 = vpop.xlane.xlu0 %8062
    %v8064 = vsel %vm1673, %v8042, 0.0
    %8065 = vadd.xlane.f32.xlu0 %v8064
    %v8066 = vpop.xlane.xlu0 %8065
    %v8067 = vrcp.pop %v8045
    %v8068 = vrcp.pop %v8048
    %v8069 = vrcp.pop %v8051
    %v8070 = vrcp.pop %v8054
    %v8071 = vrcp.pop %v8057
    %v8072 = vrcp.pop %v8060
    %v8073 = vrcp.pop %v8063
    %v8074 = vrcp.pop %v8066
    %v8075 = vmul.f32 %v8028, %v8067
    %v8076 = vmul.f32 %v8030, %v8068
    %v8077 = vmul.f32 %v8032, %v8069
    %v8078 = vmul.f32 %v8034, %v8070
    %v8079 = vmul.f32 %v8036, %v8071
    %v8080 = vmul.f32 %v8038, %v8072
    %v8081 = vmul.f32 %v8040, %v8073
    %v8082 = vmul.f32 %v8042, %v8074
    %v8083 = vpack.c.bf16 %v8076, %v8075
    %v8084 = vpack.c.bf16 %v8078, %v8077
    %v8085 = vpack.c.bf16 %v8080, %v8079
    %v8086 = vpack.c.bf16 %v8082, %v8081
    %v8088 = vsel %vm1673, %v8083, 0
    %v8091 = vsel %vm1673, %v8084, 0
    %v8094 = vsel %vm1673, %v8085, 0
    %v8097 = vsel %vm1673, %v8086, 0
    %8099 = vmatprep.subr.bf16.mxu0 0
    %8100 = vmatpush1.bf16.msra.mxu0 %v6343
    %8101 = vmatprep.subr.bf16.mxu0 0
    %8102 = vmatpush1.bf16.msra.mxu0 %v6345
    %8103 = vmatprep.subr.bf16.mxu0 0
    %8104 = vmatpush1.bf16.msra.mxu0 %v6347
    %8105 = vmatprep.subr.bf16.mxu0 0
    %8106 = vmatpush1.bf16.msra.mxu0 %v6349
    %8107 = vmatprep.subr.bf16.mxu0 0
    %8108 = vmatpush1.bf16.msra.mxu0 0
    %8109 = vmatprep.subr.bf16.mxu0 0
    %8110 = vmatpush1.bf16.msra.mxu0 0
    %8111 = vmatprep.subr.bf16.mxu0 0
    %8112 = vmatpush1.bf16.msra.mxu0 0
    %8113 = vmatprep.subr.bf16.mxu0 0
    %8114 = vmatpush1.bf16.msra.mxu0 0
    %8115 = vmatprep.subr.bf16.mxu0 0
    %8116 = vmatpush1.bf16.msra.mxu0 0
    %8117 = vmatprep.subr.bf16.mxu0 0
    %8118 = vmatpush1.bf16.msra.mxu0 0
    %8119 = vmatprep.subr.bf16.mxu0 0
    %8120 = vmatpush1.bf16.msra.mxu0 0
    %8121 = vmatprep.subr.bf16.mxu0 0
    %8122 = vmatpush1.bf16.msra.mxu0 0
    %8123 = vmatprep.subr.bf16.mxu0 0
    %8124 = vmatpush1.bf16.msra.mxu0 0
    %8125 = vmatprep.subr.bf16.mxu0 0
    %8126 = vmatpush1.bf16.msra.mxu0 0
    %8127 = vmatprep.subr.bf16.mxu0 0
    %8128 = vmatpush1.bf16.msra.mxu0 0
    %8129 = vmatprep.subr.bf16.mxu0 0
    %8130 = vmatpush1.bf16.msra.mxu0 0
    %8131 = vmatprep.mubr.bf16.mxu0 0
    %8132 = vmatmul.mubr.bf16.gmra.mrb[0].mxu0 %v8088
    %v8133 = vpop.f32.mrb[0].mxu0
    %v8134 = vadd.f32 0.0, %v8133
    %v8135 = vpop.f32.mrb[0].mxu0
    %v8136 = vpop.f32.mrb[0].mxu0
    %v8137 = vadd.f32 0.0, %v8136
    %v8138 = vpop.f32.mrb[0].mxu0
    %8139 = vmatprep.mubr.bf16.mxu0 0
    %8140 = vmatmul.mubr.bf16.gmra.mrb[0].mxu0 %v8091
    %v8141 = vpop.f32.mrb[0].mxu0
    %v8142 = vadd.f32 0.0, %v8141
    %v8143 = vpop.f32.mrb[0].mxu0
    %v8144 = vpop.f32.mrb[0].mxu0
    %v8145 = vadd.f32 0.0, %v8144
    %v8146 = vpop.f32.mrb[0].mxu0
    %8147 = vmatprep.mubr.bf16.mxu0 0
    %8148 = vmatmul.mubr.bf16.gmra.mrb[0].mxu0 %v8094
    %v8149 = vpop.f32.mrb[0].mxu0
    %v8150 = vadd.f32 0.0, %v8149
    %v8151 = vpop.f32.mrb[0].mxu0
    %v8152 = vpop.f32.mrb[0].mxu0
    %v8153 = vadd.f32 0.0, %v8152
    %v8154 = vpop.f32.mrb[0].mxu0
    %8155 = vmatprep.mubr.bf16.mxu0 0
    %8156 = vmatmul.mubr.bf16.gmra.mrb[0].mxu0 %v8097
    %v8157 = vpop.f32.mrb[0].mxu0
    %v8158 = vadd.f32 0.0, %v8157
    %v8159 = vpop.f32.mrb[0].mxu0
    %v8160 = vpop.f32.mrb[0].mxu0
    %v8161 = vadd.f32 0.0, %v8160
    %v8162 = vpop.f32.mrb[0].mxu0
    %8163 = vdwg.mxu0
    %v8164 = vpack.c.bf16 %v8137, %v8134
    %v8165 = vpack.c.bf16 %v8145, %v8142
    %v8166 = vpack.c.bf16 %v8153, %v8150
    %v8167 = vpack.c.bf16 %v8161, %v8158
    %8168 = vrot.lane.b32.xlu0 %v6342, 112
    %v8169 = vpop.permute.xlu0 %8168
    %8170 = vrot.lane.b32.xlu0 %v6344, 112
    %v8171 = vpop.permute.xlu0 %8170
    %8172 = vrot.lane.b32.xlu0 %v6346, 112
    %v8173 = vpop.permute.xlu0 %8172
    %8174 = vrot.lane.b32.xlu0 %v6348, 112
    %v8175 = vpop.permute.xlu0 %8174
    %8176 = vrot.lane.b32.xlu0 %v6342, 48
    %v8177 = vpop.permute.xlu0 %8176
    %8178 = vrot.lane.b32.xlu0 %v6344, 48
    %v8179 = vpop.permute.xlu0 %8178
    %8180 = vrot.lane.b32.xlu0 %v6346, 48
    %v8181 = vpop.permute.xlu0 %8180
    %8182 = vrot.lane.b32.xlu0 %v6348, 48
    %v8183 = vpop.permute.xlu0 %8182
    %v8185 = vsel %vm2161, %v8169, 0
    %v8188 = vsel %vm2161, %v8171, 0
    %v8191 = vsel %vm2161, %v8173, 0
    %v8194 = vsel %vm2161, %v8175, 0
    %v8197 = vsel %vm2161, %v8177, 0
    %v8200 = vsel %vm2161, %v8179, 0
    %v8203 = vsel %vm2161, %v8181, 0
    %v8206 = vsel %vm2161, %v8183, 0
    %8208 = vmatprep.subr.bf16.mxu0 0
    %8209 = vmatpush1.bf16.xpose.msra.mxu0 %v8197
    %8210 = vmatprep.subr.bf16.mxu0 0
    %8211 = vmatpush1.bf16.xpose.msra.mxu0 %v8200
    %8212 = vmatprep.subr.bf16.mxu0 0
    %8213 = vmatpush1.bf16.xpose.msra.mxu0 %v8203
    %8214 = vmatprep.subr.bf16.mxu0 0
    %8215 = vmatpush1.bf16.xpose.msra.mxu0 %v8206
    %8216 = vmatprep.subr.bf16.mxu0 0
    %8217 = vmatpush1.bf16.xpose.msra.mxu0 0
    %8218 = vmatprep.subr.bf16.mxu0 0
    %8219 = vmatpush1.bf16.xpose.msra.mxu0 0
    %8220 = vmatprep.subr.bf16.mxu0 0
    %8221 = vmatpush1.bf16.xpose.msra.mxu0 0
    %8222 = vmatprep.subr.bf16.mxu0 0
    %8223 = vmatpush1.bf16.xpose.msra.mxu0 0
    %8224 = vmatprep.subr.bf16.mxu0 0
    %8225 = vmatpush1.bf16.xpose.msra.mxu0 0
    %8226 = vmatprep.subr.bf16.mxu0 0
    %8227 = vmatpush1.bf16.xpose.msra.mxu0 0
    %8228 = vmatprep.subr.bf16.mxu0 0
    %8229 = vmatpush1.bf16.xpose.msra.mxu0 0
    %8230 = vmatprep.subr.bf16.mxu0 0
    %8231 = vmatpush1.bf16.xpose.msra.mxu0 0
    %8232 = vmatprep.subr.bf16.mxu0 0
    %8233 = vmatpush1.bf16.xpose.msra.mxu0 0
    %8234 = vmatprep.subr.bf16.mxu0 0
    %8235 = vmatpush1.bf16.xpose.msra.mxu0 0
    %8236 = vmatprep.subr.bf16.mxu0 0
    %8237 = vmatpush1.bf16.xpose.msra.mxu0 0
    %8238 = vmatprep.subr.bf16.mxu0 0
    %8239 = vmatpush1.bf16.xpose.msra.mxu0 0
    %8240 = vmatprep.mubr.bf16.mxu0 0
    %8241 = vmatmul.mubr.bf16.gmra.mrb[0].mxu0 %v8185
    %v8242 = vpop.f32.mrb[0].mxu0
    %v8243 = vadd.f32 0.0, %v8242
    %v8244 = vpop.f32.mrb[0].mxu0
    %v8245 = vpop.f32.mrb[0].mxu0
    %v8246 = vadd.f32 0.0, %v8245
    %v8247 = vpop.f32.mrb[0].mxu0
    %8248 = vmatprep.mubr.bf16.mxu0 0
    %8249 = vmatmul.mubr.bf16.gmra.mrb[0].mxu0 %v8188
    %v8250 = vpop.f32.mrb[0].mxu0
    %v8251 = vadd.f32 0.0, %v8250
    %v8252 = vpop.f32.mrb[0].mxu0
    %v8253 = vpop.f32.mrb[0].mxu0
    %v8254 = vadd.f32 0.0, %v8253
    %v8255 = vpop.f32.mrb[0].mxu0
    %8256 = vmatprep.mubr.bf16.mxu0 0
    %8257 = vmatmul.mubr.bf16.gmra.mrb[0].mxu0 %v8191
    %v8258 = vpop.f32.mrb[0].mxu0
    %v8259 = vadd.f32 0.0, %v8258
    %v8260 = vpop.f32.mrb[0].mxu0
    %v8261 = vpop.f32.mrb[0].mxu0
    %v8262 = vadd.f32 0.0, %v8261
    %v8263 = vpop.f32.mrb[0].mxu0
    %8264 = vmatprep.mubr.bf16.mxu0 0
    %8265 = vmatmul.mubr.bf16.gmra.mrb[0].mxu0 %v8194
    %v8266 = vpop.f32.mrb[0].mxu0
    %v8267 = vadd.f32 0.0, %v8266
    %v8268 = vpop.f32.mrb[0].mxu0
    %v8269 = vpop.f32.mrb[0].mxu0
    %v8270 = vadd.f32 0.0, %v8269
    %v8271 = vpop.f32.mrb[0].mxu0
    %8272 = vdwg.mxu0
    %v8273 = vmul.f32 %v8243, 0.25
    %v8274 = vmul.f32 %v8246, 0.25
    %v8275 = vmul.f32 %v8251, 0.25
    %v8276 = vmul.f32 %v8254, 0.25
    %v8277 = vmul.f32 %v8259, 0.25
    %v8278 = vmul.f32 %v8262, 0.25
    %v8279 = vmul.f32 %v8267, 0.25
    %v8280 = vmul.f32 %v8270, 0.25
    %v8281 = vsel %vm1673, %v8273, -inf
    %8282 = vmax.xlane.f32.xlu0 %v8281
    %v8283 = vpop.xlane.xlu0 %8282
    %v8284 = vsel %vm1673, %v8274, -inf
    %8285 = vmax.xlane.f32.xlu0 %v8284
    %v8286 = vpop.xlane.xlu0 %8285
    %v8287 = vsel %vm1673, %v8275, -inf
    %8288 = vmax.xlane.f32.xlu0 %v8287
    %v8289 = vpop.xlane.xlu0 %8288
    %v8290 = vsel %vm1673, %v8276, -inf
    %8291 = vmax.xlane.f32.xlu0 %v8290
    %v8292 = vpop.xlane.xlu0 %8291
    %v8293 = vsel %vm1673, %v8277, -inf
    %8294 = vmax.xlane.f32.xlu0 %v8293
    %v8295 = vpop.xlane.xlu0 %8294
    %v8296 = vsel %vm1673, %v8278, -inf
    %8297 = vmax.xlane.f32.xlu0 %v8296
    %v8298 = vpop.xlane.xlu0 %8297
    %v8299 = vsel %vm1673, %v8279, -inf
    %8300 = vmax.xlane.f32.xlu0 %v8299
    %v8301 = vpop.xlane.xlu0 %8300
    %v8302 = vsel %vm1673, %v8280, -inf
    %8303 = vmax.xlane.f32.xlu0 %v8302
    %v8304 = vpop.xlane.xlu0 %8303
    %v8305 = vsub.f32 %v8273, %v8283
    %v8306 = vsub.f32 %v8274, %v8286
    %v8307 = vsub.f32 %v8275, %v8289
    %v8308 = vsub.f32 %v8276, %v8292
    %v8309 = vsub.f32 %v8277, %v8295
    %v8310 = vsub.f32 %v8278, %v8298
    %v8311 = vsub.f32 %v8279, %v8301
    %v8312 = vsub.f32 %v8280, %v8304
    %v8313 = vmul.f32 %v8305, 1.442695
    %v8314 = vpow.pop %v8313
    %v8315 = vmul.f32 %v8306, 1.442695
    %v8316 = vpow.pop %v8315
    %v8317 = vmul.f32 %v8307, 1.442695
    %v8318 = vpow.pop %v8317
    %v8319 = vmul.f32 %v8308, 1.442695
    %v8320 = vpow.pop %v8319
    %v8321 = vmul.f32 %v8309, 1.442695
    %v8322 = vpow.pop %v8321
    %v8323 = vmul.f32 %v8310, 1.442695
    %v8324 = vpow.pop %v8323
    %v8325 = vmul.f32 %v8311, 1.442695
    %v8326 = vpow.pop %v8325
    %v8327 = vmul.f32 %v8312, 1.442695
    %v8328 = vpow.pop %v8327
    %v8329 = vsel %vm1673, %v8314, 0.0
    %8330 = vadd.xlane.f32.xlu0 %v8329
    %v8331 = vpop.xlane.xlu0 %8330
    %v8332 = vsel %vm1673, %v8316, 0.0
    %8333 = vadd.xlane.f32.xlu0 %v8332
    %v8334 = vpop.xlane.xlu0 %8333
    %v8335 = vsel %vm1673, %v8318, 0.0
    %8336 = vadd.xlane.f32.xlu0 %v8335
    %v8337 = vpop.xlane.xlu0 %8336
    %v8338 = vsel %vm1673, %v8320, 0.0
    %8339 = vadd.xlane.f32.xlu0 %v8338
    %v8340 = vpop.xlane.xlu0 %8339
    %v8341 = vsel %vm1673, %v8322, 0.0
    %8342 = vadd.xlane.f32.xlu0 %v8341
    %v8343 = vpop.xlane.xlu0 %8342
    %v8344 = vsel %vm1673, %v8324, 0.0
    %8345 = vadd.xlane.f32.xlu0 %v8344
    %v8346 = vpop.xlane.xlu0 %8345
    %v8347 = vsel %vm1673, %v8326, 0.0
    %8348 = vadd.xlane.f32.xlu0 %v8347
    %v8349 = vpop.xlane.xlu0 %8348
    %v8350 = vsel %vm1673, %v8328, 0.0
    %8351 = vadd.xlane.f32.xlu0 %v8350
    %v8352 = vpop.xlane.xlu0 %8351
    %v8353 = vrcp.pop %v8331
    %v8354 = vrcp.pop %v8334
    %v8355 = vrcp.pop %v8337
    %v8356 = vrcp.pop %v8340
    %v8357 = vrcp.pop %v8343
    %v8358 = vrcp.pop %v8346
    %v8359 = vrcp.pop %v8349
    %v8360 = vrcp.pop %v8352
    %v8361 = vmul.f32 %v8314, %v8353
    %v8362 = vmul.f32 %v8316, %v8354
    %v8363 = vmul.f32 %v8318, %v8355
    %v8364 = vmul.f32 %v8320, %v8356
    %v8365 = vmul.f32 %v8322, %v8357
    %v8366 = vmul.f32 %v8324, %v8358
    %v8367 = vmul.f32 %v8326, %v8359
    %v8368 = vmul.f32 %v8328, %v8360
    %v8369 = vpack.c.bf16 %v8362, %v8361
    %v8370 = vpack.c.bf16 %v8364, %v8363
    %v8371 = vpack.c.bf16 %v8366, %v8365
    %v8372 = vpack.c.bf16 %v8368, %v8367
    %8377 = vrot.lane.b32.xlu0 %v6343, 112
    %v8378 = vpop.permute.xlu0 %8377
    %8379 = vrot.lane.b32.xlu0 %v6345, 112
    %v8380 = vpop.permute.xlu0 %8379
    %8381 = vrot.lane.b32.xlu0 %v6347, 112
    %v8382 = vpop.permute.xlu0 %8381
    %8383 = vrot.lane.b32.xlu0 %v6349, 112
    %v8384 = vpop.permute.xlu0 %8383
    %v8390 = vsel %vm1673, %v8369, 0
    %v8393 = vsel %vm1673, %v8370, 0
    %v8396 = vsel %vm1673, %v8371, 0
    %v8399 = vsel %vm1673, %v8372, 0
    %8401 = vmatprep.subr.bf16.mxu0 0
    %8402 = vmatpush1.bf16.msra.mxu0 %v8378
    %8403 = vmatprep.subr.bf16.mxu0 0
    %8404 = vmatpush1.bf16.msra.mxu0 %v8380
    %8405 = vmatprep.subr.bf16.mxu0 0
    %8406 = vmatpush1.bf16.msra.mxu0 %v8382
    %8407 = vmatprep.subr.bf16.mxu0 0
    %8408 = vmatpush1.bf16.msra.mxu0 %v8384
    %8409 = vmatprep.subr.bf16.mxu0 0
    %8410 = vmatpush1.bf16.msra.mxu0 0
    %8411 = vmatprep.subr.bf16.mxu0 0
    %8412 = vmatpush1.bf16.msra.mxu0 0
    %8413 = vmatprep.subr.bf16.mxu0 0
    %8414 = vmatpush1.bf16.msra.mxu0 0
    %8415 = vmatprep.subr.bf16.mxu0 0
    %8416 = vmatpush1.bf16.msra.mxu0 0
    %8417 = vmatprep.subr.bf16.mxu0 0
    %8418 = vmatpush1.bf16.msra.mxu0 0
    %8419 = vmatprep.subr.bf16.mxu0 0
    %8420 = vmatpush1.bf16.msra.mxu0 0
    %8421 = vmatprep.subr.bf16.mxu0 0
    %8422 = vmatpush1.bf16.msra.mxu0 0
    %8423 = vmatprep.subr.bf16.mxu0 0
    %8424 = vmatpush1.bf16.msra.mxu0 0
    %8425 = vmatprep.subr.bf16.mxu0 0
    %8426 = vmatpush1.bf16.msra.mxu0 0
    %8427 = vmatprep.subr.bf16.mxu0 0
    %8428 = vmatpush1.bf16.msra.mxu0 0
    %8429 = vmatprep.subr.bf16.mxu0 0
    %8430 = vmatpush1.bf16.msra.mxu0 0
    %8431 = vmatprep.subr.bf16.mxu0 0
    %8432 = vmatpush1.bf16.msra.mxu0 0
    %8433 = vmatprep.mubr.bf16.mxu0 0
    %8434 = vmatmul.mubr.bf16.gmra.mrb[0].mxu0 %v8390
    %v8435 = vpop.f32.mrb[0].mxu0
    %v8436 = vadd.f32 0.0, %v8435
    %v8437 = vpop.f32.mrb[0].mxu0
    %v8438 = vpop.f32.mrb[0].mxu0
    %v8439 = vadd.f32 0.0, %v8438
    %v8440 = vpop.f32.mrb[0].mxu0
    %8441 = vmatprep.mubr.bf16.mxu0 0
    %8442 = vmatmul.mubr.bf16.gmra.mrb[0].mxu0 %v8393
    %v8443 = vpop.f32.mrb[0].mxu0
    %v8444 = vadd.f32 0.0, %v8443
    %v8445 = vpop.f32.mrb[0].mxu0
    %v8446 = vpop.f32.mrb[0].mxu0
    %v8447 = vadd.f32 0.0, %v8446
    %v8448 = vpop.f32.mrb[0].mxu0
    %8449 = vmatprep.mubr.bf16.mxu0 0
    %8450 = vmatmul.mubr.bf16.gmra.mrb[0].mxu0 %v8396
    %v8451 = vpop.f32.mrb[0].mxu0
    %v8452 = vadd.f32 0.0, %v8451
    %v8453 = vpop.f32.mrb[0].mxu0
    %v8454 = vpop.f32.mrb[0].mxu0
    %v8455 = vadd.f32 0.0, %v8454
    %v8456 = vpop.f32.mrb[0].mxu0
    %8457 = vmatprep.mubr.bf16.mxu0 0
    %8458 = vmatmul.mubr.bf16.gmra.mrb[0].mxu0 %v8399
    %v8459 = vpop.f32.mrb[0].mxu0
    %v8460 = vadd.f32 0.0, %v8459
    %v8461 = vpop.f32.mrb[0].mxu0
    %v8462 = vpop.f32.mrb[0].mxu0
    %v8463 = vadd.f32 0.0, %v8462
    %v8464 = vpop.f32.mrb[0].mxu0
    %8465 = vdwg.mxu0
    %v8466 = vpack.c.bf16 %v8439, %v8436
    %v8467 = vpack.c.bf16 %v8447, %v8444
    %v8468 = vpack.c.bf16 %v8455, %v8452
    %v8469 = vpack.c.bf16 %v8463, %v8460
    %v8471 = vsel %vm2161, %v8466, 0
    %v8474 = vsel %vm2161, %v8467, 0
    %v8477 = vsel %vm2161, %v8468, 0
    %v8480 = vsel %vm2161, %v8469, 0
    %8482 = vmatprep.subr.bf16.mxu0 0
    %8483 = vmatpush1.bf16.msra.mxu0 %v6942
    %8484 = vmatprep.subr.bf16.mxu0 0
    %8485 = vmatpush1.bf16.msra.mxu0 0
    %8486 = vmatprep.subr.bf16.mxu0 0
    %8487 = vmatpush1.bf16.msra.mxu0 0
    %8488 = vmatprep.subr.bf16.mxu0 0
    %8489 = vmatpush1.bf16.msra.mxu0 0
    %8490 = vmatprep.subr.bf16.mxu0 0
    %8491 = vmatpush1.bf16.msra.mxu0 0
    %8492 = vmatprep.subr.bf16.mxu0 0
    %8493 = vmatpush1.bf16.msra.mxu0 0
    %8494 = vmatprep.subr.bf16.mxu0 0
    %8495 = vmatpush1.bf16.msra.mxu0 0
    %8496 = vmatprep.subr.bf16.mxu0 0
    %8497 = vmatpush1.bf16.msra.mxu0 0
    %8498 = vmatprep.subr.bf16.mxu0 0
    %8499 = vmatpush1.bf16.msra.mxu0 0
    %8500 = vmatprep.subr.bf16.mxu0 0
    %8501 = vmatpush1.bf16.msra.mxu0 0
    %8502 = vmatprep.subr.bf16.mxu0 0
    %8503 = vmatpush1.bf16.msra.mxu0 0
    %8504 = vmatprep.subr.bf16.mxu0 0
    %8505 = vmatpush1.bf16.msra.mxu0 0
    %8506 = vmatprep.subr.bf16.mxu0 0
    %8507 = vmatpush1.bf16.msra.mxu0 0
    %8508 = vmatprep.subr.bf16.mxu0 0
    %8509 = vmatpush1.bf16.msra.mxu0 0
    %8510 = vmatprep.subr.bf16.mxu0 0
    %8511 = vmatpush1.bf16.msra.mxu0 0
    %8512 = vmatprep.subr.bf16.mxu0 0
    %8513 = vmatpush1.bf16.msra.mxu0 0
    %8514 = vmatprep.mubr.bf16.mxu0 0
    %8515 = vmatmul.mubr.bf16.gmra.mrb[0].mxu0 %v8471
    %v8516 = vpop.f32.mrb[0].mxu0
    %v8517 = vadd.f32 0.0, %v8516
    %v8518 = vpop.f32.mrb[0].mxu0
    %v8519 = vpop.f32.mrb[0].mxu0
    %v8520 = vadd.f32 0.0, %v8519
    %v8521 = vpop.f32.mrb[0].mxu0
    %8522 = vmatprep.mubr.bf16.mxu0 0
    %8523 = vmatmul.mubr.bf16.gmra.mrb[0].mxu0 %v8474
    %v8524 = vpop.f32.mrb[0].mxu0
    %v8525 = vadd.f32 0.0, %v8524
    %v8526 = vpop.f32.mrb[0].mxu0
    %v8527 = vpop.f32.mrb[0].mxu0
    %v8528 = vadd.f32 0.0, %v8527
    %v8529 = vpop.f32.mrb[0].mxu0
    %8530 = vmatprep.mubr.bf16.mxu0 0
    %8531 = vmatmul.mubr.bf16.gmra.mrb[0].mxu0 %v8477
    %v8532 = vpop.f32.mrb[0].mxu0
    %v8533 = vadd.f32 0.0, %v8532
    %v8534 = vpop.f32.mrb[0].mxu0
    %v8535 = vpop.f32.mrb[0].mxu0
    %v8536 = vadd.f32 0.0, %v8535
    %v8537 = vpop.f32.mrb[0].mxu0
    %8538 = vmatprep.mubr.bf16.mxu0 0
    %8539 = vmatmul.mubr.bf16.gmra.mrb[0].mxu0 %v8480
    %v8540 = vpop.f32.mrb[0].mxu0
    %v8541 = vadd.f32 0.0, %v8540
    %v8542 = vpop.f32.mrb[0].mxu0
    %v8543 = vpop.f32.mrb[0].mxu0
    %v8544 = vadd.f32 0.0, %v8543
    %v8545 = vpop.f32.mrb[0].mxu0
    %8546 = vdwg.mxu0
    %v8548 = vsel %vm2161, %v8164, 0
    %v8551 = vsel %vm2161, %v8165, 0
    %v8554 = vsel %vm2161, %v8166, 0
    %v8557 = vsel %vm2161, %v8167, 0
    %8559 = vmatprep.subr.bf16.mxu0 0
    %8560 = vmatpush1.bf16.msra.mxu0 %v7025
    %8561 = vmatprep.subr.bf16.mxu0 0
    %8562 = vmatpush1.bf16.msra.mxu0 0
    %8563 = vmatprep.subr.bf16.mxu0 0
    %8564 = vmatpush1.bf16.msra.mxu0 0
    %8565 = vmatprep.subr.bf16.mxu0 0
    %8566 = vmatpush1.bf16.msra.mxu0 0
    %8567 = vmatprep.subr.bf16.mxu0 0
    %8568 = vmatpush1.bf16.msra.mxu0 0
    %8569 = vmatprep.subr.bf16.mxu0 0
    %8570 = vmatpush1.bf16.msra.mxu0 0
    %8571 = vmatprep.subr.bf16.mxu0 0
    %8572 = vmatpush1.bf16.msra.mxu0 0
    %8573 = vmatprep.subr.bf16.mxu0 0
    %8574 = vmatpush1.bf16.msra.mxu0 0
    %8575 = vmatprep.subr.bf16.mxu0 0
    %8576 = vmatpush1.bf16.msra.mxu0 0
    %8577 = vmatprep.subr.bf16.mxu0 0
    %8578 = vmatpush1.bf16.msra.mxu0 0
    %8579 = vmatprep.subr.bf16.mxu0 0
    %8580 = vmatpush1.bf16.msra.mxu0 0
    %8581 = vmatprep.subr.bf16.mxu0 0
    %8582 = vmatpush1.bf16.msra.mxu0 0
    %8583 = vmatprep.subr.bf16.mxu0 0
    %8584 = vmatpush1.bf16.msra.mxu0 0
    %8585 = vmatprep.subr.bf16.mxu0 0
    %8586 = vmatpush1.bf16.msra.mxu0 0
    %8587 = vmatprep.subr.bf16.mxu0 0
    %8588 = vmatpush1.bf16.msra.mxu0 0
    %8589 = vmatprep.subr.bf16.mxu0 0
    %8590 = vmatpush1.bf16.msra.mxu0 0
    %8591 = vmatprep.mubr.bf16.mxu0 0
    %8592 = vmatmul.mubr.bf16.gmra.mrb[0].mxu0 %v8548
    %v8593 = vpop.f32.mrb[0].mxu0
    %v8594 = vadd.f32 %v8517, %v8593
    %v8595 = vpop.f32.mrb[0].mxu0
    %v8596 = vpop.f32.mrb[0].mxu0
    %v8597 = vadd.f32 %v8520, %v8596
    %v8598 = vpop.f32.mrb[0].mxu0
    %8599 = vmatprep.mubr.bf16.mxu0 0
    %8600 = vmatmul.mubr.bf16.gmra.mrb[0].mxu0 %v8551
    %v8601 = vpop.f32.mrb[0].mxu0
    %v8602 = vadd.f32 %v8525, %v8601
    %v8603 = vpop.f32.mrb[0].mxu0
    %v8604 = vpop.f32.mrb[0].mxu0
    %v8605 = vadd.f32 %v8528, %v8604
    %v8606 = vpop.f32.mrb[0].mxu0
    %8607 = vmatprep.mubr.bf16.mxu0 0
    %8608 = vmatmul.mubr.bf16.gmra.mrb[0].mxu0 %v8554
    %v8609 = vpop.f32.mrb[0].mxu0
    %v8610 = vadd.f32 %v8533, %v8609
    %v8611 = vpop.f32.mrb[0].mxu0
    %v8612 = vpop.f32.mrb[0].mxu0
    %v8613 = vadd.f32 %v8536, %v8612
    %v8614 = vpop.f32.mrb[0].mxu0
    %8615 = vmatprep.mubr.bf16.mxu0 0
    %8616 = vmatmul.mubr.bf16.gmra.mrb[0].mxu0 %v8557
    %v8617 = vpop.f32.mrb[0].mxu0
    %v8618 = vadd.f32 %v8541, %v8617
    %v8619 = vpop.f32.mrb[0].mxu0
    %v8620 = vpop.f32.mrb[0].mxu0
    %v8621 = vadd.f32 %v8544, %v8620
    %v8622 = vpop.f32.mrb[0].mxu0
    %8623 = vdwg.mxu0
    %8624 = vrot.lane.b32.xlu0 %v6342, 96
    %v8625 = vpop.permute.xlu0 %8624
    %8626 = vrot.lane.b32.xlu0 %v6344, 96
    %v8627 = vpop.permute.xlu0 %8626
    %8628 = vrot.lane.b32.xlu0 %v6346, 96
    %v8629 = vpop.permute.xlu0 %8628
    %8630 = vrot.lane.b32.xlu0 %v6348, 96
    %v8631 = vpop.permute.xlu0 %8630
    %8632 = vrot.lane.b32.xlu0 %v6342, 32
    %v8633 = vpop.permute.xlu0 %8632
    %8634 = vrot.lane.b32.xlu0 %v6344, 32
    %v8635 = vpop.permute.xlu0 %8634
    %8636 = vrot.lane.b32.xlu0 %v6346, 32
    %v8637 = vpop.permute.xlu0 %8636
    %8638 = vrot.lane.b32.xlu0 %v6348, 32
    %v8639 = vpop.permute.xlu0 %8638
    %v8641 = vsel %vm2161, %v8625, 0
    %v8644 = vsel %vm2161, %v8627, 0
    %v8647 = vsel %vm2161, %v8629, 0
    %v8650 = vsel %vm2161, %v8631, 0
    %v8653 = vsel %vm2161, %v8633, 0
    %v8656 = vsel %vm2161, %v8635, 0
    %v8659 = vsel %vm2161, %v8637, 0
    %v8662 = vsel %vm2161, %v8639, 0
    %8664 = vmatprep.subr.bf16.mxu0 0
    %8665 = vmatpush1.bf16.xpose.msra.mxu0 %v8653
    %8666 = vmatprep.subr.bf16.mxu0 0
    %8667 = vmatpush1.bf16.xpose.msra.mxu0 %v8656
    %8668 = vmatprep.subr.bf16.mxu0 0
    %8669 = vmatpush1.bf16.xpose.msra.mxu0 %v8659
    %8670 = vmatprep.subr.bf16.mxu0 0
    %8671 = vmatpush1.bf16.xpose.msra.mxu0 %v8662
    %8672 = vmatprep.subr.bf16.mxu0 0
    %8673 = vmatpush1.bf16.xpose.msra.mxu0 0
    %8674 = vmatprep.subr.bf16.mxu0 0
    %8675 = vmatpush1.bf16.xpose.msra.mxu0 0
    %8676 = vmatprep.subr.bf16.mxu0 0
    %8677 = vmatpush1.bf16.xpose.msra.mxu0 0
    %8678 = vmatprep.subr.bf16.mxu0 0
    %8679 = vmatpush1.bf16.xpose.msra.mxu0 0
    %8680 = vmatprep.subr.bf16.mxu0 0
    %8681 = vmatpush1.bf16.xpose.msra.mxu0 0
    %8682 = vmatprep.subr.bf16.mxu0 0
    %8683 = vmatpush1.bf16.xpose.msra.mxu0 0
    %8684 = vmatprep.subr.bf16.mxu0 0
    %8685 = vmatpush1.bf16.xpose.msra.mxu0 0
    %8686 = vmatprep.subr.bf16.mxu0 0
    %8687 = vmatpush1.bf16.xpose.msra.mxu0 0
    %8688 = vmatprep.subr.bf16.mxu0 0
    %8689 = vmatpush1.bf16.xpose.msra.mxu0 0
    %8690 = vmatprep.subr.bf16.mxu0 0
    %8691 = vmatpush1.bf16.xpose.msra.mxu0 0
    %8692 = vmatprep.subr.bf16.mxu0 0
    %8693 = vmatpush1.bf16.xpose.msra.mxu0 0
    %8694 = vmatprep.subr.bf16.mxu0 0
    %8695 = vmatpush1.bf16.xpose.msra.mxu0 0
    %8696 = vmatprep.mubr.bf16.mxu0 0
    %8697 = vmatmul.mubr.bf16.gmra.mrb[0].mxu0 %v8641
    %v8698 = vpop.f32.mrb[0].mxu0
    %v8699 = vadd.f32 0.0, %v8698
    %v8700 = vpop.f32.mrb[0].mxu0
    %v8701 = vpop.f32.mrb[0].mxu0
    %v8702 = vadd.f32 0.0, %v8701
    %v8703 = vpop.f32.mrb[0].mxu0
    %8704 = vmatprep.mubr.bf16.mxu0 0
    %8705 = vmatmul.mubr.bf16.gmra.mrb[0].mxu0 %v8644
    %v8706 = vpop.f32.mrb[0].mxu0
    %v8707 = vadd.f32 0.0, %v8706
    %v8708 = vpop.f32.mrb[0].mxu0
    %v8709 = vpop.f32.mrb[0].mxu0
    %v8710 = vadd.f32 0.0, %v8709
    %v8711 = vpop.f32.mrb[0].mxu0
    %8712 = vmatprep.mubr.bf16.mxu0 0
    %8713 = vmatmul.mubr.bf16.gmra.mrb[0].mxu0 %v8647
    %v8714 = vpop.f32.mrb[0].mxu0
    %v8715 = vadd.f32 0.0, %v8714
    %v8716 = vpop.f32.mrb[0].mxu0
    %v8717 = vpop.f32.mrb[0].mxu0
    %v8718 = vadd.f32 0.0, %v8717
    %v8719 = vpop.f32.mrb[0].mxu0
    %8720 = vmatprep.mubr.bf16.mxu0 0
    %8721 = vmatmul.mubr.bf16.gmra.mrb[0].mxu0 %v8650
    %v8722 = vpop.f32.mrb[0].mxu0
    %v8723 = vadd.f32 0.0, %v8722
    %v8724 = vpop.f32.mrb[0].mxu0
    %v8725 = vpop.f32.mrb[0].mxu0
    %v8726 = vadd.f32 0.0, %v8725
    %v8727 = vpop.f32.mrb[0].mxu0
    %8728 = vdwg.mxu0
    %v8729 = vmul.f32 %v8699, 0.25
    %v8730 = vmul.f32 %v8702, 0.25
    %v8731 = vmul.f32 %v8707, 0.25
    %v8732 = vmul.f32 %v8710, 0.25
    %v8733 = vmul.f32 %v8715, 0.25
    %v8734 = vmul.f32 %v8718, 0.25
    %v8735 = vmul.f32 %v8723, 0.25
    %v8736 = vmul.f32 %v8726, 0.25
    %v8737 = vsel %vm1673, %v8729, -inf
    %8738 = vmax.xlane.f32.xlu0 %v8737
    %v8739 = vpop.xlane.xlu0 %8738
    %v8740 = vsel %vm1673, %v8730, -inf
    %8741 = vmax.xlane.f32.xlu0 %v8740
    %v8742 = vpop.xlane.xlu0 %8741
    %v8743 = vsel %vm1673, %v8731, -inf
    %8744 = vmax.xlane.f32.xlu0 %v8743
    %v8745 = vpop.xlane.xlu0 %8744
    %v8746 = vsel %vm1673, %v8732, -inf
    %8747 = vmax.xlane.f32.xlu0 %v8746
    %v8748 = vpop.xlane.xlu0 %8747
    %v8749 = vsel %vm1673, %v8733, -inf
    %8750 = vmax.xlane.f32.xlu0 %v8749
    %v8751 = vpop.xlane.xlu0 %8750
    %v8752 = vsel %vm1673, %v8734, -inf
    %8753 = vmax.xlane.f32.xlu0 %v8752
    %v8754 = vpop.xlane.xlu0 %8753
    %v8755 = vsel %vm1673, %v8735, -inf
    %8756 = vmax.xlane.f32.xlu0 %v8755
    %v8757 = vpop.xlane.xlu0 %8756
    %v8758 = vsel %vm1673, %v8736, -inf
    %8759 = vmax.xlane.f32.xlu0 %v8758
    %v8760 = vpop.xlane.xlu0 %8759
    %v8761 = vsub.f32 %v8729, %v8739
    %v8762 = vsub.f32 %v8730, %v8742
    %v8763 = vsub.f32 %v8731, %v8745
    %v8764 = vsub.f32 %v8732, %v8748
    %v8765 = vsub.f32 %v8733, %v8751
    %v8766 = vsub.f32 %v8734, %v8754
    %v8767 = vsub.f32 %v8735, %v8757
    %v8768 = vsub.f32 %v8736, %v8760
    %v8769 = vmul.f32 %v8761, 1.442695
    %v8770 = vpow.pop %v8769
    %v8771 = vmul.f32 %v8762, 1.442695
    %v8772 = vpow.pop %v8771
    %v8773 = vmul.f32 %v8763, 1.442695
    %v8774 = vpow.pop %v8773
    %v8775 = vmul.f32 %v8764, 1.442695
    %v8776 = vpow.pop %v8775
    %v8777 = vmul.f32 %v8765, 1.442695
    %v8778 = vpow.pop %v8777
    %v8779 = vmul.f32 %v8766, 1.442695
    %v8780 = vpow.pop %v8779
    %v8781 = vmul.f32 %v8767, 1.442695
    %v8782 = vpow.pop %v8781
    %v8783 = vmul.f32 %v8768, 1.442695
    %v8784 = vpow.pop %v8783
    %v8785 = vsel %vm1673, %v8770, 0.0
    %8786 = vadd.xlane.f32.xlu0 %v8785
    %v8787 = vpop.xlane.xlu0 %8786
    %v8788 = vsel %vm1673, %v8772, 0.0
    %8789 = vadd.xlane.f32.xlu0 %v8788
    %v8790 = vpop.xlane.xlu0 %8789
    %v8791 = vsel %vm1673, %v8774, 0.0
    %8792 = vadd.xlane.f32.xlu0 %v8791
    %v8793 = vpop.xlane.xlu0 %8792
    %v8794 = vsel %vm1673, %v8776, 0.0
    %8795 = vadd.xlane.f32.xlu0 %v8794
    %v8796 = vpop.xlane.xlu0 %8795
    %v8797 = vsel %vm1673, %v8778, 0.0
    %8798 = vadd.xlane.f32.xlu0 %v8797
    %v8799 = vpop.xlane.xlu0 %8798
    %v8800 = vsel %vm1673, %v8780, 0.0
    %8801 = vadd.xlane.f32.xlu0 %v8800
    %v8802 = vpop.xlane.xlu0 %8801
    %v8803 = vsel %vm1673, %v8782, 0.0
    %8804 = vadd.xlane.f32.xlu0 %v8803
    %v8805 = vpop.xlane.xlu0 %8804
    %v8806 = vsel %vm1673, %v8784, 0.0
    %8807 = vadd.xlane.f32.xlu0 %v8806
    %v8808 = vpop.xlane.xlu0 %8807
    %v8809 = vrcp.pop %v8787
    %v8810 = vrcp.pop %v8790
    %v8811 = vrcp.pop %v8793
    %v8812 = vrcp.pop %v8796
    %v8813 = vrcp.pop %v8799
    %v8814 = vrcp.pop %v8802
    %v8815 = vrcp.pop %v8805
    %v8816 = vrcp.pop %v8808
    %v8817 = vmul.f32 %v8770, %v8809
    %v8818 = vmul.f32 %v8772, %v8810
    %v8819 = vmul.f32 %v8774, %v8811
    %v8820 = vmul.f32 %v8776, %v8812
    %v8821 = vmul.f32 %v8778, %v8813
    %v8822 = vmul.f32 %v8780, %v8814
    %v8823 = vmul.f32 %v8782, %v8815
    %v8824 = vmul.f32 %v8784, %v8816
    %v8825 = vpack.c.bf16 %v8818, %v8817
    %v8826 = vpack.c.bf16 %v8820, %v8819
    %v8827 = vpack.c.bf16 %v8822, %v8821
    %v8828 = vpack.c.bf16 %v8824, %v8823
    %8829 = vrot.lane.b32.xlu0 %v6343, 96
    %v8830 = vpop.permute.xlu0 %8829
    %8831 = vrot.lane.b32.xlu0 %v6345, 96
    %v8832 = vpop.permute.xlu0 %8831
    %8833 = vrot.lane.b32.xlu0 %v6347, 96
    %v8834 = vpop.permute.xlu0 %8833
    %8835 = vrot.lane.b32.xlu0 %v6349, 96
    %v8836 = vpop.permute.xlu0 %8835
    %v8842 = vsel %vm1673, %v8825, 0
    %v8845 = vsel %vm1673, %v8826, 0
    %v8848 = vsel %vm1673, %v8827, 0
    %v8851 = vsel %vm1673, %v8828, 0
    %8853 = vmatprep.subr.bf16.mxu0 0
    %8854 = vmatpush1.bf16.msra.mxu0 %v8830
    %8855 = vmatprep.subr.bf16.mxu0 0
    %8856 = vmatpush1.bf16.msra.mxu0 %v8832
    %8857 = vmatprep.subr.bf16.mxu0 0
    %8858 = vmatpush1.bf16.msra.mxu0 %v8834
    %8859 = vmatprep.subr.bf16.mxu0 0
    %8860 = vmatpush1.bf16.msra.mxu0 %v8836
    %8861 = vmatprep.subr.bf16.mxu0 0
    %8862 = vmatpush1.bf16.msra.mxu0 0
    %8863 = vmatprep.subr.bf16.mxu0 0
    %8864 = vmatpush1.bf16.msra.mxu0 0
    %8865 = vmatprep.subr.bf16.mxu0 0
    %8866 = vmatpush1.bf16.msra.mxu0 0
    %8867 = vmatprep.subr.bf16.mxu0 0
    %8868 = vmatpush1.bf16.msra.mxu0 0
    %8869 = vmatprep.subr.bf16.mxu0 0
    %8870 = vmatpush1.bf16.msra.mxu0 0
    %8871 = vmatprep.subr.bf16.mxu0 0
    %8872 = vmatpush1.bf16.msra.mxu0 0
    %8873 = vmatprep.subr.bf16.mxu0 0
    %8874 = vmatpush1.bf16.msra.mxu0 0
    %8875 = vmatprep.subr.bf16.mxu0 0
    %8876 = vmatpush1.bf16.msra.mxu0 0
    %8877 = vmatprep.subr.bf16.mxu0 0
    %8878 = vmatpush1.bf16.msra.mxu0 0
    %8879 = vmatprep.subr.bf16.mxu0 0
    %8880 = vmatpush1.bf16.msra.mxu0 0
    %8881 = vmatprep.subr.bf16.mxu0 0
    %8882 = vmatpush1.bf16.msra.mxu0 0
    %8883 = vmatprep.subr.bf16.mxu0 0
    %8884 = vmatpush1.bf16.msra.mxu0 0
    %8885 = vmatprep.mubr.bf16.mxu0 0
    %8886 = vmatmul.mubr.bf16.gmra.mrb[0].mxu0 %v8842
    %v8887 = vpop.f32.mrb[0].mxu0
    %v8888 = vadd.f32 0.0, %v8887
    %v8889 = vpop.f32.mrb[0].mxu0
    %v8890 = vpop.f32.mrb[0].mxu0
    %v8891 = vadd.f32 0.0, %v8890
    %v8892 = vpop.f32.mrb[0].mxu0
    %8893 = vmatprep.mubr.bf16.mxu0 0
    %8894 = vmatmul.mubr.bf16.gmra.mrb[0].mxu0 %v8845
    %v8895 = vpop.f32.mrb[0].mxu0
    %v8896 = vadd.f32 0.0, %v8895
    %v8897 = vpop.f32.mrb[0].mxu0
    %v8898 = vpop.f32.mrb[0].mxu0
    %v8899 = vadd.f32 0.0, %v8898
    %v8900 = vpop.f32.mrb[0].mxu0
    %8901 = vmatprep.mubr.bf16.mxu0 0
    %8902 = vmatmul.mubr.bf16.gmra.mrb[0].mxu0 %v8848
    %v8903 = vpop.f32.mrb[0].mxu0
    %v8904 = vadd.f32 0.0, %v8903
    %v8905 = vpop.f32.mrb[0].mxu0
    %v8906 = vpop.f32.mrb[0].mxu0
    %v8907 = vadd.f32 0.0, %v8906
    %v8908 = vpop.f32.mrb[0].mxu0
    %8909 = vmatprep.mubr.bf16.mxu0 0
    %8910 = vmatmul.mubr.bf16.gmra.mrb[0].mxu0 %v8851
    %v8911 = vpop.f32.mrb[0].mxu0
    %v8912 = vadd.f32 0.0, %v8911
    %v8913 = vpop.f32.mrb[0].mxu0
    %v8914 = vpop.f32.mrb[0].mxu0
    %v8915 = vadd.f32 0.0, %v8914
    %v8916 = vpop.f32.mrb[0].mxu0
    %8917 = vdwg.mxu0
    %v8918 = vpack.c.bf16 %v8891, %v8888
    %v8919 = vpack.c.bf16 %v8899, %v8896
    %v8920 = vpack.c.bf16 %v8907, %v8904
    %v8921 = vpack.c.bf16 %v8915, %v8912
    %v8923 = vsel %vm2161, %v8918, 0
    %v8926 = vsel %vm2161, %v8919, 0
    %v8929 = vsel %vm2161, %v8920, 0
    %v8932 = vsel %vm2161, %v8921, 0
    %8934 = vmatprep.subr.bf16.mxu0 0
    %8935 = vmatpush1.bf16.msra.mxu0 %v7408
    %8936 = vmatprep.subr.bf16.mxu0 0
    %8937 = vmatpush1.bf16.msra.mxu0 0
    %8938 = vmatprep.subr.bf16.mxu0 0
    %8939 = vmatpush1.bf16.msra.mxu0 0
    %8940 = vmatprep.subr.bf16.mxu0 0
    %8941 = vmatpush1.bf16.msra.mxu0 0
    %8942 = vmatprep.subr.bf16.mxu0 0
    %8943 = vmatpush1.bf16.msra.mxu0 0
    %8944 = vmatprep.subr.bf16.mxu0 0
    %8945 = vmatpush1.bf16.msra.mxu0 0
    %8946 = vmatprep.subr.bf16.mxu0 0
    %8947 = vmatpush1.bf16.msra.mxu0 0
    %8948 = vmatprep.subr.bf16.mxu0 0
    %8949 = vmatpush1.bf16.msra.mxu0 0
    %8950 = vmatprep.subr.bf16.mxu0 0
    %8951 = vmatpush1.bf16.msra.mxu0 0
    %8952 = vmatprep.subr.bf16.mxu0 0
    %8953 = vmatpush1.bf16.msra.mxu0 0
    %8954 = vmatprep.subr.bf16.mxu0 0
    %8955 = vmatpush1.bf16.msra.mxu0 0
    %8956 = vmatprep.subr.bf16.mxu0 0
    %8957 = vmatpush1.bf16.msra.mxu0 0
    %8958 = vmatprep.subr.bf16.mxu0 0
    %8959 = vmatpush1.bf16.msra.mxu0 0
    %8960 = vmatprep.subr.bf16.mxu0 0
    %8961 = vmatpush1.bf16.msra.mxu0 0
    %8962 = vmatprep.subr.bf16.mxu0 0
    %8963 = vmatpush1.bf16.msra.mxu0 0
    %8964 = vmatprep.subr.bf16.mxu0 0
    %8965 = vmatpush1.bf16.msra.mxu0 0
    %8966 = vmatprep.mubr.bf16.mxu0 0
    %8967 = vmatmul.mubr.bf16.gmra.mrb[0].mxu0 %v8923
    %v8968 = vpop.f32.mrb[0].mxu0
    %v8969 = vadd.f32 0.0, %v8968
    %v8970 = vpop.f32.mrb[0].mxu0
    %v8971 = vpop.f32.mrb[0].mxu0
    %v8972 = vadd.f32 0.0, %v8971
    %v8973 = vpop.f32.mrb[0].mxu0
    %8974 = vmatprep.mubr.bf16.mxu0 0
    %8975 = vmatmul.mubr.bf16.gmra.mrb[0].mxu0 %v8926
    %v8976 = vpop.f32.mrb[0].mxu0
    %v8977 = vadd.f32 0.0, %v8976
    %v8978 = vpop.f32.mrb[0].mxu0
    %v8979 = vpop.f32.mrb[0].mxu0
    %v8980 = vadd.f32 0.0, %v8979
    %v8981 = vpop.f32.mrb[0].mxu0
    %8982 = vmatprep.mubr.bf16.mxu0 0
    %8983 = vmatmul.mubr.bf16.gmra.mrb[0].mxu0 %v8929
    %v8984 = vpop.f32.mrb[0].mxu0
    %v8985 = vadd.f32 0.0, %v8984
    %v8986 = vpop.f32.mrb[0].mxu0
    %v8987 = vpop.f32.mrb[0].mxu0
    %v8988 = vadd.f32 0.0, %v8987
    %v8989 = vpop.f32.mrb[0].mxu0
    %8990 = vmatprep.mubr.bf16.mxu0 0
    %8991 = vmatmul.mubr.bf16.gmra.mrb[0].mxu0 %v8932
    %v8992 = vpop.f32.mrb[0].mxu0
    %v8993 = vadd.f32 0.0, %v8992
    %v8994 = vpop.f32.mrb[0].mxu0
    %v8995 = vpop.f32.mrb[0].mxu0
    %v8996 = vadd.f32 0.0, %v8995
    %v8997 = vpop.f32.mrb[0].mxu0
    %8998 = vdwg.mxu0
    %v8999 = vadd.f32 %v8594, %v8969
    %v9000 = vadd.f32 %v8597, %v8972
    %v9001 = vadd.f32 %v8602, %v8977
    %v9002 = vadd.f32 %v8605, %v8980
    %v9003 = vadd.f32 %v8610, %v8985
    %v9004 = vadd.f32 %v8613, %v8988
    %v9005 = vadd.f32 %v8618, %v8993
    %v9006 = vadd.f32 %v8621, %v8996
    %9007 = vrot.lane.b32.xlu0 %v6342, 80
    %v9008 = vpop.permute.xlu0 %9007
    %9009 = vrot.lane.b32.xlu0 %v6344, 80
    %v9010 = vpop.permute.xlu0 %9009
    %9011 = vrot.lane.b32.xlu0 %v6346, 80
    %v9012 = vpop.permute.xlu0 %9011
    %9013 = vrot.lane.b32.xlu0 %v6348, 80
    %v9014 = vpop.permute.xlu0 %9013
    %9015 = vrot.lane.b32.xlu0 %v6342, 16
    %v9016 = vpop.permute.xlu0 %9015
    %9017 = vrot.lane.b32.xlu0 %v6344, 16
    %v9018 = vpop.permute.xlu0 %9017
    %9019 = vrot.lane.b32.xlu0 %v6346, 16
    %v9020 = vpop.permute.xlu0 %9019
    %9021 = vrot.lane.b32.xlu0 %v6348, 16
    %v9022 = vpop.permute.xlu0 %9021
    %v9024 = vsel %vm2161, %v9008, 0
    %v9027 = vsel %vm2161, %v9010, 0
    %v9030 = vsel %vm2161, %v9012, 0
    %v9033 = vsel %vm2161, %v9014, 0
    %v9036 = vsel %vm2161, %v9016, 0
    %v9039 = vsel %vm2161, %v9018, 0
    %v9042 = vsel %vm2161, %v9020, 0
    %v9045 = vsel %vm2161, %v9022, 0
    %9047 = vmatprep.subr.bf16.mxu0 0
    %9048 = vmatpush1.bf16.xpose.msra.mxu0 %v9036
    %9049 = vmatprep.subr.bf16.mxu0 0
    %9050 = vmatpush1.bf16.xpose.msra.mxu0 %v9039
    %9051 = vmatprep.subr.bf16.mxu0 0
    %9052 = vmatpush1.bf16.xpose.msra.mxu0 %v9042
    %9053 = vmatprep.subr.bf16.mxu0 0
    %9054 = vmatpush1.bf16.xpose.msra.mxu0 %v9045
    %9055 = vmatprep.subr.bf16.mxu0 0
    %9056 = vmatpush1.bf16.xpose.msra.mxu0 0
    %9057 = vmatprep.subr.bf16.mxu0 0
    %9058 = vmatpush1.bf16.xpose.msra.mxu0 0
    %9059 = vmatprep.subr.bf16.mxu0 0
    %9060 = vmatpush1.bf16.xpose.msra.mxu0 0
    %9061 = vmatprep.subr.bf16.mxu0 0
    %9062 = vmatpush1.bf16.xpose.msra.mxu0 0
    %9063 = vmatprep.subr.bf16.mxu0 0
    %9064 = vmatpush1.bf16.xpose.msra.mxu0 0
    %9065 = vmatprep.subr.bf16.mxu0 0
    %9066 = vmatpush1.bf16.xpose.msra.mxu0 0
    %9067 = vmatprep.subr.bf16.mxu0 0
    %9068 = vmatpush1.bf16.xpose.msra.mxu0 0
    %9069 = vmatprep.subr.bf16.mxu0 0
    %9070 = vmatpush1.bf16.xpose.msra.mxu0 0
    %9071 = vmatprep.subr.bf16.mxu0 0
    %9072 = vmatpush1.bf16.xpose.msra.mxu0 0
    %9073 = vmatprep.subr.bf16.mxu0 0
    %9074 = vmatpush1.bf16.xpose.msra.mxu0 0
    %9075 = vmatprep.subr.bf16.mxu0 0
    %9076 = vmatpush1.bf16.xpose.msra.mxu0 0
    %9077 = vmatprep.subr.bf16.mxu0 0
    %9078 = vmatpush1.bf16.xpose.msra.mxu0 0
    %9079 = vmatprep.mubr.bf16.mxu0 0
    %9080 = vmatmul.mubr.bf16.gmra.mrb[0].mxu0 %v9024
    %v9081 = vpop.f32.mrb[0].mxu0
    %v9082 = vadd.f32 0.0, %v9081
    %v9083 = vpop.f32.mrb[0].mxu0
    %v9084 = vpop.f32.mrb[0].mxu0
    %v9085 = vadd.f32 0.0, %v9084
    %v9086 = vpop.f32.mrb[0].mxu0
    %9087 = vmatprep.mubr.bf16.mxu0 0
    %9088 = vmatmul.mubr.bf16.gmra.mrb[0].mxu0 %v9027
    %v9089 = vpop.f32.mrb[0].mxu0
    %v9090 = vadd.f32 0.0, %v9089
    %v9091 = vpop.f32.mrb[0].mxu0
    %v9092 = vpop.f32.mrb[0].mxu0
    %v9093 = vadd.f32 0.0, %v9092
    %v9094 = vpop.f32.mrb[0].mxu0
    %9095 = vmatprep.mubr.bf16.mxu0 0
    %9096 = vmatmul.mubr.bf16.gmra.mrb[0].mxu0 %v9030
    %v9097 = vpop.f32.mrb[0].mxu0
    %v9098 = vadd.f32 0.0, %v9097
    %v9099 = vpop.f32.mrb[0].mxu0
    %v9100 = vpop.f32.mrb[0].mxu0
    %v9101 = vadd.f32 0.0, %v9100
    %v9102 = vpop.f32.mrb[0].mxu0
    %9103 = vmatprep.mubr.bf16.mxu0 0
    %9104 = vmatmul.mubr.bf16.gmra.mrb[0].mxu0 %v9033
    %v9105 = vpop.f32.mrb[0].mxu0
    %v9106 = vadd.f32 0.0, %v9105
    %v9107 = vpop.f32.mrb[0].mxu0
    %v9108 = vpop.f32.mrb[0].mxu0
    %v9109 = vadd.f32 0.0, %v9108
    %v9110 = vpop.f32.mrb[0].mxu0
    %9111 = vdwg.mxu0
    %v9112 = vmul.f32 %v9082, 0.25
    %v9113 = vmul.f32 %v9085, 0.25
    %v9114 = vmul.f32 %v9090, 0.25
    %v9115 = vmul.f32 %v9093, 0.25
    %v9116 = vmul.f32 %v9098, 0.25
    %v9117 = vmul.f32 %v9101, 0.25
    %v9118 = vmul.f32 %v9106, 0.25
    %v9119 = vmul.f32 %v9109, 0.25
    %v9120 = vsel %vm1673, %v9112, -inf
    %9121 = vmax.xlane.f32.xlu0 %v9120
    %v9122 = vpop.xlane.xlu0 %9121
    %v9123 = vsel %vm1673, %v9113, -inf
    %9124 = vmax.xlane.f32.xlu0 %v9123
    %v9125 = vpop.xlane.xlu0 %9124
    %v9126 = vsel %vm1673, %v9114, -inf
    %9127 = vmax.xlane.f32.xlu0 %v9126
    %v9128 = vpop.xlane.xlu0 %9127
    %v9129 = vsel %vm1673, %v9115, -inf
    %9130 = vmax.xlane.f32.xlu0 %v9129
    %v9131 = vpop.xlane.xlu0 %9130
    %v9132 = vsel %vm1673, %v9116, -inf
    %9133 = vmax.xlane.f32.xlu0 %v9132
    %v9134 = vpop.xlane.xlu0 %9133
    %v9135 = vsel %vm1673, %v9117, -inf
    %9136 = vmax.xlane.f32.xlu0 %v9135
    %v9137 = vpop.xlane.xlu0 %9136
    %v9138 = vsel %vm1673, %v9118, -inf
    %9139 = vmax.xlane.f32.xlu0 %v9138
    %v9140 = vpop.xlane.xlu0 %9139
    %v9141 = vsel %vm1673, %v9119, -inf
    %9142 = vmax.xlane.f32.xlu0 %v9141
    %v9143 = vpop.xlane.xlu0 %9142
    %v9144 = vsub.f32 %v9112, %v9122
    %v9145 = vsub.f32 %v9113, %v9125
    %v9146 = vsub.f32 %v9114, %v9128
    %v9147 = vsub.f32 %v9115, %v9131
    %v9148 = vsub.f32 %v9116, %v9134
    %v9149 = vsub.f32 %v9117, %v9137
    %v9150 = vsub.f32 %v9118, %v9140
    %v9151 = vsub.f32 %v9119, %v9143
    %v9152 = vmul.f32 %v9144, 1.442695
    %v9153 = vpow.pop %v9152
    %v9154 = vmul.f32 %v9145, 1.442695
    %v9155 = vpow.pop %v9154
    %v9156 = vmul.f32 %v9146, 1.442695
    %v9157 = vpow.pop %v9156
    %v9158 = vmul.f32 %v9147, 1.442695
    %v9159 = vpow.pop %v9158
    %v9160 = vmul.f32 %v9148, 1.442695
    %v9161 = vpow.pop %v9160
    %v9162 = vmul.f32 %v9149, 1.442695
    %v9163 = vpow.pop %v9162
    %v9164 = vmul.f32 %v9150, 1.442695
    %v9165 = vpow.pop %v9164
    %v9166 = vmul.f32 %v9151, 1.442695
    %v9167 = vpow.pop %v9166
    %v9168 = vsel %vm1673, %v9153, 0.0
    %9169 = vadd.xlane.f32.xlu0 %v9168
    %v9170 = vpop.xlane.xlu0 %9169
    %v9171 = vsel %vm1673, %v9155, 0.0
    %9172 = vadd.xlane.f32.xlu0 %v9171
    %v9173 = vpop.xlane.xlu0 %9172
    %v9174 = vsel %vm1673, %v9157, 0.0
    %9175 = vadd.xlane.f32.xlu0 %v9174
    %v9176 = vpop.xlane.xlu0 %9175
    %v9177 = vsel %vm1673, %v9159, 0.0
    %9178 = vadd.xlane.f32.xlu0 %v9177
    %v9179 = vpop.xlane.xlu0 %9178
    %v9180 = vsel %vm1673, %v9161, 0.0
    %9181 = vadd.xlane.f32.xlu0 %v9180
    %v9182 = vpop.xlane.xlu0 %9181
    %v9183 = vsel %vm1673, %v9163, 0.0
    %9184 = vadd.xlane.f32.xlu0 %v9183
    %v9185 = vpop.xlane.xlu0 %9184
    %v9186 = vsel %vm1673, %v9165, 0.0
    %9187 = vadd.xlane.f32.xlu0 %v9186
    %v9188 = vpop.xlane.xlu0 %9187
    %v9189 = vsel %vm1673, %v9167, 0.0
    %9190 = vadd.xlane.f32.xlu0 %v9189
    %v9191 = vpop.xlane.xlu0 %9190
    %v9192 = vrcp.pop %v9170
    %v9193 = vrcp.pop %v9173
    %v9194 = vrcp.pop %v9176
    %v9195 = vrcp.pop %v9179
    %v9196 = vrcp.pop %v9182
    %v9197 = vrcp.pop %v9185
    %v9198 = vrcp.pop %v9188
    %v9199 = vrcp.pop %v9191
    %v9200 = vmul.f32 %v9153, %v9192
    %v9201 = vmul.f32 %v9155, %v9193
    %v9202 = vmul.f32 %v9157, %v9194
    %v9203 = vmul.f32 %v9159, %v9195
    %v9204 = vmul.f32 %v9161, %v9196
    %v9205 = vmul.f32 %v9163, %v9197
    %v9206 = vmul.f32 %v9165, %v9198
    %v9207 = vmul.f32 %v9167, %v9199
    %v9208 = vpack.c.bf16 %v9201, %v9200
    %v9209 = vpack.c.bf16 %v9203, %v9202
    %v9210 = vpack.c.bf16 %v9205, %v9204
    %v9211 = vpack.c.bf16 %v9207, %v9206
    %9212 = vrot.lane.b32.xlu0 %v6343, 80
    %v9213 = vpop.permute.xlu0 %9212
    %9214 = vrot.lane.b32.xlu0 %v6345, 80
    %v9215 = vpop.permute.xlu0 %9214
    %9216 = vrot.lane.b32.xlu0 %v6347, 80
    %v9217 = vpop.permute.xlu0 %9216
    %9218 = vrot.lane.b32.xlu0 %v6349, 80
    %v9219 = vpop.permute.xlu0 %9218
    %v9225 = vsel %vm1673, %v9208, 0
    %v9228 = vsel %vm1673, %v9209, 0
    %v9231 = vsel %vm1673, %v9210, 0
    %v9234 = vsel %vm1673, %v9211, 0
    %9236 = vmatprep.subr.bf16.mxu0 0
    %9237 = vmatpush1.bf16.msra.mxu0 %v9213
    %9238 = vmatprep.subr.bf16.mxu0 0
    %9239 = vmatpush1.bf16.msra.mxu0 %v9215
    %9240 = vmatprep.subr.bf16.mxu0 0
    %9241 = vmatpush1.bf16.msra.mxu0 %v9217
    %9242 = vmatprep.subr.bf16.mxu0 0
    %9243 = vmatpush1.bf16.msra.mxu0 %v9219
    %9244 = vmatprep.subr.bf16.mxu0 0
    %9245 = vmatpush1.bf16.msra.mxu0 0
    %9246 = vmatprep.subr.bf16.mxu0 0
    %9247 = vmatpush1.bf16.msra.mxu0 0
    %9248 = vmatprep.subr.bf16.mxu0 0
    %9249 = vmatpush1.bf16.msra.mxu0 0
    %9250 = vmatprep.subr.bf16.mxu0 0
    %9251 = vmatpush1.bf16.msra.mxu0 0
    %9252 = vmatprep.subr.bf16.mxu0 0
    %9253 = vmatpush1.bf16.msra.mxu0 0
    %9254 = vmatprep.subr.bf16.mxu0 0
    %9255 = vmatpush1.bf16.msra.mxu0 0
    %9256 = vmatprep.subr.bf16.mxu0 0
    %9257 = vmatpush1.bf16.msra.mxu0 0
    %9258 = vmatprep.subr.bf16.mxu0 0
    %9259 = vmatpush1.bf16.msra.mxu0 0
    %9260 = vmatprep.subr.bf16.mxu0 0
    %9261 = vmatpush1.bf16.msra.mxu0 0
    %9262 = vmatprep.subr.bf16.mxu0 0
    %9263 = vmatpush1.bf16.msra.mxu0 0
    %9264 = vmatprep.subr.bf16.mxu0 0
    %9265 = vmatpush1.bf16.msra.mxu0 0
    %9266 = vmatprep.subr.bf16.mxu0 0
    %9267 = vmatpush1.bf16.msra.mxu0 0
    %9268 = vmatprep.mubr.bf16.mxu0 0
    %9269 = vmatmul.mubr.bf16.gmra.mrb[0].mxu0 %v9225
    %v9270 = vpop.f32.mrb[0].mxu0
    %v9271 = vadd.f32 0.0, %v9270
    %v9272 = vpop.f32.mrb[0].mxu0
    %v9273 = vpop.f32.mrb[0].mxu0
    %v9274 = vadd.f32 0.0, %v9273
    %v9275 = vpop.f32.mrb[0].mxu0
    %9276 = vmatprep.mubr.bf16.mxu0 0
    %9277 = vmatmul.mubr.bf16.gmra.mrb[0].mxu0 %v9228
    %v9278 = vpop.f32.mrb[0].mxu0
    %v9279 = vadd.f32 0.0, %v9278
    %v9280 = vpop.f32.mrb[0].mxu0
    %v9281 = vpop.f32.mrb[0].mxu0
    %v9282 = vadd.f32 0.0, %v9281
    %v9283 = vpop.f32.mrb[0].mxu0
    %9284 = vmatprep.mubr.bf16.mxu0 0
    %9285 = vmatmul.mubr.bf16.gmra.mrb[0].mxu0 %v9231
    %v9286 = vpop.f32.mrb[0].mxu0
    %v9287 = vadd.f32 0.0, %v9286
    %v9288 = vpop.f32.mrb[0].mxu0
    %v9289 = vpop.f32.mrb[0].mxu0
    %v9290 = vadd.f32 0.0, %v9289
    %v9291 = vpop.f32.mrb[0].mxu0
    %9292 = vmatprep.mubr.bf16.mxu0 0
    %9293 = vmatmul.mubr.bf16.gmra.mrb[0].mxu0 %v9234
    %v9294 = vpop.f32.mrb[0].mxu0
    %v9295 = vadd.f32 0.0, %v9294
    %v9296 = vpop.f32.mrb[0].mxu0
    %v9297 = vpop.f32.mrb[0].mxu0
    %v9298 = vadd.f32 0.0, %v9297
    %v9299 = vpop.f32.mrb[0].mxu0
    %9300 = vdwg.mxu0
    %v9301 = vpack.c.bf16 %v9274, %v9271
    %v9302 = vpack.c.bf16 %v9282, %v9279
    %v9303 = vpack.c.bf16 %v9290, %v9287
    %v9304 = vpack.c.bf16 %v9298, %v9295
    %v9306 = vsel %vm2161, %v9301, 0
    %v9309 = vsel %vm2161, %v9302, 0
    %v9312 = vsel %vm2161, %v9303, 0
    %v9315 = vsel %vm2161, %v9304, 0
    %9317 = vmatprep.subr.bf16.mxu0 0
    %9318 = vmatpush1.bf16.msra.mxu0 %v7799
    %9319 = vmatprep.subr.bf16.mxu0 0
    %9320 = vmatpush1.bf16.msra.mxu0 0
    %9321 = vmatprep.subr.bf16.mxu0 0
    %9322 = vmatpush1.bf16.msra.mxu0 0
    %9323 = vmatprep.subr.bf16.mxu0 0
    %9324 = vmatpush1.bf16.msra.mxu0 0
    %9325 = vmatprep.subr.bf16.mxu0 0
    %9326 = vmatpush1.bf16.msra.mxu0 0
    %9327 = vmatprep.subr.bf16.mxu0 0
    %9328 = vmatpush1.bf16.msra.mxu0 0
    %9329 = vmatprep.subr.bf16.mxu0 0
    %9330 = vmatpush1.bf16.msra.mxu0 0
    %9331 = vmatprep.subr.bf16.mxu0 0
    %9332 = vmatpush1.bf16.msra.mxu0 0
    %9333 = vmatprep.subr.bf16.mxu0 0
    %9334 = vmatpush1.bf16.msra.mxu0 0
    %9335 = vmatprep.subr.bf16.mxu0 0
    %9336 = vmatpush1.bf16.msra.mxu0 0
    %9337 = vmatprep.subr.bf16.mxu0 0
    %9338 = vmatpush1.bf16.msra.mxu0 0
    %9339 = vmatprep.subr.bf16.mxu0 0
    %9340 = vmatpush1.bf16.msra.mxu0 0
    %9341 = vmatprep.subr.bf16.mxu0 0
    %9342 = vmatpush1.bf16.msra.mxu0 0
    %9343 = vmatprep.subr.bf16.mxu0 0
    %9344 = vmatpush1.bf16.msra.mxu0 0
    %9345 = vmatprep.subr.bf16.mxu0 0
    %9346 = vmatpush1.bf16.msra.mxu0 0
    %9347 = vmatprep.subr.bf16.mxu0 0
    %9348 = vmatpush1.bf16.msra.mxu0 0
    %9349 = vmatprep.mubr.bf16.mxu0 0
    %9350 = vmatmul.mubr.bf16.gmra.mrb[0].mxu0 %v9306
    %v9351 = vpop.f32.mrb[0].mxu0
    %v9352 = vadd.f32 0.0, %v9351
    %v9353 = vpop.f32.mrb[0].mxu0
    %v9354 = vpop.f32.mrb[0].mxu0
    %v9355 = vadd.f32 0.0, %v9354
    %v9356 = vpop.f32.mrb[0].mxu0
    %9357 = vmatprep.mubr.bf16.mxu0 0
    %9358 = vmatmul.mubr.bf16.gmra.mrb[0].mxu0 %v9309
    %v9359 = vpop.f32.mrb[0].mxu0
    %v9360 = vadd.f32 0.0, %v9359
    %v9361 = vpop.f32.mrb[0].mxu0
    %v9362 = vpop.f32.mrb[0].mxu0
    %v9363 = vadd.f32 0.0, %v9362
    %v9364 = vpop.f32.mrb[0].mxu0
    %9365 = vmatprep.mubr.bf16.mxu0 0
    %9366 = vmatmul.mubr.bf16.gmra.mrb[0].mxu0 %v9312
    %v9367 = vpop.f32.mrb[0].mxu0
    %v9368 = vadd.f32 0.0, %v9367
    %v9369 = vpop.f32.mrb[0].mxu0
    %v9370 = vpop.f32.mrb[0].mxu0
    %v9371 = vadd.f32 0.0, %v9370
    %v9372 = vpop.f32.mrb[0].mxu0
    %9373 = vmatprep.mubr.bf16.mxu0 0
    %9374 = vmatmul.mubr.bf16.gmra.mrb[0].mxu0 %v9315
    %v9375 = vpop.f32.mrb[0].mxu0
    %v9376 = vadd.f32 0.0, %v9375
    %v9377 = vpop.f32.mrb[0].mxu0
    %v9378 = vpop.f32.mrb[0].mxu0
    %v9379 = vadd.f32 0.0, %v9378
    %v9380 = vpop.f32.mrb[0].mxu0
    %9381 = vdwg.mxu0
    %v9382 = vadd.f32 %v8999, %v9352
    %v9383 = vadd.f32 %v9000, %v9355
    %v9384 = vadd.f32 %v9001, %v9360
    %v9385 = vadd.f32 %v9002, %v9363
    %v9386 = vadd.f32 %v9003, %v9368
    %v9387 = vadd.f32 %v9004, %v9371
    %v9388 = vadd.f32 %v9005, %v9376
    %v9389 = vadd.f32 %v9006, %v9379
    %v9390 = vadd.f32 %v5859, %v7878
    %v9391 = vadd.f32 %v5860, %v7879
    %v9392 = vadd.f32 %v5861, %v7880
    %v9393 = vadd.f32 %v5862, %v7881
    %v9394 = vadd.f32 %v5863, %v7882
    %v9395 = vadd.f32 %v5864, %v7883
    %v9396 = vadd.f32 %v5865, %v7884
    %v9397 = vadd.f32 %v5866, %v7885
    %v9398 = vadd.f32 %v5867, %v9382
    %v9399 = vadd.f32 %v5868, %v9383
    %v9400 = vadd.f32 %v5869, %v9384
    %v9401 = vadd.f32 %v5870, %v9385
    %v9402 = vadd.f32 %v5871, %v9386
    %v9403 = vadd.f32 %v5872, %v9387
    %v9404 = vadd.f32 %v5873, %v9388
    %v9405 = vadd.f32 %v5874, %v9389
    %v9406 = vld [vmem:[%s61] sm:$0x1]
    %v9408 = vlaneseq
    %v9409 = vshrl.u32 %v9408, 7
    %v9410 = vsub.s32 0, %v9409
    %v9411 = vrot.slane %v9406, %v9410
    %v9413 = vadd.f32 %v9390, %v9411
    %v9414 = vadd.f32 %v9391, %v9411
    %v9415 = vadd.f32 %v9392, %v9411
    %v9416 = vadd.f32 %v9393, %v9411
    %v9417 = vadd.f32 %v9394, %v9411
    %v9418 = vadd.f32 %v9395, %v9411
    %v9419 = vadd.f32 %v9396, %v9411
    %v9420 = vadd.f32 %v9397, %v9411
    %v9421 = vadd.f32 %v9398, %v9411
    %v9422 = vadd.f32 %v9399, %v9411
    %v9423 = vadd.f32 %v9400, %v9411
    %v9424 = vadd.f32 %v9401, %v9411
    %v9425 = vadd.f32 %v9402, %v9411
    %v9426 = vadd.f32 %v9403, %v9411
    %v9427 = vadd.f32 %v9404, %v9411
    %v9428 = vadd.f32 %v9405, %v9411
    %v9429 = vsel %vm1673, %v9413, 0.0
    %9430 = vadd.xlane.f32.xlu0 %v9429
    %v9431 = vpop.xlane.xlu0 %9430
    %v9432 = vsel %vm1673, %v9414, 0.0
    %9433 = vadd.xlane.f32.xlu0 %v9432
    %v9434 = vpop.xlane.xlu0 %9433
    %v9435 = vsel %vm1673, %v9415, 0.0
    %9436 = vadd.xlane.f32.xlu0 %v9435
    %v9437 = vpop.xlane.xlu0 %9436
    %v9438 = vsel %vm1673, %v9416, 0.0
    %9439 = vadd.xlane.f32.xlu0 %v9438
    %v9440 = vpop.xlane.xlu0 %9439
    %v9441 = vsel %vm1673, %v9417, 0.0
    %9442 = vadd.xlane.f32.xlu0 %v9441
    %v9443 = vpop.xlane.xlu0 %9442
    %v9444 = vsel %vm1673, %v9418, 0.0
    %9445 = vadd.xlane.f32.xlu0 %v9444
    %v9446 = vpop.xlane.xlu0 %9445
    %v9447 = vsel %vm1673, %v9419, 0.0
    %9448 = vadd.xlane.f32.xlu0 %v9447
    %v9449 = vpop.xlane.xlu0 %9448
    %v9450 = vsel %vm1673, %v9420, 0.0
    %9451 = vadd.xlane.f32.xlu0 %v9450
    %v9452 = vpop.xlane.xlu0 %9451
    %v9453 = vsel %vm1673, %v9421, 0.0
    %9454 = vadd.xlane.f32.xlu0 %v9453
    %v9455 = vpop.xlane.xlu0 %9454
    %v9456 = vsel %vm1673, %v9422, 0.0
    %9457 = vadd.xlane.f32.xlu0 %v9456
    %v9458 = vpop.xlane.xlu0 %9457
    %v9459 = vsel %vm1673, %v9423, 0.0
    %9460 = vadd.xlane.f32.xlu0 %v9459
    %v9461 = vpop.xlane.xlu0 %9460
    %v9462 = vsel %vm1673, %v9424, 0.0
    %9463 = vadd.xlane.f32.xlu0 %v9462
    %v9464 = vpop.xlane.xlu0 %9463
    %v9465 = vsel %vm1673, %v9425, 0.0
    %9466 = vadd.xlane.f32.xlu0 %v9465
    %v9467 = vpop.xlane.xlu0 %9466
    %v9468 = vsel %vm1673, %v9426, 0.0
    %9469 = vadd.xlane.f32.xlu0 %v9468
    %v9470 = vpop.xlane.xlu0 %9469
    %v9471 = vsel %vm1673, %v9427, 0.0
    %9472 = vadd.xlane.f32.xlu0 %v9471
    %v9473 = vpop.xlane.xlu0 %9472
    %v9474 = vsel %vm1673, %v9428, 0.0
    %9475 = vadd.xlane.f32.xlu0 %v9474
    %v9476 = vpop.xlane.xlu0 %9475
    %v9477 = vmul.f32 %v9431, %v1292
    %v9478 = vmul.f32 %v9434, %v1292
    %v9479 = vmul.f32 %v9437, %v1292
    %v9480 = vmul.f32 %v9440, %v1292
    %v9481 = vmul.f32 %v9443, %v1292
    %v9482 = vmul.f32 %v9446, %v1292
    %v9483 = vmul.f32 %v9449, %v1292
    %v9484 = vmul.f32 %v9452, %v1292
    %v9485 = vmul.f32 %v9455, %v1292
    %v9486 = vmul.f32 %v9458, %v1292
    %v9487 = vmul.f32 %v9461, %v1292
    %v9488 = vmul.f32 %v9464, %v1292
    %v9489 = vmul.f32 %v9467, %v1292
    %v9490 = vmul.f32 %v9470, %v1292
    %v9491 = vmul.f32 %v9473, %v1292
    %v9492 = vmul.f32 %v9476, %v1292
    %v9493 = vsub.f32 %v9413, %v9477
    %v9494 = vsub.f32 %v9414, %v9478
    %v9495 = vsub.f32 %v9415, %v9479
    %v9496 = vsub.f32 %v9416, %v9480
    %v9497 = vsub.f32 %v9417, %v9481
    %v9498 = vsub.f32 %v9418, %v9482
    %v9499 = vsub.f32 %v9419, %v9483
    %v9500 = vsub.f32 %v9420, %v9484
    %v9501 = vsub.f32 %v9421, %v9485
    %v9502 = vsub.f32 %v9422, %v9486
    %v9503 = vsub.f32 %v9423, %v9487
    %v9504 = vsub.f32 %v9424, %v9488
    %v9505 = vsub.f32 %v9425, %v9489
    %v9506 = vsub.f32 %v9426, %v9490
    %v9507 = vsub.f32 %v9427, %v9491
    %v9508 = vsub.f32 %v9428, %v9492
    %v9509 = vmul.f32 %v9493, %v9493
    %v9510 = vmul.f32 %v9494, %v9494
    %v9511 = vmul.f32 %v9495, %v9495
    %v9512 = vmul.f32 %v9496, %v9496
    %v9513 = vmul.f32 %v9497, %v9497
    %v9514 = vmul.f32 %v9498, %v9498
    %v9515 = vmul.f32 %v9499, %v9499
    %v9516 = vmul.f32 %v9500, %v9500
    %v9517 = vmul.f32 %v9501, %v9501
    %v9518 = vmul.f32 %v9502, %v9502
    %v9519 = vmul.f32 %v9503, %v9503
    %v9520 = vmul.f32 %v9504, %v9504
    %v9521 = vmul.f32 %v9505, %v9505
    %v9522 = vmul.f32 %v9506, %v9506
    %v9523 = vmul.f32 %v9507, %v9507
    %v9524 = vmul.f32 %v9508, %v9508
    %v9525 = vsel %vm1673, %v9509, 0.0
    %9526 = vadd.xlane.f32.xlu0 %v9525
    %v9527 = vpop.xlane.xlu0 %9526
    %v9528 = vsel %vm1673, %v9510, 0.0
    %9529 = vadd.xlane.f32.xlu0 %v9528
    %v9530 = vpop.xlane.xlu0 %9529
    %v9531 = vsel %vm1673, %v9511, 0.0
    %9532 = vadd.xlane.f32.xlu0 %v9531
    %v9533 = vpop.xlane.xlu0 %9532
    %v9534 = vsel %vm1673, %v9512, 0.0
    %9535 = vadd.xlane.f32.xlu0 %v9534
    %v9536 = vpop.xlane.xlu0 %9535
    %v9537 = vsel %vm1673, %v9513, 0.0
    %9538 = vadd.xlane.f32.xlu0 %v9537
    %v9539 = vpop.xlane.xlu0 %9538
    %v9540 = vsel %vm1673, %v9514, 0.0
    %9541 = vadd.xlane.f32.xlu0 %v9540
    %v9542 = vpop.xlane.xlu0 %9541
    %v9543 = vsel %vm1673, %v9515, 0.0
    %9544 = vadd.xlane.f32.xlu0 %v9543
    %v9545 = vpop.xlane.xlu0 %9544
    %v9546 = vsel %vm1673, %v9516, 0.0
    %9547 = vadd.xlane.f32.xlu0 %v9546
    %v9548 = vpop.xlane.xlu0 %9547
    %v9549 = vsel %vm1673, %v9517, 0.0
    %9550 = vadd.xlane.f32.xlu0 %v9549
    %v9551 = vpop.xlane.xlu0 %9550
    %v9552 = vsel %vm1673, %v9518, 0.0
    %9553 = vadd.xlane.f32.xlu0 %v9552
    %v9554 = vpop.xlane.xlu0 %9553
    %v9555 = vsel %vm1673, %v9519, 0.0
    %9556 = vadd.xlane.f32.xlu0 %v9555
    %v9557 = vpop.xlane.xlu0 %9556
    %v9558 = vsel %vm1673, %v9520, 0.0
    %9559 = vadd.xlane.f32.xlu0 %v9558
    %v9560 = vpop.xlane.xlu0 %9559
    %v9561 = vsel %vm1673, %v9521, 0.0
    %9562 = vadd.xlane.f32.xlu0 %v9561
    %v9563 = vpop.xlane.xlu0 %9562
    %v9564 = vsel %vm1673, %v9522, 0.0
    %9565 = vadd.xlane.f32.xlu0 %v9564
    %v9566 = vpop.xlane.xlu0 %9565
    %v9567 = vsel %vm1673, %v9523, 0.0
    %9568 = vadd.xlane.f32.xlu0 %v9567
    %v9569 = vpop.xlane.xlu0 %9568
    %v9570 = vsel %vm1673, %v9524, 0.0
    %9571 = vadd.xlane.f32.xlu0 %v9570
    %v9572 = vpop.xlane.xlu0 %9571
    %v9573 = vmul.f32 %v9527, %v1292
    %v9574 = vmul.f32 %v9530, %v1292
    %v9575 = vmul.f32 %v9533, %v1292
    %v9576 = vmul.f32 %v9536, %v1292
    %v9577 = vmul.f32 %v9539, %v1292
    %v9578 = vmul.f32 %v9542, %v1292
    %v9579 = vmul.f32 %v9545, %v1292
    %v9580 = vmul.f32 %v9548, %v1292
    %v9581 = vmul.f32 %v9551, %v1292
    %v9582 = vmul.f32 %v9554, %v1292
    %v9583 = vmul.f32 %v9557, %v1292
    %v9584 = vmul.f32 %v9560, %v1292
    %v9585 = vmul.f32 %v9563, %v1292
    %v9586 = vmul.f32 %v9566, %v1292
    %v9587 = vmul.f32 %v9569, %v1292
    %v9588 = vmul.f32 %v9572, %v1292
    %v9589 = vadd.f32 %v9573, 1e-05
    %v9590 = vadd.f32 %v9574, 1e-05
    %v9591 = vadd.f32 %v9575, 1e-05
    %v9592 = vadd.f32 %v9576, 1e-05
    %v9593 = vadd.f32 %v9577, 1e-05
    %v9594 = vadd.f32 %v9578, 1e-05
    %v9595 = vadd.f32 %v9579, 1e-05
    %v9596 = vadd.f32 %v9580, 1e-05
    %v9597 = vadd.f32 %v9581, 1e-05
    %v9598 = vadd.f32 %v9582, 1e-05
    %v9599 = vadd.f32 %v9583, 1e-05
    %v9600 = vadd.f32 %v9584, 1e-05
    %v9601 = vadd.f32 %v9585, 1e-05
    %v9602 = vadd.f32 %v9586, 1e-05
    %v9603 = vadd.f32 %v9587, 1e-05
    %v9604 = vadd.f32 %v9588, 1e-05
    %v9605 = vrsqrt.pop %v9589
    %v9606 = vrsqrt.pop %v9590
    %v9607 = vrsqrt.pop %v9591
    %v9608 = vrsqrt.pop %v9592
    %v9609 = vrsqrt.pop %v9593
    %v9610 = vrsqrt.pop %v9594
    %v9611 = vrsqrt.pop %v9595
    %v9612 = vrsqrt.pop %v9596
    %v9613 = vrsqrt.pop %v9597
    %v9614 = vrsqrt.pop %v9598
    %v9615 = vrsqrt.pop %v9599
    %v9616 = vrsqrt.pop %v9600
    %v9617 = vrsqrt.pop %v9601
    %v9618 = vrsqrt.pop %v9602
    %v9619 = vrsqrt.pop %v9603
    %v9620 = vrsqrt.pop %v9604
    %v9621 = vmul.f32 %v9493, %v9605
    %v9622 = vmul.f32 %v9494, %v9606
    %v9623 = vmul.f32 %v9495, %v9607
    %v9624 = vmul.f32 %v9496, %v9608
    %v9625 = vmul.f32 %v9497, %v9609
    %v9626 = vmul.f32 %v9498, %v9610
    %v9627 = vmul.f32 %v9499, %v9611
    %v9628 = vmul.f32 %v9500, %v9612
    %v9629 = vmul.f32 %v9501, %v9613
    %v9630 = vmul.f32 %v9502, %v9614
    %v9631 = vmul.f32 %v9503, %v9615
    %v9632 = vmul.f32 %v9504, %v9616
    %v9633 = vmul.f32 %v9505, %v9617
    %v9634 = vmul.f32 %v9506, %v9618
    %v9635 = vmul.f32 %v9507, %v9619
    %v9636 = vmul.f32 %v9508, %v9620
    %v9637 = vld [vmem:[%s63] sm:$0x1]
    %v9639 = vlaneseq
    %v9640 = vshrl.u32 %v9639, 7
    %v9641 = vsub.s32 0, %v9640
    %v9642 = vrot.slane %v9637, %v9641
    %v9644 = vmul.f32 %v9621, %v9642
    %v9645 = vmul.f32 %v9622, %v9642
    %v9646 = vmul.f32 %v9623, %v9642
    %v9647 = vmul.f32 %v9624, %v9642
    %v9648 = vmul.f32 %v9625, %v9642
    %v9649 = vmul.f32 %v9626, %v9642
    %v9650 = vmul.f32 %v9627, %v9642
    %v9651 = vmul.f32 %v9628, %v9642
    %v9652 = vmul.f32 %v9629, %v9642
    %v9653 = vmul.f32 %v9630, %v9642
    %v9654 = vmul.f32 %v9631, %v9642
    %v9655 = vmul.f32 %v9632, %v9642
    %v9656 = vmul.f32 %v9633, %v9642
    %v9657 = vmul.f32 %v9634, %v9642
    %v9658 = vmul.f32 %v9635, %v9642
    %v9659 = vmul.f32 %v9636, %v9642
    %v9660 = vld [vmem:[%s65] sm:$0x1]
    %v9662 = vlaneseq
    %v9663 = vshrl.u32 %v9662, 7
    %v9664 = vsub.s32 0, %v9663
    %v9665 = vrot.slane %v9660, %v9664
    %v9667 = vadd.f32 %v9644, %v9665
    %v9668 = vadd.f32 %v9645, %v9665
    %v9669 = vadd.f32 %v9646, %v9665
    %v9670 = vadd.f32 %v9647, %v9665
    %v9671 = vadd.f32 %v9648, %v9665
    %v9672 = vadd.f32 %v9649, %v9665
    %v9673 = vadd.f32 %v9650, %v9665
    %v9674 = vadd.f32 %v9651, %v9665
    %v9675 = vadd.f32 %v9652, %v9665
    %v9676 = vadd.f32 %v9653, %v9665
    %v9677 = vadd.f32 %v9654, %v9665
    %v9678 = vadd.f32 %v9655, %v9665
    %v9679 = vadd.f32 %v9656, %v9665
    %v9680 = vadd.f32 %v9657, %v9665
    %v9681 = vadd.f32 %v9658, %v9665
    %v9682 = vadd.f32 %v9659, %v9665
    %v9683 = vpack.c.bf16 %v9668, %v9667
    %v9684 = vpack.c.bf16 %v9670, %v9669
    %v9685 = vpack.c.bf16 %v9672, %v9671
    %v9686 = vpack.c.bf16 %v9674, %v9673
    %v9687 = vpack.c.bf16 %v9676, %v9675
    %v9688 = vpack.c.bf16 %v9678, %v9677
    %v9689 = vpack.c.bf16 %v9680, %v9679
    %v9690 = vpack.c.bf16 %v9682, %v9681
    %v9691 = vld [vmem:[%s67] sm:$0xf]
    %v9692 = vld [vmem:[%s67 + $0x4] sm:$0xf]
    %v9693 = vld [vmem:[%s67 + $0x8] sm:$0xf]
    %v9694 = vld [vmem:[%s67 + $0xc] sm:$0xf]
    %v9695 = vld [vmem:[%s67 + $0x10] sm:$0xf]
    %v9696 = vld [vmem:[%s67 + $0x14] sm:$0xf]
    %v9697 = vld [vmem:[%s67 + $0x18] sm:$0xf]
    %v9698 = vld [vmem:[%s67 + $0x1c] sm:$0xf]
    %v9699 = vld [vmem:[%s69] sm:$0x1]
    %v9701 = vlaneseq
    %v9702 = vshrl.u32 %v9701, 7
    %v9703 = vsub.s32 0, %v9702
    %v9704 = vrot.slane %v9699, %v9703
    %v9714 = vunpack.c.l.b16 %v9691
    %v9715 = vunpack.c.l.b16 %v9692
    %v9716 = vunpack.c.l.b16 %v9693
    %v9717 = vunpack.c.l.b16 %v9694
    %v9718 = vunpack.c.l.b16 %v9695
    %v9719 = vunpack.c.l.b16 %v9696
    %v9720 = vunpack.c.l.b16 %v9697
    %v9721 = vunpack.c.l.b16 %v9698
    %v9722 = vpack.c.b16 %v9715, %v9714
    %v9723 = vpack.c.b16 %v9717, %v9716
    %v9724 = vpack.c.b16 %v9719, %v9718
    %v9725 = vpack.c.b16 %v9721, %v9720
    %v9731 = vsel %vm1673, %v9683, 0
    %v9734 = vsel %vm1673, %v9684, 0
    %v9737 = vsel %vm1673, %v9685, 0
    %v9740 = vsel %vm1673, %v9686, 0
    %v9743 = vsel %vm1673, %v9687, 0
    %v9746 = vsel %vm1673, %v9688, 0
    %v9749 = vsel %vm1673, %v9689, 0
    %v9752 = vsel %vm1673, %v9690, 0
    %9754 = vmatprep.subr.bf16.mxu0 0
    %9755 = vmatpush1.bf16.msra.mxu0 %v9722
    %9756 = vmatprep.subr.bf16.mxu0 0
    %9757 = vmatpush1.bf16.msra.mxu0 %v9723
    %9758 = vmatprep.subr.bf16.mxu0 0
    %9759 = vmatpush1.bf16.msra.mxu0 %v9724
    %9760 = vmatprep.subr.bf16.mxu0 0
    %9761 = vmatpush1.bf16.msra.mxu0 %v9725
    %9762 = vmatprep.subr.bf16.mxu0 0
    %9763 = vmatpush1.bf16.msra.mxu0 0
    %9764 = vmatprep.subr.bf16.mxu0 0
    %9765 = vmatpush1.bf16.msra.mxu0 0
    %9766 = vmatprep.subr.bf16.mxu0 0
    %9767 = vmatpush1.bf16.msra.mxu0 0
    %9768 = vmatprep.subr.bf16.mxu0 0
    %9769 = vmatpush1.bf16.msra.mxu0 0
    %9770 = vmatprep.subr.bf16.mxu0 0
    %9771 = vmatpush1.bf16.msra.mxu0 0
    %9772 = vmatprep.subr.bf16.mxu0 0
    %9773 = vmatpush1.bf16.msra.mxu0 0
    %9774 = vmatprep.subr.bf16.mxu0 0
    %9775 = vmatpush1.bf16.msra.mxu0 0
    %9776 = vmatprep.subr.bf16.mxu0 0
    %9777 = vmatpush1.bf16.msra.mxu0 0
    %9778 = vmatprep.subr.bf16.mxu0 0
    %9779 = vmatpush1.bf16.msra.mxu0 0
    %9780 = vmatprep.subr.bf16.mxu0 0
    %9781 = vmatpush1.bf16.msra.mxu0 0
    %9782 = vmatprep.subr.bf16.mxu0 0
    %9783 = vmatpush1.bf16.msra.mxu0 0
    %9784 = vmatprep.subr.bf16.mxu0 0
    %9785 = vmatpush1.bf16.msra.mxu0 0
    %9786 = vmatprep.mubr.bf16.mxu0 0
    %9787 = vmatmul.mubr.bf16.gmra.mrb[0].mxu0 %v9731
    %v9788 = vpop.f32.mrb[0].mxu0
    %v9789 = vadd.f32 %v9704, %v9788
    %v9790 = vpop.f32.mrb[0].mxu0
    %v9791 = vpop.f32.mrb[0].mxu0
    %v9792 = vadd.f32 %v9704, %v9791
    %v9793 = vpop.f32.mrb[0].mxu0
    %9794 = vmatprep.mubr.bf16.mxu0 0
    %9795 = vmatmul.mubr.bf16.gmra.mrb[0].mxu0 %v9734
    %v9796 = vpop.f32.mrb[0].mxu0
    %v9797 = vadd.f32 %v9704, %v9796
    %v9798 = vpop.f32.mrb[0].mxu0
    %v9799 = vpop.f32.mrb[0].mxu0
    %v9800 = vadd.f32 %v9704, %v9799
    %v9801 = vpop.f32.mrb[0].mxu0
    %9802 = vmatprep.mubr.bf16.mxu0 0
    %9803 = vmatmul.mubr.bf16.gmra.mrb[0].mxu0 %v9737
    %v9804 = vpop.f32.mrb[0].mxu0
    %v9805 = vadd.f32 %v9704, %v9804
    %v9806 = vpop.f32.mrb[0].mxu0
    %v9807 = vpop.f32.mrb[0].mxu0
    %v9808 = vadd.f32 %v9704, %v9807
    %v9809 = vpop.f32.mrb[0].mxu0
    %9810 = vmatprep.mubr.bf16.mxu0 0
    %9811 = vmatmul.mubr.bf16.gmra.mrb[0].mxu0 %v9740
    %v9812 = vpop.f32.mrb[0].mxu0
    %v9813 = vadd.f32 %v9704, %v9812
    %v9814 = vpop.f32.mrb[0].mxu0
    %v9815 = vpop.f32.mrb[0].mxu0
    %v9816 = vadd.f32 %v9704, %v9815
    %v9817 = vpop.f32.mrb[0].mxu0
    %9818 = vmatprep.mubr.bf16.mxu0 0
    %9819 = vmatmul.mubr.bf16.gmra.mrb[0].mxu0 %v9743
    %v9820 = vpop.f32.mrb[0].mxu0
    %v9821 = vadd.f32 %v9704, %v9820
    %v9822 = vpop.f32.mrb[0].mxu0
    %v9823 = vpop.f32.mrb[0].mxu0
    %v9824 = vadd.f32 %v9704, %v9823
    %v9825 = vpop.f32.mrb[0].mxu0
    %9826 = vmatprep.mubr.bf16.mxu0 0
    %9827 = vmatmul.mubr.bf16.gmra.mrb[0].mxu0 %v9746
    %v9828 = vpop.f32.mrb[0].mxu0
    %v9829 = vadd.f32 %v9704, %v9828
    %v9830 = vpop.f32.mrb[0].mxu0
    %v9831 = vpop.f32.mrb[0].mxu0
    %v9832 = vadd.f32 %v9704, %v9831
    %v9833 = vpop.f32.mrb[0].mxu0
    %9834 = vmatprep.mubr.bf16.mxu0 0
    %9835 = vmatmul.mubr.bf16.gmra.mrb[0].mxu0 %v9749
    %v9836 = vpop.f32.mrb[0].mxu0
    %v9837 = vadd.f32 %v9704, %v9836
    %v9838 = vpop.f32.mrb[0].mxu0
    %v9839 = vpop.f32.mrb[0].mxu0
    %v9840 = vadd.f32 %v9704, %v9839
    %v9841 = vpop.f32.mrb[0].mxu0
    %9842 = vmatprep.mubr.bf16.mxu0 0
    %9843 = vmatmul.mubr.bf16.gmra.mrb[0].mxu0 %v9752
    %v9844 = vpop.f32.mrb[0].mxu0
    %v9845 = vadd.f32 %v9704, %v9844
    %v9846 = vpop.f32.mrb[0].mxu0
    %v9847 = vpop.f32.mrb[0].mxu0
    %v9848 = vadd.f32 %v9704, %v9847
    %v9849 = vpop.f32.mrb[0].mxu0
    %9850 = vdwg.mxu0
    %v9851 = vmax.f32 %v9789, 0.0
    %v9852 = vmax.f32 %v9792, 0.0
    %v9853 = vmax.f32 %v9797, 0.0
    %v9854 = vmax.f32 %v9800, 0.0
    %v9855 = vmax.f32 %v9805, 0.0
    %v9856 = vmax.f32 %v9808, 0.0
    %v9857 = vmax.f32 %v9813, 0.0
    %v9858 = vmax.f32 %v9816, 0.0
    %v9859 = vmax.f32 %v9821, 0.0
    %v9860 = vmax.f32 %v9824, 0.0
    %v9861 = vmax.f32 %v9829, 0.0
    %v9862 = vmax.f32 %v9832, 0.0
    %v9863 = vmax.f32 %v9837, 0.0
    %v9864 = vmax.f32 %v9840, 0.0
    %v9865 = vmax.f32 %v9845, 0.0
    %v9866 = vmax.f32 %v9848, 0.0
    %v9867 = vpack.c.bf16 %v9852, %v9851
    %v9868 = vpack.c.bf16 %v9854, %v9853
    %v9869 = vpack.c.bf16 %v9856, %v9855
    %v9870 = vpack.c.bf16 %v9858, %v9857
    %v9871 = vpack.c.bf16 %v9860, %v9859
    %v9872 = vpack.c.bf16 %v9862, %v9861
    %v9873 = vpack.c.bf16 %v9864, %v9863
    %v9874 = vpack.c.bf16 %v9866, %v9865
    %v9875 = vld [vmem:[%s71] sm:$0xf]
    %v9876 = vld [vmem:[%s71 + $0x4] sm:$0xf]
    %v9877 = vld [vmem:[%s71 + $0x8] sm:$0xf]
    %v9878 = vld [vmem:[%s71 + $0xc] sm:$0xf]
    %v9879 = vld [vmem:[%s71 + $0x10] sm:$0xf]
    %v9880 = vld [vmem:[%s71 + $0x14] sm:$0xf]
    %v9881 = vld [vmem:[%s71 + $0x18] sm:$0xf]
    %v9882 = vld [vmem:[%s71 + $0x1c] sm:$0xf]
    %v9883 = vld [vmem:[%s71 + $0x20] sm:$0xf]
    %v9884 = vld [vmem:[%s71 + $0x24] sm:$0xf]
    %v9885 = vld [vmem:[%s71 + $0x28] sm:$0xf]
    %v9886 = vld [vmem:[%s71 + $0x2c] sm:$0xf]
    %v9887 = vld [vmem:[%s71 + $0x30] sm:$0xf]
    %v9888 = vld [vmem:[%s71 + $0x34] sm:$0xf]
    %v9889 = vld [vmem:[%s71 + $0x38] sm:$0xf]
    %v9890 = vld [vmem:[%s71 + $0x3c] sm:$0xf]
    %v9907 = vunpack.c.l.b16 %v9875
    %v9908 = vunpack.c.l.b16 %v9876
    %v9909 = vunpack.c.l.b16 %v9877
    %v9910 = vunpack.c.l.b16 %v9878
    %v9911 = vunpack.c.l.b16 %v9879
    %v9912 = vunpack.c.l.b16 %v9880
    %v9913 = vunpack.c.l.b16 %v9881
    %v9914 = vunpack.c.l.b16 %v9882
    %v9915 = vunpack.c.l.b16 %v9883
    %v9916 = vunpack.c.l.b16 %v9884
    %v9917 = vunpack.c.l.b16 %v9885
    %v9918 = vunpack.c.l.b16 %v9886
    %v9919 = vunpack.c.l.b16 %v9887
    %v9920 = vunpack.c.l.b16 %v9888
    %v9921 = vunpack.c.l.b16 %v9889
    %v9922 = vunpack.c.l.b16 %v9890
    %v9923 = vpack.c.b16 %v9908, %v9907
    %v9924 = vpack.c.b16 %v9910, %v9909
    %v9925 = vpack.c.b16 %v9912, %v9911
    %v9926 = vpack.c.b16 %v9914, %v9913
    %v9927 = vpack.c.b16 %v9916, %v9915
    %v9928 = vpack.c.b16 %v9918, %v9917
    %v9929 = vpack.c.b16 %v9920, %v9919
    %v9930 = vpack.c.b16 %v9922, %v9921
    %9939 = vmatprep.subr.bf16.mxu0 0
    %9940 = vmatpush1.bf16.msra.mxu0 %v9923
    %9941 = vmatprep.subr.bf16.mxu0 0
    %9942 = vmatpush1.bf16.msra.mxu0 %v9924
    %9943 = vmatprep.subr.bf16.mxu0 0
    %9944 = vmatpush1.bf16.msra.mxu0 %v9925
    %9945 = vmatprep.subr.bf16.mxu0 0
    %9946 = vmatpush1.bf16.msra.mxu0 %v9926
    %9947 = vmatprep.subr.bf16.mxu0 0
    %9948 = vmatpush1.bf16.msra.mxu0 %v9927
    %9949 = vmatprep.subr.bf16.mxu0 0
    %9950 = vmatpush1.bf16.msra.mxu0 %v9928
    %9951 = vmatprep.subr.bf16.mxu0 0
    %9952 = vmatpush1.bf16.msra.mxu0 %v9929
    %9953 = vmatprep.subr.bf16.mxu0 0
    %9954 = vmatpush1.bf16.msra.mxu0 %v9930
    %9955 = vmatprep.subr.bf16.mxu0 0
    %9956 = vmatpush1.bf16.msra.mxu0 0
    %9957 = vmatprep.subr.bf16.mxu0 0
    %9958 = vmatpush1.bf16.msra.mxu0 0
    %9959 = vmatprep.subr.bf16.mxu0 0
    %9960 = vmatpush1.bf16.msra.mxu0 0
    %9961 = vmatprep.subr.bf16.mxu0 0
    %9962 = vmatpush1.bf16.msra.mxu0 0
    %9963 = vmatprep.subr.bf16.mxu0 0
    %9964 = vmatpush1.bf16.msra.mxu0 0
    %9965 = vmatprep.subr.bf16.mxu0 0
    %9966 = vmatpush1.bf16.msra.mxu0 0
    %9967 = vmatprep.subr.bf16.mxu0 0
    %9968 = vmatpush1.bf16.msra.mxu0 0
    %9969 = vmatprep.subr.bf16.mxu0 0
    %9970 = vmatpush1.bf16.msra.mxu0 0
    %9971 = vmatprep.mubr.bf16.mxu0 0
    %9972 = vmatmul.mubr.bf16.gmra.mrb[0].mxu0 %v9867
    %v9973 = vpop.f32.mrb[0].mxu0
    %v9974 = vadd.f32 0.0, %v9973
    %v9975 = vpop.f32.mrb[0].mxu0
    %v9976 = vpop.f32.mrb[0].mxu0
    %v9977 = vadd.f32 0.0, %v9976
    %v9978 = vpop.f32.mrb[0].mxu0
    %9979 = vmatprep.mubr.bf16.mxu0 0
    %9980 = vmatmul.mubr.bf16.gmra.mrb[0].mxu0 %v9868
    %v9981 = vpop.f32.mrb[0].mxu0
    %v9982 = vadd.f32 0.0, %v9981
    %v9983 = vpop.f32.mrb[0].mxu0
    %v9984 = vpop.f32.mrb[0].mxu0
    %v9985 = vadd.f32 0.0, %v9984
    %v9986 = vpop.f32.mrb[0].mxu0
    %9987 = vmatprep.mubr.bf16.mxu0 0
    %9988 = vmatmul.mubr.bf16.gmra.mrb[0].mxu0 %v9869
    %v9989 = vpop.f32.mrb[0].mxu0
    %v9990 = vadd.f32 0.0, %v9989
    %v9991 = vpop.f32.mrb[0].mxu0
    %v9992 = vpop.f32.mrb[0].mxu0
    %v9993 = vadd.f32 0.0, %v9992
    %v9994 = vpop.f32.mrb[0].mxu0
    %9995 = vmatprep.mubr.bf16.mxu0 0
    %9996 = vmatmul.mubr.bf16.gmra.mrb[0].mxu0 %v9870
    %v9997 = vpop.f32.mrb[0].mxu0
    %v9998 = vadd.f32 0.0, %v9997
    %v9999 = vpop.f32.mrb[0].mxu0
    %v10000 = vpop.f32.mrb[0].mxu0
    %v10001 = vadd.f32 0.0, %v10000
    %v10002 = vpop.f32.mrb[0].mxu0
    %10003 = vmatprep.mubr.bf16.mxu0 0
    %10004 = vmatmul.mubr.bf16.gmra.mrb[0].mxu0 %v9871
    %v10005 = vpop.f32.mrb[0].mxu0
    %v10006 = vadd.f32 0.0, %v10005
    %v10007 = vpop.f32.mrb[0].mxu0
    %v10008 = vpop.f32.mrb[0].mxu0
    %v10009 = vadd.f32 0.0, %v10008
    %v10010 = vpop.f32.mrb[0].mxu0
    %10011 = vmatprep.mubr.bf16.mxu0 0
    %10012 = vmatmul.mubr.bf16.gmra.mrb[0].mxu0 %v9872
    %v10013 = vpop.f32.mrb[0].mxu0
    %v10014 = vadd.f32 0.0, %v10013
    %v10015 = vpop.f32.mrb[0].mxu0
    %v10016 = vpop.f32.mrb[0].mxu0
    %v10017 = vadd.f32 0.0, %v10016
    %v10018 = vpop.f32.mrb[0].mxu0
    %10019 = vmatprep.mubr.bf16.mxu0 0
    %10020 = vmatmul.mubr.bf16.gmra.mrb[0].mxu0 %v9873
    %v10021 = vpop.f32.mrb[0].mxu0
    %v10022 = vadd.f32 0.0, %v10021
    %v10023 = vpop.f32.mrb[0].mxu0
    %v10024 = vpop.f32.mrb[0].mxu0
    %v10025 = vadd.f32 0.0, %v10024
    %v10026 = vpop.f32.mrb[0].mxu0
    %10027 = vmatprep.mubr.bf16.mxu0 0
    %10028 = vmatmul.mubr.bf16.gmra.mrb[0].mxu0 %v9874
    %v10029 = vpop.f32.mrb[0].mxu0
    %v10030 = vadd.f32 0.0, %v10029
    %v10031 = vpop.f32.mrb[0].mxu0
    %v10032 = vpop.f32.mrb[0].mxu0
    %v10033 = vadd.f32 0.0, %v10032
    %v10034 = vpop.f32.mrb[0].mxu0
    %10035 = vdwg.mxu0
    %v10036 = vadd.f32 %v9413, %v9974
    %v10037 = vadd.f32 %v9414, %v9977
    %v10038 = vadd.f32 %v9415, %v9982
    %v10039 = vadd.f32 %v9416, %v9985
    %v10040 = vadd.f32 %v9417, %v9990
    %v10041 = vadd.f32 %v9418, %v9993
    %v10042 = vadd.f32 %v9419, %v9998
    %v10043 = vadd.f32 %v9420, %v10001
    %v10044 = vadd.f32 %v9421, %v10006
    %v10045 = vadd.f32 %v9422, %v10009
    %v10046 = vadd.f32 %v9423, %v10014
    %v10047 = vadd.f32 %v9424, %v10017
    %v10048 = vadd.f32 %v9425, %v10022
    %v10049 = vadd.f32 %v9426, %v10025
    %v10050 = vadd.f32 %v9427, %v10030
    %v10051 = vadd.f32 %v9428, %v10033
    %v10052 = vld [vmem:[%s73] sm:$0x1]
    %v10054 = vlaneseq
    %v10055 = vshrl.u32 %v10054, 7
    %v10056 = vsub.s32 0, %v10055
    %v10057 = vrot.slane %v10052, %v10056
    %v10059 = vadd.f32 %v10036, %v10057
    %v10060 = vadd.f32 %v10037, %v10057
    %v10061 = vadd.f32 %v10038, %v10057
    %v10062 = vadd.f32 %v10039, %v10057
    %v10063 = vadd.f32 %v10040, %v10057
    %v10064 = vadd.f32 %v10041, %v10057
    %v10065 = vadd.f32 %v10042, %v10057
    %v10066 = vadd.f32 %v10043, %v10057
    %v10067 = vadd.f32 %v10044, %v10057
    %v10068 = vadd.f32 %v10045, %v10057
    %v10069 = vadd.f32 %v10046, %v10057
    %v10070 = vadd.f32 %v10047, %v10057
    %v10071 = vadd.f32 %v10048, %v10057
    %v10072 = vadd.f32 %v10049, %v10057
    %v10073 = vadd.f32 %v10050, %v10057
    %v10074 = vadd.f32 %v10051, %v10057
    %v10075 = vsel %vm1673, %v10059, 0.0
    %v10076 = vsel %vm1673, %v10060, 0.0
    %v10077 = vadd.f32 %v10075, %v10076
    %v10078 = vsel %vm1673, %v10061, 0.0
    %v10079 = vadd.f32 %v10077, %v10078
    %v10080 = vsel %vm1673, %v10062, 0.0
    %v10081 = vadd.f32 %v10079, %v10080
    %v10082 = vsel %vm1673, %v10063, 0.0
    %v10083 = vadd.f32 %v10081, %v10082
    %v10084 = vsel %vm1673, %v10064, 0.0
    %v10085 = vadd.f32 %v10083, %v10084
    %v10086 = vsel %vm1673, %v10065, 0.0
    %v10087 = vadd.f32 %v10085, %v10086
    %v10088 = vsel %vm1673, %v10066, 0.0
    %v10089 = vadd.f32 %v10087, %v10088
    %v10090 = vrot.slane %v10089, 4
    %v10091 = vadd.f32 %v10089, %v10090
    %v10092 = vrot.slane %v10091, 2
    %v10093 = vadd.f32 %v10091, %v10092
    %v10094 = vrot.slane %v10093, 1
    %v10095 = vadd.f32 %v10093, %v10094
    %v10096 = vmul.f32 %v10095, %v1292
    %v10097 = vsel %vm1673, %v10067, 0.0
    %v10098 = vsel %vm1673, %v10068, 0.0
    %v10099 = vadd.f32 %v10097, %v10098
    %v10100 = vsel %vm1673, %v10069, 0.0
    %v10101 = vadd.f32 %v10099, %v10100
    %v10102 = vsel %vm1673, %v10070, 0.0
    %v10103 = vadd.f32 %v10101, %v10102
    %v10104 = vsel %vm1673, %v10071, 0.0
    %v10105 = vadd.f32 %v10103, %v10104
    %v10106 = vsel %vm1673, %v10072, 0.0
    %v10107 = vadd.f32 %v10105, %v10106
    %v10108 = vsel %vm1673, %v10073, 0.0
    %v10109 = vadd.f32 %v10107, %v10108
    %v10110 = vsel %vm1673, %v10074, 0.0
    %v10111 = vadd.f32 %v10109, %v10110
    %v10112 = vrot.slane %v10111, 4
    %v10113 = vadd.f32 %v10111, %v10112
    %v10114 = vrot.slane %v10113, 2
    %v10115 = vadd.f32 %v10113, %v10114
    %v10116 = vrot.slane %v10115, 1
    %v10117 = vadd.f32 %v10115, %v10116
    %v10118 = vmul.f32 %v10117, %v1292
    %v10119 = vsel %vm1316, %v10096, %v10118
    %v10120 = vpack.c.bf16 %v10119, %v10119
    %v10121 = vld [vmem:[%s75] sm:$0xf]
    %v10122 = vld [vmem:[%s75 + $0x4] sm:$0xf]
    %v10123 = vld [vmem:[%s75 + $0x8] sm:$0xf]
    %v10124 = vld [vmem:[%s75 + $0xc] sm:$0xf]
    %v10125 = vld [vmem:[%s75 + $0x10] sm:$0xf]
    %v10126 = vld [vmem:[%s75 + $0x14] sm:$0xf]
    %v10127 = vld [vmem:[%s75 + $0x18] sm:$0xf]
    %v10128 = vld [vmem:[%s75 + $0x1c] sm:$0xf]
    %v10129 = vld [vmem:[%s77] sm:$0x1]
    %v10131 = vlaneseq
    %v10132 = vshrl.u32 %v10131, 7
    %v10133 = vsub.s32 0, %v10132
    %v10134 = vrot.slane %v10129, %v10133
    %v10144 = vunpack.c.l.b16 %v10121
    %v10145 = vunpack.c.l.b16 %v10122
    %v10146 = vunpack.c.l.b16 %v10123
    %v10147 = vunpack.c.l.b16 %v10124
    %v10148 = vunpack.c.l.b16 %v10125
    %v10149 = vunpack.c.l.b16 %v10126
    %v10150 = vunpack.c.l.b16 %v10127
    %v10151 = vunpack.c.l.b16 %v10128
    %v10152 = vpack.c.b16 %v10145, %v10144
    %v10153 = vpack.c.b16 %v10147, %v10146
    %v10154 = vpack.c.b16 %v10149, %v10148
    %v10155 = vpack.c.b16 %v10151, %v10150
    %v10161 = vsel %vm1673, %v10120, 0
    %10163 = vmatprep.subr.bf16.mxu0 0
    %10164 = vmatpush1.bf16.msra.mxu0 %v10152
    %10165 = vmatprep.subr.bf16.mxu0 0
    %10166 = vmatpush1.bf16.msra.mxu0 %v10153
    %10167 = vmatprep.subr.bf16.mxu0 0
    %10168 = vmatpush1.bf16.msra.mxu0 %v10154
    %10169 = vmatprep.subr.bf16.mxu0 0
    %10170 = vmatpush1.bf16.msra.mxu0 %v10155
    %10171 = vmatprep.subr.bf16.mxu0 0
    %10172 = vmatpush1.bf16.msra.mxu0 0
    %10173 = vmatprep.subr.bf16.mxu0 0
    %10174 = vmatpush1.bf16.msra.mxu0 0
    %10175 = vmatprep.subr.bf16.mxu0 0
    %10176 = vmatpush1.bf16.msra.mxu0 0
    %10177 = vmatprep.subr.bf16.mxu0 0
    %10178 = vmatpush1.bf16.msra.mxu0 0
    %10179 = vmatprep.subr.bf16.mxu0 0
    %10180 = vmatpush1.bf16.msra.mxu0 0
    %10181 = vmatprep.subr.bf16.mxu0 0
    %10182 = vmatpush1.bf16.msra.mxu0 0
    %10183 = vmatprep.subr.bf16.mxu0 0
    %10184 = vmatpush1.bf16.msra.mxu0 0
    %10185 = vmatprep.subr.bf16.mxu0 0
    %10186 = vmatpush1.bf16.msra.mxu0 0
    %10187 = vmatprep.subr.bf16.mxu0 0
    %10188 = vmatpush1.bf16.msra.mxu0 0
    %10189 = vmatprep.subr.bf16.mxu0 0
    %10190 = vmatpush1.bf16.msra.mxu0 0
    %10191 = vmatprep.subr.bf16.mxu0 0
    %10192 = vmatpush1.bf16.msra.mxu0 0
    %10193 = vmatprep.subr.bf16.mxu0 0
    %10194 = vmatpush1.bf16.msra.mxu0 0
    %10195 = vmatprep.mubr.bf16.mxu0 0
    %10196 = vmatmul.mubr.bf16.gmra.mrb[0].mxu0 %v10161
    %v10197 = vpop.f32.mrb[0].mxu0
    %v10198 = vadd.f32 %v10134, %v10197
    %v10199 = vpop.f32.mrb[0].mxu0
    %v10200 = vpop.f32.mrb[0].mxu0
    %v10201 = vpop.f32.mrb[0].mxu0
    %10202 = vdwg.mxu0
    %v10203 = vmax.f32 %v10198, 0.0
    %v10204 = vpack.c.bf16 %v10203, %v10203
    %v10205 = vld [vmem:[%s79] sm:$0xf]
    %v10206 = vld [vmem:[%s79 + $0x4] sm:$0xf]
    %v10207 = vld [vmem:[%s79 + $0x8] sm:$0xf]
    %v10208 = vld [vmem:[%s79 + $0xc] sm:$0xf]
    %v10209 = vld [vmem:[%s79 + $0x10] sm:$0xf]
    %v10210 = vld [vmem:[%s79 + $0x14] sm:$0xf]
    %v10211 = vld [vmem:[%s79 + $0x18] sm:$0xf]
    %v10212 = vld [vmem:[%s79 + $0x1c] sm:$0xf]
    %v10213 = vld [vmem:[%s79 + $0x20] sm:$0xf]
    %v10214 = vld [vmem:[%s79 + $0x24] sm:$0xf]
    %v10215 = vld [vmem:[%s79 + $0x28] sm:$0xf]
    %v10216 = vld [vmem:[%s79 + $0x2c] sm:$0xf]
    %v10217 = vld [vmem:[%s79 + $0x30] sm:$0xf]
    %v10218 = vld [vmem:[%s79 + $0x34] sm:$0xf]
    %v10219 = vld [vmem:[%s79 + $0x38] sm:$0xf]
    %v10220 = vld [vmem:[%s79 + $0x3c] sm:$0xf]
    %v10221 = vld [vmem:[%s81] sm:$0x1]
    %v10223 = vlaneseq
    %v10224 = vshrl.u32 %v10223, 7
    %v10225 = vsub.s32 0, %v10224
    %v10226 = vrot.slane %v10221, %v10225
    %v10244 = vunpack.c.l.b16 %v10205
    %v10245 = vunpack.c.l.b16 %v10206
    %v10246 = vunpack.c.l.b16 %v10207
    %v10247 = vunpack.c.l.b16 %v10208
    %v10248 = vunpack.c.l.b16 %v10209
    %v10249 = vunpack.c.l.b16 %v10210
    %v10250 = vunpack.c.l.b16 %v10211
    %v10251 = vunpack.c.l.b16 %v10212
    %v10252 = vunpack.c.l.b16 %v10213
    %v10253 = vunpack.c.l.b16 %v10214
    %v10254 = vunpack.c.l.b16 %v10215
    %v10255 = vunpack.c.l.b16 %v10216
    %v10256 = vunpack.c.l.b16 %v10217
    %v10257 = vunpack.c.l.b16 %v10218
    %v10258 = vunpack.c.l.b16 %v10219
    %v10259 = vunpack.c.l.b16 %v10220
    %v10260 = vpack.c.b16 %v10245, %v10244
    %v10261 = vpack.c.b16 %v10247, %v10246
    %v10262 = vpack.c.b16 %v10249, %v10248
    %v10263 = vpack.c.b16 %v10251, %v10250
    %v10264 = vpack.c.b16 %v10253, %v10252
    %v10265 = vpack.c.b16 %v10255, %v10254
    %v10266 = vpack.c.b16 %v10257, %v10256
    %v10267 = vpack.c.b16 %v10259, %v10258
    %10276 = vmatprep.subr.bf16.mxu0 0
    %10277 = vmatpush1.bf16.msra.mxu0 %v10260
    %10278 = vmatprep.subr.bf16.mxu0 0
    %10279 = vmatpush1.bf16.msra.mxu0 %v10261
    %10280 = vmatprep.subr.bf16.mxu0 0
    %10281 = vmatpush1.bf16.msra.mxu0 %v10262
    %10282 = vmatprep.subr.bf16.mxu0 0
    %10283 = vmatpush1.bf16.msra.mxu0 %v10263
    %10284 = vmatprep.subr.bf16.mxu0 0
    %10285 = vmatpush1.bf16.msra.mxu0 %v10264
    %10286 = vmatprep.subr.bf16.mxu0 0
    %10287 = vmatpush1.bf16.msra.mxu0 %v10265
    %10288 = vmatprep.subr.bf16.mxu0 0
    %10289 = vmatpush1.bf16.msra.mxu0 %v10266
    %10290 = vmatprep.subr.bf16.mxu0 0
    %10291 = vmatpush1.bf16.msra.mxu0 %v10267
    %10292 = vmatprep.subr.bf16.mxu0 0
    %10293 = vmatpush1.bf16.msra.mxu0 0
    %10294 = vmatprep.subr.bf16.mxu0 0
    %10295 = vmatpush1.bf16.msra.mxu0 0
    %10296 = vmatprep.subr.bf16.mxu0 0
    %10297 = vmatpush1.bf16.msra.mxu0 0
    %10298 = vmatprep.subr.bf16.mxu0 0
    %10299 = vmatpush1.bf16.msra.mxu0 0
    %10300 = vmatprep.subr.bf16.mxu0 0
    %10301 = vmatpush1.bf16.msra.mxu0 0
    %10302 = vmatprep.subr.bf16.mxu0 0
    %10303 = vmatpush1.bf16.msra.mxu0 0
    %10304 = vmatprep.subr.bf16.mxu0 0
    %10305 = vmatpush1.bf16.msra.mxu0 0
    %10306 = vmatprep.subr.bf16.mxu0 0
    %10307 = vmatpush1.bf16.msra.mxu0 0
    %10308 = vmatprep.mubr.bf16.mxu0 0
    %10309 = vmatmul.mubr.bf16.gmra.mrb[0].mxu0 %v10204
    %v10310 = vpop.f32.mrb[0].mxu0
    %v10311 = vadd.f32 %v10226, %v10310
    %v10312 = vpop.f32.mrb[0].mxu0
    %v10313 = vpop.f32.mrb[0].mxu0
    %v10314 = vpop.f32.mrb[0].mxu0
    %10315 = vdwg.mxu0
    %v10316 = vmax.f32 %v10311, 0.0
    %v10317 = vpack.c.bf16 %v10316, %v10316
    %v10318 = vld [vmem:[%s83] sm:$0xf]
    %v10319 = vld [vmem:[%s83 + $0x4] sm:$0xf]
    %v10320 = vld [vmem:[%s83 + $0x8] sm:$0xf]
    %v10321 = vld [vmem:[%s83 + $0xc] sm:$0xf]
    %v10322 = vld [vmem:[%s83 + $0x10] sm:$0xf]
    %v10323 = vld [vmem:[%s83 + $0x14] sm:$0xf]
    %v10324 = vld [vmem:[%s83 + $0x18] sm:$0xf]
    %v10325 = vld [vmem:[%s83 + $0x1c] sm:$0xf]
    %v10326 = vld [vmem:[%s85] sm:$0x1]
    %v10328 = vlaneseq
    %v10329 = vshrl.u32 %v10328, 7
    %v10330 = vsub.s32 0, %v10329
    %v10331 = vrot.slane %v10326, %v10330
    %v10341 = vunpack.c.l.b16 %v10318
    %v10342 = vunpack.c.l.b16 %v10319
    %v10343 = vunpack.c.l.b16 %v10320
    %v10344 = vunpack.c.l.b16 %v10321
    %v10345 = vunpack.c.l.b16 %v10322
    %v10346 = vunpack.c.l.b16 %v10323
    %v10347 = vunpack.c.l.b16 %v10324
    %v10348 = vunpack.c.l.b16 %v10325
    %v10349 = vpack.c.b16 %v10342, %v10341
    %v10350 = vpack.c.b16 %v10344, %v10343
    %v10351 = vpack.c.b16 %v10346, %v10345
    %v10352 = vpack.c.b16 %v10348, %v10347
    %v10358 = vsel %vm1673, %v10317, 0
    %10360 = vmatprep.subr.bf16.mxu0 0
    %10361 = vmatpush1.bf16.msra.mxu0 %v10349
    %10362 = vmatprep.subr.bf16.mxu0 0
    %10363 = vmatpush1.bf16.msra.mxu0 %v10350
    %10364 = vmatprep.subr.bf16.mxu0 0
    %10365 = vmatpush1.bf16.msra.mxu0 %v10351
    %10366 = vmatprep.subr.bf16.mxu0 0
    %10367 = vmatpush1.bf16.msra.mxu0 %v10352
    %10368 = vmatprep.subr.bf16.mxu0 0
    %10369 = vmatpush1.bf16.msra.mxu0 0
    %10370 = vmatprep.subr.bf16.mxu0 0
    %10371 = vmatpush1.bf16.msra.mxu0 0
    %10372 = vmatprep.subr.bf16.mxu0 0
    %10373 = vmatpush1.bf16.msra.mxu0 0
    %10374 = vmatprep.subr.bf16.mxu0 0
    %10375 = vmatpush1.bf16.msra.mxu0 0
    %10376 = vmatprep.subr.bf16.mxu0 0
    %10377 = vmatpush1.bf16.msra.mxu0 0
    %10378 = vmatprep.subr.bf16.mxu0 0
    %10379 = vmatpush1.bf16.msra.mxu0 0
    %10380 = vmatprep.subr.bf16.mxu0 0
    %10381 = vmatpush1.bf16.msra.mxu0 0
    %10382 = vmatprep.subr.bf16.mxu0 0
    %10383 = vmatpush1.bf16.msra.mxu0 0
    %10384 = vmatprep.subr.bf16.mxu0 0
    %10385 = vmatpush1.bf16.msra.mxu0 0
    %10386 = vmatprep.subr.bf16.mxu0 0
    %10387 = vmatpush1.bf16.msra.mxu0 0
    %10388 = vmatprep.subr.bf16.mxu0 0
    %10389 = vmatpush1.bf16.msra.mxu0 0
    %10390 = vmatprep.subr.bf16.mxu0 0
    %10391 = vmatpush1.bf16.msra.mxu0 0
    %10392 = vmatprep.mubr.bf16.mxu0 0
    %10393 = vmatmul.mubr.bf16.gmra.mrb[0].mxu0 %v10358
    %v10394 = vpop.f32.mrb[0].mxu0
    %v10395 = vadd.f32 %v10331, %v10394
    %v10396 = vpop.f32.mrb[0].mxu0
    %v10397 = vpop.f32.mrb[0].mxu0
    %v10398 = vpop.f32.mrb[0].mxu0
    %10399 = vdwg.mxu0
    %10400 = vst [vmem:[#allocation2] sm:$0x3] %v10395
    // Predicated region
    $region174: #{novel_hybrid_transformer.1} parent=1 // pred_check
      _
    $region175: #{novel_hybrid_transformer.1} parent=1 // pred_check_branch
      %10402 = sbr.rel (0) target = $region177
    $region176: #{novel_hybrid_transformer.1} parent=1 // pred_region
      %s10404 = ssub.s32 32, 32
      %10405 = vsyncadd [#allocation3], %s10404
      %s10407 = sshll.u32 [#allocation2], 4
      %s10408 = int_to_ptr.vmem [resolvable:$true] %s10407
      %10410 = dma.vmem_to_hbm [thread:$0]  %s10408, 32, %s87, [#allocation3]
    $region177: #{novel_hybrid_transformer.1} parent=1 // pred_fallthru
      _
    // Predicated region
    $region178: #{novel_hybrid_transformer.1} parent=1 // pred_check
      _
    $region179: #{novel_hybrid_transformer.1} parent=1 // pred_check_branch
      %10412 = sbr.rel (0) target = $region181
    $region180: #{novel_hybrid_transformer.1} parent=1 // pred_region
      %10413 = dma.done [#allocation3], 32
    $region181: #{novel_hybrid_transformer.1} parent=1 // pred_fallthru
      _
    %10414 = vsyncpa [#allocation3], 1

</llo_original>
